<compile_context>
chip_gen: v6e
topology: v6e:2x2x1
jax: 0.10.0
libtpu: 0.0.40
codegen_flags: <defaults>
</compile_context>

<pallas_src>
import jax
import jax.numpy as jnp
from jax.experimental import pallas as pl
from jax.experimental.pallas import tpu as pltpu

# ---- model dimensions (EfficientNet-B7 implies 2560 backbone features) ----
FEAT_C = 2560            # backbone num_features == feat channels
N_CLASS = 16             # n_class (small, synthetic)
PATCH = 16               # stand-in backbone patch size
PATCH_K = 3 * PATCH * PATCH
BN_EPS = 1e-5
TC = 1280                # contraction-axis tile over the 2560 input features (2 steps)
NI = 2                   # output-column halves of the preprocess Linear (parallel axis)


# --------------------------------------------------------------------------
# Fused kernel: (Linear + folded BN + Mish) + classifier (both halves)
#   grid axis 0 (i, "parallel"):  which half of the Linear's 2560 output columns
#   grid axis 1 (j, "arbitrary"): contraction tile over the 2560 input features
# The pre-Mish Linear output for half i is accumulated over j in VMEM scratch;
# at the last j the folded bias + Mish + classifier are applied and the partial
# (B, n_class) logits for this half are written (image half added once, on i==0).
# --------------------------------------------------------------------------
def featnet_kernel(xp_ref, xf_ref, wpc_ref, w1q_ref, w1s_ref, b1f_ref,
                   w2b_ref, b2c_ref, out_ref, z_acc):
    i = pl.program_id(0)
    j = pl.program_id(1)

    @pl.when(j == 0)
    def _():
        z_acc[...] = jnp.zeros_like(z_acc)

    # preprocess_feat Linear (BN folded, int8 weights): partial contraction.
    # Dequant here is a pure cast (scale applied to the accumulator at finalize),
    # so the MXU never sees an int dtype -> portable across v5e/v6e/v7x.
    z_acc[...] += jnp.dot(xf_ref[...], w1q_ref[...].astype(jnp.float32),
                          preferred_element_type=jnp.float32)

    @pl.when(j == pl.num_programs(1) - 1)
    def _():
        z = z_acc[...] * w1s_ref[...] + b1f_ref[...]          # int8 scale + folded BN/bias
        h = z * jnp.tanh(jax.nn.softplus(z))                  # Mish
        logits = jnp.dot(h.astype(jnp.bfloat16), w2b_ref[...],
                         preferred_element_type=jnp.float32)
        # image half of the classifier (linear backbone stand-in folded into wp_c
        # offline) plus the classifier bias -- added exactly once, on half 0.
        img = jnp.dot(xp_ref[...].astype(jnp.bfloat16), wpc_ref[...],
                      preferred_element_type=jnp.float32) + b2c_ref[...]
        out_ref[...] = jnp.where(i == 0, logits + img, logits)


def _featnet_fused(xp, xf, p):
    B, K = xp.shape
    _, F = xf.shape
    NC = p["b2c"].shape[1]
    NJ = F // TC                 # contraction tiles
    FH = F // NI                 # output columns per half

    cost = pl.CostEstimate(
        flops=int(2 * B * F * F + 2 * B * F * NC + 2 * B * K * NC),
        transcendentals=int(3 * B * F),
        bytes_accessed=int(F * F                      # W1' int8
                           + 2 * F * NC + 2 * K * NC  # w2b, wp_c (bf16)
                           + 4 * B * F + 4 * B * K    # xf, xp
                           + 12 * F + 4 * NC          # scales / biases
                           + 4 * NI * B * NC),        # partial logits
    )

    return pl.pallas_call(
        featnet_kernel,
        out_shape=jax.ShapeDtypeStruct((NI, B, NC), jnp.float32),
        grid=(NI, NJ),
        in_specs=[
            pl.BlockSpec((B, K), lambda i, j: (0, 0)),        # xp (pooled patches)
            pl.BlockSpec((B, TC), lambda i, j: (0, j)),       # xf contraction tile
            pl.BlockSpec((K, NC), lambda i, j: (0, 0)),       # wp_c (img proj folded, bf16)
            pl.BlockSpec((TC, FH), lambda i, j: (j, i)),      # W1' tile (int8)
            pl.BlockSpec((1, FH), lambda i, j: (0, i)),       # int8 per-column scale
            pl.BlockSpec((1, FH), lambda i, j: (0, i)),       # folded BN/bias
            pl.BlockSpec((FH, NC), lambda i, j: (i, 0)),      # W2 feat-half rows (bf16)
            pl.BlockSpec((1, NC), lambda i, j: (0, 0)),       # b2 (+ folded bp@W2a)
        ],
        out_specs=pl.BlockSpec((None, B, NC), lambda i, j: (i, 0, 0)),
        scratch_shapes=[pltpu.VMEM((B, FH), jnp.float32)],    # pre-Mish Linear accumulator
        compiler_params=pltpu.CompilerParams(
            dimension_semantics=("parallel", "arbitrary"),
            vmem_limit_bytes=24 * 1024 * 1024,
        ),
        cost_estimate=cost,
    )(xp, xf, p["wpc"], p["w1q"], p["w1s"], p["b1f"], p["w2b"], p["b2c"])


# --------------------------------------------------------------------------
# Parameters (deterministic synthetic init, PyTorch-style shapes) + offline prep
# --------------------------------------------------------------------------
def init_raw_params(key):
    ks = jax.random.split(key, 8)
    s = 0.02
    return dict(
        # stand-in backbone patch projection (3*16*16 -> 2560)
        wp=jax.random.normal(ks[0], (PATCH_K, FEAT_C), jnp.float32) * s,
        bp=jnp.zeros((FEAT_C,), jnp.float32),
        # preprocess_feat: Linear(2560, 2560) weight (out, in), bias
        w1=jax.random.normal(ks[1], (FEAT_C, FEAT_C), jnp.float32) * s,
        b1=jax.random.normal(ks[2], (FEAT_C,), jnp.float32) * s,
        # BatchNorm1d(2560) inference statistics
        bn_gamma=jnp.ones((FEAT_C,), jnp.float32),
        bn_beta=jnp.zeros((FEAT_C,), jnp.float32),
        bn_mean=jax.random.normal(ks[3], (FEAT_C,), jnp.float32) * s,
        bn_var=jax.random.uniform(ks[4], (FEAT_C,), jnp.float32, 0.5, 1.5),
        # classifier: Linear(5120, n_class)
        w2=jax.random.normal(ks[5], (N_CLASS, 2 * FEAT_C), jnp.float32) * s,
        b2=jax.random.normal(ks[6], (N_CLASS,), jnp.float32) * s,
    )


def prepare_params(raw):
    """Offline (one-time) transforms: fold BN into W1, fold the (linear) image branch
    into the classifier, int8-quantize W1' per output column, cast small weights to bf16."""
    # --- BN(eval) folded into the Linear ---
    bn_scale = raw["bn_gamma"] * jax.lax.rsqrt(raw["bn_var"] + BN_EPS)       # (F,)
    w1_folded = raw["w1"] * bn_scale[:, None]                                # (out, in)
    b1_folded = (raw["b1"] - raw["bn_mean"]) * bn_scale + raw["bn_beta"]     # (F,)
    w1t = jnp.transpose(w1_folded)                                           # (in, out)

    # --- int8 quantization of W1' with per-output-column scales ---
    amax = jnp.maximum(jnp.max(jnp.abs(w1t), axis=0), 1e-8)                  # (F,)
    w1_scale = amax / 127.0
    w1q = jnp.clip(jnp.round(w1t / w1_scale[None, :]), -127, 127).astype(jnp.int8)

    # --- classifier split + image-branch folding (exact while the stand-in is linear) ---
    w2a = jnp.transpose(raw["w2"][:, :FEAT_C])                               # (F, NC) img half
    w2b = jnp.transpose(raw["w2"][:, FEAT_C:])                               # (F, NC) feat half
    wp_c = raw["wp"] @ w2a                                                   # (K, NC)
    b2_c = raw["b2"] + raw["bp"] @ w2a                                       # (NC,)

    return dict(
        wpc=wp_c.astype(jnp.bfloat16),
        w1q=w1q,
        w1s=w1_scale.reshape(1, FEAT_C).astype(jnp.float32),
        b1f=b1_folded.reshape(1, FEAT_C),
        w2b=w2b.astype(jnp.bfloat16),
        b2c=b2_c.reshape(1, N_CLASS),
    )


# --------------------------------------------------------------------------
# Forward
# --------------------------------------------------------------------------
@jax.jit
def featnet_forward(img, feat, p):
    B, Cin, H, W = img.shape
    ph, pw = H // PATCH, W // PATCH

    # --- image branch: x = global_pool(net.features(img)).flatten(1) ---
    # TODO(synk): the full EfficientNet-B7 backbone (self.net.features) is not
    # reimplemented; a pooled patch-projection stand-in (linear, folded into the
    # classifier offline) yields the 2560-dim pooled feature instead.
    xp = img.reshape(B, Cin, ph, PATCH, pw, PATCH).mean(axis=(2, 4))
    xp = xp.reshape(B, Cin * PATCH * PATCH)                          # (B, 768)

    # --- feat branch: AdaptiveAvgPool2d(1).flatten(1), pre-pooled (lane-dense) ---
    xf = feat.mean(axis=(2, 3))                                      # (B, 2560)

    # dropout (drop_rate > 0) is the identity in inference mode -> skipped
    partial_logits = _featnet_fused(xp, xf, p)                       # (NI, B, n_class)
    return partial_logits.sum(axis=0)                                # (B, n_class)


if __name__ == "__main__":
    key = jax.random.PRNGKey(0)
    k_img, k_feat = jax.random.split(key)

    B = 2
    img = jax.random.normal(k_img, (B, 3, 64, 64), jnp.float32)          # NCHW
    feat = jax.random.normal(k_feat, (B, FEAT_C, 8, 8), jnp.float32)     # NCHW

    params = prepare_params(init_raw_params(jax.random.PRNGKey(1)))

    out = featnet_forward(img, feat, params)
    jax.block_until_ready(out)
    assert out.shape == (B, N_CLASS) and out.dtype == jnp.float32
    assert bool(jnp.all(jnp.isfinite(out)))
    print("KERNEL_OK")
</pallas_src>

<mosaic_0001>
module attributes {stable_mosaic.version = 11 : i64} {
  func.func @featnet_kernel(%arg0: i32, %arg1: i32, %arg2: memref<2x768xf32, #tpu.memory_space<vmem>>, %arg3: memref<2x1280xf32, #tpu.memory_space<vmem>>, %arg4: memref<768x16xbf16, #tpu.memory_space<vmem>>, %arg5: memref<1280x1280xi8, #tpu.memory_space<vmem>>, %arg6: memref<1x1280xf32, #tpu.memory_space<vmem>>, %arg7: memref<1x1280xf32, #tpu.memory_space<vmem>>, %arg8: memref<1280x16xbf16, #tpu.memory_space<vmem>>, %arg9: memref<1x16xf32, #tpu.memory_space<vmem>>, %arg10: memref<1x2x16xf32, #tpu.memory_space<vmem>>, %arg11: memref<2x1280xf32, #tpu.memory_space<vmem>>) attributes {dimension_semantics = [#tpu.dimension_semantics<parallel>, #tpu.dimension_semantics<arbitrary>], iteration_bounds = array<i64: 2, 2>, scalar_prefetch = 0 : i64, scratch_operands = 1 : i64, tpu.core_type = #tpu.core_type<tc>, window_params = [{pipeline_mode = #tpu.pipeline_mode<synchronous>, transform_indices = @transform_0, window_bounds = array<i64: 2, 768>}, {transform_indices = @transform_1, window_bounds = array<i64: 2, 1280>}, {pipeline_mode = #tpu.pipeline_mode<synchronous>, transform_indices = @transform_2, window_bounds = array<i64: 768, 16>}, {transform_indices = @transform_3, window_bounds = array<i64: 1280, 1280>}, {transform_indices = @transform_4, window_bounds = array<i64: 1, 1280>}, {transform_indices = @transform_5, window_bounds = array<i64: 1, 1280>}, {transform_indices = @transform_6, window_bounds = array<i64: 1280, 16>}, {pipeline_mode = #tpu.pipeline_mode<synchronous>, transform_indices = @transform_7, window_bounds = array<i64: 1, 16>}, {transform_indices = @transform_8, window_bounds = array<i64: 1, 2, 16>}]} {
    %c0_i32 = arith.constant 0 : i32
    %0 = arith.cmpi eq, %arg1, %c0_i32 : i32
    %1 = arith.extui %0 : i1 to i32
    %c0_i32_0 = arith.constant 0 : i32
    %2 = arith.cmpi ne, %1, %c0_i32_0 : i32
    scf.if %2 {
      %cst_9 = arith.constant 0.000000e+00 : f32
      %13 = vector.broadcast %cst_9 : f32 to vector<2x1280xf32>
      %c0_10 = arith.constant 0 : index
      %c0_11 = arith.constant 0 : index
      %14 = vector.load %arg11[%c0_10, %c0_11] : memref<2x1280xf32, #tpu.memory_space<vmem>>, vector<2x1280xf32>
      tpu.vector_store %arg11[%c0_10, %c0_11], %13 {strides = array<i32>} : memref<2x1280xf32, #tpu.memory_space<vmem>>, vector<2x1280xf32>,
    } else {
    }
    %c0 = arith.constant 0 : index
    %c0_1 = arith.constant 0 : index
    %3 = vector.load %arg11[%c0, %c0_1] : memref<2x1280xf32, #tpu.memory_space<vmem>>, vector<2x1280xf32>
    %c0_2 = arith.constant 0 : index
    %c0_3 = arith.constant 0 : index
    %4 = vector.load %arg3[%c0_2, %c0_3] : memref<2x1280xf32, #tpu.memory_space<vmem>>, vector<2x1280xf32>
    %c0_4 = arith.constant 0 : index
    %c0_5 = arith.constant 0 : index
    %5 = vector.load %arg5[%c0_4, %c0_5] : memref<1280x1280xi8, #tpu.memory_space<vmem>>, vector<1280x1280xi8>
    %6 = arith.sitofp %5 : vector<1280x1280xi8> to vector<1280x1280xf32>
    %cst = arith.constant dense<0.000000e+00> : vector<2x1280xf32>
    %7 = tpu.matmul %4, %6, %cst {dimension_numbers = #tpu.dot_dimension_numbers<[1], [0], [0], [1], [0, 0, 1, 1], [], []>} : vector<2x1280xf32>, vector<1280x1280xf32>, vector<2x1280xf32> -> vector<2x1280xf32>
    %8 = arith.addf %3, %7 : vector<2x1280xf32>
    %c0_6 = arith.constant 0 : index
    %c0_7 = arith.constant 0 : index
    %9 = vector.load %arg11[%c0_6, %c0_7] : memref<2x1280xf32, #tpu.memory_space<vmem>>, vector<2x1280xf32>
    tpu.vector_store %arg11[%c0_6, %c0_7], %8 {strides = array<i32>} : memref<2x1280xf32, #tpu.memory_space<vmem>>, vector<2x1280xf32>,
    %c1_i32 = arith.constant 1 : i32
    %10 = arith.cmpi eq, %arg1, %c1_i32 : i32
    %11 = arith.extui %10 : i1 to i32
    %c0_i32_8 = arith.constant 0 : i32
    %12 = arith.cmpi ne, %11, %c0_i32_8 : i32
    scf.if %12 {
      %c0_9 = arith.constant 0 : index
      %c0_10 = arith.constant 0 : index
      %13 = vector.load %arg11[%c0_9, %c0_10] : memref<2x1280xf32, #tpu.memory_space<vmem>>, vector<2x1280xf32>
      %c0_11 = arith.constant 0 : index
      %c0_12 = arith.constant 0 : index
      %14 = vector.load %arg6[%c0_11, %c0_12] : memref<1x1280xf32, #tpu.memory_space<vmem>>, vector<1x1280xf32>
      %15 = vector.broadcast %14 : vector<1x1280xf32> to vector<2x1280xf32>
      %16 = arith.mulf %13, %15 : vector<2x1280xf32>
      %c0_13 = arith.constant 0 : index
      %c0_14 = arith.constant 0 : index
      %17 = vector.load %arg7[%c0_13, %c0_14] : memref<1x1280xf32, #tpu.memory_space<vmem>>, vector<1x1280xf32>
      %18 = vector.broadcast %17 : vector<1x1280xf32> to vector<2x1280xf32>
      %19 = arith.addf %16, %18 : vector<2x1280xf32>
      %cst_15 = arith.constant 0.000000e+00 : f32
      %20 = vector.broadcast %cst_15 : f32 to vector<2x1280xf32>
      %21 = arith.maximumf %19, %20 : vector<2x1280xf32>
      %22 = vector.broadcast %cst_15 : f32 to vector<2x1280xf32>
      %23 = arith.subf %19, %22 : vector<2x1280xf32>
      %24 = arith.cmpf one, %23, %23 : vector<2x1280xf32>
      %25 = vector.broadcast %cst_15 : f32 to vector<2x1280xf32>
      %26 = arith.addf %19, %25 : vector<2x1280xf32>
      %27 = math.absf %23 : vector<2x1280xf32>
      %cst_16 = arith.constant 0.000000e+00 : f32
      %28 = vector.broadcast %cst_16 : f32 to vector<2x1280xf32>
      %29 = arith.subf %28, %27 : vector<2x1280xf32>
      %30 = math.exp %29 : vector<2x1280xf32>
      %31 = math.log1p %30 : vector<2x1280xf32>
      %32 = arith.addf %21, %31 : vector<2x1280xf32>
      %33 = arith.select %24, %26, %32 : vector<2x1280xi1>, vector<2x1280xf32>
      %34 = math.tanh %33 : vector<2x1280xf32>
      %35 = arith.mulf %19, %34 : vector<2x1280xf32>
      %36 = arith.truncf %35 : vector<2x1280xf32> to vector<2x1280xbf16>
      %c0_17 = arith.constant 0 : index
      %c0_18 = arith.constant 0 : index
      %37 = vector.load %arg8[%c0_17, %c0_18] : memref<1280x16xbf16, #tpu.memory_space<vmem>>, vector<1280x16xbf16>
      %cst_19 = arith.constant dense<0.000000e+00> : vector<2x16xf32>
      %38 = tpu.matmul %36, %37, %cst_19 {dimension_numbers = #tpu.dot_dimension_numbers<[1], [0], [0], [1], [0, 0, 1, 1], [], []>} : vector<2x1280xbf16>, vector<1280x16xbf16>, vector<2x16xf32> -> vector<2x16xf32>
      %c0_20 = arith.constant 0 : index
      %c0_21 = arith.constant 0 : index
      %39 = vector.load %arg2[%c0_20, %c0_21] : memref<2x768xf32, #tpu.memory_space<vmem>>, vector<2x768xf32>
      %40 = arith.truncf %39 : vector<2x768xf32> to vector<2x768xbf16>
      %c0_22 = arith.constant 0 : index
      %c0_23 = arith.constant 0 : index
      %41 = vector.load %arg4[%c0_22, %c0_23] : memref<768x16xbf16, #tpu.memory_space<vmem>>, vector<768x16xbf16>
      %cst_24 = arith.constant dense<0.000000e+00> : vector<2x16xf32>
      %42 = tpu.matmul %40, %41, %cst_24 {dimension_numbers = #tpu.dot_dimension_numbers<[1], [0], [0], [1], [0, 0, 1, 1], [], []>} : vector<2x768xbf16>, vector<768x16xbf16>, vector<2x16xf32> -> vector<2x16xf32>
      %c0_25 = arith.constant 0 : index
      %c0_26 = arith.constant 0 : index
      %43 = vector.load %arg9[%c0_25, %c0_26] : memref<1x16xf32, #tpu.memory_space<vmem>>, vector<1x16xf32>
      %44 = vector.broadcast %43 : vector<1x16xf32> to vector<2x16xf32>
      %45 = arith.addf %42, %44 : vector<2x16xf32>
      %c0_i32_27 = arith.constant 0 : i32
      %46 = arith.cmpi eq, %arg0, %c0_i32_27 : i32
      %47 = arith.addf %38, %45 : vector<2x16xf32>
      %48 = arith.select %46, %47, %38 : vector<2x16xf32>
      %c0_28 = arith.constant 0 : index
      %c0_29 = arith.constant 0 : index
      %c0_30 = arith.constant 0 : index
      %49 = vector.load %arg10[%c0_28, %c0_29, %c0_30] : memref<1x2x16xf32, #tpu.memory_space<vmem>>, vector<1x2x16xf32>
      %50 = vector.shape_cast %49 : vector<1x2x16xf32> to vector<2x16xf32>
      %51 = vector.shape_cast %48 : vector<2x16xf32> to vector<1x2x16xf32>
      tpu.vector_store %arg10[%c0_28, %c0_29, %c0_30], %51 {strides = array<i32>} : memref<1x2x16xf32, #tpu.memory_space<vmem>>, vector<1x2x16xf32>,
    } else {
    }
    return
  }
  func.func @transform_0(%arg0: i32, %arg1: i32) -> (i32, i32) {
    %c0_i32 = arith.constant 0 : i32
    %c0_i32_0 = arith.constant 0 : i32
    %c0_i32_1 = arith.constant 0 : i32
    return %c0_i32, %c0_i32_0 : i32, i32
  }
  func.func @transform_1(%arg0: i32, %arg1: i32) -> (i32, i32) {
    %c0_i32 = arith.constant 0 : i32
    %c0_i32_0 = arith.constant 0 : i32
    return %c0_i32, %arg1 : i32, i32
  }
  func.func @transform_2(%arg0: i32, %arg1: i32) -> (i32, i32) {
    %c0_i32 = arith.constant 0 : i32
    %c0_i32_0 = arith.constant 0 : i32
    %c0_i32_1 = arith.constant 0 : i32
    return %c0_i32, %c0_i32_0 : i32, i32
  }
  func.func @transform_3(%arg0: i32, %arg1: i32) -> (i32, i32) {
    %c0_i32 = arith.constant 0 : i32
    return %arg1, %arg0 : i32, i32
  }
  func.func @transform_4(%arg0: i32, %arg1: i32) -> (i32, i32) {
    %c0_i32 = arith.constant 0 : i32
    %c0_i32_0 = arith.constant 0 : i32
    return %c0_i32, %arg0 : i32, i32
  }
  func.func @transform_5(%arg0: i32, %arg1: i32) -> (i32, i32) {
    %c0_i32 = arith.constant 0 : i32
    %c0_i32_0 = arith.constant 0 : i32
    return %c0_i32, %arg0 : i32, i32
  }
  func.func @transform_6(%arg0: i32, %arg1: i32) -> (i32, i32) {
    %c0_i32 = arith.constant 0 : i32
    %c0_i32_0 = arith.constant 0 : i32
    return %arg0, %c0_i32 : i32, i32
  }
  func.func @transform_7(%arg0: i32, %arg1: i32) -> (i32, i32) {
    %c0_i32 = arith.constant 0 : i32
    %c0_i32_0 = arith.constant 0 : i32
    %c0_i32_1 = arith.constant 0 : i32
    return %c0_i32, %c0_i32_0 : i32, i32
  }
  func.func @transform_8(%arg0: i32, %arg1: i32) -> (i32, i32, i32) {
    %c0_i32 = arith.constant 0 : i32
    %c0_i32_0 = arith.constant 0 : i32
    %c0_i32_1 = arith.constant 0 : i32
    return %arg0, %c0_i32, %c0_i32_0 : i32, i32, i32
  }
}

</mosaic_0001>

<llo_original>
// kernel: featnet_forward.1
$region0: #{featnet_forward.1}
  #allocation0 [shape = 'u32[]', space=smem, size = 0x4, offset = 0x4, fixed_abs, tag = 'smem constant byte address 0x4 - core index']
  #allocation1 [shape = 'u32[144,128]{1,0:T(1,128)}', space=vmem, size = 0x12000, scoped, tag = 'internal scratch']
  #allocation2 [shape = 'f32[2,1280]{1,0:T(2,128)}', space=vmem, size = 0x2800, scoped, tag = 'scratch operand']
  %s0 = inlined_call_operand.vmem [shape: f32[2,768], index: 0, kind: input, shape index: {}]
  %s1 = inlined_call_operand.vmem [shape: f32[2,2560], index: 1, kind: input, shape index: {}]
  %s2 = inlined_call_operand.vmem [shape: bf16[768,16], index: 2, kind: input, shape index: {}]
  %s3 = inlined_call_operand.hbm [shape: s8[2560,2560], index: 3, kind: input, shape index: {}]
  %s4 = inlined_call_operand.hbm [shape: f32[1,2560], index: 4, kind: input, shape index: {}]
  %s5 = inlined_call_operand.hbm [shape: f32[1,2560], index: 5, kind: input, shape index: {}]
  %s6 = inlined_call_operand.vmem [shape: bf16[2560,16], index: 6, kind: input, shape index: {}]
  %s7 = inlined_call_operand.hbm [shape: f32[1,16], index: 7, kind: input, shape index: {}]
  %s8 = inlined_call_operand.vmem [shape: f32[2,2,16], index: 8, kind: output, shape index: {}]
  %s9 = sld [smem:[#allocation0]]
  $region89: #{featnet_forward.1} parent=0
    _
  %s11 = ssub.s32 1, %s9
  %s12 = scalar_select 0, %s11, %s9
  $region1: #{featnet_forward.1} parent=0
    #allocation3 [shape = 'u8[3276800]{0}', space=vmem, size = 0x320000, scoped, tag = 'input window, operand 3']
    #allocation4 [shape = 's32[2]{0}', space=sflag, size = 0x8, scoped, tag = 'scoped memory for featnet_forward.1']
    #allocation5 [shape = 'u8[10240]{0}', space=vmem, size = 0x2800, scoped, tag = 'input window, operand 4']
    #allocation6 [shape = 's32[2]{0}', space=sflag, size = 0x8, scoped, tag = 'scoped memory for featnet_forward.1']
    #allocation7 [shape = 'u8[10240]{0}', space=vmem, size = 0x2800, scoped, tag = 'input window, operand 5']
    #allocation8 [shape = 'u8[512]{0}', space=vmem, size = 0x400, scoped, tag = 'input window, operand 7, single buffered']
    #allocation9 [shape = 's32[1]{0}', space=sflag, size = 0x4, scoped, tag = 'scoped memory for featnet_forward.1']
    %13 = vsyncpa [#allocation4], 0
    %s14 = scalar_lea.sflag [#allocation4], 1
    %15 = vsyncpa %s14, 0
    %16 = vsyncpa [#allocation6], 0
    %s17 = scalar_lea.sflag [#allocation6], 1
    %18 = vsyncpa %s17, 0
    %19 = vsyncpa [#allocation9], 0
    loop: start=0, step=1, limit=6
    $region2: #{featnet_forward.1} parent=1 // loop_pre_header
      _
    $region3: #{featnet_forward.1} parent=1 // loop_header
      %s21 = sphi 0, %s25
      %p22 = scmp.ge.s32.totalorder %s21, 6
      %s28 = sphi 0, %s40
      %s29 = sphi 0, %s36
      %s30 = sphi 0, %s28
      %s31 = sphi 0, %s29
      %s32 = sphi 0, %s30
      %s33 = sphi 0, %s31
      %s41 = sphi 0, %s41
      %s43 = sphi 0, %s41
      %s44 = sphi 0, %s43
      %s58 = sphi 0, %s44
      %s64 = sphi 0, %s66
      %s67 = sphi 0, %s64
      %s68 = sphi 0, %s67
      %s84 = sphi 0, %s68
      %s88 = sphi 0, %s88
      %s90 = sphi 0, %s88
      %s91 = sphi 0, %s90
      %s105 = sphi 0, %s91
      %s113 = sphi 0, %s115
      %s116 = sphi 0, %s113
      %s117 = sphi 0, %s116
      %s133 = sphi 0, %s117
      %s139 = sphi 0, %s141
      %s142 = sphi 0, %s139
      %s143 = sphi 0, %s142
      %s159 = sphi 0, %s143
      %s165 = sphi 0, %s167
      %s168 = sphi 0, %s165
      %s169 = sphi 0, %s168
      %s185 = sphi 0, %s169
      %s191 = sphi 0, %s193
      %s194 = sphi 0, %s191
      %s195 = sphi 0, %s194
      %s211 = sphi 0, %s195
      %s215 = sphi 0, %s215
      %s217 = sphi 0, %s215
      %s218 = sphi 0, %s217
      %s232 = sphi 0, %s218
      %s238 = sphi 0, %s240
      %s241 = sphi 0, %s238
      %s242 = sphi 0, %s241
      %s258 = sphi 0, %s242
    $region4: #{featnet_forward.1} parent=1 // loop_header_branch
      %24 = sbr.rel (%p22) target = $region8
    $region5: #{featnet_forward.1} parent=1 // loop_body
      %s26 = ssub.s32 %s21, 1
      %s27 = ssub.s32 %s21, 2
      %s34 = sadd.s32 1, %s29
      %p35 = scmp.ge.s32.totalorder %s34, 2
      %s36 = scalar_select %p35, 0, %s34
      %s37 = sadd.s32 1, %s28
      %s38 = scalar_select %p35, %s37, %s28
      %p39 = scmp.ge.s32.totalorder %s38, 2
      %s40 = scalar_select %p39, 0, %s38
      %s42 = sadd.s32 %s41, 1
      %p45 = scmp.eq.s32.totalorder %s21, 3
      %p46 = scmp.ne.s32.totalorder %s41, %s43
      %p47 = scmp.eq.s32.totalorder %s21, 0
      %p48 = por %p46, %p47
      %p49 = scmp.ne.s32.totalorder %s41, %s43
      %p50 = scmp.eq.s32.totalorder %s26, 3
      %p51 = por %p49, %p50
      %p52 = scmp.ne.s32.totalorder %s43, %s44
      %p53 = scmp.eq.s32.totalorder %s26, 0
      %p54 = por %p52, %p53
      %p55 = scmp.ne.s32.totalorder %s43, %s44
      %p56 = scmp.eq.s32.totalorder %s27, 3
      %p57 = por %p55, %p56
      %p59 = scmp.ne.s32.totalorder %s44, %s58
      %p60 = scmp.eq.s32.totalorder %s27, 0
      %p61 = por %p59, %p60
      %s62 = ssub.s32 %s29, %s36
      %p63 = scmp.eq.s32.totalorder %s62, 0
      %s65 = sadd.s32 %s64, 1
      %s66 = scalar_select %p63, %s64, %s65
      %p69 = pneg %p63
      %p70 = scmp.eq.s32.totalorder %s21, 3
      %p71 = por %p69, %p70
      %p72 = scmp.ne.s32.totalorder %s64, %s67
      %p73 = scmp.eq.s32.totalorder %s21, 0
      %p74 = por %p72, %p73
      %p75 = scmp.ne.s32.totalorder %s64, %s67
      %p76 = scmp.eq.s32.totalorder %s26, 3
      %p77 = por %p75, %p76
      %p78 = scmp.ne.s32.totalorder %s67, %s68
      %p79 = scmp.eq.s32.totalorder %s26, 0
      %p80 = por %p78, %p79
      %p81 = scmp.ne.s32.totalorder %s67, %s68
      %p82 = scmp.eq.s32.totalorder %s27, 3
      %p83 = por %p81, %p82
      %p85 = scmp.ne.s32.totalorder %s68, %s84
      %p86 = scmp.eq.s32.totalorder %s27, 0
      %p87 = por %p85, %p86
      %s89 = sadd.s32 %s88, 1
      %p92 = scmp.eq.s32.totalorder %s21, 3
      %p93 = scmp.ne.s32.totalorder %s88, %s90
      %p94 = scmp.eq.s32.totalorder %s21, 0
      %p95 = por %p93, %p94
      %p96 = scmp.ne.s32.totalorder %s88, %s90
      %p97 = scmp.eq.s32.totalorder %s26, 3
      %p98 = por %p96, %p97
      %p99 = scmp.ne.s32.totalorder %s90, %s91
      %p100 = scmp.eq.s32.totalorder %s26, 0
      %p101 = por %p99, %p100
      %p102 = scmp.ne.s32.totalorder %s90, %s91
      %p103 = scmp.eq.s32.totalorder %s27, 3
      %p104 = por %p102, %p103
      %p106 = scmp.ne.s32.totalorder %s91, %s105
      %p107 = scmp.eq.s32.totalorder %s27, 0
      %p108 = por %p106, %p107
      %s109 = ssub.s32 %s29, %s36
      %s110 = ssub.s32 %s28, %s40
      %s111 = sor.u32 %s109, %s110
      %p112 = scmp.eq.s32.totalorder %s111, 0
      %s114 = sadd.s32 %s113, 1
      %s115 = scalar_select %p112, %s113, %s114
      %p118 = pneg %p112
      %p119 = scmp.eq.s32.totalorder %s21, 3
      %p120 = por %p118, %p119
      %p121 = scmp.ne.s32.totalorder %s113, %s116
      %p122 = scmp.eq.s32.totalorder %s21, 0
      %p123 = por %p121, %p122
      %p124 = scmp.ne.s32.totalorder %s113, %s116
      %p125 = scmp.eq.s32.totalorder %s26, 3
      %p126 = por %p124, %p125
      %p127 = scmp.ne.s32.totalorder %s116, %s117
      %p128 = scmp.eq.s32.totalorder %s26, 0
      %p129 = por %p127, %p128
      %p130 = scmp.ne.s32.totalorder %s116, %s117
      %p131 = scmp.eq.s32.totalorder %s27, 3
      %p132 = por %p130, %p131
      %p134 = scmp.ne.s32.totalorder %s117, %s133
      %p135 = scmp.eq.s32.totalorder %s27, 0
      %p136 = por %p134, %p135
      %s137 = ssub.s32 %s28, %s40
      %p138 = scmp.eq.s32.totalorder %s137, 0
      %s140 = sadd.s32 %s139, 1
      %s141 = scalar_select %p138, %s139, %s140
      %p144 = pneg %p138
      %p145 = scmp.eq.s32.totalorder %s21, 3
      %p146 = por %p144, %p145
      %p147 = scmp.ne.s32.totalorder %s139, %s142
      %p148 = scmp.eq.s32.totalorder %s21, 0
      %p149 = por %p147, %p148
      %p150 = scmp.ne.s32.totalorder %s139, %s142
      %p151 = scmp.eq.s32.totalorder %s26, 3
      %p152 = por %p150, %p151
      %p153 = scmp.ne.s32.totalorder %s142, %s143
      %p154 = scmp.eq.s32.totalorder %s26, 0
      %p155 = por %p153, %p154
      %p156 = scmp.ne.s32.totalorder %s142, %s143
      %p157 = scmp.eq.s32.totalorder %s27, 3
      %p158 = por %p156, %p157
      %p160 = scmp.ne.s32.totalorder %s143, %s159
      %p161 = scmp.eq.s32.totalorder %s27, 0
      %p162 = por %p160, %p161
      %s163 = ssub.s32 %s28, %s40
      %p164 = scmp.eq.s32.totalorder %s163, 0
      %s166 = sadd.s32 %s165, 1
      %s167 = scalar_select %p164, %s165, %s166
      %p170 = pneg %p164
      %p171 = scmp.eq.s32.totalorder %s21, 3
      %p172 = por %p170, %p171
      %p173 = scmp.ne.s32.totalorder %s165, %s168
      %p174 = scmp.eq.s32.totalorder %s21, 0
      %p175 = por %p173, %p174
      %p176 = scmp.ne.s32.totalorder %s165, %s168
      %p177 = scmp.eq.s32.totalorder %s26, 3
      %p178 = por %p176, %p177
      %p179 = scmp.ne.s32.totalorder %s168, %s169
      %p180 = scmp.eq.s32.totalorder %s26, 0
      %p181 = por %p179, %p180
      %p182 = scmp.ne.s32.totalorder %s168, %s169
      %p183 = scmp.eq.s32.totalorder %s27, 3
      %p184 = por %p182, %p183
      %p186 = scmp.ne.s32.totalorder %s169, %s185
      %p187 = scmp.eq.s32.totalorder %s27, 0
      %p188 = por %p186, %p187
      %s189 = ssub.s32 %s28, %s40
      %p190 = scmp.eq.s32.totalorder %s189, 0
      %s192 = sadd.s32 %s191, 1
      %s193 = scalar_select %p190, %s191, %s192
      %p196 = pneg %p190
      %p197 = scmp.eq.s32.totalorder %s21, 3
      %p198 = por %p196, %p197
      %p199 = scmp.ne.s32.totalorder %s191, %s194
      %p200 = scmp.eq.s32.totalorder %s21, 0
      %p201 = por %p199, %p200
      %p202 = scmp.ne.s32.totalorder %s191, %s194
      %p203 = scmp.eq.s32.totalorder %s26, 3
      %p204 = por %p202, %p203
      %p205 = scmp.ne.s32.totalorder %s194, %s195
      %p206 = scmp.eq.s32.totalorder %s26, 0
      %p207 = por %p205, %p206
      %p208 = scmp.ne.s32.totalorder %s194, %s195
      %p209 = scmp.eq.s32.totalorder %s27, 3
      %p210 = por %p208, %p209
      %p212 = scmp.ne.s32.totalorder %s195, %s211
      %p213 = scmp.eq.s32.totalorder %s27, 0
      %p214 = por %p212, %p213
      %s216 = sadd.s32 %s215, 1
      %p219 = scmp.eq.s32.totalorder %s21, 3
      %p220 = scmp.ne.s32.totalorder %s215, %s217
      %p221 = scmp.eq.s32.totalorder %s21, 0
      %p222 = por %p220, %p221
      %p223 = scmp.ne.s32.totalorder %s215, %s217
      %p224 = scmp.eq.s32.totalorder %s26, 3
      %p225 = por %p223, %p224
      %p226 = scmp.ne.s32.totalorder %s217, %s218
      %p227 = scmp.eq.s32.totalorder %s26, 0
      %p228 = por %p226, %p227
      %p229 = scmp.ne.s32.totalorder %s217, %s218
      %p230 = scmp.eq.s32.totalorder %s27, 3
      %p231 = por %p229, %p230
      %p233 = scmp.ne.s32.totalorder %s218, %s232
      %p234 = scmp.eq.s32.totalorder %s27, 0
      %p235 = por %p233, %p234
      %s236 = ssub.s32 %s28, %s40
      %p237 = scmp.eq.s32.totalorder %s236, 0
      %s239 = sadd.s32 %s238, 1
      %s240 = scalar_select %p237, %s238, %s239
      %p243 = pneg %p237
      %p244 = scmp.eq.s32.totalorder %s21, 3
      %p245 = por %p243, %p244
      %p246 = scmp.ne.s32.totalorder %s238, %s241
      %p247 = scmp.eq.s32.totalorder %s21, 0
      %p248 = por %p246, %p247
      %p249 = scmp.ne.s32.totalorder %s238, %s241
      %p250 = scmp.eq.s32.totalorder %s26, 3
      %p251 = por %p249, %p250
      %p252 = scmp.ne.s32.totalorder %s241, %s242
      %p253 = scmp.eq.s32.totalorder %s26, 0
      %p254 = por %p252, %p253
      %p255 = scmp.ne.s32.totalorder %s241, %s242
      %p256 = scmp.eq.s32.totalorder %s27, 3
      %p257 = por %p255, %p256
      %p259 = scmp.ne.s32.totalorder %s242, %s258
      %p260 = scmp.eq.s32.totalorder %s27, 0
      %p261 = por %p259, %p260
      %p262 = scmp.le.s32.totalorder 1, %s21
      %p263 = scmp.lt.s32.totalorder %s21, 5
      %p264 = pnand %p262, %p263
      %p265 = pneg %p264
      // Predicated region
      $region9: #{featnet_forward.1} parent=5 // pred_check
        _
      $region10: #{featnet_forward.1} parent=5 // pred_check_branch
        %267 = sbr.rel (%p264) target = $region12
      $region11: #{featnet_forward.1} parent=5 // pred_region
        %s268 = ssub.s32 %s21, 1
        // Predicated region
        $region13: #{featnet_forward.1} parent=11 // pred_check
          %p269 = pneg %p54
        $region14: #{featnet_forward.1} parent=11 // pred_check_branch
          %271 = sbr.rel (%p269) target = $region16
        $region15: #{featnet_forward.1} parent=11 // pred_region
          _
        $region16: #{featnet_forward.1} parent=11 // pred_fallthru
          _
        // Predicated region
        $region17: #{featnet_forward.1} parent=11 // pred_check
          %p272 = pneg %p101
        $region18: #{featnet_forward.1} parent=11 // pred_check_branch
          %274 = sbr.rel (%p272) target = $region20
        $region19: #{featnet_forward.1} parent=11 // pred_region
          _
        $region20: #{featnet_forward.1} parent=11 // pred_fallthru
          _
        // Predicated region
        $region21: #{featnet_forward.1} parent=11 // pred_check
          %p275 = pneg %p228
        $region22: #{featnet_forward.1} parent=11 // pred_check_branch
          %277 = sbr.rel (%p275) target = $region24
        $region23: #{featnet_forward.1} parent=11 // pred_region
          %s279 = ssub.s32 16, 16
          %280 = vsyncadd [#allocation9], %s279
          %s282 = sshll.u32 [#allocation8], 4
          %s283 = int_to_ptr.vmem [resolvable:$true] %s282
          %285 = dma.hbm_to_vmem [thread:$0]  %s7, 16, %s283, [#allocation9]
        $region24: #{featnet_forward.1} parent=11 // pred_fallthru
          _
      $region12: #{featnet_forward.1} parent=5 // pred_fallthru
        _
      %p286 = scmp.lt.s32.totalorder %s21, 4
      // Predicated region
      $region25: #{featnet_forward.1} parent=5 // pred_check
        %p287 = pneg %p286
      $region26: #{featnet_forward.1} parent=5 // pred_check_branch
        %289 = sbr.rel (%p287) target = $region28
      $region27: #{featnet_forward.1} parent=5 // pred_region
        // Predicated region
        $region29: #{featnet_forward.1} parent=27 // pred_check
          %p290 = pneg %p74
        $region30: #{featnet_forward.1} parent=27 // pred_check_branch
          %292 = sbr.rel (%p290) target = $region32
        $region31: #{featnet_forward.1} parent=27 // pred_region
          %s293 = smul.u32 10, %s29
          %p294 = scmp.lt.s32.totalorder %s293, 19
          %s295 = scalar_select %p294, %s293, 19
          %s296 = smul.addr %s295, 2
          %s297 = scalar_lea.vmem %s1, %s296
          %s298 = smul.u32 10, %s29
        $region32: #{featnet_forward.1} parent=27 // pred_fallthru
          _
        // Predicated region
        $region33: #{featnet_forward.1} parent=27 // pred_check
          %p299 = pneg %p123
        $region34: #{featnet_forward.1} parent=27 // pred_check_branch
          %301 = sbr.rel (%p299) target = $region36
        $region35: #{featnet_forward.1} parent=27 // pred_region
          %s302 = sand.u32 %s113, 1
          %s303 = scalar_lea.sflag [#allocation4], %s302
          %s304 = sand.u32 %s113, 1
          %s305 = smul.addr %s304, 3200
          %s306 = scalar_lea.vmem [#allocation3], %s305
          %s307 = smul.u32 40, %s29
          %s308 = smul.u32 10, %s28
          %s310 = ssub.s32 51200, 51200
          %311 = vsyncadd %s303, %s310
          %s312 = smul.addr %s307, 20
          %s313 = sadd.s32 %s308, %s312
          %s314 = smul.addr %s313, 128
          %s315 = scalar_lea.hbm %s3, %s314
          %s316 = sshll.u32 %s306, 4
          %s317 = int_to_ptr.vmem [resolvable:$true] %s316
          %322 = dma.hbm_to_vmem [thread:$0]  %s315, 51200, %s317, %s303, 2560, 1280, 80
        $region36: #{featnet_forward.1} parent=27 // pred_fallthru
          _
        // Predicated region
        $region37: #{featnet_forward.1} parent=27 // pred_check
          %p323 = pneg %p149
        $region38: #{featnet_forward.1} parent=27 // pred_check_branch
          %325 = sbr.rel (%p323) target = $region40
        $region39: #{featnet_forward.1} parent=27 // pred_region
          %s326 = sand.u32 %s21, 1
          %s327 = scalar_lea.sflag [#allocation6], %s326
          %s328 = sand.u32 %s139, 1
          %s329 = smul.addr %s328, 10
          %s330 = scalar_lea.vmem [#allocation5], %s329
          %s331 = smul.u32 10, %s28
          %s333 = ssub.s32 160, 160
          %334 = vsyncadd %s327, %s333
          %s335 = smul.addr %s331, 16
          %s336 = scalar_lea.hbm %s4, %s335
          %s338 = sshll.u32 %s330, 4
          %s339 = int_to_ptr.vmem [resolvable:$true] %s338
          %341 = dma.hbm_to_vmem [thread:$0]  %s336, 160, %s339, %s327
        $region40: #{featnet_forward.1} parent=27 // pred_fallthru
          _
        // Predicated region
        $region41: #{featnet_forward.1} parent=27 // pred_check
          %p342 = pneg %p175
        $region42: #{featnet_forward.1} parent=27 // pred_check_branch
          %344 = sbr.rel (%p342) target = $region44
        $region43: #{featnet_forward.1} parent=27 // pred_region
          %s345 = sand.u32 %s21, 1
          %s346 = scalar_lea.sflag [#allocation6], %s345
          %s347 = sand.u32 %s165, 1
          %s348 = smul.addr %s347, 10
          %s349 = scalar_lea.vmem [#allocation7], %s348
          %s350 = smul.u32 10, %s28
          %s352 = ssub.s32 160, 160
          %353 = vsyncadd %s346, %s352
          %s354 = smul.addr %s350, 16
          %s355 = scalar_lea.hbm %s5, %s354
          %s357 = sshll.u32 %s349, 4
          %s358 = int_to_ptr.vmem [resolvable:$true] %s357
          %360 = dma.hbm_to_vmem [thread:$0]  %s355, 160, %s358, %s346
        $region44: #{featnet_forward.1} parent=27 // pred_fallthru
          _
        // Predicated region
        $region45: #{featnet_forward.1} parent=27 // pred_check
          %p361 = pneg %p201
        $region46: #{featnet_forward.1} parent=27 // pred_check_branch
          %363 = sbr.rel (%p361) target = $region48
        $region47: #{featnet_forward.1} parent=27 // pred_region
          %s364 = smul.u32 160, %s28
          %p365 = scmp.lt.s32.totalorder %s364, 319
          %s366 = scalar_select %p365, %s364, 319
          %s367 = smul.addr %s366, 4
          %s368 = scalar_lea.vmem %s6, %s367
          %s369 = smul.u32 160, %s28
        $region48: #{featnet_forward.1} parent=27 // pred_fallthru
          _
      $region28: #{featnet_forward.1} parent=5 // pred_fallthru
        _
      %p370 = scmp.le.s32.totalorder 1, %s21
      %p371 = scmp.lt.s32.totalorder %s21, 5
      %p372 = pnand %p370, %p371
      %p373 = pneg %p372
      // Predicated region
      $region49: #{featnet_forward.1} parent=5 // pred_check
        _
      $region50: #{featnet_forward.1} parent=5 // pred_check_branch
        %375 = sbr.rel (%p372) target = $region52
      $region51: #{featnet_forward.1} parent=5 // pred_region
        %s376 = ssub.s32 %s21, 1
        %s377 = sand.u32 %s116, 1
        %s378 = scalar_lea.sflag [#allocation4], %s377
        %s379 = sand.u32 %s116, 1
        %s380 = smul.addr %s379, 3200
        %s381 = scalar_lea.vmem [#allocation3], %s380
        // Predicated region
        $region53: #{featnet_forward.1} parent=51 // pred_check
          %p382 = pneg %p129
        $region54: #{featnet_forward.1} parent=51 // pred_check_branch
          %384 = sbr.rel (%p382) target = $region56
        $region55: #{featnet_forward.1} parent=51 // pred_region
          %385 = dma.done %s378, 51200
        $region56: #{featnet_forward.1} parent=51 // pred_fallthru
          _
        %s386 = sand.u32 %s26, 1
        %s387 = scalar_lea.sflag [#allocation6], %s386
        %s388 = sand.u32 %s142, 1
        %s389 = smul.addr %s388, 10
        %s390 = scalar_lea.vmem [#allocation5], %s389
        // Predicated region
        $region57: #{featnet_forward.1} parent=51 // pred_check
          %p391 = pneg %p155
        $region58: #{featnet_forward.1} parent=51 // pred_check_branch
          %393 = sbr.rel (%p391) target = $region60
        $region59: #{featnet_forward.1} parent=51 // pred_region
          %394 = dma.done %s387, 160
        $region60: #{featnet_forward.1} parent=51 // pred_fallthru
          _
        %s395 = sand.u32 %s26, 1
        %s396 = scalar_lea.sflag [#allocation6], %s395
        %s397 = sand.u32 %s168, 1
        %s398 = smul.addr %s397, 10
        %s399 = scalar_lea.vmem [#allocation7], %s398
        // Predicated region
        $region61: #{featnet_forward.1} parent=51 // pred_check
          %p400 = pneg %p181
        $region62: #{featnet_forward.1} parent=51 // pred_check_branch
          %402 = sbr.rel (%p400) target = $region64
        $region63: #{featnet_forward.1} parent=51 // pred_region
          %403 = dma.done %s396, 160
        $region64: #{featnet_forward.1} parent=51 // pred_fallthru
          _
        // Predicated region
        $region65: #{featnet_forward.1} parent=51 // pred_check
          %p404 = pneg %p228
        $region66: #{featnet_forward.1} parent=51 // pred_check_branch
          %406 = sbr.rel (%p404) target = $region68
        $region67: #{featnet_forward.1} parent=51 // pred_region
          %407 = dma.done [#allocation9], 16
        $region68: #{featnet_forward.1} parent=51 // pred_fallthru
          _
        %p408 = pneg %p54
        %p409 = pneg %p51
        %s410 = smul.u32 10, %s31
        %p411 = scmp.lt.s32.totalorder %s410, 19
        %s412 = scalar_select %p411, %s410, 19
        %s413 = smul.addr %s412, 2
        %s414 = scalar_lea.vmem %s1, %s413
        %p415 = pneg %p80
        %p416 = pneg %p77
        %p417 = pneg %p101
        %p418 = pneg %p98
        %s419 = sand.u32 %s116, 1
        %s420 = scalar_lea.sflag [#allocation4], %s419
        %s421 = sand.u32 %s116, 1
        %s422 = smul.addr %s421, 3200
        %s423 = scalar_lea.vmem [#allocation3], %s422
        %p424 = pneg %p129
        %p425 = pneg %p126
        %s426 = sand.u32 %s26, 1
        %s427 = scalar_lea.sflag [#allocation6], %s426
        %s428 = sand.u32 %s142, 1
        %s429 = smul.addr %s428, 10
        %s430 = scalar_lea.vmem [#allocation5], %s429
        %p431 = pneg %p155
        %p432 = pneg %p152
        %s433 = sand.u32 %s26, 1
        %s434 = scalar_lea.sflag [#allocation6], %s433
        %s435 = sand.u32 %s168, 1
        %s436 = smul.addr %s435, 10
        %s437 = scalar_lea.vmem [#allocation7], %s436
        %p438 = pneg %p181
        %p439 = pneg %p178
        %s440 = smul.u32 160, %s30
        %p441 = scmp.lt.s32.totalorder %s440, 319
        %s442 = scalar_select %p441, %s440, 319
        %s443 = smul.addr %s442, 4
        %s444 = scalar_lea.vmem %s6, %s443
        %p445 = pneg %p207
        %p446 = pneg %p204
        %p447 = pneg %p228
        %p448 = pneg %p225
        %p449 = pneg %p254
        %p450 = pneg %p251
        %p451 = scmp.lt.s32.totalorder %s30, 1
        %s452 = scalar_select %p451, %s30, 1
        %s453 = smul.addr %s452, 2
        %s454 = scalar_lea.vmem %s8, %s453
        %s455 = smul.u32 10, %s31
        %p456 = scmp.lt.s32.totalorder %s455, 19
        %s457 = scalar_select %p456, %s455, 19
        %s458 = smul.addr %s457, 2
        %s459 = scalar_lea.vmem %s1, %s458
        %s460 = smul.u32 10, %s31
        %s461 = smul.u32 40, %s31
        %s462 = smul.u32 10, %s30
        %s463 = smul.u32 10, %s30
        %s464 = smul.u32 10, %s30
        %s465 = smul.u32 160, %s30
        %p466 = scmp.lt.s32.totalorder %s465, 319
        %s467 = scalar_select %p466, %s465, 319
        %s468 = smul.addr %s467, 4
        %s469 = scalar_lea.vmem %s6, %s468
        %s470 = smul.u32 160, %s30
        %p471 = scmp.lt.s32.totalorder %s30, 1
        %s472 = scalar_select %p471, %s30, 1
        %s473 = smul.addr %s472, 2
        %s474 = scalar_lea.vmem %s8, %s473
        %p476 = scmp.eq.s32.totalorder %s31, 0
        // Predicated region
        $region69: #{featnet_forward.1} parent=51 // pred_check
          %p477 = pneg %p476
        $region70: #{featnet_forward.1} parent=51 // pred_check_branch
          %479 = sbr.rel (%p477) target = $region72
        $region71: #{featnet_forward.1} parent=51 // pred_region
          %480 = vst [vmem:[#allocation2] sm:$0xff] 0.0
          %481 = vst [vmem:[#allocation2 + $0x8] sm:$0xff] 0.0
          %482 = vst [vmem:[#allocation2 + $0x10] sm:$0xf] 0.0
        $region72: #{featnet_forward.1} parent=51 // pred_fallthru
          _
        %v483 = vld [vmem:[#allocation2] sm:$0xff]
        %v484 = vld [vmem:[#allocation2 + $0x8] sm:$0xff]
        %v485 = vld [vmem:[#allocation2 + $0x10] sm:$0xf]
        %v486 = vld [vmem:[%s459] sm:$0xff]
        %v487 = vld [vmem:[%s459 + $0x8] sm:$0xff]
        %v488 = vld [vmem:[%s459 + $0x10] sm:$0xf]
        %v489 = vld [vmem:[%s381] sm:$0xff]
        %v490 = vld [vmem:[%s381 + $0x8] sm:$0xff]
        %v491 = vld [vmem:[%s381 + $0x10] sm:$0xff]
        %v492 = vld [vmem:[%s381 + $0x18] sm:$0xff]
        %v493 = vld [vmem:[%s381 + $0x20] sm:$0xff]
        %v494 = vld [vmem:[%s381 + $0x28] sm:$0xff]
        %v495 = vld [vmem:[%s381 + $0x30] sm:$0xff]
        %v496 = vld [vmem:[%s381 + $0x38] sm:$0xff]
        %v497 = vld [vmem:[%s381 + $0x40] sm:$0xff]
        %v498 = vld [vmem:[%s381 + $0x48] sm:$0xff]
        %v499 = vld [vmem:[%s381 + $0x50] sm:$0xff]
        %v500 = vld [vmem:[%s381 + $0x58] sm:$0xff]
        %v501 = vld [vmem:[%s381 + $0x60] sm:$0xff]
        %v502 = vld [vmem:[%s381 + $0x68] sm:$0xff]
        %v503 = vld [vmem:[%s381 + $0x70] sm:$0xff]
        %v504 = vld [vmem:[%s381 + $0x78] sm:$0xff]
        %v505 = vld [vmem:[%s381 + $0x80] sm:$0xff]
        %v506 = vld [vmem:[%s381 + $0x88] sm:$0xff]
        %v507 = vld [vmem:[%s381 + $0x90] sm:$0xff]
        %v508 = vld [vmem:[%s381 + $0x98] sm:$0xff]
        %v509 = vld [vmem:[%s381 + $0xa0] sm:$0xff]
        %v510 = vld [vmem:[%s381 + $0xa8] sm:$0xff]
        %v511 = vld [vmem:[%s381 + $0xb0] sm:$0xff]
        %v512 = vld [vmem:[%s381 + $0xb8] sm:$0xff]
        %v513 = vld [vmem:[%s381 + $0xc0] sm:$0xff]
        %v514 = vld [vmem:[%s381 + $0xc8] sm:$0xff]
        %v515 = vld [vmem:[%s381 + $0xd0] sm:$0xff]
        %v516 = vld [vmem:[%s381 + $0xd8] sm:$0xff]
        %v517 = vld [vmem:[%s381 + $0xe0] sm:$0xff]
        %v518 = vld [vmem:[%s381 + $0xe8] sm:$0xff]
        %v519 = vld [vmem:[%s381 + $0xf0] sm:$0xff]
        %v520 = vld [vmem:[%s381 + $0xf8] sm:$0xff]
        %v521 = vld [vmem:[%s381 + $0x100] sm:$0xff]
        %v522 = vld [vmem:[%s381 + $0x108] sm:$0xff]
        %v523 = vld [vmem:[%s381 + $0x110] sm:$0xff]
        %v524 = vld [vmem:[%s381 + $0x118] sm:$0xff]
        %v525 = vld [vmem:[%s381 + $0x120] sm:$0xff]
        %v526 = vld [vmem:[%s381 + $0x128] sm:$0xff]
        %v527 = vld [vmem:[%s381 + $0x130] sm:$0xff]
        %v528 = vld [vmem:[%s381 + $0x138] sm:$0xff]
        %v529 = vld [vmem:[%s381 + $0x140] sm:$0xff]
        %v530 = vld [vmem:[%s381 + $0x148] sm:$0xff]
        %v531 = vld [vmem:[%s381 + $0x150] sm:$0xff]
        %v532 = vld [vmem:[%s381 + $0x158] sm:$0xff]
        %v533 = vld [vmem:[%s381 + $0x160] sm:$0xff]
        %v534 = vld [vmem:[%s381 + $0x168] sm:$0xff]
        %v535 = vld [vmem:[%s381 + $0x170] sm:$0xff]
        %v536 = vld [vmem:[%s381 + $0x178] sm:$0xff]
        %v537 = vld [vmem:[%s381 + $0x180] sm:$0xff]
        %v538 = vld [vmem:[%s381 + $0x188] sm:$0xff]
        %v539 = vld [vmem:[%s381 + $0x190] sm:$0xff]
        %v540 = vld [vmem:[%s381 + $0x198] sm:$0xff]
        %v541 = vld [vmem:[%s381 + $0x1a0] sm:$0xff]
        %v542 = vld [vmem:[%s381 + $0x1a8] sm:$0xff]
        %v543 = vld [vmem:[%s381 + $0x1b0] sm:$0xff]
        %v544 = vld [vmem:[%s381 + $0x1b8] sm:$0xff]
        %v545 = vld [vmem:[%s381 + $0x1c0] sm:$0xff]
        %v546 = vld [vmem:[%s381 + $0x1c8] sm:$0xff]
        %v547 = vld [vmem:[%s381 + $0x1d0] sm:$0xff]
        %v548 = vld [vmem:[%s381 + $0x1d8] sm:$0xff]
        %v549 = vld [vmem:[%s381 + $0x1e0] sm:$0xff]
        %v550 = vld [vmem:[%s381 + $0x1e8] sm:$0xff]
        %v551 = vld [vmem:[%s381 + $0x1f0] sm:$0xff]
        %v552 = vld [vmem:[%s381 + $0x1f8] sm:$0xff]
        %v553 = vld [vmem:[%s381 + $0x200] sm:$0xff]
        %v554 = vld [vmem:[%s381 + $0x208] sm:$0xff]
        %v555 = vld [vmem:[%s381 + $0x210] sm:$0xff]
        %v556 = vld [vmem:[%s381 + $0x218] sm:$0xff]
        %v557 = vld [vmem:[%s381 + $0x220] sm:$0xff]
        %v558 = vld [vmem:[%s381 + $0x228] sm:$0xff]
        %v559 = vld [vmem:[%s381 + $0x230] sm:$0xff]
        %v560 = vld [vmem:[%s381 + $0x238] sm:$0xff]
        %v561 = vld [vmem:[%s381 + $0x240] sm:$0xff]
        %v562 = vld [vmem:[%s381 + $0x248] sm:$0xff]
        %v563 = vld [vmem:[%s381 + $0x250] sm:$0xff]
        %v564 = vld [vmem:[%s381 + $0x258] sm:$0xff]
        %v565 = vld [vmem:[%s381 + $0x260] sm:$0xff]
        %v566 = vld [vmem:[%s381 + $0x268] sm:$0xff]
        %v567 = vld [vmem:[%s381 + $0x270] sm:$0xff]
        %v568 = vld [vmem:[%s381 + $0x278] sm:$0xff]
        %v569 = vld [vmem:[%s381 + $0x280] sm:$0xff]
        %v570 = vld [vmem:[%s381 + $0x288] sm:$0xff]
        %v571 = vld [vmem:[%s381 + $0x290] sm:$0xff]
        %v572 = vld [vmem:[%s381 + $0x298] sm:$0xff]
        %v573 = vld [vmem:[%s381 + $0x2a0] sm:$0xff]
        %v574 = vld [vmem:[%s381 + $0x2a8] sm:$0xff]
        %v575 = vld [vmem:[%s381 + $0x2b0] sm:$0xff]
        %v576 = vld [vmem:[%s381 + $0x2b8] sm:$0xff]
        %v577 = vld [vmem:[%s381 + $0x2c0] sm:$0xff]
        %v578 = vld [vmem:[%s381 + $0x2c8] sm:$0xff]
        %v579 = vld [vmem:[%s381 + $0x2d0] sm:$0xff]
        %v580 = vld [vmem:[%s381 + $0x2d8] sm:$0xff]
        %v581 = vld [vmem:[%s381 + $0x2e0] sm:$0xff]
        %v582 = vld [vmem:[%s381 + $0x2e8] sm:$0xff]
        %v583 = vld [vmem:[%s381 + $0x2f0] sm:$0xff]
        %v584 = vld [vmem:[%s381 + $0x2f8] sm:$0xff]
        %v585 = vld [vmem:[%s381 + $0x300] sm:$0xff]
        %v586 = vld [vmem:[%s381 + $0x308] sm:$0xff]
        %v587 = vld [vmem:[%s381 + $0x310] sm:$0xff]
        %v588 = vld [vmem:[%s381 + $0x318] sm:$0xff]
        %v589 = vld [vmem:[%s381 + $0x320] sm:$0xff]
        %v590 = vld [vmem:[%s381 + $0x328] sm:$0xff]
        %v591 = vld [vmem:[%s381 + $0x330] sm:$0xff]
        %v592 = vld [vmem:[%s381 + $0x338] sm:$0xff]
        %v593 = vld [vmem:[%s381 + $0x340] sm:$0xff]
        %v594 = vld [vmem:[%s381 + $0x348] sm:$0xff]
        %v595 = vld [vmem:[%s381 + $0x350] sm:$0xff]
        %v596 = vld [vmem:[%s381 + $0x358] sm:$0xff]
        %v597 = vld [vmem:[%s381 + $0x360] sm:$0xff]
        %v598 = vld [vmem:[%s381 + $0x368] sm:$0xff]
        %v599 = vld [vmem:[%s381 + $0x370] sm:$0xff]
        %v600 = vld [vmem:[%s381 + $0x378] sm:$0xff]
        %v601 = vld [vmem:[%s381 + $0x380] sm:$0xff]
        %v602 = vld [vmem:[%s381 + $0x388] sm:$0xff]
        %v603 = vld [vmem:[%s381 + $0x390] sm:$0xff]
        %v604 = vld [vmem:[%s381 + $0x398] sm:$0xff]
        %v605 = vld [vmem:[%s381 + $0x3a0] sm:$0xff]
        %v606 = vld [vmem:[%s381 + $0x3a8] sm:$0xff]
        %v607 = vld [vmem:[%s381 + $0x3b0] sm:$0xff]
        %v608 = vld [vmem:[%s381 + $0x3b8] sm:$0xff]
        %v609 = vld [vmem:[%s381 + $0x3c0] sm:$0xff]
        %v610 = vld [vmem:[%s381 + $0x3c8] sm:$0xff]
        %v611 = vld [vmem:[%s381 + $0x3d0] sm:$0xff]
        %v612 = vld [vmem:[%s381 + $0x3d8] sm:$0xff]
        %v613 = vld [vmem:[%s381 + $0x3e0] sm:$0xff]
        %v614 = vld [vmem:[%s381 + $0x3e8] sm:$0xff]
        %v615 = vld [vmem:[%s381 + $0x3f0] sm:$0xff]
        %v616 = vld [vmem:[%s381 + $0x3f8] sm:$0xff]
        %v617 = vld [vmem:[%s381 + $0x400] sm:$0xff]
        %v618 = vld [vmem:[%s381 + $0x408] sm:$0xff]
        %v619 = vld [vmem:[%s381 + $0x410] sm:$0xff]
        %v620 = vld [vmem:[%s381 + $0x418] sm:$0xff]
        %v621 = vld [vmem:[%s381 + $0x420] sm:$0xff]
        %v622 = vld [vmem:[%s381 + $0x428] sm:$0xff]
        %v623 = vld [vmem:[%s381 + $0x430] sm:$0xff]
        %v624 = vld [vmem:[%s381 + $0x438] sm:$0xff]
        %v625 = vld [vmem:[%s381 + $0x440] sm:$0xff]
        %v626 = vld [vmem:[%s381 + $0x448] sm:$0xff]
        %v627 = vld [vmem:[%s381 + $0x450] sm:$0xff]
        %v628 = vld [vmem:[%s381 + $0x458] sm:$0xff]
        %v629 = vld [vmem:[%s381 + $0x460] sm:$0xff]
        %v630 = vld [vmem:[%s381 + $0x468] sm:$0xff]
        %v631 = vld [vmem:[%s381 + $0x470] sm:$0xff]
        %v632 = vld [vmem:[%s381 + $0x478] sm:$0xff]
        %v633 = vld [vmem:[%s381 + $0x480] sm:$0xff]
        %v634 = vld [vmem:[%s381 + $0x488] sm:$0xff]
        %v635 = vld [vmem:[%s381 + $0x490] sm:$0xff]
        %v636 = vld [vmem:[%s381 + $0x498] sm:$0xff]
        %v637 = vld [vmem:[%s381 + $0x4a0] sm:$0xff]
        %v638 = vld [vmem:[%s381 + $0x4a8] sm:$0xff]
        %v639 = vld [vmem:[%s381 + $0x4b0] sm:$0xff]
        %v640 = vld [vmem:[%s381 + $0x4b8] sm:$0xff]
        %v641 = vld [vmem:[%s381 + $0x4c0] sm:$0xff]
        %v642 = vld [vmem:[%s381 + $0x4c8] sm:$0xff]
        %v643 = vld [vmem:[%s381 + $0x4d0] sm:$0xff]
        %v644 = vld [vmem:[%s381 + $0x4d8] sm:$0xff]
        %v645 = vld [vmem:[%s381 + $0x4e0] sm:$0xff]
        %v646 = vld [vmem:[%s381 + $0x4e8] sm:$0xff]
        %v647 = vld [vmem:[%s381 + $0x4f0] sm:$0xff]
        %v648 = vld [vmem:[%s381 + $0x4f8] sm:$0xff]
        %v649 = vld [vmem:[%s381 + $0x500] sm:$0xff]
        %v650 = vld [vmem:[%s381 + $0x508] sm:$0xff]
        %v651 = vld [vmem:[%s381 + $0x510] sm:$0xff]
        %v652 = vld [vmem:[%s381 + $0x518] sm:$0xff]
        %v653 = vld [vmem:[%s381 + $0x520] sm:$0xff]
        %v654 = vld [vmem:[%s381 + $0x528] sm:$0xff]
        %v655 = vld [vmem:[%s381 + $0x530] sm:$0xff]
        %v656 = vld [vmem:[%s381 + $0x538] sm:$0xff]
        %v657 = vld [vmem:[%s381 + $0x540] sm:$0xff]
        %v658 = vld [vmem:[%s381 + $0x548] sm:$0xff]
        %v659 = vld [vmem:[%s381 + $0x550] sm:$0xff]
        %v660 = vld [vmem:[%s381 + $0x558] sm:$0xff]
        %v661 = vld [vmem:[%s381 + $0x560] sm:$0xff]
        %v662 = vld [vmem:[%s381 + $0x568] sm:$0xff]
        %v663 = vld [vmem:[%s381 + $0x570] sm:$0xff]
        %v664 = vld [vmem:[%s381 + $0x578] sm:$0xff]
        %v665 = vld [vmem:[%s381 + $0x580] sm:$0xff]
        %v666 = vld [vmem:[%s381 + $0x588] sm:$0xff]
        %v667 = vld [vmem:[%s381 + $0x590] sm:$0xff]
        %v668 = vld [vmem:[%s381 + $0x598] sm:$0xff]
        %v669 = vld [vmem:[%s381 + $0x5a0] sm:$0xff]
        %v670 = vld [vmem:[%s381 + $0x5a8] sm:$0xff]
        %v671 = vld [vmem:[%s381 + $0x5b0] sm:$0xff]
        %v672 = vld [vmem:[%s381 + $0x5b8] sm:$0xff]
        %v673 = vld [vmem:[%s381 + $0x5c0] sm:$0xff]
        %v674 = vld [vmem:[%s381 + $0x5c8] sm:$0xff]
        %v675 = vld [vmem:[%s381 + $0x5d0] sm:$0xff]
        %v676 = vld [vmem:[%s381 + $0x5d8] sm:$0xff]
        %v677 = vld [vmem:[%s381 + $0x5e0] sm:$0xff]
        %v678 = vld [vmem:[%s381 + $0x5e8] sm:$0xff]
        %v679 = vld [vmem:[%s381 + $0x5f0] sm:$0xff]
        %v680 = vld [vmem:[%s381 + $0x5f8] sm:$0xff]
        %v681 = vld [vmem:[%s381 + $0x600] sm:$0xff]
        %v682 = vld [vmem:[%s381 + $0x608] sm:$0xff]
        %v683 = vld [vmem:[%s381 + $0x610] sm:$0xff]
        %v684 = vld [vmem:[%s381 + $0x618] sm:$0xff]
        %v685 = vld [vmem:[%s381 + $0x620] sm:$0xff]
        %v686 = vld [vmem:[%s381 + $0x628] sm:$0xff]
        %v687 = vld [vmem:[%s381 + $0x630] sm:$0xff]
        %v688 = vld [vmem:[%s381 + $0x638] sm:$0xff]
        %v689 = vld [vmem:[%s381 + $0x640] sm:$0xff]
        %v690 = vld [vmem:[%s381 + $0x648] sm:$0xff]
        %v691 = vld [vmem:[%s381 + $0x650] sm:$0xff]
        %v692 = vld [vmem:[%s381 + $0x658] sm:$0xff]
        %v693 = vld [vmem:[%s381 + $0x660] sm:$0xff]
        %v694 = vld [vmem:[%s381 + $0x668] sm:$0xff]
        %v695 = vld [vmem:[%s381 + $0x670] sm:$0xff]
        %v696 = vld [vmem:[%s381 + $0x678] sm:$0xff]
        %v697 = vld [vmem:[%s381 + $0x680] sm:$0xff]
        %v698 = vld [vmem:[%s381 + $0x688] sm:$0xff]
        %v699 = vld [vmem:[%s381 + $0x690] sm:$0xff]
        %v700 = vld [vmem:[%s381 + $0x698] sm:$0xff]
        %v701 = vld [vmem:[%s381 + $0x6a0] sm:$0xff]
        %v702 = vld [vmem:[%s381 + $0x6a8] sm:$0xff]
        %v703 = vld [vmem:[%s381 + $0x6b0] sm:$0xff]
        %v704 = vld [vmem:[%s381 + $0x6b8] sm:$0xff]
        %v705 = vld [vmem:[%s381 + $0x6c0] sm:$0xff]
        %v706 = vld [vmem:[%s381 + $0x6c8] sm:$0xff]
        %v707 = vld [vmem:[%s381 + $0x6d0] sm:$0xff]
        %v708 = vld [vmem:[%s381 + $0x6d8] sm:$0xff]
        %v709 = vld [vmem:[%s381 + $0x6e0] sm:$0xff]
        %v710 = vld [vmem:[%s381 + $0x6e8] sm:$0xff]
        %v711 = vld [vmem:[%s381 + $0x6f0] sm:$0xff]
        %v712 = vld [vmem:[%s381 + $0x6f8] sm:$0xff]
        %v713 = vld [vmem:[%s381 + $0x700] sm:$0xff]
        %v714 = vld [vmem:[%s381 + $0x708] sm:$0xff]
        %v715 = vld [vmem:[%s381 + $0x710] sm:$0xff]
        %v716 = vld [vmem:[%s381 + $0x718] sm:$0xff]
        %v717 = vld [vmem:[%s381 + $0x720] sm:$0xff]
        %v718 = vld [vmem:[%s381 + $0x728] sm:$0xff]
        %v719 = vld [vmem:[%s381 + $0x730] sm:$0xff]
        %v720 = vld [vmem:[%s381 + $0x738] sm:$0xff]
        %v721 = vld [vmem:[%s381 + $0x740] sm:$0xff]
        %v722 = vld [vmem:[%s381 + $0x748] sm:$0xff]
        %v723 = vld [vmem:[%s381 + $0x750] sm:$0xff]
        %v724 = vld [vmem:[%s381 + $0x758] sm:$0xff]
        %v725 = vld [vmem:[%s381 + $0x760] sm:$0xff]
        %v726 = vld [vmem:[%s381 + $0x768] sm:$0xff]
        %v727 = vld [vmem:[%s381 + $0x770] sm:$0xff]
        %v728 = vld [vmem:[%s381 + $0x778] sm:$0xff]
        %v729 = vld [vmem:[%s381 + $0x780] sm:$0xff]
        %v730 = vld [vmem:[%s381 + $0x788] sm:$0xff]
        %v731 = vld [vmem:[%s381 + $0x790] sm:$0xff]
        %v732 = vld [vmem:[%s381 + $0x798] sm:$0xff]
        %v733 = vld [vmem:[%s381 + $0x7a0] sm:$0xff]
        %v734 = vld [vmem:[%s381 + $0x7a8] sm:$0xff]
        %v735 = vld [vmem:[%s381 + $0x7b0] sm:$0xff]
        %v736 = vld [vmem:[%s381 + $0x7b8] sm:$0xff]
        %v737 = vld [vmem:[%s381 + $0x7c0] sm:$0xff]
        %v738 = vld [vmem:[%s381 + $0x7c8] sm:$0xff]
        %v739 = vld [vmem:[%s381 + $0x7d0] sm:$0xff]
        %v740 = vld [vmem:[%s381 + $0x7d8] sm:$0xff]
        %v741 = vld [vmem:[%s381 + $0x7e0] sm:$0xff]
        %v742 = vld [vmem:[%s381 + $0x7e8] sm:$0xff]
        %v743 = vld [vmem:[%s381 + $0x7f0] sm:$0xff]
        %v744 = vld [vmem:[%s381 + $0x7f8] sm:$0xff]
        %v745 = vld [vmem:[%s381 + $0x800] sm:$0xff]
        %v746 = vld [vmem:[%s381 + $0x808] sm:$0xff]
        %v747 = vld [vmem:[%s381 + $0x810] sm:$0xff]
        %v748 = vld [vmem:[%s381 + $0x818] sm:$0xff]
        %v749 = vld [vmem:[%s381 + $0x820] sm:$0xff]
        %v750 = vld [vmem:[%s381 + $0x828] sm:$0xff]
        %v751 = vld [vmem:[%s381 + $0x830] sm:$0xff]
        %v752 = vld [vmem:[%s381 + $0x838] sm:$0xff]
        %v753 = vld [vmem:[%s381 + $0x840] sm:$0xff]
        %v754 = vld [vmem:[%s381 + $0x848] sm:$0xff]
        %v755 = vld [vmem:[%s381 + $0x850] sm:$0xff]
        %v756 = vld [vmem:[%s381 + $0x858] sm:$0xff]
        %v757 = vld [vmem:[%s381 + $0x860] sm:$0xff]
        %v758 = vld [vmem:[%s381 + $0x868] sm:$0xff]
        %v759 = vld [vmem:[%s381 + $0x870] sm:$0xff]
        %v760 = vld [vmem:[%s381 + $0x878] sm:$0xff]
        %v761 = vld [vmem:[%s381 + $0x880] sm:$0xff]
        %v762 = vld [vmem:[%s381 + $0x888] sm:$0xff]
        %v763 = vld [vmem:[%s381 + $0x890] sm:$0xff]
        %v764 = vld [vmem:[%s381 + $0x898] sm:$0xff]
        %v765 = vld [vmem:[%s381 + $0x8a0] sm:$0xff]
        %v766 = vld [vmem:[%s381 + $0x8a8] sm:$0xff]
        %v767 = vld [vmem:[%s381 + $0x8b0] sm:$0xff]
        %v768 = vld [vmem:[%s381 + $0x8b8] sm:$0xff]
        %v769 = vld [vmem:[%s381 + $0x8c0] sm:$0xff]
        %v770 = vld [vmem:[%s381 + $0x8c8] sm:$0xff]
        %v771 = vld [vmem:[%s381 + $0x8d0] sm:$0xff]
        %v772 = vld [vmem:[%s381 + $0x8d8] sm:$0xff]
        %v773 = vld [vmem:[%s381 + $0x8e0] sm:$0xff]
        %v774 = vld [vmem:[%s381 + $0x8e8] sm:$0xff]
        %v775 = vld [vmem:[%s381 + $0x8f0] sm:$0xff]
        %v776 = vld [vmem:[%s381 + $0x8f8] sm:$0xff]
        %v777 = vld [vmem:[%s381 + $0x900] sm:$0xff]
        %v778 = vld [vmem:[%s381 + $0x908] sm:$0xff]
        %v779 = vld [vmem:[%s381 + $0x910] sm:$0xff]
        %v780 = vld [vmem:[%s381 + $0x918] sm:$0xff]
        %v781 = vld [vmem:[%s381 + $0x920] sm:$0xff]
        %v782 = vld [vmem:[%s381 + $0x928] sm:$0xff]
        %v783 = vld [vmem:[%s381 + $0x930] sm:$0xff]
        %v784 = vld [vmem:[%s381 + $0x938] sm:$0xff]
        %v785 = vld [vmem:[%s381 + $0x940] sm:$0xff]
        %v786 = vld [vmem:[%s381 + $0x948] sm:$0xff]
        %v787 = vld [vmem:[%s381 + $0x950] sm:$0xff]
        %v788 = vld [vmem:[%s381 + $0x958] sm:$0xff]
        %v789 = vld [vmem:[%s381 + $0x960] sm:$0xff]
        %v790 = vld [vmem:[%s381 + $0x968] sm:$0xff]
        %v791 = vld [vmem:[%s381 + $0x970] sm:$0xff]
        %v792 = vld [vmem:[%s381 + $0x978] sm:$0xff]
        %v793 = vld [vmem:[%s381 + $0x980] sm:$0xff]
        %v794 = vld [vmem:[%s381 + $0x988] sm:$0xff]
        %v795 = vld [vmem:[%s381 + $0x990] sm:$0xff]
        %v796 = vld [vmem:[%s381 + $0x998] sm:$0xff]
        %v797 = vld [vmem:[%s381 + $0x9a0] sm:$0xff]
        %v798 = vld [vmem:[%s381 + $0x9a8] sm:$0xff]
        %v799 = vld [vmem:[%s381 + $0x9b0] sm:$0xff]
        %v800 = vld [vmem:[%s381 + $0x9b8] sm:$0xff]
        %v801 = vld [vmem:[%s381 + $0x9c0] sm:$0xff]
        %v802 = vld [vmem:[%s381 + $0x9c8] sm:$0xff]
        %v803 = vld [vmem:[%s381 + $0x9d0] sm:$0xff]
        %v804 = vld [vmem:[%s381 + $0x9d8] sm:$0xff]
        %v805 = vld [vmem:[%s381 + $0x9e0] sm:$0xff]
        %v806 = vld [vmem:[%s381 + $0x9e8] sm:$0xff]
        %v807 = vld [vmem:[%s381 + $0x9f0] sm:$0xff]
        %v808 = vld [vmem:[%s381 + $0x9f8] sm:$0xff]
        %v809 = vld [vmem:[%s381 + $0xa00] sm:$0xff]
        %v810 = vld [vmem:[%s381 + $0xa08] sm:$0xff]
        %v811 = vld [vmem:[%s381 + $0xa10] sm:$0xff]
        %v812 = vld [vmem:[%s381 + $0xa18] sm:$0xff]
        %v813 = vld [vmem:[%s381 + $0xa20] sm:$0xff]
        %v814 = vld [vmem:[%s381 + $0xa28] sm:$0xff]
        %v815 = vld [vmem:[%s381 + $0xa30] sm:$0xff]
        %v816 = vld [vmem:[%s381 + $0xa38] sm:$0xff]
        %v817 = vld [vmem:[%s381 + $0xa40] sm:$0xff]
        %v818 = vld [vmem:[%s381 + $0xa48] sm:$0xff]
        %v819 = vld [vmem:[%s381 + $0xa50] sm:$0xff]
        %v820 = vld [vmem:[%s381 + $0xa58] sm:$0xff]
        %v821 = vld [vmem:[%s381 + $0xa60] sm:$0xff]
        %v822 = vld [vmem:[%s381 + $0xa68] sm:$0xff]
        %v823 = vld [vmem:[%s381 + $0xa70] sm:$0xff]
        %v824 = vld [vmem:[%s381 + $0xa78] sm:$0xff]
        %v825 = vld [vmem:[%s381 + $0xa80] sm:$0xff]
        %v826 = vld [vmem:[%s381 + $0xa88] sm:$0xff]
        %v827 = vld [vmem:[%s381 + $0xa90] sm:$0xff]
        %v828 = vld [vmem:[%s381 + $0xa98] sm:$0xff]
        %v829 = vld [vmem:[%s381 + $0xaa0] sm:$0xff]
        %v830 = vld [vmem:[%s381 + $0xaa8] sm:$0xff]
        %v831 = vld [vmem:[%s381 + $0xab0] sm:$0xff]
        %v832 = vld [vmem:[%s381 + $0xab8] sm:$0xff]
        %v833 = vld [vmem:[%s381 + $0xac0] sm:$0xff]
        %v834 = vld [vmem:[%s381 + $0xac8] sm:$0xff]
        %v835 = vld [vmem:[%s381 + $0xad0] sm:$0xff]
        %v836 = vld [vmem:[%s381 + $0xad8] sm:$0xff]
        %v837 = vld [vmem:[%s381 + $0xae0] sm:$0xff]
        %v838 = vld [vmem:[%s381 + $0xae8] sm:$0xff]
        %v839 = vld [vmem:[%s381 + $0xaf0] sm:$0xff]
        %v840 = vld [vmem:[%s381 + $0xaf8] sm:$0xff]
        %v841 = vld [vmem:[%s381 + $0xb00] sm:$0xff]
        %v842 = vld [vmem:[%s381 + $0xb08] sm:$0xff]
        %v843 = vld [vmem:[%s381 + $0xb10] sm:$0xff]
        %v844 = vld [vmem:[%s381 + $0xb18] sm:$0xff]
        %v845 = vld [vmem:[%s381 + $0xb20] sm:$0xff]
        %v846 = vld [vmem:[%s381 + $0xb28] sm:$0xff]
        %v847 = vld [vmem:[%s381 + $0xb30] sm:$0xff]
        %v848 = vld [vmem:[%s381 + $0xb38] sm:$0xff]
        %v849 = vld [vmem:[%s381 + $0xb40] sm:$0xff]
        %v850 = vld [vmem:[%s381 + $0xb48] sm:$0xff]
        %v851 = vld [vmem:[%s381 + $0xb50] sm:$0xff]
        %v852 = vld [vmem:[%s381 + $0xb58] sm:$0xff]
        %v853 = vld [vmem:[%s381 + $0xb60] sm:$0xff]
        %v854 = vld [vmem:[%s381 + $0xb68] sm:$0xff]
        %v855 = vld [vmem:[%s381 + $0xb70] sm:$0xff]
        %v856 = vld [vmem:[%s381 + $0xb78] sm:$0xff]
        %v857 = vld [vmem:[%s381 + $0xb80] sm:$0xff]
        %v858 = vld [vmem:[%s381 + $0xb88] sm:$0xff]
        %v859 = vld [vmem:[%s381 + $0xb90] sm:$0xff]
        %v860 = vld [vmem:[%s381 + $0xb98] sm:$0xff]
        %v861 = vld [vmem:[%s381 + $0xba0] sm:$0xff]
        %v862 = vld [vmem:[%s381 + $0xba8] sm:$0xff]
        %v863 = vld [vmem:[%s381 + $0xbb0] sm:$0xff]
        %v864 = vld [vmem:[%s381 + $0xbb8] sm:$0xff]
        %v865 = vld [vmem:[%s381 + $0xbc0] sm:$0xff]
        %v866 = vld [vmem:[%s381 + $0xbc8] sm:$0xff]
        %v867 = vld [vmem:[%s381 + $0xbd0] sm:$0xff]
        %v868 = vld [vmem:[%s381 + $0xbd8] sm:$0xff]
        %v869 = vld [vmem:[%s381 + $0xbe0] sm:$0xff]
        %v870 = vld [vmem:[%s381 + $0xbe8] sm:$0xff]
        %v871 = vld [vmem:[%s381 + $0xbf0] sm:$0xff]
        %v872 = vld [vmem:[%s381 + $0xbf8] sm:$0xff]
        %v873 = vld [vmem:[%s381 + $0xc00] sm:$0xff]
        %v874 = vld [vmem:[%s381 + $0xc08] sm:$0xff]
        %v875 = vld [vmem:[%s381 + $0xc10] sm:$0xff]
        %v876 = vld [vmem:[%s381 + $0xc18] sm:$0xff]
        %v877 = vld [vmem:[%s381 + $0xc20] sm:$0xff]
        %v878 = vld [vmem:[%s381 + $0xc28] sm:$0xff]
        %v879 = vld [vmem:[%s381 + $0xc30] sm:$0xff]
        %v880 = vld [vmem:[%s381 + $0xc38] sm:$0xff]
        %v881 = vld [vmem:[%s381 + $0xc40] sm:$0xff]
        %v882 = vld [vmem:[%s381 + $0xc48] sm:$0xff]
        %v883 = vld [vmem:[%s381 + $0xc50] sm:$0xff]
        %v884 = vld [vmem:[%s381 + $0xc58] sm:$0xff]
        %v885 = vld [vmem:[%s381 + $0xc60] sm:$0xff]
        %v886 = vld [vmem:[%s381 + $0xc68] sm:$0xff]
        %v887 = vld [vmem:[%s381 + $0xc70] sm:$0xff]
        %v888 = vld [vmem:[%s381 + $0xc78] sm:$0xff]
        %v889 = vunpack.c.0.s8 %v489
        %v890 = vunpack.c.0.s8 %v490
        %v891 = vunpack.c.0.s8 %v491
        %v892 = vunpack.c.0.s8 %v492
        %v893 = vunpack.c.0.s8 %v493
        %v894 = vunpack.c.0.s8 %v494
        %v895 = vunpack.c.0.s8 %v495
        %v896 = vunpack.c.0.s8 %v496
        %v897 = vunpack.c.0.s8 %v497
        %v898 = vunpack.c.0.s8 %v498
        %v899 = vunpack.c.1.s8 %v489
        %v900 = vunpack.c.1.s8 %v490
        %v901 = vunpack.c.1.s8 %v491
        %v902 = vunpack.c.1.s8 %v492
        %v903 = vunpack.c.1.s8 %v493
        %v904 = vunpack.c.1.s8 %v494
        %v905 = vunpack.c.1.s8 %v495
        %v906 = vunpack.c.1.s8 %v496
        %v907 = vunpack.c.1.s8 %v497
        %v908 = vunpack.c.1.s8 %v498
        %v909 = vunpack.c.2.s8 %v489
        %v910 = vunpack.c.2.s8 %v490
        %v911 = vunpack.c.2.s8 %v491
        %v912 = vunpack.c.2.s8 %v492
        %v913 = vunpack.c.2.s8 %v493
        %v914 = vunpack.c.2.s8 %v494
        %v915 = vunpack.c.2.s8 %v495
        %v916 = vunpack.c.2.s8 %v496
        %v917 = vunpack.c.2.s8 %v497
        %v918 = vunpack.c.2.s8 %v498
        %v919 = vunpack.c.3.s8 %v489
        %v920 = vunpack.c.3.s8 %v490
        %v921 = vunpack.c.3.s8 %v491
        %v922 = vunpack.c.3.s8 %v492
        %v923 = vunpack.c.3.s8 %v493
        %v924 = vunpack.c.3.s8 %v494
        %v925 = vunpack.c.3.s8 %v495
        %v926 = vunpack.c.3.s8 %v496
        %v927 = vunpack.c.3.s8 %v497
        %v928 = vunpack.c.3.s8 %v498
        %v929 = vunpack.c.0.s8 %v499
        %v930 = vunpack.c.0.s8 %v500
        %v931 = vunpack.c.0.s8 %v501
        %v932 = vunpack.c.0.s8 %v502
        %v933 = vunpack.c.0.s8 %v503
        %v934 = vunpack.c.0.s8 %v504
        %v935 = vunpack.c.0.s8 %v505
        %v936 = vunpack.c.0.s8 %v506
        %v937 = vunpack.c.0.s8 %v507
        %v938 = vunpack.c.0.s8 %v508
        %v939 = vunpack.c.1.s8 %v499
        %v940 = vunpack.c.1.s8 %v500
        %v941 = vunpack.c.1.s8 %v501
        %v942 = vunpack.c.1.s8 %v502
        %v943 = vunpack.c.1.s8 %v503
        %v944 = vunpack.c.1.s8 %v504
        %v945 = vunpack.c.1.s8 %v505
        %v946 = vunpack.c.1.s8 %v506
        %v947 = vunpack.c.1.s8 %v507
        %v948 = vunpack.c.1.s8 %v508
        %v949 = vunpack.c.2.s8 %v499
        %v950 = vunpack.c.2.s8 %v500
        %v951 = vunpack.c.2.s8 %v501
        %v952 = vunpack.c.2.s8 %v502
        %v953 = vunpack.c.2.s8 %v503
        %v954 = vunpack.c.2.s8 %v504
        %v955 = vunpack.c.2.s8 %v505
        %v956 = vunpack.c.2.s8 %v506
        %v957 = vunpack.c.2.s8 %v507
        %v958 = vunpack.c.2.s8 %v508
        %v959 = vunpack.c.3.s8 %v499
        %v960 = vunpack.c.3.s8 %v500
        %v961 = vunpack.c.3.s8 %v501
        %v962 = vunpack.c.3.s8 %v502
        %v963 = vunpack.c.3.s8 %v503
        %v964 = vunpack.c.3.s8 %v504
        %v965 = vunpack.c.3.s8 %v505
        %v966 = vunpack.c.3.s8 %v506
        %v967 = vunpack.c.3.s8 %v507
        %v968 = vunpack.c.3.s8 %v508
        %v969 = vunpack.c.0.s8 %v509
        %v970 = vunpack.c.0.s8 %v510
        %v971 = vunpack.c.0.s8 %v511
        %v972 = vunpack.c.0.s8 %v512
        %v973 = vunpack.c.0.s8 %v513
        %v974 = vunpack.c.0.s8 %v514
        %v975 = vunpack.c.0.s8 %v515
        %v976 = vunpack.c.0.s8 %v516
        %v977 = vunpack.c.0.s8 %v517
        %v978 = vunpack.c.0.s8 %v518
        %v979 = vunpack.c.1.s8 %v509
        %v980 = vunpack.c.1.s8 %v510
        %v981 = vunpack.c.1.s8 %v511
        %v982 = vunpack.c.1.s8 %v512
        %v983 = vunpack.c.1.s8 %v513
        %v984 = vunpack.c.1.s8 %v514
        %v985 = vunpack.c.1.s8 %v515
        %v986 = vunpack.c.1.s8 %v516
        %v987 = vunpack.c.1.s8 %v517
        %v988 = vunpack.c.1.s8 %v518
        %v989 = vunpack.c.2.s8 %v509
        %v990 = vunpack.c.2.s8 %v510
        %v991 = vunpack.c.2.s8 %v511
        %v992 = vunpack.c.2.s8 %v512
        %v993 = vunpack.c.2.s8 %v513
        %v994 = vunpack.c.2.s8 %v514
        %v995 = vunpack.c.2.s8 %v515
        %v996 = vunpack.c.2.s8 %v516
        %v997 = vunpack.c.2.s8 %v517
        %v998 = vunpack.c.2.s8 %v518
        %v999 = vunpack.c.3.s8 %v509
        %v1000 = vunpack.c.3.s8 %v510
        %v1001 = vunpack.c.3.s8 %v511
        %v1002 = vunpack.c.3.s8 %v512
        %v1003 = vunpack.c.3.s8 %v513
        %v1004 = vunpack.c.3.s8 %v514
        %v1005 = vunpack.c.3.s8 %v515
        %v1006 = vunpack.c.3.s8 %v516
        %v1007 = vunpack.c.3.s8 %v517
        %v1008 = vunpack.c.3.s8 %v518
        %v1009 = vunpack.c.0.s8 %v519
        %v1010 = vunpack.c.0.s8 %v520
        %v1011 = vunpack.c.0.s8 %v521
        %v1012 = vunpack.c.0.s8 %v522
        %v1013 = vunpack.c.0.s8 %v523
        %v1014 = vunpack.c.0.s8 %v524
        %v1015 = vunpack.c.0.s8 %v525
        %v1016 = vunpack.c.0.s8 %v526
        %v1017 = vunpack.c.0.s8 %v527
        %v1018 = vunpack.c.0.s8 %v528
        %v1019 = vunpack.c.1.s8 %v519
        %v1020 = vunpack.c.1.s8 %v520
        %v1021 = vunpack.c.1.s8 %v521
        %v1022 = vunpack.c.1.s8 %v522
        %v1023 = vunpack.c.1.s8 %v523
        %v1024 = vunpack.c.1.s8 %v524
        %v1025 = vunpack.c.1.s8 %v525
        %v1026 = vunpack.c.1.s8 %v526
        %v1027 = vunpack.c.1.s8 %v527
        %v1028 = vunpack.c.1.s8 %v528
        %v1029 = vunpack.c.2.s8 %v519
        %v1030 = vunpack.c.2.s8 %v520
        %v1031 = vunpack.c.2.s8 %v521
        %v1032 = vunpack.c.2.s8 %v522
        %v1033 = vunpack.c.2.s8 %v523
        %v1034 = vunpack.c.2.s8 %v524
        %v1035 = vunpack.c.2.s8 %v525
        %v1036 = vunpack.c.2.s8 %v526
        %v1037 = vunpack.c.2.s8 %v527
        %v1038 = vunpack.c.2.s8 %v528
        %v1039 = vunpack.c.3.s8 %v519
        %v1040 = vunpack.c.3.s8 %v520
        %v1041 = vunpack.c.3.s8 %v521
        %v1042 = vunpack.c.3.s8 %v522
        %v1043 = vunpack.c.3.s8 %v523
        %v1044 = vunpack.c.3.s8 %v524
        %v1045 = vunpack.c.3.s8 %v525
        %v1046 = vunpack.c.3.s8 %v526
        %v1047 = vunpack.c.3.s8 %v527
        %v1048 = vunpack.c.3.s8 %v528
        %v1049 = vunpack.c.0.s8 %v529
        %v1050 = vunpack.c.0.s8 %v530
        %v1051 = vunpack.c.0.s8 %v531
        %v1052 = vunpack.c.0.s8 %v532
        %v1053 = vunpack.c.0.s8 %v533
        %v1054 = vunpack.c.0.s8 %v534
        %v1055 = vunpack.c.0.s8 %v535
        %v1056 = vunpack.c.0.s8 %v536
        %v1057 = vunpack.c.0.s8 %v537
        %v1058 = vunpack.c.0.s8 %v538
        %v1059 = vunpack.c.1.s8 %v529
        %v1060 = vunpack.c.1.s8 %v530
        %v1061 = vunpack.c.1.s8 %v531
        %v1062 = vunpack.c.1.s8 %v532
        %v1063 = vunpack.c.1.s8 %v533
        %v1064 = vunpack.c.1.s8 %v534
        %v1065 = vunpack.c.1.s8 %v535
        %v1066 = vunpack.c.1.s8 %v536
        %v1067 = vunpack.c.1.s8 %v537
        %v1068 = vunpack.c.1.s8 %v538
        %v1069 = vunpack.c.2.s8 %v529
        %v1070 = vunpack.c.2.s8 %v530
        %v1071 = vunpack.c.2.s8 %v531
        %v1072 = vunpack.c.2.s8 %v532
        %v1073 = vunpack.c.2.s8 %v533
        %v1074 = vunpack.c.2.s8 %v534
        %v1075 = vunpack.c.2.s8 %v535
        %v1076 = vunpack.c.2.s8 %v536
        %v1077 = vunpack.c.2.s8 %v537
        %v1078 = vunpack.c.2.s8 %v538
        %v1079 = vunpack.c.3.s8 %v529
        %v1080 = vunpack.c.3.s8 %v530
        %v1081 = vunpack.c.3.s8 %v531
        %v1082 = vunpack.c.3.s8 %v532
        %v1083 = vunpack.c.3.s8 %v533
        %v1084 = vunpack.c.3.s8 %v534
        %v1085 = vunpack.c.3.s8 %v535
        %v1086 = vunpack.c.3.s8 %v536
        %v1087 = vunpack.c.3.s8 %v537
        %v1088 = vunpack.c.3.s8 %v538
        %v1089 = vunpack.c.0.s8 %v539
        %v1090 = vunpack.c.0.s8 %v540
        %v1091 = vunpack.c.0.s8 %v541
        %v1092 = vunpack.c.0.s8 %v542
        %v1093 = vunpack.c.0.s8 %v543
        %v1094 = vunpack.c.0.s8 %v544
        %v1095 = vunpack.c.0.s8 %v545
        %v1096 = vunpack.c.0.s8 %v546
        %v1097 = vunpack.c.0.s8 %v547
        %v1098 = vunpack.c.0.s8 %v548
        %v1099 = vunpack.c.1.s8 %v539
        %v1100 = vunpack.c.1.s8 %v540
        %v1101 = vunpack.c.1.s8 %v541
        %v1102 = vunpack.c.1.s8 %v542
        %v1103 = vunpack.c.1.s8 %v543
        %v1104 = vunpack.c.1.s8 %v544
        %v1105 = vunpack.c.1.s8 %v545
        %v1106 = vunpack.c.1.s8 %v546
        %v1107 = vunpack.c.1.s8 %v547
        %v1108 = vunpack.c.1.s8 %v548
        %v1109 = vunpack.c.2.s8 %v539
        %v1110 = vunpack.c.2.s8 %v540
        %v1111 = vunpack.c.2.s8 %v541
        %v1112 = vunpack.c.2.s8 %v542
        %v1113 = vunpack.c.2.s8 %v543
        %v1114 = vunpack.c.2.s8 %v544
        %v1115 = vunpack.c.2.s8 %v545
        %v1116 = vunpack.c.2.s8 %v546
        %v1117 = vunpack.c.2.s8 %v547
        %v1118 = vunpack.c.2.s8 %v548
        %v1119 = vunpack.c.3.s8 %v539
        %v1120 = vunpack.c.3.s8 %v540
        %v1121 = vunpack.c.3.s8 %v541
        %v1122 = vunpack.c.3.s8 %v542
        %v1123 = vunpack.c.3.s8 %v543
        %v1124 = vunpack.c.3.s8 %v544
        %v1125 = vunpack.c.3.s8 %v545
        %v1126 = vunpack.c.3.s8 %v546
        %v1127 = vunpack.c.3.s8 %v547
        %v1128 = vunpack.c.3.s8 %v548
        %v1129 = vunpack.c.0.s8 %v549
        %v1130 = vunpack.c.0.s8 %v550
        %v1131 = vunpack.c.0.s8 %v551
        %v1132 = vunpack.c.0.s8 %v552
        %v1133 = vunpack.c.0.s8 %v553
        %v1134 = vunpack.c.0.s8 %v554
        %v1135 = vunpack.c.0.s8 %v555
        %v1136 = vunpack.c.0.s8 %v556
        %v1137 = vunpack.c.0.s8 %v557
        %v1138 = vunpack.c.0.s8 %v558
        %v1139 = vunpack.c.1.s8 %v549
        %v1140 = vunpack.c.1.s8 %v550
        %v1141 = vunpack.c.1.s8 %v551
        %v1142 = vunpack.c.1.s8 %v552
        %v1143 = vunpack.c.1.s8 %v553
        %v1144 = vunpack.c.1.s8 %v554
        %v1145 = vunpack.c.1.s8 %v555
        %v1146 = vunpack.c.1.s8 %v556
        %v1147 = vunpack.c.1.s8 %v557
        %v1148 = vunpack.c.1.s8 %v558
        %v1149 = vunpack.c.2.s8 %v549
        %v1150 = vunpack.c.2.s8 %v550
        %v1151 = vunpack.c.2.s8 %v551
        %v1152 = vunpack.c.2.s8 %v552
        %v1153 = vunpack.c.2.s8 %v553
        %v1154 = vunpack.c.2.s8 %v554
        %v1155 = vunpack.c.2.s8 %v555
        %v1156 = vunpack.c.2.s8 %v556
        %v1157 = vunpack.c.2.s8 %v557
        %v1158 = vunpack.c.2.s8 %v558
        %v1159 = vunpack.c.3.s8 %v549
        %v1160 = vunpack.c.3.s8 %v550
        %v1161 = vunpack.c.3.s8 %v551
        %v1162 = vunpack.c.3.s8 %v552
        %v1163 = vunpack.c.3.s8 %v553
        %v1164 = vunpack.c.3.s8 %v554
        %v1165 = vunpack.c.3.s8 %v555
        %v1166 = vunpack.c.3.s8 %v556
        %v1167 = vunpack.c.3.s8 %v557
        %v1168 = vunpack.c.3.s8 %v558
        %v1169 = vunpack.c.0.s8 %v559
        %v1170 = vunpack.c.0.s8 %v560
        %v1171 = vunpack.c.0.s8 %v561
        %v1172 = vunpack.c.0.s8 %v562
        %v1173 = vunpack.c.0.s8 %v563
        %v1174 = vunpack.c.0.s8 %v564
        %v1175 = vunpack.c.0.s8 %v565
        %v1176 = vunpack.c.0.s8 %v566
        %v1177 = vunpack.c.0.s8 %v567
        %v1178 = vunpack.c.0.s8 %v568
        %v1179 = vunpack.c.1.s8 %v559
        %v1180 = vunpack.c.1.s8 %v560
        %v1181 = vunpack.c.1.s8 %v561
        %v1182 = vunpack.c.1.s8 %v562
        %v1183 = vunpack.c.1.s8 %v563
        %v1184 = vunpack.c.1.s8 %v564
        %v1185 = vunpack.c.1.s8 %v565
        %v1186 = vunpack.c.1.s8 %v566
        %v1187 = vunpack.c.1.s8 %v567
        %v1188 = vunpack.c.1.s8 %v568
        %v1189 = vunpack.c.2.s8 %v559
        %v1190 = vunpack.c.2.s8 %v560
        %v1191 = vunpack.c.2.s8 %v561
        %v1192 = vunpack.c.2.s8 %v562
        %v1193 = vunpack.c.2.s8 %v563
        %v1194 = vunpack.c.2.s8 %v564
        %v1195 = vunpack.c.2.s8 %v565
        %v1196 = vunpack.c.2.s8 %v566
        %v1197 = vunpack.c.2.s8 %v567
        %v1198 = vunpack.c.2.s8 %v568
        %v1199 = vunpack.c.3.s8 %v559
        %v1200 = vunpack.c.3.s8 %v560
        %v1201 = vunpack.c.3.s8 %v561
        %v1202 = vunpack.c.3.s8 %v562
        %v1203 = vunpack.c.3.s8 %v563
        %v1204 = vunpack.c.3.s8 %v564
        %v1205 = vunpack.c.3.s8 %v565
        %v1206 = vunpack.c.3.s8 %v566
        %v1207 = vunpack.c.3.s8 %v567
        %v1208 = vunpack.c.3.s8 %v568
        %v1209 = vunpack.c.0.s8 %v569
        %v1210 = vunpack.c.0.s8 %v570
        %v1211 = vunpack.c.0.s8 %v571
        %v1212 = vunpack.c.0.s8 %v572
        %v1213 = vunpack.c.0.s8 %v573
        %v1214 = vunpack.c.0.s8 %v574
        %v1215 = vunpack.c.0.s8 %v575
        %v1216 = vunpack.c.0.s8 %v576
        %v1217 = vunpack.c.0.s8 %v577
        %v1218 = vunpack.c.0.s8 %v578
        %v1219 = vunpack.c.1.s8 %v569
        %v1220 = vunpack.c.1.s8 %v570
        %v1221 = vunpack.c.1.s8 %v571
        %v1222 = vunpack.c.1.s8 %v572
        %v1223 = vunpack.c.1.s8 %v573
        %v1224 = vunpack.c.1.s8 %v574
        %v1225 = vunpack.c.1.s8 %v575
        %v1226 = vunpack.c.1.s8 %v576
        %v1227 = vunpack.c.1.s8 %v577
        %v1228 = vunpack.c.1.s8 %v578
        %v1229 = vunpack.c.2.s8 %v569
        %v1230 = vunpack.c.2.s8 %v570
        %v1231 = vunpack.c.2.s8 %v571
        %v1232 = vunpack.c.2.s8 %v572
        %v1233 = vunpack.c.2.s8 %v573
        %v1234 = vunpack.c.2.s8 %v574
        %v1235 = vunpack.c.2.s8 %v575
        %v1236 = vunpack.c.2.s8 %v576
        %v1237 = vunpack.c.2.s8 %v577
        %v1238 = vunpack.c.2.s8 %v578
        %v1239 = vunpack.c.3.s8 %v569
        %v1240 = vunpack.c.3.s8 %v570
        %v1241 = vunpack.c.3.s8 %v571
        %v1242 = vunpack.c.3.s8 %v572
        %v1243 = vunpack.c.3.s8 %v573
        %v1244 = vunpack.c.3.s8 %v574
        %v1245 = vunpack.c.3.s8 %v575
        %v1246 = vunpack.c.3.s8 %v576
        %v1247 = vunpack.c.3.s8 %v577
        %v1248 = vunpack.c.3.s8 %v578
        %v1249 = vunpack.c.0.s8 %v579
        %v1250 = vunpack.c.0.s8 %v580
        %v1251 = vunpack.c.0.s8 %v581
        %v1252 = vunpack.c.0.s8 %v582
        %v1253 = vunpack.c.0.s8 %v583
        %v1254 = vunpack.c.0.s8 %v584
        %v1255 = vunpack.c.0.s8 %v585
        %v1256 = vunpack.c.0.s8 %v586
        %v1257 = vunpack.c.0.s8 %v587
        %v1258 = vunpack.c.0.s8 %v588
        %v1259 = vunpack.c.1.s8 %v579
        %v1260 = vunpack.c.1.s8 %v580
        %v1261 = vunpack.c.1.s8 %v581
        %v1262 = vunpack.c.1.s8 %v582
        %v1263 = vunpack.c.1.s8 %v583
        %v1264 = vunpack.c.1.s8 %v584
        %v1265 = vunpack.c.1.s8 %v585
        %v1266 = vunpack.c.1.s8 %v586
        %v1267 = vunpack.c.1.s8 %v587
        %v1268 = vunpack.c.1.s8 %v588
        %v1269 = vunpack.c.2.s8 %v579
        %v1270 = vunpack.c.2.s8 %v580
        %v1271 = vunpack.c.2.s8 %v581
        %v1272 = vunpack.c.2.s8 %v582
        %v1273 = vunpack.c.2.s8 %v583
        %v1274 = vunpack.c.2.s8 %v584
        %v1275 = vunpack.c.2.s8 %v585
        %v1276 = vunpack.c.2.s8 %v586
        %v1277 = vunpack.c.2.s8 %v587
        %v1278 = vunpack.c.2.s8 %v588
        %v1279 = vunpack.c.3.s8 %v579
        %v1280 = vunpack.c.3.s8 %v580
        %v1281 = vunpack.c.3.s8 %v581
        %v1282 = vunpack.c.3.s8 %v582
        %v1283 = vunpack.c.3.s8 %v583
        %v1284 = vunpack.c.3.s8 %v584
        %v1285 = vunpack.c.3.s8 %v585
        %v1286 = vunpack.c.3.s8 %v586
        %v1287 = vunpack.c.3.s8 %v587
        %v1288 = vunpack.c.3.s8 %v588
        %v1289 = vunpack.c.0.s8 %v589
        %v1290 = vunpack.c.0.s8 %v590
        %v1291 = vunpack.c.0.s8 %v591
        %v1292 = vunpack.c.0.s8 %v592
        %v1293 = vunpack.c.0.s8 %v593
        %v1294 = vunpack.c.0.s8 %v594
        %v1295 = vunpack.c.0.s8 %v595
        %v1296 = vunpack.c.0.s8 %v596
        %v1297 = vunpack.c.0.s8 %v597
        %v1298 = vunpack.c.0.s8 %v598
        %v1299 = vunpack.c.1.s8 %v589
        %v1300 = vunpack.c.1.s8 %v590
        %v1301 = vunpack.c.1.s8 %v591
        %v1302 = vunpack.c.1.s8 %v592
        %v1303 = vunpack.c.1.s8 %v593
        %v1304 = vunpack.c.1.s8 %v594
        %v1305 = vunpack.c.1.s8 %v595
        %v1306 = vunpack.c.1.s8 %v596
        %v1307 = vunpack.c.1.s8 %v597
        %v1308 = vunpack.c.1.s8 %v598
        %v1309 = vunpack.c.2.s8 %v589
        %v1310 = vunpack.c.2.s8 %v590
        %v1311 = vunpack.c.2.s8 %v591
        %v1312 = vunpack.c.2.s8 %v592
        %v1313 = vunpack.c.2.s8 %v593
        %v1314 = vunpack.c.2.s8 %v594
        %v1315 = vunpack.c.2.s8 %v595
        %v1316 = vunpack.c.2.s8 %v596
        %v1317 = vunpack.c.2.s8 %v597
        %v1318 = vunpack.c.2.s8 %v598
        %v1319 = vunpack.c.3.s8 %v589
        %v1320 = vunpack.c.3.s8 %v590
        %v1321 = vunpack.c.3.s8 %v591
        %v1322 = vunpack.c.3.s8 %v592
        %v1323 = vunpack.c.3.s8 %v593
        %v1324 = vunpack.c.3.s8 %v594
        %v1325 = vunpack.c.3.s8 %v595
        %v1326 = vunpack.c.3.s8 %v596
        %v1327 = vunpack.c.3.s8 %v597
        %v1328 = vunpack.c.3.s8 %v598
        %v1329 = vunpack.c.0.s8 %v599
        %v1330 = vunpack.c.0.s8 %v600
        %v1331 = vunpack.c.0.s8 %v601
        %v1332 = vunpack.c.0.s8 %v602
        %v1333 = vunpack.c.0.s8 %v603
        %v1334 = vunpack.c.0.s8 %v604
        %v1335 = vunpack.c.0.s8 %v605
        %v1336 = vunpack.c.0.s8 %v606
        %v1337 = vunpack.c.0.s8 %v607
        %v1338 = vunpack.c.0.s8 %v608
        %v1339 = vunpack.c.1.s8 %v599
        %v1340 = vunpack.c.1.s8 %v600
        %v1341 = vunpack.c.1.s8 %v601
        %v1342 = vunpack.c.1.s8 %v602
        %v1343 = vunpack.c.1.s8 %v603
        %v1344 = vunpack.c.1.s8 %v604
        %v1345 = vunpack.c.1.s8 %v605
        %v1346 = vunpack.c.1.s8 %v606
        %v1347 = vunpack.c.1.s8 %v607
        %v1348 = vunpack.c.1.s8 %v608
        %v1349 = vunpack.c.2.s8 %v599
        %v1350 = vunpack.c.2.s8 %v600
        %v1351 = vunpack.c.2.s8 %v601
        %v1352 = vunpack.c.2.s8 %v602
        %v1353 = vunpack.c.2.s8 %v603
        %v1354 = vunpack.c.2.s8 %v604
        %v1355 = vunpack.c.2.s8 %v605
        %v1356 = vunpack.c.2.s8 %v606
        %v1357 = vunpack.c.2.s8 %v607
        %v1358 = vunpack.c.2.s8 %v608
        %v1359 = vunpack.c.3.s8 %v599
        %v1360 = vunpack.c.3.s8 %v600
        %v1361 = vunpack.c.3.s8 %v601
        %v1362 = vunpack.c.3.s8 %v602
        %v1363 = vunpack.c.3.s8 %v603
        %v1364 = vunpack.c.3.s8 %v604
        %v1365 = vunpack.c.3.s8 %v605
        %v1366 = vunpack.c.3.s8 %v606
        %v1367 = vunpack.c.3.s8 %v607
        %v1368 = vunpack.c.3.s8 %v608
        %v1369 = vunpack.c.0.s8 %v609
        %v1370 = vunpack.c.0.s8 %v610
        %v1371 = vunpack.c.0.s8 %v611
        %v1372 = vunpack.c.0.s8 %v612
        %v1373 = vunpack.c.0.s8 %v613
        %v1374 = vunpack.c.0.s8 %v614
        %v1375 = vunpack.c.0.s8 %v615
        %v1376 = vunpack.c.0.s8 %v616
        %v1377 = vunpack.c.0.s8 %v617
        %v1378 = vunpack.c.0.s8 %v618
        %v1379 = vunpack.c.1.s8 %v609
        %v1380 = vunpack.c.1.s8 %v610
        %v1381 = vunpack.c.1.s8 %v611
        %v1382 = vunpack.c.1.s8 %v612
        %v1383 = vunpack.c.1.s8 %v613
        %v1384 = vunpack.c.1.s8 %v614
        %v1385 = vunpack.c.1.s8 %v615
        %v1386 = vunpack.c.1.s8 %v616
        %v1387 = vunpack.c.1.s8 %v617
        %v1388 = vunpack.c.1.s8 %v618
        %v1389 = vunpack.c.2.s8 %v609
        %v1390 = vunpack.c.2.s8 %v610
        %v1391 = vunpack.c.2.s8 %v611
        %v1392 = vunpack.c.2.s8 %v612
        %v1393 = vunpack.c.2.s8 %v613
        %v1394 = vunpack.c.2.s8 %v614
        %v1395 = vunpack.c.2.s8 %v615
        %v1396 = vunpack.c.2.s8 %v616
        %v1397 = vunpack.c.2.s8 %v617
        %v1398 = vunpack.c.2.s8 %v618
        %v1399 = vunpack.c.3.s8 %v609
        %v1400 = vunpack.c.3.s8 %v610
        %v1401 = vunpack.c.3.s8 %v611
        %v1402 = vunpack.c.3.s8 %v612
        %v1403 = vunpack.c.3.s8 %v613
        %v1404 = vunpack.c.3.s8 %v614
        %v1405 = vunpack.c.3.s8 %v615
        %v1406 = vunpack.c.3.s8 %v616
        %v1407 = vunpack.c.3.s8 %v617
        %v1408 = vunpack.c.3.s8 %v618
        %v1409 = vunpack.c.0.s8 %v619
        %v1410 = vunpack.c.0.s8 %v620
        %v1411 = vunpack.c.0.s8 %v621
        %v1412 = vunpack.c.0.s8 %v622
        %v1413 = vunpack.c.0.s8 %v623
        %v1414 = vunpack.c.0.s8 %v624
        %v1415 = vunpack.c.0.s8 %v625
        %v1416 = vunpack.c.0.s8 %v626
        %v1417 = vunpack.c.0.s8 %v627
        %v1418 = vunpack.c.0.s8 %v628
        %v1419 = vunpack.c.1.s8 %v619
        %v1420 = vunpack.c.1.s8 %v620
        %v1421 = vunpack.c.1.s8 %v621
        %v1422 = vunpack.c.1.s8 %v622
        %v1423 = vunpack.c.1.s8 %v623
        %v1424 = vunpack.c.1.s8 %v624
        %v1425 = vunpack.c.1.s8 %v625
        %v1426 = vunpack.c.1.s8 %v626
        %v1427 = vunpack.c.1.s8 %v627
        %v1428 = vunpack.c.1.s8 %v628
        %v1429 = vunpack.c.2.s8 %v619
        %v1430 = vunpack.c.2.s8 %v620
        %v1431 = vunpack.c.2.s8 %v621
        %v1432 = vunpack.c.2.s8 %v622
        %v1433 = vunpack.c.2.s8 %v623
        %v1434 = vunpack.c.2.s8 %v624
        %v1435 = vunpack.c.2.s8 %v625
        %v1436 = vunpack.c.2.s8 %v626
        %v1437 = vunpack.c.2.s8 %v627
        %v1438 = vunpack.c.2.s8 %v628
        %v1439 = vunpack.c.3.s8 %v619
        %v1440 = vunpack.c.3.s8 %v620
        %v1441 = vunpack.c.3.s8 %v621
        %v1442 = vunpack.c.3.s8 %v622
        %v1443 = vunpack.c.3.s8 %v623
        %v1444 = vunpack.c.3.s8 %v624
        %v1445 = vunpack.c.3.s8 %v625
        %v1446 = vunpack.c.3.s8 %v626
        %v1447 = vunpack.c.3.s8 %v627
        %v1448 = vunpack.c.3.s8 %v628
        %v1449 = vunpack.c.0.s8 %v629
        %v1450 = vunpack.c.0.s8 %v630
        %v1451 = vunpack.c.0.s8 %v631
        %v1452 = vunpack.c.0.s8 %v632
        %v1453 = vunpack.c.0.s8 %v633
        %v1454 = vunpack.c.0.s8 %v634
        %v1455 = vunpack.c.0.s8 %v635
        %v1456 = vunpack.c.0.s8 %v636
        %v1457 = vunpack.c.0.s8 %v637
        %v1458 = vunpack.c.0.s8 %v638
        %v1459 = vunpack.c.1.s8 %v629
        %v1460 = vunpack.c.1.s8 %v630
        %v1461 = vunpack.c.1.s8 %v631
        %v1462 = vunpack.c.1.s8 %v632
        %v1463 = vunpack.c.1.s8 %v633
        %v1464 = vunpack.c.1.s8 %v634
        %v1465 = vunpack.c.1.s8 %v635
        %v1466 = vunpack.c.1.s8 %v636
        %v1467 = vunpack.c.1.s8 %v637
        %v1468 = vunpack.c.1.s8 %v638
        %v1469 = vunpack.c.2.s8 %v629
        %v1470 = vunpack.c.2.s8 %v630
        %v1471 = vunpack.c.2.s8 %v631
        %v1472 = vunpack.c.2.s8 %v632
        %v1473 = vunpack.c.2.s8 %v633
        %v1474 = vunpack.c.2.s8 %v634
        %v1475 = vunpack.c.2.s8 %v635
        %v1476 = vunpack.c.2.s8 %v636
        %v1477 = vunpack.c.2.s8 %v637
        %v1478 = vunpack.c.2.s8 %v638
        %v1479 = vunpack.c.3.s8 %v629
        %v1480 = vunpack.c.3.s8 %v630
        %v1481 = vunpack.c.3.s8 %v631
        %v1482 = vunpack.c.3.s8 %v632
        %v1483 = vunpack.c.3.s8 %v633
        %v1484 = vunpack.c.3.s8 %v634
        %v1485 = vunpack.c.3.s8 %v635
        %v1486 = vunpack.c.3.s8 %v636
        %v1487 = vunpack.c.3.s8 %v637
        %v1488 = vunpack.c.3.s8 %v638
        %v1489 = vunpack.c.0.s8 %v639
        %v1490 = vunpack.c.0.s8 %v640
        %v1491 = vunpack.c.0.s8 %v641
        %v1492 = vunpack.c.0.s8 %v642
        %v1493 = vunpack.c.0.s8 %v643
        %v1494 = vunpack.c.0.s8 %v644
        %v1495 = vunpack.c.0.s8 %v645
        %v1496 = vunpack.c.0.s8 %v646
        %v1497 = vunpack.c.0.s8 %v647
        %v1498 = vunpack.c.0.s8 %v648
        %v1499 = vunpack.c.1.s8 %v639
        %v1500 = vunpack.c.1.s8 %v640
        %v1501 = vunpack.c.1.s8 %v641
        %v1502 = vunpack.c.1.s8 %v642
        %v1503 = vunpack.c.1.s8 %v643
        %v1504 = vunpack.c.1.s8 %v644
        %v1505 = vunpack.c.1.s8 %v645
        %v1506 = vunpack.c.1.s8 %v646
        %v1507 = vunpack.c.1.s8 %v647
        %v1508 = vunpack.c.1.s8 %v648
        %v1509 = vunpack.c.2.s8 %v639
        %v1510 = vunpack.c.2.s8 %v640
        %v1511 = vunpack.c.2.s8 %v641
        %v1512 = vunpack.c.2.s8 %v642
        %v1513 = vunpack.c.2.s8 %v643
        %v1514 = vunpack.c.2.s8 %v644
        %v1515 = vunpack.c.2.s8 %v645
        %v1516 = vunpack.c.2.s8 %v646
        %v1517 = vunpack.c.2.s8 %v647
        %v1518 = vunpack.c.2.s8 %v648
        %v1519 = vunpack.c.3.s8 %v639
        %v1520 = vunpack.c.3.s8 %v640
        %v1521 = vunpack.c.3.s8 %v641
        %v1522 = vunpack.c.3.s8 %v642
        %v1523 = vunpack.c.3.s8 %v643
        %v1524 = vunpack.c.3.s8 %v644
        %v1525 = vunpack.c.3.s8 %v645
        %v1526 = vunpack.c.3.s8 %v646
        %v1527 = vunpack.c.3.s8 %v647
        %v1528 = vunpack.c.3.s8 %v648
        %v1529 = vunpack.c.0.s8 %v649
        %v1530 = vunpack.c.0.s8 %v650
        %v1531 = vunpack.c.0.s8 %v651
        %v1532 = vunpack.c.0.s8 %v652
        %v1533 = vunpack.c.0.s8 %v653
        %v1534 = vunpack.c.0.s8 %v654
        %v1535 = vunpack.c.0.s8 %v655
        %v1536 = vunpack.c.0.s8 %v656
        %v1537 = vunpack.c.0.s8 %v657
        %v1538 = vunpack.c.0.s8 %v658
        %v1539 = vunpack.c.1.s8 %v649
        %v1540 = vunpack.c.1.s8 %v650
        %v1541 = vunpack.c.1.s8 %v651
        %v1542 = vunpack.c.1.s8 %v652
        %v1543 = vunpack.c.1.s8 %v653
        %v1544 = vunpack.c.1.s8 %v654
        %v1545 = vunpack.c.1.s8 %v655
        %v1546 = vunpack.c.1.s8 %v656
        %v1547 = vunpack.c.1.s8 %v657
        %v1548 = vunpack.c.1.s8 %v658
        %v1549 = vunpack.c.2.s8 %v649
        %v1550 = vunpack.c.2.s8 %v650
        %v1551 = vunpack.c.2.s8 %v651
        %v1552 = vunpack.c.2.s8 %v652
        %v1553 = vunpack.c.2.s8 %v653
        %v1554 = vunpack.c.2.s8 %v654
        %v1555 = vunpack.c.2.s8 %v655
        %v1556 = vunpack.c.2.s8 %v656
        %v1557 = vunpack.c.2.s8 %v657
        %v1558 = vunpack.c.2.s8 %v658
        %v1559 = vunpack.c.3.s8 %v649
        %v1560 = vunpack.c.3.s8 %v650
        %v1561 = vunpack.c.3.s8 %v651
        %v1562 = vunpack.c.3.s8 %v652
        %v1563 = vunpack.c.3.s8 %v653
        %v1564 = vunpack.c.3.s8 %v654
        %v1565 = vunpack.c.3.s8 %v655
        %v1566 = vunpack.c.3.s8 %v656
        %v1567 = vunpack.c.3.s8 %v657
        %v1568 = vunpack.c.3.s8 %v658
        %v1569 = vunpack.c.0.s8 %v659
        %v1570 = vunpack.c.0.s8 %v660
        %v1571 = vunpack.c.0.s8 %v661
        %v1572 = vunpack.c.0.s8 %v662
        %v1573 = vunpack.c.0.s8 %v663
        %v1574 = vunpack.c.0.s8 %v664
        %v1575 = vunpack.c.0.s8 %v665
        %v1576 = vunpack.c.0.s8 %v666
        %v1577 = vunpack.c.0.s8 %v667
        %v1578 = vunpack.c.0.s8 %v668
        %v1579 = vunpack.c.1.s8 %v659
        %v1580 = vunpack.c.1.s8 %v660
        %v1581 = vunpack.c.1.s8 %v661
        %v1582 = vunpack.c.1.s8 %v662
        %v1583 = vunpack.c.1.s8 %v663
        %v1584 = vunpack.c.1.s8 %v664
        %v1585 = vunpack.c.1.s8 %v665
        %v1586 = vunpack.c.1.s8 %v666
        %v1587 = vunpack.c.1.s8 %v667
        %v1588 = vunpack.c.1.s8 %v668
        %v1589 = vunpack.c.2.s8 %v659
        %v1590 = vunpack.c.2.s8 %v660
        %v1591 = vunpack.c.2.s8 %v661
        %v1592 = vunpack.c.2.s8 %v662
        %v1593 = vunpack.c.2.s8 %v663
        %v1594 = vunpack.c.2.s8 %v664
        %v1595 = vunpack.c.2.s8 %v665
        %v1596 = vunpack.c.2.s8 %v666
        %v1597 = vunpack.c.2.s8 %v667
        %v1598 = vunpack.c.2.s8 %v668
        %v1599 = vunpack.c.3.s8 %v659
        %v1600 = vunpack.c.3.s8 %v660
        %v1601 = vunpack.c.3.s8 %v661
        %v1602 = vunpack.c.3.s8 %v662
        %v1603 = vunpack.c.3.s8 %v663
        %v1604 = vunpack.c.3.s8 %v664
        %v1605 = vunpack.c.3.s8 %v665
        %v1606 = vunpack.c.3.s8 %v666
        %v1607 = vunpack.c.3.s8 %v667
        %v1608 = vunpack.c.3.s8 %v668
        %v1609 = vunpack.c.0.s8 %v669
        %v1610 = vunpack.c.0.s8 %v670
        %v1611 = vunpack.c.0.s8 %v671
        %v1612 = vunpack.c.0.s8 %v672
        %v1613 = vunpack.c.0.s8 %v673
        %v1614 = vunpack.c.0.s8 %v674
        %v1615 = vunpack.c.0.s8 %v675
        %v1616 = vunpack.c.0.s8 %v676
        %v1617 = vunpack.c.0.s8 %v677
        %v1618 = vunpack.c.0.s8 %v678
        %v1619 = vunpack.c.1.s8 %v669
        %v1620 = vunpack.c.1.s8 %v670
        %v1621 = vunpack.c.1.s8 %v671
        %v1622 = vunpack.c.1.s8 %v672
        %v1623 = vunpack.c.1.s8 %v673
        %v1624 = vunpack.c.1.s8 %v674
        %v1625 = vunpack.c.1.s8 %v675
        %v1626 = vunpack.c.1.s8 %v676
        %v1627 = vunpack.c.1.s8 %v677
        %v1628 = vunpack.c.1.s8 %v678
        %v1629 = vunpack.c.2.s8 %v669
        %v1630 = vunpack.c.2.s8 %v670
        %v1631 = vunpack.c.2.s8 %v671
        %v1632 = vunpack.c.2.s8 %v672
        %v1633 = vunpack.c.2.s8 %v673
        %v1634 = vunpack.c.2.s8 %v674
        %v1635 = vunpack.c.2.s8 %v675
        %v1636 = vunpack.c.2.s8 %v676
        %v1637 = vunpack.c.2.s8 %v677
        %v1638 = vunpack.c.2.s8 %v678
        %v1639 = vunpack.c.3.s8 %v669
        %v1640 = vunpack.c.3.s8 %v670
        %v1641 = vunpack.c.3.s8 %v671
        %v1642 = vunpack.c.3.s8 %v672
        %v1643 = vunpack.c.3.s8 %v673
        %v1644 = vunpack.c.3.s8 %v674
        %v1645 = vunpack.c.3.s8 %v675
        %v1646 = vunpack.c.3.s8 %v676
        %v1647 = vunpack.c.3.s8 %v677
        %v1648 = vunpack.c.3.s8 %v678
        %v1649 = vunpack.c.0.s8 %v679
        %v1650 = vunpack.c.0.s8 %v680
        %v1651 = vunpack.c.0.s8 %v681
        %v1652 = vunpack.c.0.s8 %v682
        %v1653 = vunpack.c.0.s8 %v683
        %v1654 = vunpack.c.0.s8 %v684
        %v1655 = vunpack.c.0.s8 %v685
        %v1656 = vunpack.c.0.s8 %v686
        %v1657 = vunpack.c.0.s8 %v687
        %v1658 = vunpack.c.0.s8 %v688
        %v1659 = vunpack.c.1.s8 %v679
        %v1660 = vunpack.c.1.s8 %v680
        %v1661 = vunpack.c.1.s8 %v681
        %v1662 = vunpack.c.1.s8 %v682
        %v1663 = vunpack.c.1.s8 %v683
        %v1664 = vunpack.c.1.s8 %v684
        %v1665 = vunpack.c.1.s8 %v685
        %v1666 = vunpack.c.1.s8 %v686
        %v1667 = vunpack.c.1.s8 %v687
        %v1668 = vunpack.c.1.s8 %v688
        %v1669 = vunpack.c.2.s8 %v679
        %v1670 = vunpack.c.2.s8 %v680
        %v1671 = vunpack.c.2.s8 %v681
        %v1672 = vunpack.c.2.s8 %v682
        %v1673 = vunpack.c.2.s8 %v683
        %v1674 = vunpack.c.2.s8 %v684
        %v1675 = vunpack.c.2.s8 %v685
        %v1676 = vunpack.c.2.s8 %v686
        %v1677 = vunpack.c.2.s8 %v687
        %v1678 = vunpack.c.2.s8 %v688
        %v1679 = vunpack.c.3.s8 %v679
        %v1680 = vunpack.c.3.s8 %v680
        %v1681 = vunpack.c.3.s8 %v681
        %v1682 = vunpack.c.3.s8 %v682
        %v1683 = vunpack.c.3.s8 %v683
        %v1684 = vunpack.c.3.s8 %v684
        %v1685 = vunpack.c.3.s8 %v685
        %v1686 = vunpack.c.3.s8 %v686
        %v1687 = vunpack.c.3.s8 %v687
        %v1688 = vunpack.c.3.s8 %v688
        %v1689 = vunpack.c.0.s8 %v689
        %v1690 = vunpack.c.0.s8 %v690
        %v1691 = vunpack.c.0.s8 %v691
        %v1692 = vunpack.c.0.s8 %v692
        %v1693 = vunpack.c.0.s8 %v693
        %v1694 = vunpack.c.0.s8 %v694
        %v1695 = vunpack.c.0.s8 %v695
        %v1696 = vunpack.c.0.s8 %v696
        %v1697 = vunpack.c.0.s8 %v697
        %v1698 = vunpack.c.0.s8 %v698
        %v1699 = vunpack.c.1.s8 %v689
        %v1700 = vunpack.c.1.s8 %v690
        %v1701 = vunpack.c.1.s8 %v691
        %v1702 = vunpack.c.1.s8 %v692
        %v1703 = vunpack.c.1.s8 %v693
        %v1704 = vunpack.c.1.s8 %v694
        %v1705 = vunpack.c.1.s8 %v695
        %v1706 = vunpack.c.1.s8 %v696
        %v1707 = vunpack.c.1.s8 %v697
        %v1708 = vunpack.c.1.s8 %v698
        %v1709 = vunpack.c.2.s8 %v689
        %v1710 = vunpack.c.2.s8 %v690
        %v1711 = vunpack.c.2.s8 %v691
        %v1712 = vunpack.c.2.s8 %v692
        %v1713 = vunpack.c.2.s8 %v693
        %v1714 = vunpack.c.2.s8 %v694
        %v1715 = vunpack.c.2.s8 %v695
        %v1716 = vunpack.c.2.s8 %v696
        %v1717 = vunpack.c.2.s8 %v697
        %v1718 = vunpack.c.2.s8 %v698
        %v1719 = vunpack.c.3.s8 %v689
        %v1720 = vunpack.c.3.s8 %v690
        %v1721 = vunpack.c.3.s8 %v691
        %v1722 = vunpack.c.3.s8 %v692
        %v1723 = vunpack.c.3.s8 %v693
        %v1724 = vunpack.c.3.s8 %v694
        %v1725 = vunpack.c.3.s8 %v695
        %v1726 = vunpack.c.3.s8 %v696
        %v1727 = vunpack.c.3.s8 %v697
        %v1728 = vunpack.c.3.s8 %v698
        %v1729 = vunpack.c.0.s8 %v699
        %v1730 = vunpack.c.0.s8 %v700
        %v1731 = vunpack.c.0.s8 %v701
        %v1732 = vunpack.c.0.s8 %v702
        %v1733 = vunpack.c.0.s8 %v703
        %v1734 = vunpack.c.0.s8 %v704
        %v1735 = vunpack.c.0.s8 %v705
        %v1736 = vunpack.c.0.s8 %v706
        %v1737 = vunpack.c.0.s8 %v707
        %v1738 = vunpack.c.0.s8 %v708
        %v1739 = vunpack.c.1.s8 %v699
        %v1740 = vunpack.c.1.s8 %v700
        %v1741 = vunpack.c.1.s8 %v701
        %v1742 = vunpack.c.1.s8 %v702
        %v1743 = vunpack.c.1.s8 %v703
        %v1744 = vunpack.c.1.s8 %v704
        %v1745 = vunpack.c.1.s8 %v705
        %v1746 = vunpack.c.1.s8 %v706
        %v1747 = vunpack.c.1.s8 %v707
        %v1748 = vunpack.c.1.s8 %v708
        %v1749 = vunpack.c.2.s8 %v699
        %v1750 = vunpack.c.2.s8 %v700
        %v1751 = vunpack.c.2.s8 %v701
        %v1752 = vunpack.c.2.s8 %v702
        %v1753 = vunpack.c.2.s8 %v703
        %v1754 = vunpack.c.2.s8 %v704
        %v1755 = vunpack.c.2.s8 %v705
        %v1756 = vunpack.c.2.s8 %v706
        %v1757 = vunpack.c.2.s8 %v707
        %v1758 = vunpack.c.2.s8 %v708
        %v1759 = vunpack.c.3.s8 %v699
        %v1760 = vunpack.c.3.s8 %v700
        %v1761 = vunpack.c.3.s8 %v701
        %v1762 = vunpack.c.3.s8 %v702
        %v1763 = vunpack.c.3.s8 %v703
        %v1764 = vunpack.c.3.s8 %v704
        %v1765 = vunpack.c.3.s8 %v705
        %v1766 = vunpack.c.3.s8 %v706
        %v1767 = vunpack.c.3.s8 %v707
        %v1768 = vunpack.c.3.s8 %v708
        %v1769 = vunpack.c.0.s8 %v709
        %v1770 = vunpack.c.0.s8 %v710
        %v1771 = vunpack.c.0.s8 %v711
        %v1772 = vunpack.c.0.s8 %v712
        %v1773 = vunpack.c.0.s8 %v713
        %v1774 = vunpack.c.0.s8 %v714
        %v1775 = vunpack.c.0.s8 %v715
        %v1776 = vunpack.c.0.s8 %v716
        %v1777 = vunpack.c.0.s8 %v717
        %v1778 = vunpack.c.0.s8 %v718
        %v1779 = vunpack.c.1.s8 %v709
        %v1780 = vunpack.c.1.s8 %v710
        %v1781 = vunpack.c.1.s8 %v711
        %v1782 = vunpack.c.1.s8 %v712
        %v1783 = vunpack.c.1.s8 %v713
        %v1784 = vunpack.c.1.s8 %v714
        %v1785 = vunpack.c.1.s8 %v715
        %v1786 = vunpack.c.1.s8 %v716
        %v1787 = vunpack.c.1.s8 %v717
        %v1788 = vunpack.c.1.s8 %v718
        %v1789 = vunpack.c.2.s8 %v709
        %v1790 = vunpack.c.2.s8 %v710
        %v1791 = vunpack.c.2.s8 %v711
        %v1792 = vunpack.c.2.s8 %v712
        %v1793 = vunpack.c.2.s8 %v713
        %v1794 = vunpack.c.2.s8 %v714
        %v1795 = vunpack.c.2.s8 %v715
        %v1796 = vunpack.c.2.s8 %v716
        %v1797 = vunpack.c.2.s8 %v717
        %v1798 = vunpack.c.2.s8 %v718
        %v1799 = vunpack.c.3.s8 %v709
        %v1800 = vunpack.c.3.s8 %v710
        %v1801 = vunpack.c.3.s8 %v711
        %v1802 = vunpack.c.3.s8 %v712
        %v1803 = vunpack.c.3.s8 %v713
        %v1804 = vunpack.c.3.s8 %v714
        %v1805 = vunpack.c.3.s8 %v715
        %v1806 = vunpack.c.3.s8 %v716
        %v1807 = vunpack.c.3.s8 %v717
        %v1808 = vunpack.c.3.s8 %v718
        %v1809 = vunpack.c.0.s8 %v719
        %v1810 = vunpack.c.0.s8 %v720
        %v1811 = vunpack.c.0.s8 %v721
        %v1812 = vunpack.c.0.s8 %v722
        %v1813 = vunpack.c.0.s8 %v723
        %v1814 = vunpack.c.0.s8 %v724
        %v1815 = vunpack.c.0.s8 %v725
        %v1816 = vunpack.c.0.s8 %v726
        %v1817 = vunpack.c.0.s8 %v727
        %v1818 = vunpack.c.0.s8 %v728
        %v1819 = vunpack.c.1.s8 %v719
        %v1820 = vunpack.c.1.s8 %v720
        %v1821 = vunpack.c.1.s8 %v721
        %v1822 = vunpack.c.1.s8 %v722
        %v1823 = vunpack.c.1.s8 %v723
        %v1824 = vunpack.c.1.s8 %v724
        %v1825 = vunpack.c.1.s8 %v725
        %v1826 = vunpack.c.1.s8 %v726
        %v1827 = vunpack.c.1.s8 %v727
        %v1828 = vunpack.c.1.s8 %v728
        %v1829 = vunpack.c.2.s8 %v719
        %v1830 = vunpack.c.2.s8 %v720
        %v1831 = vunpack.c.2.s8 %v721
        %v1832 = vunpack.c.2.s8 %v722
        %v1833 = vunpack.c.2.s8 %v723
        %v1834 = vunpack.c.2.s8 %v724
        %v1835 = vunpack.c.2.s8 %v725
        %v1836 = vunpack.c.2.s8 %v726
        %v1837 = vunpack.c.2.s8 %v727
        %v1838 = vunpack.c.2.s8 %v728
        %v1839 = vunpack.c.3.s8 %v719
        %v1840 = vunpack.c.3.s8 %v720
        %v1841 = vunpack.c.3.s8 %v721
        %v1842 = vunpack.c.3.s8 %v722
        %v1843 = vunpack.c.3.s8 %v723
        %v1844 = vunpack.c.3.s8 %v724
        %v1845 = vunpack.c.3.s8 %v725
        %v1846 = vunpack.c.3.s8 %v726
        %v1847 = vunpack.c.3.s8 %v727
        %v1848 = vunpack.c.3.s8 %v728
        %v1849 = vunpack.c.0.s8 %v729
        %v1850 = vunpack.c.0.s8 %v730
        %v1851 = vunpack.c.0.s8 %v731
        %v1852 = vunpack.c.0.s8 %v732
        %v1853 = vunpack.c.0.s8 %v733
        %v1854 = vunpack.c.0.s8 %v734
        %v1855 = vunpack.c.0.s8 %v735
        %v1856 = vunpack.c.0.s8 %v736
        %v1857 = vunpack.c.0.s8 %v737
        %v1858 = vunpack.c.0.s8 %v738
        %v1859 = vunpack.c.1.s8 %v729
        %v1860 = vunpack.c.1.s8 %v730
        %v1861 = vunpack.c.1.s8 %v731
        %v1862 = vunpack.c.1.s8 %v732
        %v1863 = vunpack.c.1.s8 %v733
        %v1864 = vunpack.c.1.s8 %v734
        %v1865 = vunpack.c.1.s8 %v735
        %v1866 = vunpack.c.1.s8 %v736
        %v1867 = vunpack.c.1.s8 %v737
        %v1868 = vunpack.c.1.s8 %v738
        %v1869 = vunpack.c.2.s8 %v729
        %v1870 = vunpack.c.2.s8 %v730
        %v1871 = vunpack.c.2.s8 %v731
        %v1872 = vunpack.c.2.s8 %v732
        %v1873 = vunpack.c.2.s8 %v733
        %v1874 = vunpack.c.2.s8 %v734
        %v1875 = vunpack.c.2.s8 %v735
        %v1876 = vunpack.c.2.s8 %v736
        %v1877 = vunpack.c.2.s8 %v737
        %v1878 = vunpack.c.2.s8 %v738
        %v1879 = vunpack.c.3.s8 %v729
        %v1880 = vunpack.c.3.s8 %v730
        %v1881 = vunpack.c.3.s8 %v731
        %v1882 = vunpack.c.3.s8 %v732
        %v1883 = vunpack.c.3.s8 %v733
        %v1884 = vunpack.c.3.s8 %v734
        %v1885 = vunpack.c.3.s8 %v735
        %v1886 = vunpack.c.3.s8 %v736
        %v1887 = vunpack.c.3.s8 %v737
        %v1888 = vunpack.c.3.s8 %v738
        %v1889 = vunpack.c.0.s8 %v739
        %v1890 = vunpack.c.0.s8 %v740
        %v1891 = vunpack.c.0.s8 %v741
        %v1892 = vunpack.c.0.s8 %v742
        %v1893 = vunpack.c.0.s8 %v743
        %v1894 = vunpack.c.0.s8 %v744
        %v1895 = vunpack.c.0.s8 %v745
        %v1896 = vunpack.c.0.s8 %v746
        %v1897 = vunpack.c.0.s8 %v747
        %v1898 = vunpack.c.0.s8 %v748
        %v1899 = vunpack.c.1.s8 %v739
        %v1900 = vunpack.c.1.s8 %v740
        %v1901 = vunpack.c.1.s8 %v741
        %v1902 = vunpack.c.1.s8 %v742
        %v1903 = vunpack.c.1.s8 %v743
        %v1904 = vunpack.c.1.s8 %v744
        %v1905 = vunpack.c.1.s8 %v745
        %v1906 = vunpack.c.1.s8 %v746
        %v1907 = vunpack.c.1.s8 %v747
        %v1908 = vunpack.c.1.s8 %v748
        %v1909 = vunpack.c.2.s8 %v739
        %v1910 = vunpack.c.2.s8 %v740
        %v1911 = vunpack.c.2.s8 %v741
        %v1912 = vunpack.c.2.s8 %v742
        %v1913 = vunpack.c.2.s8 %v743
        %v1914 = vunpack.c.2.s8 %v744
        %v1915 = vunpack.c.2.s8 %v745
        %v1916 = vunpack.c.2.s8 %v746
        %v1917 = vunpack.c.2.s8 %v747
        %v1918 = vunpack.c.2.s8 %v748
        %v1919 = vunpack.c.3.s8 %v739
        %v1920 = vunpack.c.3.s8 %v740
        %v1921 = vunpack.c.3.s8 %v741
        %v1922 = vunpack.c.3.s8 %v742
        %v1923 = vunpack.c.3.s8 %v743
        %v1924 = vunpack.c.3.s8 %v744
        %v1925 = vunpack.c.3.s8 %v745
        %v1926 = vunpack.c.3.s8 %v746
        %v1927 = vunpack.c.3.s8 %v747
        %v1928 = vunpack.c.3.s8 %v748
        %v1929 = vunpack.c.0.s8 %v749
        %v1930 = vunpack.c.0.s8 %v750
        %v1931 = vunpack.c.0.s8 %v751
        %v1932 = vunpack.c.0.s8 %v752
        %v1933 = vunpack.c.0.s8 %v753
        %v1934 = vunpack.c.0.s8 %v754
        %v1935 = vunpack.c.0.s8 %v755
        %v1936 = vunpack.c.0.s8 %v756
        %v1937 = vunpack.c.0.s8 %v757
        %v1938 = vunpack.c.0.s8 %v758
        %v1939 = vunpack.c.1.s8 %v749
        %v1940 = vunpack.c.1.s8 %v750
        %v1941 = vunpack.c.1.s8 %v751
        %v1942 = vunpack.c.1.s8 %v752
        %v1943 = vunpack.c.1.s8 %v753
        %v1944 = vunpack.c.1.s8 %v754
        %v1945 = vunpack.c.1.s8 %v755
        %v1946 = vunpack.c.1.s8 %v756
        %v1947 = vunpack.c.1.s8 %v757
        %v1948 = vunpack.c.1.s8 %v758
        %v1949 = vunpack.c.2.s8 %v749
        %v1950 = vunpack.c.2.s8 %v750
        %v1951 = vunpack.c.2.s8 %v751
        %v1952 = vunpack.c.2.s8 %v752
        %v1953 = vunpack.c.2.s8 %v753
        %v1954 = vunpack.c.2.s8 %v754
        %v1955 = vunpack.c.2.s8 %v755
        %v1956 = vunpack.c.2.s8 %v756
        %v1957 = vunpack.c.2.s8 %v757
        %v1958 = vunpack.c.2.s8 %v758
        %v1959 = vunpack.c.3.s8 %v749
        %v1960 = vunpack.c.3.s8 %v750
        %v1961 = vunpack.c.3.s8 %v751
        %v1962 = vunpack.c.3.s8 %v752
        %v1963 = vunpack.c.3.s8 %v753
        %v1964 = vunpack.c.3.s8 %v754
        %v1965 = vunpack.c.3.s8 %v755
        %v1966 = vunpack.c.3.s8 %v756
        %v1967 = vunpack.c.3.s8 %v757
        %v1968 = vunpack.c.3.s8 %v758
        %v1969 = vunpack.c.0.s8 %v759
        %v1970 = vunpack.c.0.s8 %v760
        %v1971 = vunpack.c.0.s8 %v761
        %v1972 = vunpack.c.0.s8 %v762
        %v1973 = vunpack.c.0.s8 %v763
        %v1974 = vunpack.c.0.s8 %v764
        %v1975 = vunpack.c.0.s8 %v765
        %v1976 = vunpack.c.0.s8 %v766
        %v1977 = vunpack.c.0.s8 %v767
        %v1978 = vunpack.c.0.s8 %v768
        %v1979 = vunpack.c.1.s8 %v759
        %v1980 = vunpack.c.1.s8 %v760
        %v1981 = vunpack.c.1.s8 %v761
        %v1982 = vunpack.c.1.s8 %v762
        %v1983 = vunpack.c.1.s8 %v763
        %v1984 = vunpack.c.1.s8 %v764
        %v1985 = vunpack.c.1.s8 %v765
        %v1986 = vunpack.c.1.s8 %v766
        %v1987 = vunpack.c.1.s8 %v767
        %v1988 = vunpack.c.1.s8 %v768
        %v1989 = vunpack.c.2.s8 %v759
        %v1990 = vunpack.c.2.s8 %v760
        %v1991 = vunpack.c.2.s8 %v761
        %v1992 = vunpack.c.2.s8 %v762
        %v1993 = vunpack.c.2.s8 %v763
        %v1994 = vunpack.c.2.s8 %v764
        %v1995 = vunpack.c.2.s8 %v765
        %v1996 = vunpack.c.2.s8 %v766
        %v1997 = vunpack.c.2.s8 %v767
        %v1998 = vunpack.c.2.s8 %v768
        %v1999 = vunpack.c.3.s8 %v759
        %v2000 = vunpack.c.3.s8 %v760
        %v2001 = vunpack.c.3.s8 %v761
        %v2002 = vunpack.c.3.s8 %v762
        %v2003 = vunpack.c.3.s8 %v763
        %v2004 = vunpack.c.3.s8 %v764
        %v2005 = vunpack.c.3.s8 %v765
        %v2006 = vunpack.c.3.s8 %v766
        %v2007 = vunpack.c.3.s8 %v767
        %v2008 = vunpack.c.3.s8 %v768
        %v2009 = vunpack.c.0.s8 %v769
        %v2010 = vunpack.c.0.s8 %v770
        %v2011 = vunpack.c.0.s8 %v771
        %v2012 = vunpack.c.0.s8 %v772
        %v2013 = vunpack.c.0.s8 %v773
        %v2014 = vunpack.c.0.s8 %v774
        %v2015 = vunpack.c.0.s8 %v775
        %v2016 = vunpack.c.0.s8 %v776
        %v2017 = vunpack.c.0.s8 %v777
        %v2018 = vunpack.c.0.s8 %v778
        %v2019 = vunpack.c.1.s8 %v769
        %v2020 = vunpack.c.1.s8 %v770
        %v2021 = vunpack.c.1.s8 %v771
        %v2022 = vunpack.c.1.s8 %v772
        %v2023 = vunpack.c.1.s8 %v773
        %v2024 = vunpack.c.1.s8 %v774
        %v2025 = vunpack.c.1.s8 %v775
        %v2026 = vunpack.c.1.s8 %v776
        %v2027 = vunpack.c.1.s8 %v777
        %v2028 = vunpack.c.1.s8 %v778
        %v2029 = vunpack.c.2.s8 %v769
        %v2030 = vunpack.c.2.s8 %v770
        %v2031 = vunpack.c.2.s8 %v771
        %v2032 = vunpack.c.2.s8 %v772
        %v2033 = vunpack.c.2.s8 %v773
        %v2034 = vunpack.c.2.s8 %v774
        %v2035 = vunpack.c.2.s8 %v775
        %v2036 = vunpack.c.2.s8 %v776
        %v2037 = vunpack.c.2.s8 %v777
        %v2038 = vunpack.c.2.s8 %v778
        %v2039 = vunpack.c.3.s8 %v769
        %v2040 = vunpack.c.3.s8 %v770
        %v2041 = vunpack.c.3.s8 %v771
        %v2042 = vunpack.c.3.s8 %v772
        %v2043 = vunpack.c.3.s8 %v773
        %v2044 = vunpack.c.3.s8 %v774
        %v2045 = vunpack.c.3.s8 %v775
        %v2046 = vunpack.c.3.s8 %v776
        %v2047 = vunpack.c.3.s8 %v777
        %v2048 = vunpack.c.3.s8 %v778
        %v2049 = vunpack.c.0.s8 %v779
        %v2050 = vunpack.c.0.s8 %v780
        %v2051 = vunpack.c.0.s8 %v781
        %v2052 = vunpack.c.0.s8 %v782
        %v2053 = vunpack.c.0.s8 %v783
        %v2054 = vunpack.c.0.s8 %v784
        %v2055 = vunpack.c.0.s8 %v785
        %v2056 = vunpack.c.0.s8 %v786
        %v2057 = vunpack.c.0.s8 %v787
        %v2058 = vunpack.c.0.s8 %v788
        %v2059 = vunpack.c.1.s8 %v779
        %v2060 = vunpack.c.1.s8 %v780
        %v2061 = vunpack.c.1.s8 %v781
        %v2062 = vunpack.c.1.s8 %v782
        %v2063 = vunpack.c.1.s8 %v783
        %v2064 = vunpack.c.1.s8 %v784
        %v2065 = vunpack.c.1.s8 %v785
        %v2066 = vunpack.c.1.s8 %v786
        %v2067 = vunpack.c.1.s8 %v787
        %v2068 = vunpack.c.1.s8 %v788
        %v2069 = vunpack.c.2.s8 %v779
        %v2070 = vunpack.c.2.s8 %v780
        %v2071 = vunpack.c.2.s8 %v781
        %v2072 = vunpack.c.2.s8 %v782
        %v2073 = vunpack.c.2.s8 %v783
        %v2074 = vunpack.c.2.s8 %v784
        %v2075 = vunpack.c.2.s8 %v785
        %v2076 = vunpack.c.2.s8 %v786
        %v2077 = vunpack.c.2.s8 %v787
        %v2078 = vunpack.c.2.s8 %v788
        %v2079 = vunpack.c.3.s8 %v779
        %v2080 = vunpack.c.3.s8 %v780
        %v2081 = vunpack.c.3.s8 %v781
        %v2082 = vunpack.c.3.s8 %v782
        %v2083 = vunpack.c.3.s8 %v783
        %v2084 = vunpack.c.3.s8 %v784
        %v2085 = vunpack.c.3.s8 %v785
        %v2086 = vunpack.c.3.s8 %v786
        %v2087 = vunpack.c.3.s8 %v787
        %v2088 = vunpack.c.3.s8 %v788
        %v2089 = vunpack.c.0.s8 %v789
        %v2090 = vunpack.c.0.s8 %v790
        %v2091 = vunpack.c.0.s8 %v791
        %v2092 = vunpack.c.0.s8 %v792
        %v2093 = vunpack.c.0.s8 %v793
        %v2094 = vunpack.c.0.s8 %v794
        %v2095 = vunpack.c.0.s8 %v795
        %v2096 = vunpack.c.0.s8 %v796
        %v2097 = vunpack.c.0.s8 %v797
        %v2098 = vunpack.c.0.s8 %v798
        %v2099 = vunpack.c.1.s8 %v789
        %v2100 = vunpack.c.1.s8 %v790
        %v2101 = vunpack.c.1.s8 %v791
        %v2102 = vunpack.c.1.s8 %v792
        %v2103 = vunpack.c.1.s8 %v793
        %v2104 = vunpack.c.1.s8 %v794
        %v2105 = vunpack.c.1.s8 %v795
        %v2106 = vunpack.c.1.s8 %v796
        %v2107 = vunpack.c.1.s8 %v797
        %v2108 = vunpack.c.1.s8 %v798
        %v2109 = vunpack.c.2.s8 %v789
        %v2110 = vunpack.c.2.s8 %v790
        %v2111 = vunpack.c.2.s8 %v791
        %v2112 = vunpack.c.2.s8 %v792
        %v2113 = vunpack.c.2.s8 %v793
        %v2114 = vunpack.c.2.s8 %v794
        %v2115 = vunpack.c.2.s8 %v795
        %v2116 = vunpack.c.2.s8 %v796
        %v2117 = vunpack.c.2.s8 %v797
        %v2118 = vunpack.c.2.s8 %v798
        %v2119 = vunpack.c.3.s8 %v789
        %v2120 = vunpack.c.3.s8 %v790
        %v2121 = vunpack.c.3.s8 %v791
        %v2122 = vunpack.c.3.s8 %v792
        %v2123 = vunpack.c.3.s8 %v793
        %v2124 = vunpack.c.3.s8 %v794
        %v2125 = vunpack.c.3.s8 %v795
        %v2126 = vunpack.c.3.s8 %v796
        %v2127 = vunpack.c.3.s8 %v797
        %v2128 = vunpack.c.3.s8 %v798
        %v2129 = vunpack.c.0.s8 %v799
        %v2130 = vunpack.c.0.s8 %v800
        %v2131 = vunpack.c.0.s8 %v801
        %v2132 = vunpack.c.0.s8 %v802
        %v2133 = vunpack.c.0.s8 %v803
        %v2134 = vunpack.c.0.s8 %v804
        %v2135 = vunpack.c.0.s8 %v805
        %v2136 = vunpack.c.0.s8 %v806
        %v2137 = vunpack.c.0.s8 %v807
        %v2138 = vunpack.c.0.s8 %v808
        %v2139 = vunpack.c.1.s8 %v799
        %v2140 = vunpack.c.1.s8 %v800
        %v2141 = vunpack.c.1.s8 %v801
        %v2142 = vunpack.c.1.s8 %v802
        %v2143 = vunpack.c.1.s8 %v803
        %v2144 = vunpack.c.1.s8 %v804
        %v2145 = vunpack.c.1.s8 %v805
        %v2146 = vunpack.c.1.s8 %v806
        %v2147 = vunpack.c.1.s8 %v807
        %v2148 = vunpack.c.1.s8 %v808
        %v2149 = vunpack.c.2.s8 %v799
        %v2150 = vunpack.c.2.s8 %v800
        %v2151 = vunpack.c.2.s8 %v801
        %v2152 = vunpack.c.2.s8 %v802
        %v2153 = vunpack.c.2.s8 %v803
        %v2154 = vunpack.c.2.s8 %v804
        %v2155 = vunpack.c.2.s8 %v805
        %v2156 = vunpack.c.2.s8 %v806
        %v2157 = vunpack.c.2.s8 %v807
        %v2158 = vunpack.c.2.s8 %v808
        %v2159 = vunpack.c.3.s8 %v799
        %v2160 = vunpack.c.3.s8 %v800
        %v2161 = vunpack.c.3.s8 %v801
        %v2162 = vunpack.c.3.s8 %v802
        %v2163 = vunpack.c.3.s8 %v803
        %v2164 = vunpack.c.3.s8 %v804
        %v2165 = vunpack.c.3.s8 %v805
        %v2166 = vunpack.c.3.s8 %v806
        %v2167 = vunpack.c.3.s8 %v807
        %v2168 = vunpack.c.3.s8 %v808
        %v2169 = vunpack.c.0.s8 %v809
        %v2170 = vunpack.c.0.s8 %v810
        %v2171 = vunpack.c.0.s8 %v811
        %v2172 = vunpack.c.0.s8 %v812
        %v2173 = vunpack.c.0.s8 %v813
        %v2174 = vunpack.c.0.s8 %v814
        %v2175 = vunpack.c.0.s8 %v815
        %v2176 = vunpack.c.0.s8 %v816
        %v2177 = vunpack.c.0.s8 %v817
        %v2178 = vunpack.c.0.s8 %v818
        %v2179 = vunpack.c.1.s8 %v809
        %v2180 = vunpack.c.1.s8 %v810
        %v2181 = vunpack.c.1.s8 %v811
        %v2182 = vunpack.c.1.s8 %v812
        %v2183 = vunpack.c.1.s8 %v813
        %v2184 = vunpack.c.1.s8 %v814
        %v2185 = vunpack.c.1.s8 %v815
        %v2186 = vunpack.c.1.s8 %v816
        %v2187 = vunpack.c.1.s8 %v817
        %v2188 = vunpack.c.1.s8 %v818
        %v2189 = vunpack.c.2.s8 %v809
        %v2190 = vunpack.c.2.s8 %v810
        %v2191 = vunpack.c.2.s8 %v811
        %v2192 = vunpack.c.2.s8 %v812
        %v2193 = vunpack.c.2.s8 %v813
        %v2194 = vunpack.c.2.s8 %v814
        %v2195 = vunpack.c.2.s8 %v815
        %v2196 = vunpack.c.2.s8 %v816
        %v2197 = vunpack.c.2.s8 %v817
        %v2198 = vunpack.c.2.s8 %v818
        %v2199 = vunpack.c.3.s8 %v809
        %v2200 = vunpack.c.3.s8 %v810
        %v2201 = vunpack.c.3.s8 %v811
        %v2202 = vunpack.c.3.s8 %v812
        %v2203 = vunpack.c.3.s8 %v813
        %v2204 = vunpack.c.3.s8 %v814
        %v2205 = vunpack.c.3.s8 %v815
        %v2206 = vunpack.c.3.s8 %v816
        %v2207 = vunpack.c.3.s8 %v817
        %v2208 = vunpack.c.3.s8 %v818
        %v2209 = vunpack.c.0.s8 %v819
        %v2210 = vunpack.c.0.s8 %v820
        %v2211 = vunpack.c.0.s8 %v821
        %v2212 = vunpack.c.0.s8 %v822
        %v2213 = vunpack.c.0.s8 %v823
        %v2214 = vunpack.c.0.s8 %v824
        %v2215 = vunpack.c.0.s8 %v825
        %v2216 = vunpack.c.0.s8 %v826
        %v2217 = vunpack.c.0.s8 %v827
        %v2218 = vunpack.c.0.s8 %v828
        %v2219 = vunpack.c.1.s8 %v819
        %v2220 = vunpack.c.1.s8 %v820
        %v2221 = vunpack.c.1.s8 %v821
        %v2222 = vunpack.c.1.s8 %v822
        %v2223 = vunpack.c.1.s8 %v823
        %v2224 = vunpack.c.1.s8 %v824
        %v2225 = vunpack.c.1.s8 %v825
        %v2226 = vunpack.c.1.s8 %v826
        %v2227 = vunpack.c.1.s8 %v827
        %v2228 = vunpack.c.1.s8 %v828
        %v2229 = vunpack.c.2.s8 %v819
        %v2230 = vunpack.c.2.s8 %v820
        %v2231 = vunpack.c.2.s8 %v821
        %v2232 = vunpack.c.2.s8 %v822
        %v2233 = vunpack.c.2.s8 %v823
        %v2234 = vunpack.c.2.s8 %v824
        %v2235 = vunpack.c.2.s8 %v825
        %v2236 = vunpack.c.2.s8 %v826
        %v2237 = vunpack.c.2.s8 %v827
        %v2238 = vunpack.c.2.s8 %v828
        %v2239 = vunpack.c.3.s8 %v819
        %v2240 = vunpack.c.3.s8 %v820
        %v2241 = vunpack.c.3.s8 %v821
        %v2242 = vunpack.c.3.s8 %v822
        %v2243 = vunpack.c.3.s8 %v823
        %v2244 = vunpack.c.3.s8 %v824
        %v2245 = vunpack.c.3.s8 %v825
        %v2246 = vunpack.c.3.s8 %v826
        %v2247 = vunpack.c.3.s8 %v827
        %v2248 = vunpack.c.3.s8 %v828
        %v2249 = vunpack.c.0.s8 %v829
        %v2250 = vunpack.c.0.s8 %v830
        %v2251 = vunpack.c.0.s8 %v831
        %v2252 = vunpack.c.0.s8 %v832
        %v2253 = vunpack.c.0.s8 %v833
        %v2254 = vunpack.c.0.s8 %v834
        %v2255 = vunpack.c.0.s8 %v835
        %v2256 = vunpack.c.0.s8 %v836
        %v2257 = vunpack.c.0.s8 %v837
        %v2258 = vunpack.c.0.s8 %v838
        %v2259 = vunpack.c.1.s8 %v829
        %v2260 = vunpack.c.1.s8 %v830
        %v2261 = vunpack.c.1.s8 %v831
        %v2262 = vunpack.c.1.s8 %v832
        %v2263 = vunpack.c.1.s8 %v833
        %v2264 = vunpack.c.1.s8 %v834
        %v2265 = vunpack.c.1.s8 %v835
        %v2266 = vunpack.c.1.s8 %v836
        %v2267 = vunpack.c.1.s8 %v837
        %v2268 = vunpack.c.1.s8 %v838
        %v2269 = vunpack.c.2.s8 %v829
        %v2270 = vunpack.c.2.s8 %v830
        %v2271 = vunpack.c.2.s8 %v831
        %v2272 = vunpack.c.2.s8 %v832
        %v2273 = vunpack.c.2.s8 %v833
        %v2274 = vunpack.c.2.s8 %v834
        %v2275 = vunpack.c.2.s8 %v835
        %v2276 = vunpack.c.2.s8 %v836
        %v2277 = vunpack.c.2.s8 %v837
        %v2278 = vunpack.c.2.s8 %v838
        %v2279 = vunpack.c.3.s8 %v829
        %v2280 = vunpack.c.3.s8 %v830
        %v2281 = vunpack.c.3.s8 %v831
        %v2282 = vunpack.c.3.s8 %v832
        %v2283 = vunpack.c.3.s8 %v833
        %v2284 = vunpack.c.3.s8 %v834
        %v2285 = vunpack.c.3.s8 %v835
        %v2286 = vunpack.c.3.s8 %v836
        %v2287 = vunpack.c.3.s8 %v837
        %v2288 = vunpack.c.3.s8 %v838
        %v2289 = vunpack.c.0.s8 %v839
        %v2290 = vunpack.c.0.s8 %v840
        %v2291 = vunpack.c.0.s8 %v841
        %v2292 = vunpack.c.0.s8 %v842
        %v2293 = vunpack.c.0.s8 %v843
        %v2294 = vunpack.c.0.s8 %v844
        %v2295 = vunpack.c.0.s8 %v845
        %v2296 = vunpack.c.0.s8 %v846
        %v2297 = vunpack.c.0.s8 %v847
        %v2298 = vunpack.c.0.s8 %v848
        %v2299 = vunpack.c.1.s8 %v839
        %v2300 = vunpack.c.1.s8 %v840
        %v2301 = vunpack.c.1.s8 %v841
        %v2302 = vunpack.c.1.s8 %v842
        %v2303 = vunpack.c.1.s8 %v843
        %v2304 = vunpack.c.1.s8 %v844
        %v2305 = vunpack.c.1.s8 %v845
        %v2306 = vunpack.c.1.s8 %v846
        %v2307 = vunpack.c.1.s8 %v847
        %v2308 = vunpack.c.1.s8 %v848
        %v2309 = vunpack.c.2.s8 %v839
        %v2310 = vunpack.c.2.s8 %v840
        %v2311 = vunpack.c.2.s8 %v841
        %v2312 = vunpack.c.2.s8 %v842
        %v2313 = vunpack.c.2.s8 %v843
        %v2314 = vunpack.c.2.s8 %v844
        %v2315 = vunpack.c.2.s8 %v845
        %v2316 = vunpack.c.2.s8 %v846
        %v2317 = vunpack.c.2.s8 %v847
        %v2318 = vunpack.c.2.s8 %v848
        %v2319 = vunpack.c.3.s8 %v839
        %v2320 = vunpack.c.3.s8 %v840
        %v2321 = vunpack.c.3.s8 %v841
        %v2322 = vunpack.c.3.s8 %v842
        %v2323 = vunpack.c.3.s8 %v843
        %v2324 = vunpack.c.3.s8 %v844
        %v2325 = vunpack.c.3.s8 %v845
        %v2326 = vunpack.c.3.s8 %v846
        %v2327 = vunpack.c.3.s8 %v847
        %v2328 = vunpack.c.3.s8 %v848
        %v2329 = vunpack.c.0.s8 %v849
        %v2330 = vunpack.c.0.s8 %v850
        %v2331 = vunpack.c.0.s8 %v851
        %v2332 = vunpack.c.0.s8 %v852
        %v2333 = vunpack.c.0.s8 %v853
        %v2334 = vunpack.c.0.s8 %v854
        %v2335 = vunpack.c.0.s8 %v855
        %v2336 = vunpack.c.0.s8 %v856
        %v2337 = vunpack.c.0.s8 %v857
        %v2338 = vunpack.c.0.s8 %v858
        %v2339 = vunpack.c.1.s8 %v849
        %v2340 = vunpack.c.1.s8 %v850
        %v2341 = vunpack.c.1.s8 %v851
        %v2342 = vunpack.c.1.s8 %v852
        %v2343 = vunpack.c.1.s8 %v853
        %v2344 = vunpack.c.1.s8 %v854
        %v2345 = vunpack.c.1.s8 %v855
        %v2346 = vunpack.c.1.s8 %v856
        %v2347 = vunpack.c.1.s8 %v857
        %v2348 = vunpack.c.1.s8 %v858
        %v2349 = vunpack.c.2.s8 %v849
        %v2350 = vunpack.c.2.s8 %v850
        %v2351 = vunpack.c.2.s8 %v851
        %v2352 = vunpack.c.2.s8 %v852
        %v2353 = vunpack.c.2.s8 %v853
        %v2354 = vunpack.c.2.s8 %v854
        %v2355 = vunpack.c.2.s8 %v855
        %v2356 = vunpack.c.2.s8 %v856
        %v2357 = vunpack.c.2.s8 %v857
        %v2358 = vunpack.c.2.s8 %v858
        %v2359 = vunpack.c.3.s8 %v849
        %v2360 = vunpack.c.3.s8 %v850
        %v2361 = vunpack.c.3.s8 %v851
        %v2362 = vunpack.c.3.s8 %v852
        %v2363 = vunpack.c.3.s8 %v853
        %v2364 = vunpack.c.3.s8 %v854
        %v2365 = vunpack.c.3.s8 %v855
        %v2366 = vunpack.c.3.s8 %v856
        %v2367 = vunpack.c.3.s8 %v857
        %v2368 = vunpack.c.3.s8 %v858
        %v2369 = vunpack.c.0.s8 %v859
        %v2370 = vunpack.c.0.s8 %v860
        %v2371 = vunpack.c.0.s8 %v861
        %v2372 = vunpack.c.0.s8 %v862
        %v2373 = vunpack.c.0.s8 %v863
        %v2374 = vunpack.c.0.s8 %v864
        %v2375 = vunpack.c.0.s8 %v865
        %v2376 = vunpack.c.0.s8 %v866
        %v2377 = vunpack.c.0.s8 %v867
        %v2378 = vunpack.c.0.s8 %v868
        %v2379 = vunpack.c.1.s8 %v859
        %v2380 = vunpack.c.1.s8 %v860
        %v2381 = vunpack.c.1.s8 %v861
        %v2382 = vunpack.c.1.s8 %v862
        %v2383 = vunpack.c.1.s8 %v863
        %v2384 = vunpack.c.1.s8 %v864
        %v2385 = vunpack.c.1.s8 %v865
        %v2386 = vunpack.c.1.s8 %v866
        %v2387 = vunpack.c.1.s8 %v867
        %v2388 = vunpack.c.1.s8 %v868
        %v2389 = vunpack.c.2.s8 %v859
        %v2390 = vunpack.c.2.s8 %v860
        %v2391 = vunpack.c.2.s8 %v861
        %v2392 = vunpack.c.2.s8 %v862
        %v2393 = vunpack.c.2.s8 %v863
        %v2394 = vunpack.c.2.s8 %v864
        %v2395 = vunpack.c.2.s8 %v865
        %v2396 = vunpack.c.2.s8 %v866
        %v2397 = vunpack.c.2.s8 %v867
        %v2398 = vunpack.c.2.s8 %v868
        %v2399 = vunpack.c.3.s8 %v859
        %v2400 = vunpack.c.3.s8 %v860
        %v2401 = vunpack.c.3.s8 %v861
        %v2402 = vunpack.c.3.s8 %v862
        %v2403 = vunpack.c.3.s8 %v863
        %v2404 = vunpack.c.3.s8 %v864
        %v2405 = vunpack.c.3.s8 %v865
        %v2406 = vunpack.c.3.s8 %v866
        %v2407 = vunpack.c.3.s8 %v867
        %v2408 = vunpack.c.3.s8 %v868
        %v2409 = vunpack.c.0.s8 %v869
        %v2410 = vunpack.c.0.s8 %v870
        %v2411 = vunpack.c.0.s8 %v871
        %v2412 = vunpack.c.0.s8 %v872
        %v2413 = vunpack.c.0.s8 %v873
        %v2414 = vunpack.c.0.s8 %v874
        %v2415 = vunpack.c.0.s8 %v875
        %v2416 = vunpack.c.0.s8 %v876
        %v2417 = vunpack.c.0.s8 %v877
        %v2418 = vunpack.c.0.s8 %v878
        %v2419 = vunpack.c.1.s8 %v869
        %v2420 = vunpack.c.1.s8 %v870
        %v2421 = vunpack.c.1.s8 %v871
        %v2422 = vunpack.c.1.s8 %v872
        %v2423 = vunpack.c.1.s8 %v873
        %v2424 = vunpack.c.1.s8 %v874
        %v2425 = vunpack.c.1.s8 %v875
        %v2426 = vunpack.c.1.s8 %v876
        %v2427 = vunpack.c.1.s8 %v877
        %v2428 = vunpack.c.1.s8 %v878
        %v2429 = vunpack.c.2.s8 %v869
        %v2430 = vunpack.c.2.s8 %v870
        %v2431 = vunpack.c.2.s8 %v871
        %v2432 = vunpack.c.2.s8 %v872
        %v2433 = vunpack.c.2.s8 %v873
        %v2434 = vunpack.c.2.s8 %v874
        %v2435 = vunpack.c.2.s8 %v875
        %v2436 = vunpack.c.2.s8 %v876
        %v2437 = vunpack.c.2.s8 %v877
        %v2438 = vunpack.c.2.s8 %v878
        %v2439 = vunpack.c.3.s8 %v869
        %v2440 = vunpack.c.3.s8 %v870
        %v2441 = vunpack.c.3.s8 %v871
        %v2442 = vunpack.c.3.s8 %v872
        %v2443 = vunpack.c.3.s8 %v873
        %v2444 = vunpack.c.3.s8 %v874
        %v2445 = vunpack.c.3.s8 %v875
        %v2446 = vunpack.c.3.s8 %v876
        %v2447 = vunpack.c.3.s8 %v877
        %v2448 = vunpack.c.3.s8 %v878
        %v2449 = vunpack.c.0.s8 %v879
        %v2450 = vunpack.c.0.s8 %v880
        %v2451 = vunpack.c.0.s8 %v881
        %v2452 = vunpack.c.0.s8 %v882
        %v2453 = vunpack.c.0.s8 %v883
        %v2454 = vunpack.c.0.s8 %v884
        %v2455 = vunpack.c.0.s8 %v885
        %v2456 = vunpack.c.0.s8 %v886
        %v2457 = vunpack.c.0.s8 %v887
        %v2458 = vunpack.c.0.s8 %v888
        %v2459 = vunpack.c.1.s8 %v879
        %v2460 = vunpack.c.1.s8 %v880
        %v2461 = vunpack.c.1.s8 %v881
        %v2462 = vunpack.c.1.s8 %v882
        %v2463 = vunpack.c.1.s8 %v883
        %v2464 = vunpack.c.1.s8 %v884
        %v2465 = vunpack.c.1.s8 %v885
        %v2466 = vunpack.c.1.s8 %v886
        %v2467 = vunpack.c.1.s8 %v887
        %v2468 = vunpack.c.1.s8 %v888
        %v2469 = vunpack.c.2.s8 %v879
        %v2470 = vunpack.c.2.s8 %v880
        %v2471 = vunpack.c.2.s8 %v881
        %v2472 = vunpack.c.2.s8 %v882
        %v2473 = vunpack.c.2.s8 %v883
        %v2474 = vunpack.c.2.s8 %v884
        %v2475 = vunpack.c.2.s8 %v885
        %v2476 = vunpack.c.2.s8 %v886
        %v2477 = vunpack.c.2.s8 %v887
        %v2478 = vunpack.c.2.s8 %v888
        %v2479 = vunpack.c.3.s8 %v879
        %v2480 = vunpack.c.3.s8 %v880
        %v2481 = vunpack.c.3.s8 %v881
        %v2482 = vunpack.c.3.s8 %v882
        %v2483 = vunpack.c.3.s8 %v883
        %v2484 = vunpack.c.3.s8 %v884
        %v2485 = vunpack.c.3.s8 %v885
        %v2486 = vunpack.c.3.s8 %v886
        %v2487 = vunpack.c.3.s8 %v887
        %v2488 = vunpack.c.3.s8 %v888
        %v2489 = vcvt.s32.f32 %v889
        %v2490 = vcvt.s32.f32 %v890
        %v2491 = vcvt.s32.f32 %v891
        %v2492 = vcvt.s32.f32 %v892
        %v2493 = vcvt.s32.f32 %v893
        %v2494 = vcvt.s32.f32 %v894
        %v2495 = vcvt.s32.f32 %v895
        %v2496 = vcvt.s32.f32 %v896
        %v2497 = vcvt.s32.f32 %v897
        %v2498 = vcvt.s32.f32 %v898
        %v2499 = vcvt.s32.f32 %v899
        %v2500 = vcvt.s32.f32 %v900
        %v2501 = vcvt.s32.f32 %v901
        %v2502 = vcvt.s32.f32 %v902
        %v2503 = vcvt.s32.f32 %v903
        %v2504 = vcvt.s32.f32 %v904
        %v2505 = vcvt.s32.f32 %v905
        %v2506 = vcvt.s32.f32 %v906
        %v2507 = vcvt.s32.f32 %v907
        %v2508 = vcvt.s32.f32 %v908
        %v2509 = vcvt.s32.f32 %v909
        %v2510 = vcvt.s32.f32 %v910
        %v2511 = vcvt.s32.f32 %v911
        %v2512 = vcvt.s32.f32 %v912
        %v2513 = vcvt.s32.f32 %v913
        %v2514 = vcvt.s32.f32 %v914
        %v2515 = vcvt.s32.f32 %v915
        %v2516 = vcvt.s32.f32 %v916
        %v2517 = vcvt.s32.f32 %v917
        %v2518 = vcvt.s32.f32 %v918
        %v2519 = vcvt.s32.f32 %v919
        %v2520 = vcvt.s32.f32 %v920
        %v2521 = vcvt.s32.f32 %v921
        %v2522 = vcvt.s32.f32 %v922
        %v2523 = vcvt.s32.f32 %v923
        %v2524 = vcvt.s32.f32 %v924
        %v2525 = vcvt.s32.f32 %v925
        %v2526 = vcvt.s32.f32 %v926
        %v2527 = vcvt.s32.f32 %v927
        %v2528 = vcvt.s32.f32 %v928
        %v2529 = vcvt.s32.f32 %v929
        %v2530 = vcvt.s32.f32 %v930
        %v2531 = vcvt.s32.f32 %v931
        %v2532 = vcvt.s32.f32 %v932
        %v2533 = vcvt.s32.f32 %v933
        %v2534 = vcvt.s32.f32 %v934
        %v2535 = vcvt.s32.f32 %v935
        %v2536 = vcvt.s32.f32 %v936
        %v2537 = vcvt.s32.f32 %v937
        %v2538 = vcvt.s32.f32 %v938
        %v2539 = vcvt.s32.f32 %v939
        %v2540 = vcvt.s32.f32 %v940
        %v2541 = vcvt.s32.f32 %v941
        %v2542 = vcvt.s32.f32 %v942
        %v2543 = vcvt.s32.f32 %v943
        %v2544 = vcvt.s32.f32 %v944
        %v2545 = vcvt.s32.f32 %v945
        %v2546 = vcvt.s32.f32 %v946
        %v2547 = vcvt.s32.f32 %v947
        %v2548 = vcvt.s32.f32 %v948
        %v2549 = vcvt.s32.f32 %v949
        %v2550 = vcvt.s32.f32 %v950
        %v2551 = vcvt.s32.f32 %v951
        %v2552 = vcvt.s32.f32 %v952
        %v2553 = vcvt.s32.f32 %v953
        %v2554 = vcvt.s32.f32 %v954
        %v2555 = vcvt.s32.f32 %v955
        %v2556 = vcvt.s32.f32 %v956
        %v2557 = vcvt.s32.f32 %v957
        %v2558 = vcvt.s32.f32 %v958
        %v2559 = vcvt.s32.f32 %v959
        %v2560 = vcvt.s32.f32 %v960
        %v2561 = vcvt.s32.f32 %v961
        %v2562 = vcvt.s32.f32 %v962
        %v2563 = vcvt.s32.f32 %v963
        %v2564 = vcvt.s32.f32 %v964
        %v2565 = vcvt.s32.f32 %v965
        %v2566 = vcvt.s32.f32 %v966
        %v2567 = vcvt.s32.f32 %v967
        %v2568 = vcvt.s32.f32 %v968
        %v2569 = vcvt.s32.f32 %v969
        %v2570 = vcvt.s32.f32 %v970
        %v2571 = vcvt.s32.f32 %v971
        %v2572 = vcvt.s32.f32 %v972
        %v2573 = vcvt.s32.f32 %v973
        %v2574 = vcvt.s32.f32 %v974
        %v2575 = vcvt.s32.f32 %v975
        %v2576 = vcvt.s32.f32 %v976
        %v2577 = vcvt.s32.f32 %v977
        %v2578 = vcvt.s32.f32 %v978
        %v2579 = vcvt.s32.f32 %v979
        %v2580 = vcvt.s32.f32 %v980
        %v2581 = vcvt.s32.f32 %v981
        %v2582 = vcvt.s32.f32 %v982
        %v2583 = vcvt.s32.f32 %v983
        %v2584 = vcvt.s32.f32 %v984
        %v2585 = vcvt.s32.f32 %v985
        %v2586 = vcvt.s32.f32 %v986
        %v2587 = vcvt.s32.f32 %v987
        %v2588 = vcvt.s32.f32 %v988
        %v2589 = vcvt.s32.f32 %v989
        %v2590 = vcvt.s32.f32 %v990
        %v2591 = vcvt.s32.f32 %v991
        %v2592 = vcvt.s32.f32 %v992
        %v2593 = vcvt.s32.f32 %v993
        %v2594 = vcvt.s32.f32 %v994
        %v2595 = vcvt.s32.f32 %v995
        %v2596 = vcvt.s32.f32 %v996
        %v2597 = vcvt.s32.f32 %v997
        %v2598 = vcvt.s32.f32 %v998
        %v2599 = vcvt.s32.f32 %v999
        %v2600 = vcvt.s32.f32 %v1000
        %v2601 = vcvt.s32.f32 %v1001
        %v2602 = vcvt.s32.f32 %v1002
        %v2603 = vcvt.s32.f32 %v1003
        %v2604 = vcvt.s32.f32 %v1004
        %v2605 = vcvt.s32.f32 %v1005
        %v2606 = vcvt.s32.f32 %v1006
        %v2607 = vcvt.s32.f32 %v1007
        %v2608 = vcvt.s32.f32 %v1008
        %v2609 = vcvt.s32.f32 %v1009
        %v2610 = vcvt.s32.f32 %v1010
        %v2611 = vcvt.s32.f32 %v1011
        %v2612 = vcvt.s32.f32 %v1012
        %v2613 = vcvt.s32.f32 %v1013
        %v2614 = vcvt.s32.f32 %v1014
        %v2615 = vcvt.s32.f32 %v1015
        %v2616 = vcvt.s32.f32 %v1016
        %v2617 = vcvt.s32.f32 %v1017
        %v2618 = vcvt.s32.f32 %v1018
        %v2619 = vcvt.s32.f32 %v1019
        %v2620 = vcvt.s32.f32 %v1020
        %v2621 = vcvt.s32.f32 %v1021
        %v2622 = vcvt.s32.f32 %v1022
        %v2623 = vcvt.s32.f32 %v1023
        %v2624 = vcvt.s32.f32 %v1024
        %v2625 = vcvt.s32.f32 %v1025
        %v2626 = vcvt.s32.f32 %v1026
        %v2627 = vcvt.s32.f32 %v1027
        %v2628 = vcvt.s32.f32 %v1028
        %v2629 = vcvt.s32.f32 %v1029
        %v2630 = vcvt.s32.f32 %v1030
        %v2631 = vcvt.s32.f32 %v1031
        %v2632 = vcvt.s32.f32 %v1032
        %v2633 = vcvt.s32.f32 %v1033
        %v2634 = vcvt.s32.f32 %v1034
        %v2635 = vcvt.s32.f32 %v1035
        %v2636 = vcvt.s32.f32 %v1036
        %v2637 = vcvt.s32.f32 %v1037
        %v2638 = vcvt.s32.f32 %v1038
        %v2639 = vcvt.s32.f32 %v1039
        %v2640 = vcvt.s32.f32 %v1040
        %v2641 = vcvt.s32.f32 %v1041
        %v2642 = vcvt.s32.f32 %v1042
        %v2643 = vcvt.s32.f32 %v1043
        %v2644 = vcvt.s32.f32 %v1044
        %v2645 = vcvt.s32.f32 %v1045
        %v2646 = vcvt.s32.f32 %v1046
        %v2647 = vcvt.s32.f32 %v1047
        %v2648 = vcvt.s32.f32 %v1048
        %v2649 = vcvt.s32.f32 %v1049
        %v2650 = vcvt.s32.f32 %v1050
        %v2651 = vcvt.s32.f32 %v1051
        %v2652 = vcvt.s32.f32 %v1052
        %v2653 = vcvt.s32.f32 %v1053
        %v2654 = vcvt.s32.f32 %v1054
        %v2655 = vcvt.s32.f32 %v1055
        %v2656 = vcvt.s32.f32 %v1056
        %v2657 = vcvt.s32.f32 %v1057
        %v2658 = vcvt.s32.f32 %v1058
        %v2659 = vcvt.s32.f32 %v1059
        %v2660 = vcvt.s32.f32 %v1060
        %v2661 = vcvt.s32.f32 %v1061
        %v2662 = vcvt.s32.f32 %v1062
        %v2663 = vcvt.s32.f32 %v1063
        %v2664 = vcvt.s32.f32 %v1064
        %v2665 = vcvt.s32.f32 %v1065
        %v2666 = vcvt.s32.f32 %v1066
        %v2667 = vcvt.s32.f32 %v1067
        %v2668 = vcvt.s32.f32 %v1068
        %v2669 = vcvt.s32.f32 %v1069
        %v2670 = vcvt.s32.f32 %v1070
        %v2671 = vcvt.s32.f32 %v1071
        %v2672 = vcvt.s32.f32 %v1072
        %v2673 = vcvt.s32.f32 %v1073
        %v2674 = vcvt.s32.f32 %v1074
        %v2675 = vcvt.s32.f32 %v1075
        %v2676 = vcvt.s32.f32 %v1076
        %v2677 = vcvt.s32.f32 %v1077
        %v2678 = vcvt.s32.f32 %v1078
        %v2679 = vcvt.s32.f32 %v1079
        %v2680 = vcvt.s32.f32 %v1080
        %v2681 = vcvt.s32.f32 %v1081
        %v2682 = vcvt.s32.f32 %v1082
        %v2683 = vcvt.s32.f32 %v1083
        %v2684 = vcvt.s32.f32 %v1084
        %v2685 = vcvt.s32.f32 %v1085
        %v2686 = vcvt.s32.f32 %v1086
        %v2687 = vcvt.s32.f32 %v1087
        %v2688 = vcvt.s32.f32 %v1088
        %v2689 = vcvt.s32.f32 %v1089
        %v2690 = vcvt.s32.f32 %v1090
        %v2691 = vcvt.s32.f32 %v1091
        %v2692 = vcvt.s32.f32 %v1092
        %v2693 = vcvt.s32.f32 %v1093
        %v2694 = vcvt.s32.f32 %v1094
        %v2695 = vcvt.s32.f32 %v1095
        %v2696 = vcvt.s32.f32 %v1096
        %v2697 = vcvt.s32.f32 %v1097
        %v2698 = vcvt.s32.f32 %v1098
        %v2699 = vcvt.s32.f32 %v1099
        %v2700 = vcvt.s32.f32 %v1100
        %v2701 = vcvt.s32.f32 %v1101
        %v2702 = vcvt.s32.f32 %v1102
        %v2703 = vcvt.s32.f32 %v1103
        %v2704 = vcvt.s32.f32 %v1104
        %v2705 = vcvt.s32.f32 %v1105
        %v2706 = vcvt.s32.f32 %v1106
        %v2707 = vcvt.s32.f32 %v1107
        %v2708 = vcvt.s32.f32 %v1108
        %v2709 = vcvt.s32.f32 %v1109
        %v2710 = vcvt.s32.f32 %v1110
        %v2711 = vcvt.s32.f32 %v1111
        %v2712 = vcvt.s32.f32 %v1112
        %v2713 = vcvt.s32.f32 %v1113
        %v2714 = vcvt.s32.f32 %v1114
        %v2715 = vcvt.s32.f32 %v1115
        %v2716 = vcvt.s32.f32 %v1116
        %v2717 = vcvt.s32.f32 %v1117
        %v2718 = vcvt.s32.f32 %v1118
        %v2719 = vcvt.s32.f32 %v1119
        %v2720 = vcvt.s32.f32 %v1120
        %v2721 = vcvt.s32.f32 %v1121
        %v2722 = vcvt.s32.f32 %v1122
        %v2723 = vcvt.s32.f32 %v1123
        %v2724 = vcvt.s32.f32 %v1124
        %v2725 = vcvt.s32.f32 %v1125
        %v2726 = vcvt.s32.f32 %v1126
        %v2727 = vcvt.s32.f32 %v1127
        %v2728 = vcvt.s32.f32 %v1128
        %v2729 = vcvt.s32.f32 %v1129
        %v2730 = vcvt.s32.f32 %v1130
        %v2731 = vcvt.s32.f32 %v1131
        %v2732 = vcvt.s32.f32 %v1132
        %v2733 = vcvt.s32.f32 %v1133
        %v2734 = vcvt.s32.f32 %v1134
        %v2735 = vcvt.s32.f32 %v1135
        %v2736 = vcvt.s32.f32 %v1136
        %v2737 = vcvt.s32.f32 %v1137
        %v2738 = vcvt.s32.f32 %v1138
        %v2739 = vcvt.s32.f32 %v1139
        %v2740 = vcvt.s32.f32 %v1140
        %v2741 = vcvt.s32.f32 %v1141
        %v2742 = vcvt.s32.f32 %v1142
        %v2743 = vcvt.s32.f32 %v1143
        %v2744 = vcvt.s32.f32 %v1144
        %v2745 = vcvt.s32.f32 %v1145
        %v2746 = vcvt.s32.f32 %v1146
        %v2747 = vcvt.s32.f32 %v1147
        %v2748 = vcvt.s32.f32 %v1148
        %v2749 = vcvt.s32.f32 %v1149
        %v2750 = vcvt.s32.f32 %v1150
        %v2751 = vcvt.s32.f32 %v1151
        %v2752 = vcvt.s32.f32 %v1152
        %v2753 = vcvt.s32.f32 %v1153
        %v2754 = vcvt.s32.f32 %v1154
        %v2755 = vcvt.s32.f32 %v1155
        %v2756 = vcvt.s32.f32 %v1156
        %v2757 = vcvt.s32.f32 %v1157
        %v2758 = vcvt.s32.f32 %v1158
        %v2759 = vcvt.s32.f32 %v1159
        %v2760 = vcvt.s32.f32 %v1160
        %v2761 = vcvt.s32.f32 %v1161
        %v2762 = vcvt.s32.f32 %v1162
        %v2763 = vcvt.s32.f32 %v1163
        %v2764 = vcvt.s32.f32 %v1164
        %v2765 = vcvt.s32.f32 %v1165
        %v2766 = vcvt.s32.f32 %v1166
        %v2767 = vcvt.s32.f32 %v1167
        %v2768 = vcvt.s32.f32 %v1168
        %v2769 = vcvt.s32.f32 %v1169
        %v2770 = vcvt.s32.f32 %v1170
        %v2771 = vcvt.s32.f32 %v1171
        %v2772 = vcvt.s32.f32 %v1172
        %v2773 = vcvt.s32.f32 %v1173
        %v2774 = vcvt.s32.f32 %v1174
        %v2775 = vcvt.s32.f32 %v1175
        %v2776 = vcvt.s32.f32 %v1176
        %v2777 = vcvt.s32.f32 %v1177
        %v2778 = vcvt.s32.f32 %v1178
        %v2779 = vcvt.s32.f32 %v1179
        %v2780 = vcvt.s32.f32 %v1180
        %v2781 = vcvt.s32.f32 %v1181
        %v2782 = vcvt.s32.f32 %v1182
        %v2783 = vcvt.s32.f32 %v1183
        %v2784 = vcvt.s32.f32 %v1184
        %v2785 = vcvt.s32.f32 %v1185
        %v2786 = vcvt.s32.f32 %v1186
        %v2787 = vcvt.s32.f32 %v1187
        %v2788 = vcvt.s32.f32 %v1188
        %v2789 = vcvt.s32.f32 %v1189
        %v2790 = vcvt.s32.f32 %v1190
        %v2791 = vcvt.s32.f32 %v1191
        %v2792 = vcvt.s32.f32 %v1192
        %v2793 = vcvt.s32.f32 %v1193
        %v2794 = vcvt.s32.f32 %v1194
        %v2795 = vcvt.s32.f32 %v1195
        %v2796 = vcvt.s32.f32 %v1196
        %v2797 = vcvt.s32.f32 %v1197
        %v2798 = vcvt.s32.f32 %v1198
        %v2799 = vcvt.s32.f32 %v1199
        %v2800 = vcvt.s32.f32 %v1200
        %v2801 = vcvt.s32.f32 %v1201
        %v2802 = vcvt.s32.f32 %v1202
        %v2803 = vcvt.s32.f32 %v1203
        %v2804 = vcvt.s32.f32 %v1204
        %v2805 = vcvt.s32.f32 %v1205
        %v2806 = vcvt.s32.f32 %v1206
        %v2807 = vcvt.s32.f32 %v1207
        %v2808 = vcvt.s32.f32 %v1208
        %v2809 = vcvt.s32.f32 %v1209
        %v2810 = vcvt.s32.f32 %v1210
        %v2811 = vcvt.s32.f32 %v1211
        %v2812 = vcvt.s32.f32 %v1212
        %v2813 = vcvt.s32.f32 %v1213
        %v2814 = vcvt.s32.f32 %v1214
        %v2815 = vcvt.s32.f32 %v1215
        %v2816 = vcvt.s32.f32 %v1216
        %v2817 = vcvt.s32.f32 %v1217
        %v2818 = vcvt.s32.f32 %v1218
        %v2819 = vcvt.s32.f32 %v1219
        %v2820 = vcvt.s32.f32 %v1220
        %v2821 = vcvt.s32.f32 %v1221
        %v2822 = vcvt.s32.f32 %v1222
        %v2823 = vcvt.s32.f32 %v1223
        %v2824 = vcvt.s32.f32 %v1224
        %v2825 = vcvt.s32.f32 %v1225
        %v2826 = vcvt.s32.f32 %v1226
        %v2827 = vcvt.s32.f32 %v1227
        %v2828 = vcvt.s32.f32 %v1228
        %v2829 = vcvt.s32.f32 %v1229
        %v2830 = vcvt.s32.f32 %v1230
        %v2831 = vcvt.s32.f32 %v1231
        %v2832 = vcvt.s32.f32 %v1232
        %v2833 = vcvt.s32.f32 %v1233
        %v2834 = vcvt.s32.f32 %v1234
        %v2835 = vcvt.s32.f32 %v1235
        %v2836 = vcvt.s32.f32 %v1236
        %v2837 = vcvt.s32.f32 %v1237
        %v2838 = vcvt.s32.f32 %v1238
        %v2839 = vcvt.s32.f32 %v1239
        %v2840 = vcvt.s32.f32 %v1240
        %v2841 = vcvt.s32.f32 %v1241
        %v2842 = vcvt.s32.f32 %v1242
        %v2843 = vcvt.s32.f32 %v1243
        %v2844 = vcvt.s32.f32 %v1244
        %v2845 = vcvt.s32.f32 %v1245
        %v2846 = vcvt.s32.f32 %v1246
        %v2847 = vcvt.s32.f32 %v1247
        %v2848 = vcvt.s32.f32 %v1248
        %v2849 = vcvt.s32.f32 %v1249
        %v2850 = vcvt.s32.f32 %v1250
        %v2851 = vcvt.s32.f32 %v1251
        %v2852 = vcvt.s32.f32 %v1252
        %v2853 = vcvt.s32.f32 %v1253
        %v2854 = vcvt.s32.f32 %v1254
        %v2855 = vcvt.s32.f32 %v1255
        %v2856 = vcvt.s32.f32 %v1256
        %v2857 = vcvt.s32.f32 %v1257
        %v2858 = vcvt.s32.f32 %v1258
        %v2859 = vcvt.s32.f32 %v1259
        %v2860 = vcvt.s32.f32 %v1260
        %v2861 = vcvt.s32.f32 %v1261
        %v2862 = vcvt.s32.f32 %v1262
        %v2863 = vcvt.s32.f32 %v1263
        %v2864 = vcvt.s32.f32 %v1264
        %v2865 = vcvt.s32.f32 %v1265
        %v2866 = vcvt.s32.f32 %v1266
        %v2867 = vcvt.s32.f32 %v1267
        %v2868 = vcvt.s32.f32 %v1268
        %v2869 = vcvt.s32.f32 %v1269
        %v2870 = vcvt.s32.f32 %v1270
        %v2871 = vcvt.s32.f32 %v1271
        %v2872 = vcvt.s32.f32 %v1272
        %v2873 = vcvt.s32.f32 %v1273
        %v2874 = vcvt.s32.f32 %v1274
        %v2875 = vcvt.s32.f32 %v1275
        %v2876 = vcvt.s32.f32 %v1276
        %v2877 = vcvt.s32.f32 %v1277
        %v2878 = vcvt.s32.f32 %v1278
        %v2879 = vcvt.s32.f32 %v1279
        %v2880 = vcvt.s32.f32 %v1280
        %v2881 = vcvt.s32.f32 %v1281
        %v2882 = vcvt.s32.f32 %v1282
        %v2883 = vcvt.s32.f32 %v1283
        %v2884 = vcvt.s32.f32 %v1284
        %v2885 = vcvt.s32.f32 %v1285
        %v2886 = vcvt.s32.f32 %v1286
        %v2887 = vcvt.s32.f32 %v1287
        %v2888 = vcvt.s32.f32 %v1288
        %v2889 = vcvt.s32.f32 %v1289
        %v2890 = vcvt.s32.f32 %v1290
        %v2891 = vcvt.s32.f32 %v1291
        %v2892 = vcvt.s32.f32 %v1292
        %v2893 = vcvt.s32.f32 %v1293
        %v2894 = vcvt.s32.f32 %v1294
        %v2895 = vcvt.s32.f32 %v1295
        %v2896 = vcvt.s32.f32 %v1296
        %v2897 = vcvt.s32.f32 %v1297
        %v2898 = vcvt.s32.f32 %v1298
        %v2899 = vcvt.s32.f32 %v1299
        %v2900 = vcvt.s32.f32 %v1300
        %v2901 = vcvt.s32.f32 %v1301
        %v2902 = vcvt.s32.f32 %v1302
        %v2903 = vcvt.s32.f32 %v1303
        %v2904 = vcvt.s32.f32 %v1304
        %v2905 = vcvt.s32.f32 %v1305
        %v2906 = vcvt.s32.f32 %v1306
        %v2907 = vcvt.s32.f32 %v1307
        %v2908 = vcvt.s32.f32 %v1308
        %v2909 = vcvt.s32.f32 %v1309
        %v2910 = vcvt.s32.f32 %v1310
        %v2911 = vcvt.s32.f32 %v1311
        %v2912 = vcvt.s32.f32 %v1312
        %v2913 = vcvt.s32.f32 %v1313
        %v2914 = vcvt.s32.f32 %v1314
        %v2915 = vcvt.s32.f32 %v1315
        %v2916 = vcvt.s32.f32 %v1316
        %v2917 = vcvt.s32.f32 %v1317
        %v2918 = vcvt.s32.f32 %v1318
        %v2919 = vcvt.s32.f32 %v1319
        %v2920 = vcvt.s32.f32 %v1320
        %v2921 = vcvt.s32.f32 %v1321
        %v2922 = vcvt.s32.f32 %v1322
        %v2923 = vcvt.s32.f32 %v1323
        %v2924 = vcvt.s32.f32 %v1324
        %v2925 = vcvt.s32.f32 %v1325
        %v2926 = vcvt.s32.f32 %v1326
        %v2927 = vcvt.s32.f32 %v1327
        %v2928 = vcvt.s32.f32 %v1328
        %v2929 = vcvt.s32.f32 %v1329
        %v2930 = vcvt.s32.f32 %v1330
        %v2931 = vcvt.s32.f32 %v1331
        %v2932 = vcvt.s32.f32 %v1332
        %v2933 = vcvt.s32.f32 %v1333
        %v2934 = vcvt.s32.f32 %v1334
        %v2935 = vcvt.s32.f32 %v1335
        %v2936 = vcvt.s32.f32 %v1336
        %v2937 = vcvt.s32.f32 %v1337
        %v2938 = vcvt.s32.f32 %v1338
        %v2939 = vcvt.s32.f32 %v1339
        %v2940 = vcvt.s32.f32 %v1340
        %v2941 = vcvt.s32.f32 %v1341
        %v2942 = vcvt.s32.f32 %v1342
        %v2943 = vcvt.s32.f32 %v1343
        %v2944 = vcvt.s32.f32 %v1344
        %v2945 = vcvt.s32.f32 %v1345
        %v2946 = vcvt.s32.f32 %v1346
        %v2947 = vcvt.s32.f32 %v1347
        %v2948 = vcvt.s32.f32 %v1348
        %v2949 = vcvt.s32.f32 %v1349
        %v2950 = vcvt.s32.f32 %v1350
        %v2951 = vcvt.s32.f32 %v1351
        %v2952 = vcvt.s32.f32 %v1352
        %v2953 = vcvt.s32.f32 %v1353
        %v2954 = vcvt.s32.f32 %v1354
        %v2955 = vcvt.s32.f32 %v1355
        %v2956 = vcvt.s32.f32 %v1356
        %v2957 = vcvt.s32.f32 %v1357
        %v2958 = vcvt.s32.f32 %v1358
        %v2959 = vcvt.s32.f32 %v1359
        %v2960 = vcvt.s32.f32 %v1360
        %v2961 = vcvt.s32.f32 %v1361
        %v2962 = vcvt.s32.f32 %v1362
        %v2963 = vcvt.s32.f32 %v1363
        %v2964 = vcvt.s32.f32 %v1364
        %v2965 = vcvt.s32.f32 %v1365
        %v2966 = vcvt.s32.f32 %v1366
        %v2967 = vcvt.s32.f32 %v1367
        %v2968 = vcvt.s32.f32 %v1368
        %v2969 = vcvt.s32.f32 %v1369
        %v2970 = vcvt.s32.f32 %v1370
        %v2971 = vcvt.s32.f32 %v1371
        %v2972 = vcvt.s32.f32 %v1372
        %v2973 = vcvt.s32.f32 %v1373
        %v2974 = vcvt.s32.f32 %v1374
        %v2975 = vcvt.s32.f32 %v1375
        %v2976 = vcvt.s32.f32 %v1376
        %v2977 = vcvt.s32.f32 %v1377
        %v2978 = vcvt.s32.f32 %v1378
        %v2979 = vcvt.s32.f32 %v1379
        %v2980 = vcvt.s32.f32 %v1380
        %v2981 = vcvt.s32.f32 %v1381
        %v2982 = vcvt.s32.f32 %v1382
        %v2983 = vcvt.s32.f32 %v1383
        %v2984 = vcvt.s32.f32 %v1384
        %v2985 = vcvt.s32.f32 %v1385
        %v2986 = vcvt.s32.f32 %v1386
        %v2987 = vcvt.s32.f32 %v1387
        %v2988 = vcvt.s32.f32 %v1388
        %v2989 = vcvt.s32.f32 %v1389
        %v2990 = vcvt.s32.f32 %v1390
        %v2991 = vcvt.s32.f32 %v1391
        %v2992 = vcvt.s32.f32 %v1392
        %v2993 = vcvt.s32.f32 %v1393
        %v2994 = vcvt.s32.f32 %v1394
        %v2995 = vcvt.s32.f32 %v1395
        %v2996 = vcvt.s32.f32 %v1396
        %v2997 = vcvt.s32.f32 %v1397
        %v2998 = vcvt.s32.f32 %v1398
        %v2999 = vcvt.s32.f32 %v1399
        %v3000 = vcvt.s32.f32 %v1400
        %v3001 = vcvt.s32.f32 %v1401
        %v3002 = vcvt.s32.f32 %v1402
        %v3003 = vcvt.s32.f32 %v1403
        %v3004 = vcvt.s32.f32 %v1404
        %v3005 = vcvt.s32.f32 %v1405
        %v3006 = vcvt.s32.f32 %v1406
        %v3007 = vcvt.s32.f32 %v1407
        %v3008 = vcvt.s32.f32 %v1408
        %v3009 = vcvt.s32.f32 %v1409
        %v3010 = vcvt.s32.f32 %v1410
        %v3011 = vcvt.s32.f32 %v1411
        %v3012 = vcvt.s32.f32 %v1412
        %v3013 = vcvt.s32.f32 %v1413
        %v3014 = vcvt.s32.f32 %v1414
        %v3015 = vcvt.s32.f32 %v1415
        %v3016 = vcvt.s32.f32 %v1416
        %v3017 = vcvt.s32.f32 %v1417
        %v3018 = vcvt.s32.f32 %v1418
        %v3019 = vcvt.s32.f32 %v1419
        %v3020 = vcvt.s32.f32 %v1420
        %v3021 = vcvt.s32.f32 %v1421
        %v3022 = vcvt.s32.f32 %v1422
        %v3023 = vcvt.s32.f32 %v1423
        %v3024 = vcvt.s32.f32 %v1424
        %v3025 = vcvt.s32.f32 %v1425
        %v3026 = vcvt.s32.f32 %v1426
        %v3027 = vcvt.s32.f32 %v1427
        %v3028 = vcvt.s32.f32 %v1428
        %v3029 = vcvt.s32.f32 %v1429
        %v3030 = vcvt.s32.f32 %v1430
        %v3031 = vcvt.s32.f32 %v1431
        %v3032 = vcvt.s32.f32 %v1432
        %v3033 = vcvt.s32.f32 %v1433
        %v3034 = vcvt.s32.f32 %v1434
        %v3035 = vcvt.s32.f32 %v1435
        %v3036 = vcvt.s32.f32 %v1436
        %v3037 = vcvt.s32.f32 %v1437
        %v3038 = vcvt.s32.f32 %v1438
        %v3039 = vcvt.s32.f32 %v1439
        %v3040 = vcvt.s32.f32 %v1440
        %v3041 = vcvt.s32.f32 %v1441
        %v3042 = vcvt.s32.f32 %v1442
        %v3043 = vcvt.s32.f32 %v1443
        %v3044 = vcvt.s32.f32 %v1444
        %v3045 = vcvt.s32.f32 %v1445
        %v3046 = vcvt.s32.f32 %v1446
        %v3047 = vcvt.s32.f32 %v1447
        %v3048 = vcvt.s32.f32 %v1448
        %v3049 = vcvt.s32.f32 %v1449
        %v3050 = vcvt.s32.f32 %v1450
        %v3051 = vcvt.s32.f32 %v1451
        %v3052 = vcvt.s32.f32 %v1452
        %v3053 = vcvt.s32.f32 %v1453
        %v3054 = vcvt.s32.f32 %v1454
        %v3055 = vcvt.s32.f32 %v1455
        %v3056 = vcvt.s32.f32 %v1456
        %v3057 = vcvt.s32.f32 %v1457
        %v3058 = vcvt.s32.f32 %v1458
        %v3059 = vcvt.s32.f32 %v1459
        %v3060 = vcvt.s32.f32 %v1460
        %v3061 = vcvt.s32.f32 %v1461
        %v3062 = vcvt.s32.f32 %v1462
        %v3063 = vcvt.s32.f32 %v1463
        %v3064 = vcvt.s32.f32 %v1464
        %v3065 = vcvt.s32.f32 %v1465
        %v3066 = vcvt.s32.f32 %v1466
        %v3067 = vcvt.s32.f32 %v1467
        %v3068 = vcvt.s32.f32 %v1468
        %v3069 = vcvt.s32.f32 %v1469
        %v3070 = vcvt.s32.f32 %v1470
        %v3071 = vcvt.s32.f32 %v1471
        %v3072 = vcvt.s32.f32 %v1472
        %v3073 = vcvt.s32.f32 %v1473
        %v3074 = vcvt.s32.f32 %v1474
        %v3075 = vcvt.s32.f32 %v1475
        %v3076 = vcvt.s32.f32 %v1476
        %v3077 = vcvt.s32.f32 %v1477
        %v3078 = vcvt.s32.f32 %v1478
        %v3079 = vcvt.s32.f32 %v1479
        %v3080 = vcvt.s32.f32 %v1480
        %v3081 = vcvt.s32.f32 %v1481
        %v3082 = vcvt.s32.f32 %v1482
        %v3083 = vcvt.s32.f32 %v1483
        %v3084 = vcvt.s32.f32 %v1484
        %v3085 = vcvt.s32.f32 %v1485
        %v3086 = vcvt.s32.f32 %v1486
        %v3087 = vcvt.s32.f32 %v1487
        %v3088 = vcvt.s32.f32 %v1488
        %v3089 = vcvt.s32.f32 %v1489
        %v3090 = vcvt.s32.f32 %v1490
        %v3091 = vcvt.s32.f32 %v1491
        %v3092 = vcvt.s32.f32 %v1492
        %v3093 = vcvt.s32.f32 %v1493
        %v3094 = vcvt.s32.f32 %v1494
        %v3095 = vcvt.s32.f32 %v1495
        %v3096 = vcvt.s32.f32 %v1496
        %v3097 = vcvt.s32.f32 %v1497
        %v3098 = vcvt.s32.f32 %v1498
        %v3099 = vcvt.s32.f32 %v1499
        %v3100 = vcvt.s32.f32 %v1500
        %v3101 = vcvt.s32.f32 %v1501
        %v3102 = vcvt.s32.f32 %v1502
        %v3103 = vcvt.s32.f32 %v1503
        %v3104 = vcvt.s32.f32 %v1504
        %v3105 = vcvt.s32.f32 %v1505
        %v3106 = vcvt.s32.f32 %v1506
        %v3107 = vcvt.s32.f32 %v1507
        %v3108 = vcvt.s32.f32 %v1508
        %v3109 = vcvt.s32.f32 %v1509
        %v3110 = vcvt.s32.f32 %v1510
        %v3111 = vcvt.s32.f32 %v1511
        %v3112 = vcvt.s32.f32 %v1512
        %v3113 = vcvt.s32.f32 %v1513
        %v3114 = vcvt.s32.f32 %v1514
        %v3115 = vcvt.s32.f32 %v1515
        %v3116 = vcvt.s32.f32 %v1516
        %v3117 = vcvt.s32.f32 %v1517
        %v3118 = vcvt.s32.f32 %v1518
        %v3119 = vcvt.s32.f32 %v1519
        %v3120 = vcvt.s32.f32 %v1520
        %v3121 = vcvt.s32.f32 %v1521
        %v3122 = vcvt.s32.f32 %v1522
        %v3123 = vcvt.s32.f32 %v1523
        %v3124 = vcvt.s32.f32 %v1524
        %v3125 = vcvt.s32.f32 %v1525
        %v3126 = vcvt.s32.f32 %v1526
        %v3127 = vcvt.s32.f32 %v1527
        %v3128 = vcvt.s32.f32 %v1528
        %v3129 = vcvt.s32.f32 %v1529
        %v3130 = vcvt.s32.f32 %v1530
        %v3131 = vcvt.s32.f32 %v1531
        %v3132 = vcvt.s32.f32 %v1532
        %v3133 = vcvt.s32.f32 %v1533
        %v3134 = vcvt.s32.f32 %v1534
        %v3135 = vcvt.s32.f32 %v1535
        %v3136 = vcvt.s32.f32 %v1536
        %v3137 = vcvt.s32.f32 %v1537
        %v3138 = vcvt.s32.f32 %v1538
        %v3139 = vcvt.s32.f32 %v1539
        %v3140 = vcvt.s32.f32 %v1540
        %v3141 = vcvt.s32.f32 %v1541
        %v3142 = vcvt.s32.f32 %v1542
        %v3143 = vcvt.s32.f32 %v1543
        %v3144 = vcvt.s32.f32 %v1544
        %v3145 = vcvt.s32.f32 %v1545
        %v3146 = vcvt.s32.f32 %v1546
        %v3147 = vcvt.s32.f32 %v1547
        %v3148 = vcvt.s32.f32 %v1548
        %v3149 = vcvt.s32.f32 %v1549
        %v3150 = vcvt.s32.f32 %v1550
        %v3151 = vcvt.s32.f32 %v1551
        %v3152 = vcvt.s32.f32 %v1552
        %v3153 = vcvt.s32.f32 %v1553
        %v3154 = vcvt.s32.f32 %v1554
        %v3155 = vcvt.s32.f32 %v1555
        %v3156 = vcvt.s32.f32 %v1556
        %v3157 = vcvt.s32.f32 %v1557
        %v3158 = vcvt.s32.f32 %v1558
        %v3159 = vcvt.s32.f32 %v1559
        %v3160 = vcvt.s32.f32 %v1560
        %v3161 = vcvt.s32.f32 %v1561
        %v3162 = vcvt.s32.f32 %v1562
        %v3163 = vcvt.s32.f32 %v1563
        %v3164 = vcvt.s32.f32 %v1564
        %v3165 = vcvt.s32.f32 %v1565
        %v3166 = vcvt.s32.f32 %v1566
        %v3167 = vcvt.s32.f32 %v1567
        %v3168 = vcvt.s32.f32 %v1568
        %v3169 = vcvt.s32.f32 %v1569
        %v3170 = vcvt.s32.f32 %v1570
        %v3171 = vcvt.s32.f32 %v1571
        %v3172 = vcvt.s32.f32 %v1572
        %v3173 = vcvt.s32.f32 %v1573
        %v3174 = vcvt.s32.f32 %v1574
        %v3175 = vcvt.s32.f32 %v1575
        %v3176 = vcvt.s32.f32 %v1576
        %v3177 = vcvt.s32.f32 %v1577
        %v3178 = vcvt.s32.f32 %v1578
        %v3179 = vcvt.s32.f32 %v1579
        %v3180 = vcvt.s32.f32 %v1580
        %v3181 = vcvt.s32.f32 %v1581
        %v3182 = vcvt.s32.f32 %v1582
        %v3183 = vcvt.s32.f32 %v1583
        %v3184 = vcvt.s32.f32 %v1584
        %v3185 = vcvt.s32.f32 %v1585
        %v3186 = vcvt.s32.f32 %v1586
        %v3187 = vcvt.s32.f32 %v1587
        %v3188 = vcvt.s32.f32 %v1588
        %v3189 = vcvt.s32.f32 %v1589
        %v3190 = vcvt.s32.f32 %v1590
        %v3191 = vcvt.s32.f32 %v1591
        %v3192 = vcvt.s32.f32 %v1592
        %v3193 = vcvt.s32.f32 %v1593
        %v3194 = vcvt.s32.f32 %v1594
        %v3195 = vcvt.s32.f32 %v1595
        %v3196 = vcvt.s32.f32 %v1596
        %v3197 = vcvt.s32.f32 %v1597
        %v3198 = vcvt.s32.f32 %v1598
        %v3199 = vcvt.s32.f32 %v1599
        %v3200 = vcvt.s32.f32 %v1600
        %v3201 = vcvt.s32.f32 %v1601
        %v3202 = vcvt.s32.f32 %v1602
        %v3203 = vcvt.s32.f32 %v1603
        %v3204 = vcvt.s32.f32 %v1604
        %v3205 = vcvt.s32.f32 %v1605
        %v3206 = vcvt.s32.f32 %v1606
        %v3207 = vcvt.s32.f32 %v1607
        %v3208 = vcvt.s32.f32 %v1608
        %v3209 = vcvt.s32.f32 %v1609
        %v3210 = vcvt.s32.f32 %v1610
        %v3211 = vcvt.s32.f32 %v1611
        %v3212 = vcvt.s32.f32 %v1612
        %v3213 = vcvt.s32.f32 %v1613
        %v3214 = vcvt.s32.f32 %v1614
        %v3215 = vcvt.s32.f32 %v1615
        %v3216 = vcvt.s32.f32 %v1616
        %v3217 = vcvt.s32.f32 %v1617
        %v3218 = vcvt.s32.f32 %v1618
        %v3219 = vcvt.s32.f32 %v1619
        %v3220 = vcvt.s32.f32 %v1620
        %v3221 = vcvt.s32.f32 %v1621
        %v3222 = vcvt.s32.f32 %v1622
        %v3223 = vcvt.s32.f32 %v1623
        %v3224 = vcvt.s32.f32 %v1624
        %v3225 = vcvt.s32.f32 %v1625
        %v3226 = vcvt.s32.f32 %v1626
        %v3227 = vcvt.s32.f32 %v1627
        %v3228 = vcvt.s32.f32 %v1628
        %v3229 = vcvt.s32.f32 %v1629
        %v3230 = vcvt.s32.f32 %v1630
        %v3231 = vcvt.s32.f32 %v1631
        %v3232 = vcvt.s32.f32 %v1632
        %v3233 = vcvt.s32.f32 %v1633
        %v3234 = vcvt.s32.f32 %v1634
        %v3235 = vcvt.s32.f32 %v1635
        %v3236 = vcvt.s32.f32 %v1636
        %v3237 = vcvt.s32.f32 %v1637
        %v3238 = vcvt.s32.f32 %v1638
        %v3239 = vcvt.s32.f32 %v1639
        %v3240 = vcvt.s32.f32 %v1640
        %v3241 = vcvt.s32.f32 %v1641
        %v3242 = vcvt.s32.f32 %v1642
        %v3243 = vcvt.s32.f32 %v1643
        %v3244 = vcvt.s32.f32 %v1644
        %v3245 = vcvt.s32.f32 %v1645
        %v3246 = vcvt.s32.f32 %v1646
        %v3247 = vcvt.s32.f32 %v1647
        %v3248 = vcvt.s32.f32 %v1648
        %v3249 = vcvt.s32.f32 %v1649
        %v3250 = vcvt.s32.f32 %v1650
        %v3251 = vcvt.s32.f32 %v1651
        %v3252 = vcvt.s32.f32 %v1652
        %v3253 = vcvt.s32.f32 %v1653
        %v3254 = vcvt.s32.f32 %v1654
        %v3255 = vcvt.s32.f32 %v1655
        %v3256 = vcvt.s32.f32 %v1656
        %v3257 = vcvt.s32.f32 %v1657
        %v3258 = vcvt.s32.f32 %v1658
        %v3259 = vcvt.s32.f32 %v1659
        %v3260 = vcvt.s32.f32 %v1660
        %v3261 = vcvt.s32.f32 %v1661
        %v3262 = vcvt.s32.f32 %v1662
        %v3263 = vcvt.s32.f32 %v1663
        %v3264 = vcvt.s32.f32 %v1664
        %v3265 = vcvt.s32.f32 %v1665
        %v3266 = vcvt.s32.f32 %v1666
        %v3267 = vcvt.s32.f32 %v1667
        %v3268 = vcvt.s32.f32 %v1668
        %v3269 = vcvt.s32.f32 %v1669
        %v3270 = vcvt.s32.f32 %v1670
        %v3271 = vcvt.s32.f32 %v1671
        %v3272 = vcvt.s32.f32 %v1672
        %v3273 = vcvt.s32.f32 %v1673
        %v3274 = vcvt.s32.f32 %v1674
        %v3275 = vcvt.s32.f32 %v1675
        %v3276 = vcvt.s32.f32 %v1676
        %v3277 = vcvt.s32.f32 %v1677
        %v3278 = vcvt.s32.f32 %v1678
        %v3279 = vcvt.s32.f32 %v1679
        %v3280 = vcvt.s32.f32 %v1680
        %v3281 = vcvt.s32.f32 %v1681
        %v3282 = vcvt.s32.f32 %v1682
        %v3283 = vcvt.s32.f32 %v1683
        %v3284 = vcvt.s32.f32 %v1684
        %v3285 = vcvt.s32.f32 %v1685
        %v3286 = vcvt.s32.f32 %v1686
        %v3287 = vcvt.s32.f32 %v1687
        %v3288 = vcvt.s32.f32 %v1688
        %v3289 = vcvt.s32.f32 %v1689
        %v3290 = vcvt.s32.f32 %v1690
        %v3291 = vcvt.s32.f32 %v1691
        %v3292 = vcvt.s32.f32 %v1692
        %v3293 = vcvt.s32.f32 %v1693
        %v3294 = vcvt.s32.f32 %v1694
        %v3295 = vcvt.s32.f32 %v1695
        %v3296 = vcvt.s32.f32 %v1696
        %v3297 = vcvt.s32.f32 %v1697
        %v3298 = vcvt.s32.f32 %v1698
        %v3299 = vcvt.s32.f32 %v1699
        %v3300 = vcvt.s32.f32 %v1700
        %v3301 = vcvt.s32.f32 %v1701
        %v3302 = vcvt.s32.f32 %v1702
        %v3303 = vcvt.s32.f32 %v1703
        %v3304 = vcvt.s32.f32 %v1704
        %v3305 = vcvt.s32.f32 %v1705
        %v3306 = vcvt.s32.f32 %v1706
        %v3307 = vcvt.s32.f32 %v1707
        %v3308 = vcvt.s32.f32 %v1708
        %v3309 = vcvt.s32.f32 %v1709
        %v3310 = vcvt.s32.f32 %v1710
        %v3311 = vcvt.s32.f32 %v1711
        %v3312 = vcvt.s32.f32 %v1712
        %v3313 = vcvt.s32.f32 %v1713
        %v3314 = vcvt.s32.f32 %v1714
        %v3315 = vcvt.s32.f32 %v1715
        %v3316 = vcvt.s32.f32 %v1716
        %v3317 = vcvt.s32.f32 %v1717
        %v3318 = vcvt.s32.f32 %v1718
        %v3319 = vcvt.s32.f32 %v1719
        %v3320 = vcvt.s32.f32 %v1720
        %v3321 = vcvt.s32.f32 %v1721
        %v3322 = vcvt.s32.f32 %v1722
        %v3323 = vcvt.s32.f32 %v1723
        %v3324 = vcvt.s32.f32 %v1724
        %v3325 = vcvt.s32.f32 %v1725
        %v3326 = vcvt.s32.f32 %v1726
        %v3327 = vcvt.s32.f32 %v1727
        %v3328 = vcvt.s32.f32 %v1728
        %v3329 = vcvt.s32.f32 %v1729
        %v3330 = vcvt.s32.f32 %v1730
        %v3331 = vcvt.s32.f32 %v1731
        %v3332 = vcvt.s32.f32 %v1732
        %v3333 = vcvt.s32.f32 %v1733
        %v3334 = vcvt.s32.f32 %v1734
        %v3335 = vcvt.s32.f32 %v1735
        %v3336 = vcvt.s32.f32 %v1736
        %v3337 = vcvt.s32.f32 %v1737
        %v3338 = vcvt.s32.f32 %v1738
        %v3339 = vcvt.s32.f32 %v1739
        %v3340 = vcvt.s32.f32 %v1740
        %v3341 = vcvt.s32.f32 %v1741
        %v3342 = vcvt.s32.f32 %v1742
        %v3343 = vcvt.s32.f32 %v1743
        %v3344 = vcvt.s32.f32 %v1744
        %v3345 = vcvt.s32.f32 %v1745
        %v3346 = vcvt.s32.f32 %v1746
        %v3347 = vcvt.s32.f32 %v1747
        %v3348 = vcvt.s32.f32 %v1748
        %v3349 = vcvt.s32.f32 %v1749
        %v3350 = vcvt.s32.f32 %v1750
        %v3351 = vcvt.s32.f32 %v1751
        %v3352 = vcvt.s32.f32 %v1752
        %v3353 = vcvt.s32.f32 %v1753
        %v3354 = vcvt.s32.f32 %v1754
        %v3355 = vcvt.s32.f32 %v1755
        %v3356 = vcvt.s32.f32 %v1756
        %v3357 = vcvt.s32.f32 %v1757
        %v3358 = vcvt.s32.f32 %v1758
        %v3359 = vcvt.s32.f32 %v1759
        %v3360 = vcvt.s32.f32 %v1760
        %v3361 = vcvt.s32.f32 %v1761
        %v3362 = vcvt.s32.f32 %v1762
        %v3363 = vcvt.s32.f32 %v1763
        %v3364 = vcvt.s32.f32 %v1764
        %v3365 = vcvt.s32.f32 %v1765
        %v3366 = vcvt.s32.f32 %v1766
        %v3367 = vcvt.s32.f32 %v1767
        %v3368 = vcvt.s32.f32 %v1768
        %v3369 = vcvt.s32.f32 %v1769
        %v3370 = vcvt.s32.f32 %v1770
        %v3371 = vcvt.s32.f32 %v1771
        %v3372 = vcvt.s32.f32 %v1772
        %v3373 = vcvt.s32.f32 %v1773
        %v3374 = vcvt.s32.f32 %v1774
        %v3375 = vcvt.s32.f32 %v1775
        %v3376 = vcvt.s32.f32 %v1776
        %v3377 = vcvt.s32.f32 %v1777
        %v3378 = vcvt.s32.f32 %v1778
        %v3379 = vcvt.s32.f32 %v1779
        %v3380 = vcvt.s32.f32 %v1780
        %v3381 = vcvt.s32.f32 %v1781
        %v3382 = vcvt.s32.f32 %v1782
        %v3383 = vcvt.s32.f32 %v1783
        %v3384 = vcvt.s32.f32 %v1784
        %v3385 = vcvt.s32.f32 %v1785
        %v3386 = vcvt.s32.f32 %v1786
        %v3387 = vcvt.s32.f32 %v1787
        %v3388 = vcvt.s32.f32 %v1788
        %v3389 = vcvt.s32.f32 %v1789
        %v3390 = vcvt.s32.f32 %v1790
        %v3391 = vcvt.s32.f32 %v1791
        %v3392 = vcvt.s32.f32 %v1792
        %v3393 = vcvt.s32.f32 %v1793
        %v3394 = vcvt.s32.f32 %v1794
        %v3395 = vcvt.s32.f32 %v1795
        %v3396 = vcvt.s32.f32 %v1796
        %v3397 = vcvt.s32.f32 %v1797
        %v3398 = vcvt.s32.f32 %v1798
        %v3399 = vcvt.s32.f32 %v1799
        %v3400 = vcvt.s32.f32 %v1800
        %v3401 = vcvt.s32.f32 %v1801
        %v3402 = vcvt.s32.f32 %v1802
        %v3403 = vcvt.s32.f32 %v1803
        %v3404 = vcvt.s32.f32 %v1804
        %v3405 = vcvt.s32.f32 %v1805
        %v3406 = vcvt.s32.f32 %v1806
        %v3407 = vcvt.s32.f32 %v1807
        %v3408 = vcvt.s32.f32 %v1808
        %v3409 = vcvt.s32.f32 %v1809
        %v3410 = vcvt.s32.f32 %v1810
        %v3411 = vcvt.s32.f32 %v1811
        %v3412 = vcvt.s32.f32 %v1812
        %v3413 = vcvt.s32.f32 %v1813
        %v3414 = vcvt.s32.f32 %v1814
        %v3415 = vcvt.s32.f32 %v1815
        %v3416 = vcvt.s32.f32 %v1816
        %v3417 = vcvt.s32.f32 %v1817
        %v3418 = vcvt.s32.f32 %v1818
        %v3419 = vcvt.s32.f32 %v1819
        %v3420 = vcvt.s32.f32 %v1820
        %v3421 = vcvt.s32.f32 %v1821
        %v3422 = vcvt.s32.f32 %v1822
        %v3423 = vcvt.s32.f32 %v1823
        %v3424 = vcvt.s32.f32 %v1824
        %v3425 = vcvt.s32.f32 %v1825
        %v3426 = vcvt.s32.f32 %v1826
        %v3427 = vcvt.s32.f32 %v1827
        %v3428 = vcvt.s32.f32 %v1828
        %v3429 = vcvt.s32.f32 %v1829
        %v3430 = vcvt.s32.f32 %v1830
        %v3431 = vcvt.s32.f32 %v1831
        %v3432 = vcvt.s32.f32 %v1832
        %v3433 = vcvt.s32.f32 %v1833
        %v3434 = vcvt.s32.f32 %v1834
        %v3435 = vcvt.s32.f32 %v1835
        %v3436 = vcvt.s32.f32 %v1836
        %v3437 = vcvt.s32.f32 %v1837
        %v3438 = vcvt.s32.f32 %v1838
        %v3439 = vcvt.s32.f32 %v1839
        %v3440 = vcvt.s32.f32 %v1840
        %v3441 = vcvt.s32.f32 %v1841
        %v3442 = vcvt.s32.f32 %v1842
        %v3443 = vcvt.s32.f32 %v1843
        %v3444 = vcvt.s32.f32 %v1844
        %v3445 = vcvt.s32.f32 %v1845
        %v3446 = vcvt.s32.f32 %v1846
        %v3447 = vcvt.s32.f32 %v1847
        %v3448 = vcvt.s32.f32 %v1848
        %v3449 = vcvt.s32.f32 %v1849
        %v3450 = vcvt.s32.f32 %v1850
        %v3451 = vcvt.s32.f32 %v1851
        %v3452 = vcvt.s32.f32 %v1852
        %v3453 = vcvt.s32.f32 %v1853
        %v3454 = vcvt.s32.f32 %v1854
        %v3455 = vcvt.s32.f32 %v1855
        %v3456 = vcvt.s32.f32 %v1856
        %v3457 = vcvt.s32.f32 %v1857
        %v3458 = vcvt.s32.f32 %v1858
        %v3459 = vcvt.s32.f32 %v1859
        %v3460 = vcvt.s32.f32 %v1860
        %v3461 = vcvt.s32.f32 %v1861
        %v3462 = vcvt.s32.f32 %v1862
        %v3463 = vcvt.s32.f32 %v1863
        %v3464 = vcvt.s32.f32 %v1864
        %v3465 = vcvt.s32.f32 %v1865
        %v3466 = vcvt.s32.f32 %v1866
        %v3467 = vcvt.s32.f32 %v1867
        %v3468 = vcvt.s32.f32 %v1868
        %v3469 = vcvt.s32.f32 %v1869
        %v3470 = vcvt.s32.f32 %v1870
        %v3471 = vcvt.s32.f32 %v1871
        %v3472 = vcvt.s32.f32 %v1872
        %v3473 = vcvt.s32.f32 %v1873
        %v3474 = vcvt.s32.f32 %v1874
        %v3475 = vcvt.s32.f32 %v1875
        %v3476 = vcvt.s32.f32 %v1876
        %v3477 = vcvt.s32.f32 %v1877
        %v3478 = vcvt.s32.f32 %v1878
        %v3479 = vcvt.s32.f32 %v1879
        %v3480 = vcvt.s32.f32 %v1880
        %v3481 = vcvt.s32.f32 %v1881
        %v3482 = vcvt.s32.f32 %v1882
        %v3483 = vcvt.s32.f32 %v1883
        %v3484 = vcvt.s32.f32 %v1884
        %v3485 = vcvt.s32.f32 %v1885
        %v3486 = vcvt.s32.f32 %v1886
        %v3487 = vcvt.s32.f32 %v1887
        %v3488 = vcvt.s32.f32 %v1888
        %v3489 = vcvt.s32.f32 %v1889
        %v3490 = vcvt.s32.f32 %v1890
        %v3491 = vcvt.s32.f32 %v1891
        %v3492 = vcvt.s32.f32 %v1892
        %v3493 = vcvt.s32.f32 %v1893
        %v3494 = vcvt.s32.f32 %v1894
        %v3495 = vcvt.s32.f32 %v1895
        %v3496 = vcvt.s32.f32 %v1896
        %v3497 = vcvt.s32.f32 %v1897
        %v3498 = vcvt.s32.f32 %v1898
        %v3499 = vcvt.s32.f32 %v1899
        %v3500 = vcvt.s32.f32 %v1900
        %v3501 = vcvt.s32.f32 %v1901
        %v3502 = vcvt.s32.f32 %v1902
        %v3503 = vcvt.s32.f32 %v1903
        %v3504 = vcvt.s32.f32 %v1904
        %v3505 = vcvt.s32.f32 %v1905
        %v3506 = vcvt.s32.f32 %v1906
        %v3507 = vcvt.s32.f32 %v1907
        %v3508 = vcvt.s32.f32 %v1908
        %v3509 = vcvt.s32.f32 %v1909
        %v3510 = vcvt.s32.f32 %v1910
        %v3511 = vcvt.s32.f32 %v1911
        %v3512 = vcvt.s32.f32 %v1912
        %v3513 = vcvt.s32.f32 %v1913
        %v3514 = vcvt.s32.f32 %v1914
        %v3515 = vcvt.s32.f32 %v1915
        %v3516 = vcvt.s32.f32 %v1916
        %v3517 = vcvt.s32.f32 %v1917
        %v3518 = vcvt.s32.f32 %v1918
        %v3519 = vcvt.s32.f32 %v1919
        %v3520 = vcvt.s32.f32 %v1920
        %v3521 = vcvt.s32.f32 %v1921
        %v3522 = vcvt.s32.f32 %v1922
        %v3523 = vcvt.s32.f32 %v1923
        %v3524 = vcvt.s32.f32 %v1924
        %v3525 = vcvt.s32.f32 %v1925
        %v3526 = vcvt.s32.f32 %v1926
        %v3527 = vcvt.s32.f32 %v1927
        %v3528 = vcvt.s32.f32 %v1928
        %v3529 = vcvt.s32.f32 %v1929
        %v3530 = vcvt.s32.f32 %v1930
        %v3531 = vcvt.s32.f32 %v1931
        %v3532 = vcvt.s32.f32 %v1932
        %v3533 = vcvt.s32.f32 %v1933
        %v3534 = vcvt.s32.f32 %v1934
        %v3535 = vcvt.s32.f32 %v1935
        %v3536 = vcvt.s32.f32 %v1936
        %v3537 = vcvt.s32.f32 %v1937
        %v3538 = vcvt.s32.f32 %v1938
        %v3539 = vcvt.s32.f32 %v1939
        %v3540 = vcvt.s32.f32 %v1940
        %v3541 = vcvt.s32.f32 %v1941
        %v3542 = vcvt.s32.f32 %v1942
        %v3543 = vcvt.s32.f32 %v1943
        %v3544 = vcvt.s32.f32 %v1944
        %v3545 = vcvt.s32.f32 %v1945
        %v3546 = vcvt.s32.f32 %v1946
        %v3547 = vcvt.s32.f32 %v1947
        %v3548 = vcvt.s32.f32 %v1948
        %v3549 = vcvt.s32.f32 %v1949
        %v3550 = vcvt.s32.f32 %v1950
        %v3551 = vcvt.s32.f32 %v1951
        %v3552 = vcvt.s32.f32 %v1952
        %v3553 = vcvt.s32.f32 %v1953
        %v3554 = vcvt.s32.f32 %v1954
        %v3555 = vcvt.s32.f32 %v1955
        %v3556 = vcvt.s32.f32 %v1956
        %v3557 = vcvt.s32.f32 %v1957
        %v3558 = vcvt.s32.f32 %v1958
        %v3559 = vcvt.s32.f32 %v1959
        %v3560 = vcvt.s32.f32 %v1960
        %v3561 = vcvt.s32.f32 %v1961
        %v3562 = vcvt.s32.f32 %v1962
        %v3563 = vcvt.s32.f32 %v1963
        %v3564 = vcvt.s32.f32 %v1964
        %v3565 = vcvt.s32.f32 %v1965
        %v3566 = vcvt.s32.f32 %v1966
        %v3567 = vcvt.s32.f32 %v1967
        %v3568 = vcvt.s32.f32 %v1968
        %v3569 = vcvt.s32.f32 %v1969
        %v3570 = vcvt.s32.f32 %v1970
        %v3571 = vcvt.s32.f32 %v1971
        %v3572 = vcvt.s32.f32 %v1972
        %v3573 = vcvt.s32.f32 %v1973
        %v3574 = vcvt.s32.f32 %v1974
        %v3575 = vcvt.s32.f32 %v1975
        %v3576 = vcvt.s32.f32 %v1976
        %v3577 = vcvt.s32.f32 %v1977
        %v3578 = vcvt.s32.f32 %v1978
        %v3579 = vcvt.s32.f32 %v1979
        %v3580 = vcvt.s32.f32 %v1980
        %v3581 = vcvt.s32.f32 %v1981
        %v3582 = vcvt.s32.f32 %v1982
        %v3583 = vcvt.s32.f32 %v1983
        %v3584 = vcvt.s32.f32 %v1984
        %v3585 = vcvt.s32.f32 %v1985
        %v3586 = vcvt.s32.f32 %v1986
        %v3587 = vcvt.s32.f32 %v1987
        %v3588 = vcvt.s32.f32 %v1988
        %v3589 = vcvt.s32.f32 %v1989
        %v3590 = vcvt.s32.f32 %v1990
        %v3591 = vcvt.s32.f32 %v1991
        %v3592 = vcvt.s32.f32 %v1992
        %v3593 = vcvt.s32.f32 %v1993
        %v3594 = vcvt.s32.f32 %v1994
        %v3595 = vcvt.s32.f32 %v1995
        %v3596 = vcvt.s32.f32 %v1996
        %v3597 = vcvt.s32.f32 %v1997
        %v3598 = vcvt.s32.f32 %v1998
        %v3599 = vcvt.s32.f32 %v1999
        %v3600 = vcvt.s32.f32 %v2000
        %v3601 = vcvt.s32.f32 %v2001
        %v3602 = vcvt.s32.f32 %v2002
        %v3603 = vcvt.s32.f32 %v2003
        %v3604 = vcvt.s32.f32 %v2004
        %v3605 = vcvt.s32.f32 %v2005
        %v3606 = vcvt.s32.f32 %v2006
        %v3607 = vcvt.s32.f32 %v2007
        %v3608 = vcvt.s32.f32 %v2008
        %v3609 = vcvt.s32.f32 %v2009
        %v3610 = vcvt.s32.f32 %v2010
        %v3611 = vcvt.s32.f32 %v2011
        %v3612 = vcvt.s32.f32 %v2012
        %v3613 = vcvt.s32.f32 %v2013
        %v3614 = vcvt.s32.f32 %v2014
        %v3615 = vcvt.s32.f32 %v2015
        %v3616 = vcvt.s32.f32 %v2016
        %v3617 = vcvt.s32.f32 %v2017
        %v3618 = vcvt.s32.f32 %v2018
        %v3619 = vcvt.s32.f32 %v2019
        %v3620 = vcvt.s32.f32 %v2020
        %v3621 = vcvt.s32.f32 %v2021
        %v3622 = vcvt.s32.f32 %v2022
        %v3623 = vcvt.s32.f32 %v2023
        %v3624 = vcvt.s32.f32 %v2024
        %v3625 = vcvt.s32.f32 %v2025
        %v3626 = vcvt.s32.f32 %v2026
        %v3627 = vcvt.s32.f32 %v2027
        %v3628 = vcvt.s32.f32 %v2028
        %v3629 = vcvt.s32.f32 %v2029
        %v3630 = vcvt.s32.f32 %v2030
        %v3631 = vcvt.s32.f32 %v2031
        %v3632 = vcvt.s32.f32 %v2032
        %v3633 = vcvt.s32.f32 %v2033
        %v3634 = vcvt.s32.f32 %v2034
        %v3635 = vcvt.s32.f32 %v2035
        %v3636 = vcvt.s32.f32 %v2036
        %v3637 = vcvt.s32.f32 %v2037
        %v3638 = vcvt.s32.f32 %v2038
        %v3639 = vcvt.s32.f32 %v2039
        %v3640 = vcvt.s32.f32 %v2040
        %v3641 = vcvt.s32.f32 %v2041
        %v3642 = vcvt.s32.f32 %v2042
        %v3643 = vcvt.s32.f32 %v2043
        %v3644 = vcvt.s32.f32 %v2044
        %v3645 = vcvt.s32.f32 %v2045
        %v3646 = vcvt.s32.f32 %v2046
        %v3647 = vcvt.s32.f32 %v2047
        %v3648 = vcvt.s32.f32 %v2048
        %v3649 = vcvt.s32.f32 %v2049
        %v3650 = vcvt.s32.f32 %v2050
        %v3651 = vcvt.s32.f32 %v2051
        %v3652 = vcvt.s32.f32 %v2052
        %v3653 = vcvt.s32.f32 %v2053
        %v3654 = vcvt.s32.f32 %v2054
        %v3655 = vcvt.s32.f32 %v2055
        %v3656 = vcvt.s32.f32 %v2056
        %v3657 = vcvt.s32.f32 %v2057
        %v3658 = vcvt.s32.f32 %v2058
        %v3659 = vcvt.s32.f32 %v2059
        %v3660 = vcvt.s32.f32 %v2060
        %v3661 = vcvt.s32.f32 %v2061
        %v3662 = vcvt.s32.f32 %v2062
        %v3663 = vcvt.s32.f32 %v2063
        %v3664 = vcvt.s32.f32 %v2064
        %v3665 = vcvt.s32.f32 %v2065
        %v3666 = vcvt.s32.f32 %v2066
        %v3667 = vcvt.s32.f32 %v2067
        %v3668 = vcvt.s32.f32 %v2068
        %v3669 = vcvt.s32.f32 %v2069
        %v3670 = vcvt.s32.f32 %v2070
        %v3671 = vcvt.s32.f32 %v2071
        %v3672 = vcvt.s32.f32 %v2072
        %v3673 = vcvt.s32.f32 %v2073
        %v3674 = vcvt.s32.f32 %v2074
        %v3675 = vcvt.s32.f32 %v2075
        %v3676 = vcvt.s32.f32 %v2076
        %v3677 = vcvt.s32.f32 %v2077
        %v3678 = vcvt.s32.f32 %v2078
        %v3679 = vcvt.s32.f32 %v2079
        %v3680 = vcvt.s32.f32 %v2080
        %v3681 = vcvt.s32.f32 %v2081
        %v3682 = vcvt.s32.f32 %v2082
        %v3683 = vcvt.s32.f32 %v2083
        %v3684 = vcvt.s32.f32 %v2084
        %v3685 = vcvt.s32.f32 %v2085
        %v3686 = vcvt.s32.f32 %v2086
        %v3687 = vcvt.s32.f32 %v2087
        %v3688 = vcvt.s32.f32 %v2088
        %v3689 = vcvt.s32.f32 %v2089
        %v3690 = vcvt.s32.f32 %v2090
        %v3691 = vcvt.s32.f32 %v2091
        %v3692 = vcvt.s32.f32 %v2092
        %v3693 = vcvt.s32.f32 %v2093
        %v3694 = vcvt.s32.f32 %v2094
        %v3695 = vcvt.s32.f32 %v2095
        %v3696 = vcvt.s32.f32 %v2096
        %v3697 = vcvt.s32.f32 %v2097
        %v3698 = vcvt.s32.f32 %v2098
        %v3699 = vcvt.s32.f32 %v2099
        %v3700 = vcvt.s32.f32 %v2100
        %v3701 = vcvt.s32.f32 %v2101
        %v3702 = vcvt.s32.f32 %v2102
        %v3703 = vcvt.s32.f32 %v2103
        %v3704 = vcvt.s32.f32 %v2104
        %v3705 = vcvt.s32.f32 %v2105
        %v3706 = vcvt.s32.f32 %v2106
        %v3707 = vcvt.s32.f32 %v2107
        %v3708 = vcvt.s32.f32 %v2108
        %v3709 = vcvt.s32.f32 %v2109
        %v3710 = vcvt.s32.f32 %v2110
        %v3711 = vcvt.s32.f32 %v2111
        %v3712 = vcvt.s32.f32 %v2112
        %v3713 = vcvt.s32.f32 %v2113
        %v3714 = vcvt.s32.f32 %v2114
        %v3715 = vcvt.s32.f32 %v2115
        %v3716 = vcvt.s32.f32 %v2116
        %v3717 = vcvt.s32.f32 %v2117
        %v3718 = vcvt.s32.f32 %v2118
        %v3719 = vcvt.s32.f32 %v2119
        %v3720 = vcvt.s32.f32 %v2120
        %v3721 = vcvt.s32.f32 %v2121
        %v3722 = vcvt.s32.f32 %v2122
        %v3723 = vcvt.s32.f32 %v2123
        %v3724 = vcvt.s32.f32 %v2124
        %v3725 = vcvt.s32.f32 %v2125
        %v3726 = vcvt.s32.f32 %v2126
        %v3727 = vcvt.s32.f32 %v2127
        %v3728 = vcvt.s32.f32 %v2128
        %v3729 = vcvt.s32.f32 %v2129
        %v3730 = vcvt.s32.f32 %v2130
        %v3731 = vcvt.s32.f32 %v2131
        %v3732 = vcvt.s32.f32 %v2132
        %v3733 = vcvt.s32.f32 %v2133
        %v3734 = vcvt.s32.f32 %v2134
        %v3735 = vcvt.s32.f32 %v2135
        %v3736 = vcvt.s32.f32 %v2136
        %v3737 = vcvt.s32.f32 %v2137
        %v3738 = vcvt.s32.f32 %v2138
        %v3739 = vcvt.s32.f32 %v2139
        %v3740 = vcvt.s32.f32 %v2140
        %v3741 = vcvt.s32.f32 %v2141
        %v3742 = vcvt.s32.f32 %v2142
        %v3743 = vcvt.s32.f32 %v2143
        %v3744 = vcvt.s32.f32 %v2144
        %v3745 = vcvt.s32.f32 %v2145
        %v3746 = vcvt.s32.f32 %v2146
        %v3747 = vcvt.s32.f32 %v2147
        %v3748 = vcvt.s32.f32 %v2148
        %v3749 = vcvt.s32.f32 %v2149
        %v3750 = vcvt.s32.f32 %v2150
        %v3751 = vcvt.s32.f32 %v2151
        %v3752 = vcvt.s32.f32 %v2152
        %v3753 = vcvt.s32.f32 %v2153
        %v3754 = vcvt.s32.f32 %v2154
        %v3755 = vcvt.s32.f32 %v2155
        %v3756 = vcvt.s32.f32 %v2156
        %v3757 = vcvt.s32.f32 %v2157
        %v3758 = vcvt.s32.f32 %v2158
        %v3759 = vcvt.s32.f32 %v2159
        %v3760 = vcvt.s32.f32 %v2160
        %v3761 = vcvt.s32.f32 %v2161
        %v3762 = vcvt.s32.f32 %v2162
        %v3763 = vcvt.s32.f32 %v2163
        %v3764 = vcvt.s32.f32 %v2164
        %v3765 = vcvt.s32.f32 %v2165
        %v3766 = vcvt.s32.f32 %v2166
        %v3767 = vcvt.s32.f32 %v2167
        %v3768 = vcvt.s32.f32 %v2168
        %v3769 = vcvt.s32.f32 %v2169
        %v3770 = vcvt.s32.f32 %v2170
        %v3771 = vcvt.s32.f32 %v2171
        %v3772 = vcvt.s32.f32 %v2172
        %v3773 = vcvt.s32.f32 %v2173
        %v3774 = vcvt.s32.f32 %v2174
        %v3775 = vcvt.s32.f32 %v2175
        %v3776 = vcvt.s32.f32 %v2176
        %v3777 = vcvt.s32.f32 %v2177
        %v3778 = vcvt.s32.f32 %v2178
        %v3779 = vcvt.s32.f32 %v2179
        %v3780 = vcvt.s32.f32 %v2180
        %v3781 = vcvt.s32.f32 %v2181
        %v3782 = vcvt.s32.f32 %v2182
        %v3783 = vcvt.s32.f32 %v2183
        %v3784 = vcvt.s32.f32 %v2184
        %v3785 = vcvt.s32.f32 %v2185
        %v3786 = vcvt.s32.f32 %v2186
        %v3787 = vcvt.s32.f32 %v2187
        %v3788 = vcvt.s32.f32 %v2188
        %v3789 = vcvt.s32.f32 %v2189
        %v3790 = vcvt.s32.f32 %v2190
        %v3791 = vcvt.s32.f32 %v2191
        %v3792 = vcvt.s32.f32 %v2192
        %v3793 = vcvt.s32.f32 %v2193
        %v3794 = vcvt.s32.f32 %v2194
        %v3795 = vcvt.s32.f32 %v2195
        %v3796 = vcvt.s32.f32 %v2196
        %v3797 = vcvt.s32.f32 %v2197
        %v3798 = vcvt.s32.f32 %v2198
        %v3799 = vcvt.s32.f32 %v2199
        %v3800 = vcvt.s32.f32 %v2200
        %v3801 = vcvt.s32.f32 %v2201
        %v3802 = vcvt.s32.f32 %v2202
        %v3803 = vcvt.s32.f32 %v2203
        %v3804 = vcvt.s32.f32 %v2204
        %v3805 = vcvt.s32.f32 %v2205
        %v3806 = vcvt.s32.f32 %v2206
        %v3807 = vcvt.s32.f32 %v2207
        %v3808 = vcvt.s32.f32 %v2208
        %v3809 = vcvt.s32.f32 %v2209
        %v3810 = vcvt.s32.f32 %v2210
        %v3811 = vcvt.s32.f32 %v2211
        %v3812 = vcvt.s32.f32 %v2212
        %v3813 = vcvt.s32.f32 %v2213
        %v3814 = vcvt.s32.f32 %v2214
        %v3815 = vcvt.s32.f32 %v2215
        %v3816 = vcvt.s32.f32 %v2216
        %v3817 = vcvt.s32.f32 %v2217
        %v3818 = vcvt.s32.f32 %v2218
        %v3819 = vcvt.s32.f32 %v2219
        %v3820 = vcvt.s32.f32 %v2220
        %v3821 = vcvt.s32.f32 %v2221
        %v3822 = vcvt.s32.f32 %v2222
        %v3823 = vcvt.s32.f32 %v2223
        %v3824 = vcvt.s32.f32 %v2224
        %v3825 = vcvt.s32.f32 %v2225
        %v3826 = vcvt.s32.f32 %v2226
        %v3827 = vcvt.s32.f32 %v2227
        %v3828 = vcvt.s32.f32 %v2228
        %v3829 = vcvt.s32.f32 %v2229
        %v3830 = vcvt.s32.f32 %v2230
        %v3831 = vcvt.s32.f32 %v2231
        %v3832 = vcvt.s32.f32 %v2232
        %v3833 = vcvt.s32.f32 %v2233
        %v3834 = vcvt.s32.f32 %v2234
        %v3835 = vcvt.s32.f32 %v2235
        %v3836 = vcvt.s32.f32 %v2236
        %v3837 = vcvt.s32.f32 %v2237
        %v3838 = vcvt.s32.f32 %v2238
        %v3839 = vcvt.s32.f32 %v2239
        %v3840 = vcvt.s32.f32 %v2240
        %v3841 = vcvt.s32.f32 %v2241
        %v3842 = vcvt.s32.f32 %v2242
        %v3843 = vcvt.s32.f32 %v2243
        %v3844 = vcvt.s32.f32 %v2244
        %v3845 = vcvt.s32.f32 %v2245
        %v3846 = vcvt.s32.f32 %v2246
        %v3847 = vcvt.s32.f32 %v2247
        %v3848 = vcvt.s32.f32 %v2248
        %v3849 = vcvt.s32.f32 %v2249
        %v3850 = vcvt.s32.f32 %v2250
        %v3851 = vcvt.s32.f32 %v2251
        %v3852 = vcvt.s32.f32 %v2252
        %v3853 = vcvt.s32.f32 %v2253
        %v3854 = vcvt.s32.f32 %v2254
        %v3855 = vcvt.s32.f32 %v2255
        %v3856 = vcvt.s32.f32 %v2256
        %v3857 = vcvt.s32.f32 %v2257
        %v3858 = vcvt.s32.f32 %v2258
        %v3859 = vcvt.s32.f32 %v2259
        %v3860 = vcvt.s32.f32 %v2260
        %v3861 = vcvt.s32.f32 %v2261
        %v3862 = vcvt.s32.f32 %v2262
        %v3863 = vcvt.s32.f32 %v2263
        %v3864 = vcvt.s32.f32 %v2264
        %v3865 = vcvt.s32.f32 %v2265
        %v3866 = vcvt.s32.f32 %v2266
        %v3867 = vcvt.s32.f32 %v2267
        %v3868 = vcvt.s32.f32 %v2268
        %v3869 = vcvt.s32.f32 %v2269
        %v3870 = vcvt.s32.f32 %v2270
        %v3871 = vcvt.s32.f32 %v2271
        %v3872 = vcvt.s32.f32 %v2272
        %v3873 = vcvt.s32.f32 %v2273
        %v3874 = vcvt.s32.f32 %v2274
        %v3875 = vcvt.s32.f32 %v2275
        %v3876 = vcvt.s32.f32 %v2276
        %v3877 = vcvt.s32.f32 %v2277
        %v3878 = vcvt.s32.f32 %v2278
        %v3879 = vcvt.s32.f32 %v2279
        %v3880 = vcvt.s32.f32 %v2280
        %v3881 = vcvt.s32.f32 %v2281
        %v3882 = vcvt.s32.f32 %v2282
        %v3883 = vcvt.s32.f32 %v2283
        %v3884 = vcvt.s32.f32 %v2284
        %v3885 = vcvt.s32.f32 %v2285
        %v3886 = vcvt.s32.f32 %v2286
        %v3887 = vcvt.s32.f32 %v2287
        %v3888 = vcvt.s32.f32 %v2288
        %v3889 = vcvt.s32.f32 %v2289
        %v3890 = vcvt.s32.f32 %v2290
        %v3891 = vcvt.s32.f32 %v2291
        %v3892 = vcvt.s32.f32 %v2292
        %v3893 = vcvt.s32.f32 %v2293
        %v3894 = vcvt.s32.f32 %v2294
        %v3895 = vcvt.s32.f32 %v2295
        %v3896 = vcvt.s32.f32 %v2296
        %v3897 = vcvt.s32.f32 %v2297
        %v3898 = vcvt.s32.f32 %v2298
        %v3899 = vcvt.s32.f32 %v2299
        %v3900 = vcvt.s32.f32 %v2300
        %v3901 = vcvt.s32.f32 %v2301
        %v3902 = vcvt.s32.f32 %v2302
        %v3903 = vcvt.s32.f32 %v2303
        %v3904 = vcvt.s32.f32 %v2304
        %v3905 = vcvt.s32.f32 %v2305
        %v3906 = vcvt.s32.f32 %v2306
        %v3907 = vcvt.s32.f32 %v2307
        %v3908 = vcvt.s32.f32 %v2308
        %v3909 = vcvt.s32.f32 %v2309
        %v3910 = vcvt.s32.f32 %v2310
        %v3911 = vcvt.s32.f32 %v2311
        %v3912 = vcvt.s32.f32 %v2312
        %v3913 = vcvt.s32.f32 %v2313
        %v3914 = vcvt.s32.f32 %v2314
        %v3915 = vcvt.s32.f32 %v2315
        %v3916 = vcvt.s32.f32 %v2316
        %v3917 = vcvt.s32.f32 %v2317
        %v3918 = vcvt.s32.f32 %v2318
        %v3919 = vcvt.s32.f32 %v2319
        %v3920 = vcvt.s32.f32 %v2320
        %v3921 = vcvt.s32.f32 %v2321
        %v3922 = vcvt.s32.f32 %v2322
        %v3923 = vcvt.s32.f32 %v2323
        %v3924 = vcvt.s32.f32 %v2324
        %v3925 = vcvt.s32.f32 %v2325
        %v3926 = vcvt.s32.f32 %v2326
        %v3927 = vcvt.s32.f32 %v2327
        %v3928 = vcvt.s32.f32 %v2328
        %v3929 = vcvt.s32.f32 %v2329
        %v3930 = vcvt.s32.f32 %v2330
        %v3931 = vcvt.s32.f32 %v2331
        %v3932 = vcvt.s32.f32 %v2332
        %v3933 = vcvt.s32.f32 %v2333
        %v3934 = vcvt.s32.f32 %v2334
        %v3935 = vcvt.s32.f32 %v2335
        %v3936 = vcvt.s32.f32 %v2336
        %v3937 = vcvt.s32.f32 %v2337
        %v3938 = vcvt.s32.f32 %v2338
        %v3939 = vcvt.s32.f32 %v2339
        %v3940 = vcvt.s32.f32 %v2340
        %v3941 = vcvt.s32.f32 %v2341
        %v3942 = vcvt.s32.f32 %v2342
        %v3943 = vcvt.s32.f32 %v2343
        %v3944 = vcvt.s32.f32 %v2344
        %v3945 = vcvt.s32.f32 %v2345
        %v3946 = vcvt.s32.f32 %v2346
        %v3947 = vcvt.s32.f32 %v2347
        %v3948 = vcvt.s32.f32 %v2348
        %v3949 = vcvt.s32.f32 %v2349
        %v3950 = vcvt.s32.f32 %v2350
        %v3951 = vcvt.s32.f32 %v2351
        %v3952 = vcvt.s32.f32 %v2352
        %v3953 = vcvt.s32.f32 %v2353
        %v3954 = vcvt.s32.f32 %v2354
        %v3955 = vcvt.s32.f32 %v2355
        %v3956 = vcvt.s32.f32 %v2356
        %v3957 = vcvt.s32.f32 %v2357
        %v3958 = vcvt.s32.f32 %v2358
        %v3959 = vcvt.s32.f32 %v2359
        %v3960 = vcvt.s32.f32 %v2360
        %v3961 = vcvt.s32.f32 %v2361
        %v3962 = vcvt.s32.f32 %v2362
        %v3963 = vcvt.s32.f32 %v2363
        %v3964 = vcvt.s32.f32 %v2364
        %v3965 = vcvt.s32.f32 %v2365
        %v3966 = vcvt.s32.f32 %v2366
        %v3967 = vcvt.s32.f32 %v2367
        %v3968 = vcvt.s32.f32 %v2368
        %v3969 = vcvt.s32.f32 %v2369
        %v3970 = vcvt.s32.f32 %v2370
        %v3971 = vcvt.s32.f32 %v2371
        %v3972 = vcvt.s32.f32 %v2372
        %v3973 = vcvt.s32.f32 %v2373
        %v3974 = vcvt.s32.f32 %v2374
        %v3975 = vcvt.s32.f32 %v2375
        %v3976 = vcvt.s32.f32 %v2376
        %v3977 = vcvt.s32.f32 %v2377
        %v3978 = vcvt.s32.f32 %v2378
        %v3979 = vcvt.s32.f32 %v2379
        %v3980 = vcvt.s32.f32 %v2380
        %v3981 = vcvt.s32.f32 %v2381
        %v3982 = vcvt.s32.f32 %v2382
        %v3983 = vcvt.s32.f32 %v2383
        %v3984 = vcvt.s32.f32 %v2384
        %v3985 = vcvt.s32.f32 %v2385
        %v3986 = vcvt.s32.f32 %v2386
        %v3987 = vcvt.s32.f32 %v2387
        %v3988 = vcvt.s32.f32 %v2388
        %v3989 = vcvt.s32.f32 %v2389
        %v3990 = vcvt.s32.f32 %v2390
        %v3991 = vcvt.s32.f32 %v2391
        %v3992 = vcvt.s32.f32 %v2392
        %v3993 = vcvt.s32.f32 %v2393
        %v3994 = vcvt.s32.f32 %v2394
        %v3995 = vcvt.s32.f32 %v2395
        %v3996 = vcvt.s32.f32 %v2396
        %v3997 = vcvt.s32.f32 %v2397
        %v3998 = vcvt.s32.f32 %v2398
        %v3999 = vcvt.s32.f32 %v2399
        %v4000 = vcvt.s32.f32 %v2400
        %v4001 = vcvt.s32.f32 %v2401
        %v4002 = vcvt.s32.f32 %v2402
        %v4003 = vcvt.s32.f32 %v2403
        %v4004 = vcvt.s32.f32 %v2404
        %v4005 = vcvt.s32.f32 %v2405
        %v4006 = vcvt.s32.f32 %v2406
        %v4007 = vcvt.s32.f32 %v2407
        %v4008 = vcvt.s32.f32 %v2408
        %v4009 = vcvt.s32.f32 %v2409
        %v4010 = vcvt.s32.f32 %v2410
        %v4011 = vcvt.s32.f32 %v2411
        %v4012 = vcvt.s32.f32 %v2412
        %v4013 = vcvt.s32.f32 %v2413
        %v4014 = vcvt.s32.f32 %v2414
        %v4015 = vcvt.s32.f32 %v2415
        %v4016 = vcvt.s32.f32 %v2416
        %v4017 = vcvt.s32.f32 %v2417
        %v4018 = vcvt.s32.f32 %v2418
        %v4019 = vcvt.s32.f32 %v2419
        %v4020 = vcvt.s32.f32 %v2420
        %v4021 = vcvt.s32.f32 %v2421
        %v4022 = vcvt.s32.f32 %v2422
        %v4023 = vcvt.s32.f32 %v2423
        %v4024 = vcvt.s32.f32 %v2424
        %v4025 = vcvt.s32.f32 %v2425
        %v4026 = vcvt.s32.f32 %v2426
        %v4027 = vcvt.s32.f32 %v2427
        %v4028 = vcvt.s32.f32 %v2428
        %v4029 = vcvt.s32.f32 %v2429
        %v4030 = vcvt.s32.f32 %v2430
        %v4031 = vcvt.s32.f32 %v2431
        %v4032 = vcvt.s32.f32 %v2432
        %v4033 = vcvt.s32.f32 %v2433
        %v4034 = vcvt.s32.f32 %v2434
        %v4035 = vcvt.s32.f32 %v2435
        %v4036 = vcvt.s32.f32 %v2436
        %v4037 = vcvt.s32.f32 %v2437
        %v4038 = vcvt.s32.f32 %v2438
        %v4039 = vcvt.s32.f32 %v2439
        %v4040 = vcvt.s32.f32 %v2440
        %v4041 = vcvt.s32.f32 %v2441
        %v4042 = vcvt.s32.f32 %v2442
        %v4043 = vcvt.s32.f32 %v2443
        %v4044 = vcvt.s32.f32 %v2444
        %v4045 = vcvt.s32.f32 %v2445
        %v4046 = vcvt.s32.f32 %v2446
        %v4047 = vcvt.s32.f32 %v2447
        %v4048 = vcvt.s32.f32 %v2448
        %v4049 = vcvt.s32.f32 %v2449
        %v4050 = vcvt.s32.f32 %v2450
        %v4051 = vcvt.s32.f32 %v2451
        %v4052 = vcvt.s32.f32 %v2452
        %v4053 = vcvt.s32.f32 %v2453
        %v4054 = vcvt.s32.f32 %v2454
        %v4055 = vcvt.s32.f32 %v2455
        %v4056 = vcvt.s32.f32 %v2456
        %v4057 = vcvt.s32.f32 %v2457
        %v4058 = vcvt.s32.f32 %v2458
        %v4059 = vcvt.s32.f32 %v2459
        %v4060 = vcvt.s32.f32 %v2460
        %v4061 = vcvt.s32.f32 %v2461
        %v4062 = vcvt.s32.f32 %v2462
        %v4063 = vcvt.s32.f32 %v2463
        %v4064 = vcvt.s32.f32 %v2464
        %v4065 = vcvt.s32.f32 %v2465
        %v4066 = vcvt.s32.f32 %v2466
        %v4067 = vcvt.s32.f32 %v2467
        %v4068 = vcvt.s32.f32 %v2468
        %v4069 = vcvt.s32.f32 %v2469
        %v4070 = vcvt.s32.f32 %v2470
        %v4071 = vcvt.s32.f32 %v2471
        %v4072 = vcvt.s32.f32 %v2472
        %v4073 = vcvt.s32.f32 %v2473
        %v4074 = vcvt.s32.f32 %v2474
        %v4075 = vcvt.s32.f32 %v2475
        %v4076 = vcvt.s32.f32 %v2476
        %v4077 = vcvt.s32.f32 %v2477
        %v4078 = vcvt.s32.f32 %v2478
        %v4079 = vcvt.s32.f32 %v2479
        %v4080 = vcvt.s32.f32 %v2480
        %v4081 = vcvt.s32.f32 %v2481
        %v4082 = vcvt.s32.f32 %v2482
        %v4083 = vcvt.s32.f32 %v2483
        %v4084 = vcvt.s32.f32 %v2484
        %v4085 = vcvt.s32.f32 %v2485
        %v4086 = vcvt.s32.f32 %v2486
        %v4087 = vcvt.s32.f32 %v2487
        %v4088 = vcvt.s32.f32 %v2488
        %v4092 = vcombine.high %v486, %v486
        %v4094 = vunpack.c.l.s4 1983009808
        %v4095 = vunpack.c.0.s8 %v4094
        %v4096 = vlaneseq
        %v4097 = vshrl.u32 %v4096, 7
        %v4098 = vsub.s32 %v4095, %v4097
        %v4099 = vrot.slane %v486, %v4098
        %v4101 = vunpack.c.l.s4 1983009808
        %v4102 = vunpack.c.0.s8 %v4101
        %v4103 = vlaneseq
        %v4104 = vshrl.u32 %v4103, 7
        %v4105 = vsub.s32 %v4102, %v4104
        %v4106 = vrot.slane %v4092, %v4105
        %v4107 = vcombine.high %v4099, %v4099
        %v4108 = vcombine.high %v4106, %v4106
        %v4109 = vcombine.high %v487, %v487
        %v4111 = vunpack.c.l.s4 1983009808
        %v4112 = vunpack.c.0.s8 %v4111
        %v4113 = vlaneseq
        %v4114 = vshrl.u32 %v4113, 7
        %v4115 = vsub.s32 %v4112, %v4114
        %v4116 = vrot.slane %v487, %v4115
        %v4118 = vunpack.c.l.s4 1983009808
        %v4119 = vunpack.c.0.s8 %v4118
        %v4120 = vlaneseq
        %v4121 = vshrl.u32 %v4120, 7
        %v4122 = vsub.s32 %v4119, %v4121
        %v4123 = vrot.slane %v4109, %v4122
        %v4124 = vcombine.high %v4116, %v4116
        %v4125 = vcombine.high %v4123, %v4123
        %v4127 = vunpack.c.l.s4 1983009808
        %v4128 = vunpack.c.0.s8 %v4127
        %v4129 = vlaneseq
        %v4130 = vshrl.u32 %v4129, 7
        %v4131 = vsub.s32 %v4128, %v4130
        %v4132 = vrot.slane %v488, %v4131
        %v4133 = vcombine.high %v4132, %v4132
        %4144 = vmatprep.subr.mxu0 %v2640
        %4145 = vmatpush1.msra.mxu0 %v2639
        %4146 = vmatprep.subr.mxu0 %v2630
        %4147 = vmatpush1.msra.mxu0 %v2629
        %4148 = vmatprep.subr.mxu0 %v2620
        %4149 = vmatpush1.msra.mxu0 %v2619
        %4150 = vmatprep.subr.mxu0 %v2610
        %4151 = vmatpush1.msra.mxu0 %v2609
        %4152 = vmatprep.subr.mxu0 %v2600
        %4153 = vmatpush1.msra.mxu0 %v2599
        %4154 = vmatprep.subr.mxu0 %v2590
        %4155 = vmatpush1.msra.mxu0 %v2589
        %4156 = vmatprep.subr.mxu0 %v2580
        %4157 = vmatpush1.msra.mxu0 %v2579
        %4158 = vmatprep.subr.mxu0 %v2570
        %4159 = vmatpush1.msra.mxu0 %v2569
        %4160 = vmatprep.subr.mxu0 %v2560
        %4161 = vmatpush1.msra.mxu0 %v2559
        %4162 = vmatprep.subr.mxu0 %v2550
        %4163 = vmatpush1.msra.mxu0 %v2549
        %4164 = vmatprep.subr.mxu0 %v2540
        %4165 = vmatpush1.msra.mxu0 %v2539
        %4166 = vmatprep.subr.mxu0 %v2530
        %4167 = vmatpush1.msra.mxu0 %v2529
        %4168 = vmatprep.subr.mxu0 %v2520
        %4169 = vmatpush1.msra.mxu0 %v2519
        %4170 = vmatprep.subr.mxu0 %v2510
        %4171 = vmatpush1.msra.mxu0 %v2509
        %4172 = vmatprep.subr.mxu0 %v2500
        %4173 = vmatpush1.msra.mxu0 %v2499
        %4174 = vmatprep.subr.mxu0 %v2490
        %4175 = vmatpush1.msra.mxu0 %v2489
        %4176 = vmatprep.subr.mxu0 %v2800
        %4177 = vmatpush2.msra.mxu0 %v2799
        %4178 = vmatprep.subr.mxu0 %v2790
        %4179 = vmatpush2.msra.mxu0 %v2789
        %4180 = vmatprep.subr.mxu0 %v2780
        %4181 = vmatpush2.msra.mxu0 %v2779
        %4182 = vmatprep.subr.mxu0 %v2770
        %4183 = vmatpush2.msra.mxu0 %v2769
        %4184 = vmatprep.subr.mxu0 %v2760
        %4185 = vmatpush2.msra.mxu0 %v2759
        %4186 = vmatprep.subr.mxu0 %v2750
        %4187 = vmatpush2.msra.mxu0 %v2749
        %4188 = vmatprep.subr.mxu0 %v2740
        %4189 = vmatpush2.msra.mxu0 %v2739
        %4190 = vmatprep.subr.mxu0 %v2730
        %4191 = vmatpush2.msra.mxu0 %v2729
        %4192 = vmatprep.subr.mxu0 %v2720
        %4193 = vmatpush2.msra.mxu0 %v2719
        %4194 = vmatprep.subr.mxu0 %v2710
        %4195 = vmatpush2.msra.mxu0 %v2709
        %4196 = vmatprep.subr.mxu0 %v2700
        %4197 = vmatpush2.msra.mxu0 %v2699
        %4198 = vmatprep.subr.mxu0 %v2690
        %4199 = vmatpush2.msra.mxu0 %v2689
        %4200 = vmatprep.subr.mxu0 %v2680
        %4201 = vmatpush2.msra.mxu0 %v2679
        %4202 = vmatprep.subr.mxu0 %v2670
        %4203 = vmatpush2.msra.mxu0 %v2669
        %4204 = vmatprep.subr.mxu0 %v2660
        %4205 = vmatpush2.msra.mxu0 %v2659
        %4206 = vmatprep.subr.mxu0 %v2650
        %4207 = vmatpush2.msra.mxu0 %v2649
        %4208 = vmatprep.mubr.f32.mxu0 %v4107
        %4209 = vmatmul.mubr.f32.gmra.mxu0 %v4099
        %v4210 = vpop.f32.mrf.mxu0
        %v4211 = vadd.f32 0.0, %v4210
        %v4212 = vpop.f32.mrf.mxu0
        %v4213 = vadd.f32 0.0, %v4212
        %4214 = vdwg.mxu0
        %4215 = vmatprep.subr.mxu0 %v2960
        %4216 = vmatpush1.msra.mxu0 %v2959
        %4217 = vmatprep.subr.mxu0 %v2950
        %4218 = vmatpush1.msra.mxu0 %v2949
        %4219 = vmatprep.subr.mxu0 %v2940
        %4220 = vmatpush1.msra.mxu0 %v2939
        %4221 = vmatprep.subr.mxu0 %v2930
        %4222 = vmatpush1.msra.mxu0 %v2929
        %4223 = vmatprep.subr.mxu0 %v2920
        %4224 = vmatpush1.msra.mxu0 %v2919
        %4225 = vmatprep.subr.mxu0 %v2910
        %4226 = vmatpush1.msra.mxu0 %v2909
        %4227 = vmatprep.subr.mxu0 %v2900
        %4228 = vmatpush1.msra.mxu0 %v2899
        %4229 = vmatprep.subr.mxu0 %v2890
        %4230 = vmatpush1.msra.mxu0 %v2889
        %4231 = vmatprep.subr.mxu0 %v2880
        %4232 = vmatpush1.msra.mxu0 %v2879
        %4233 = vmatprep.subr.mxu0 %v2870
        %4234 = vmatpush1.msra.mxu0 %v2869
        %4235 = vmatprep.subr.mxu0 %v2860
        %4236 = vmatpush1.msra.mxu0 %v2859
        %4237 = vmatprep.subr.mxu0 %v2850
        %4238 = vmatpush1.msra.mxu0 %v2849
        %4239 = vmatprep.subr.mxu0 %v2840
        %4240 = vmatpush1.msra.mxu0 %v2839
        %4241 = vmatprep.subr.mxu0 %v2830
        %4242 = vmatpush1.msra.mxu0 %v2829
        %4243 = vmatprep.subr.mxu0 %v2820
        %4244 = vmatpush1.msra.mxu0 %v2819
        %4245 = vmatprep.subr.mxu0 %v2810
        %4246 = vmatpush1.msra.mxu0 %v2809
        %4247 = vmatprep.subr.mxu0 %v3120
        %4248 = vmatpush2.msra.mxu0 %v3119
        %4249 = vmatprep.subr.mxu0 %v3110
        %4250 = vmatpush2.msra.mxu0 %v3109
        %4251 = vmatprep.subr.mxu0 %v3100
        %4252 = vmatpush2.msra.mxu0 %v3099
        %4253 = vmatprep.subr.mxu0 %v3090
        %4254 = vmatpush2.msra.mxu0 %v3089
        %4255 = vmatprep.subr.mxu0 %v3080
        %4256 = vmatpush2.msra.mxu0 %v3079
        %4257 = vmatprep.subr.mxu0 %v3070
        %4258 = vmatpush2.msra.mxu0 %v3069
        %4259 = vmatprep.subr.mxu0 %v3060
        %4260 = vmatpush2.msra.mxu0 %v3059
        %4261 = vmatprep.subr.mxu0 %v3050
        %4262 = vmatpush2.msra.mxu0 %v3049
        %4263 = vmatprep.subr.mxu0 %v3040
        %4264 = vmatpush2.msra.mxu0 %v3039
        %4265 = vmatprep.subr.mxu0 %v3030
        %4266 = vmatpush2.msra.mxu0 %v3029
        %4267 = vmatprep.subr.mxu0 %v3020
        %4268 = vmatpush2.msra.mxu0 %v3019
        %4269 = vmatprep.subr.mxu0 %v3010
        %4270 = vmatpush2.msra.mxu0 %v3009
        %4271 = vmatprep.subr.mxu0 %v3000
        %4272 = vmatpush2.msra.mxu0 %v2999
        %4273 = vmatprep.subr.mxu0 %v2990
        %4274 = vmatpush2.msra.mxu0 %v2989
        %4275 = vmatprep.subr.mxu0 %v2980
        %4276 = vmatpush2.msra.mxu0 %v2979
        %4277 = vmatprep.subr.mxu0 %v2970
        %4278 = vmatpush2.msra.mxu0 %v2969
        %4279 = vmatprep.mubr.f32.mxu0 %v4108
        %4280 = vmatmul.mubr.f32.gmra.mxu0 %v4106
        %v4281 = vpop.f32.mrf.mxu0
        %v4282 = vadd.f32 %v4211, %v4281
        %v4283 = vpop.f32.mrf.mxu0
        %v4284 = vadd.f32 %v4213, %v4283
        %4285 = vdwg.mxu0
        %4286 = vmatprep.subr.mxu0 %v3280
        %4287 = vmatpush1.msra.mxu0 %v3279
        %4288 = vmatprep.subr.mxu0 %v3270
        %4289 = vmatpush1.msra.mxu0 %v3269
        %4290 = vmatprep.subr.mxu0 %v3260
        %4291 = vmatpush1.msra.mxu0 %v3259
        %4292 = vmatprep.subr.mxu0 %v3250
        %4293 = vmatpush1.msra.mxu0 %v3249
        %4294 = vmatprep.subr.mxu0 %v3240
        %4295 = vmatpush1.msra.mxu0 %v3239
        %4296 = vmatprep.subr.mxu0 %v3230
        %4297 = vmatpush1.msra.mxu0 %v3229
        %4298 = vmatprep.subr.mxu0 %v3220
        %4299 = vmatpush1.msra.mxu0 %v3219
        %4300 = vmatprep.subr.mxu0 %v3210
        %4301 = vmatpush1.msra.mxu0 %v3209
        %4302 = vmatprep.subr.mxu0 %v3200
        %4303 = vmatpush1.msra.mxu0 %v3199
        %4304 = vmatprep.subr.mxu0 %v3190
        %4305 = vmatpush1.msra.mxu0 %v3189
        %4306 = vmatprep.subr.mxu0 %v3180
        %4307 = vmatpush1.msra.mxu0 %v3179
        %4308 = vmatprep.subr.mxu0 %v3170
        %4309 = vmatpush1.msra.mxu0 %v3169
        %4310 = vmatprep.subr.mxu0 %v3160
        %4311 = vmatpush1.msra.mxu0 %v3159
        %4312 = vmatprep.subr.mxu0 %v3150
        %4313 = vmatpush1.msra.mxu0 %v3149
        %4314 = vmatprep.subr.mxu0 %v3140
        %4315 = vmatpush1.msra.mxu0 %v3139
        %4316 = vmatprep.subr.mxu0 %v3130
        %4317 = vmatpush1.msra.mxu0 %v3129
        %4318 = vmatprep.subr.mxu0 %v3440
        %4319 = vmatpush2.msra.mxu0 %v3439
        %4320 = vmatprep.subr.mxu0 %v3430
        %4321 = vmatpush2.msra.mxu0 %v3429
        %4322 = vmatprep.subr.mxu0 %v3420
        %4323 = vmatpush2.msra.mxu0 %v3419
        %4324 = vmatprep.subr.mxu0 %v3410
        %4325 = vmatpush2.msra.mxu0 %v3409
        %4326 = vmatprep.subr.mxu0 %v3400
        %4327 = vmatpush2.msra.mxu0 %v3399
        %4328 = vmatprep.subr.mxu0 %v3390
        %4329 = vmatpush2.msra.mxu0 %v3389
        %4330 = vmatprep.subr.mxu0 %v3380
        %4331 = vmatpush2.msra.mxu0 %v3379
        %4332 = vmatprep.subr.mxu0 %v3370
        %4333 = vmatpush2.msra.mxu0 %v3369
        %4334 = vmatprep.subr.mxu0 %v3360
        %4335 = vmatpush2.msra.mxu0 %v3359
        %4336 = vmatprep.subr.mxu0 %v3350
        %4337 = vmatpush2.msra.mxu0 %v3349
        %4338 = vmatprep.subr.mxu0 %v3340
        %4339 = vmatpush2.msra.mxu0 %v3339
        %4340 = vmatprep.subr.mxu0 %v3330
        %4341 = vmatpush2.msra.mxu0 %v3329
        %4342 = vmatprep.subr.mxu0 %v3320
        %4343 = vmatpush2.msra.mxu0 %v3319
        %4344 = vmatprep.subr.mxu0 %v3310
        %4345 = vmatpush2.msra.mxu0 %v3309
        %4346 = vmatprep.subr.mxu0 %v3300
        %4347 = vmatpush2.msra.mxu0 %v3299
        %4348 = vmatprep.subr.mxu0 %v3290
        %4349 = vmatpush2.msra.mxu0 %v3289
        %4350 = vmatprep.mubr.f32.mxu0 %v4124
        %4351 = vmatmul.mubr.f32.gmra.mxu0 %v4116
        %v4352 = vpop.f32.mrf.mxu0
        %v4353 = vadd.f32 %v4282, %v4352
        %v4354 = vpop.f32.mrf.mxu0
        %v4355 = vadd.f32 %v4284, %v4354
        %4356 = vdwg.mxu0
        %4357 = vmatprep.subr.mxu0 %v3600
        %4358 = vmatpush1.msra.mxu0 %v3599
        %4359 = vmatprep.subr.mxu0 %v3590
        %4360 = vmatpush1.msra.mxu0 %v3589
        %4361 = vmatprep.subr.mxu0 %v3580
        %4362 = vmatpush1.msra.mxu0 %v3579
        %4363 = vmatprep.subr.mxu0 %v3570
        %4364 = vmatpush1.msra.mxu0 %v3569
        %4365 = vmatprep.subr.mxu0 %v3560
        %4366 = vmatpush1.msra.mxu0 %v3559
        %4367 = vmatprep.subr.mxu0 %v3550
        %4368 = vmatpush1.msra.mxu0 %v3549
        %4369 = vmatprep.subr.mxu0 %v3540
        %4370 = vmatpush1.msra.mxu0 %v3539
        %4371 = vmatprep.subr.mxu0 %v3530
        %4372 = vmatpush1.msra.mxu0 %v3529
        %4373 = vmatprep.subr.mxu0 %v3520
        %4374 = vmatpush1.msra.mxu0 %v3519
        %4375 = vmatprep.subr.mxu0 %v3510
        %4376 = vmatpush1.msra.mxu0 %v3509
        %4377 = vmatprep.subr.mxu0 %v3500
        %4378 = vmatpush1.msra.mxu0 %v3499
        %4379 = vmatprep.subr.mxu0 %v3490
        %4380 = vmatpush1.msra.mxu0 %v3489
        %4381 = vmatprep.subr.mxu0 %v3480
        %4382 = vmatpush1.msra.mxu0 %v3479
        %4383 = vmatprep.subr.mxu0 %v3470
        %4384 = vmatpush1.msra.mxu0 %v3469
        %4385 = vmatprep.subr.mxu0 %v3460
        %4386 = vmatpush1.msra.mxu0 %v3459
        %4387 = vmatprep.subr.mxu0 %v3450
        %4388 = vmatpush1.msra.mxu0 %v3449
        %4389 = vmatprep.subr.mxu0 %v3760
        %4390 = vmatpush2.msra.mxu0 %v3759
        %4391 = vmatprep.subr.mxu0 %v3750
        %4392 = vmatpush2.msra.mxu0 %v3749
        %4393 = vmatprep.subr.mxu0 %v3740
        %4394 = vmatpush2.msra.mxu0 %v3739
        %4395 = vmatprep.subr.mxu0 %v3730
        %4396 = vmatpush2.msra.mxu0 %v3729
        %4397 = vmatprep.subr.mxu0 %v3720
        %4398 = vmatpush2.msra.mxu0 %v3719
        %4399 = vmatprep.subr.mxu0 %v3710
        %4400 = vmatpush2.msra.mxu0 %v3709
        %4401 = vmatprep.subr.mxu0 %v3700
        %4402 = vmatpush2.msra.mxu0 %v3699
        %4403 = vmatprep.subr.mxu0 %v3690
        %4404 = vmatpush2.msra.mxu0 %v3689
        %4405 = vmatprep.subr.mxu0 %v3680
        %4406 = vmatpush2.msra.mxu0 %v3679
        %4407 = vmatprep.subr.mxu0 %v3670
        %4408 = vmatpush2.msra.mxu0 %v3669
        %4409 = vmatprep.subr.mxu0 %v3660
        %4410 = vmatpush2.msra.mxu0 %v3659
        %4411 = vmatprep.subr.mxu0 %v3650
        %4412 = vmatpush2.msra.mxu0 %v3649
        %4413 = vmatprep.subr.mxu0 %v3640
        %4414 = vmatpush2.msra.mxu0 %v3639
        %4415 = vmatprep.subr.mxu0 %v3630
        %4416 = vmatpush2.msra.mxu0 %v3629
        %4417 = vmatprep.subr.mxu0 %v3620
        %4418 = vmatpush2.msra.mxu0 %v3619
        %4419 = vmatprep.subr.mxu0 %v3610
        %4420 = vmatpush2.msra.mxu0 %v3609
        %4421 = vmatprep.mubr.f32.mxu0 %v4125
        %4422 = vmatmul.mubr.f32.gmra.mxu0 %v4123
        %v4423 = vpop.f32.mrf.mxu0
        %v4424 = vadd.f32 %v4353, %v4423
        %v4425 = vpop.f32.mrf.mxu0
        %v4426 = vadd.f32 %v4355, %v4425
        %4427 = vdwg.mxu0
        %4428 = vmatprep.subr.mxu0 %v3920
        %4429 = vmatpush1.msra.mxu0 %v3919
        %4430 = vmatprep.subr.mxu0 %v3910
        %4431 = vmatpush1.msra.mxu0 %v3909
        %4432 = vmatprep.subr.mxu0 %v3900
        %4433 = vmatpush1.msra.mxu0 %v3899
        %4434 = vmatprep.subr.mxu0 %v3890
        %4435 = vmatpush1.msra.mxu0 %v3889
        %4436 = vmatprep.subr.mxu0 %v3880
        %4437 = vmatpush1.msra.mxu0 %v3879
        %4438 = vmatprep.subr.mxu0 %v3870
        %4439 = vmatpush1.msra.mxu0 %v3869
        %4440 = vmatprep.subr.mxu0 %v3860
        %4441 = vmatpush1.msra.mxu0 %v3859
        %4442 = vmatprep.subr.mxu0 %v3850
        %4443 = vmatpush1.msra.mxu0 %v3849
        %4444 = vmatprep.subr.mxu0 %v3840
        %4445 = vmatpush1.msra.mxu0 %v3839
        %4446 = vmatprep.subr.mxu0 %v3830
        %4447 = vmatpush1.msra.mxu0 %v3829
        %4448 = vmatprep.subr.mxu0 %v3820
        %4449 = vmatpush1.msra.mxu0 %v3819
        %4450 = vmatprep.subr.mxu0 %v3810
        %4451 = vmatpush1.msra.mxu0 %v3809
        %4452 = vmatprep.subr.mxu0 %v3800
        %4453 = vmatpush1.msra.mxu0 %v3799
        %4454 = vmatprep.subr.mxu0 %v3790
        %4455 = vmatpush1.msra.mxu0 %v3789
        %4456 = vmatprep.subr.mxu0 %v3780
        %4457 = vmatpush1.msra.mxu0 %v3779
        %4458 = vmatprep.subr.mxu0 %v3770
        %4459 = vmatpush1.msra.mxu0 %v3769
        %4460 = vmatprep.subr.mxu0 %v4080
        %4461 = vmatpush2.msra.mxu0 %v4079
        %4462 = vmatprep.subr.mxu0 %v4070
        %4463 = vmatpush2.msra.mxu0 %v4069
        %4464 = vmatprep.subr.mxu0 %v4060
        %4465 = vmatpush2.msra.mxu0 %v4059
        %4466 = vmatprep.subr.mxu0 %v4050
        %4467 = vmatpush2.msra.mxu0 %v4049
        %4468 = vmatprep.subr.mxu0 %v4040
        %4469 = vmatpush2.msra.mxu0 %v4039
        %4470 = vmatprep.subr.mxu0 %v4030
        %4471 = vmatpush2.msra.mxu0 %v4029
        %4472 = vmatprep.subr.mxu0 %v4020
        %4473 = vmatpush2.msra.mxu0 %v4019
        %4474 = vmatprep.subr.mxu0 %v4010
        %4475 = vmatpush2.msra.mxu0 %v4009
        %4476 = vmatprep.subr.mxu0 %v4000
        %4477 = vmatpush2.msra.mxu0 %v3999
        %4478 = vmatprep.subr.mxu0 %v3990
        %4479 = vmatpush2.msra.mxu0 %v3989
        %4480 = vmatprep.subr.mxu0 %v3980
        %4481 = vmatpush2.msra.mxu0 %v3979
        %4482 = vmatprep.subr.mxu0 %v3970
        %4483 = vmatpush2.msra.mxu0 %v3969
        %4484 = vmatprep.subr.mxu0 %v3960
        %4485 = vmatpush2.msra.mxu0 %v3959
        %4486 = vmatprep.subr.mxu0 %v3950
        %4487 = vmatpush2.msra.mxu0 %v3949
        %4488 = vmatprep.subr.mxu0 %v3940
        %4489 = vmatpush2.msra.mxu0 %v3939
        %4490 = vmatprep.subr.mxu0 %v3930
        %4491 = vmatpush2.msra.mxu0 %v3929
        %4492 = vmatprep.mubr.f32.mxu0 %v4133
        %4493 = vmatmul.mubr.f32.gmra.mxu0 %v4132
        %v4494 = vpop.f32.mrf.mxu0
        %v4495 = vadd.f32 %v4424, %v4494
        %v4496 = vpop.f32.mrf.mxu0
        %v4497 = vadd.f32 %v4426, %v4496
        %4498 = vdwg.mxu0
        %4499 = vmatprep.subr.mxu0 %v2642
        %4500 = vmatpush1.msra.mxu0 %v2641
        %4501 = vmatprep.subr.mxu0 %v2632
        %4502 = vmatpush1.msra.mxu0 %v2631
        %4503 = vmatprep.subr.mxu0 %v2622
        %4504 = vmatpush1.msra.mxu0 %v2621
        %4505 = vmatprep.subr.mxu0 %v2612
        %4506 = vmatpush1.msra.mxu0 %v2611
        %4507 = vmatprep.subr.mxu0 %v2602
        %4508 = vmatpush1.msra.mxu0 %v2601
        %4509 = vmatprep.subr.mxu0 %v2592
        %4510 = vmatpush1.msra.mxu0 %v2591
        %4511 = vmatprep.subr.mxu0 %v2582
        %4512 = vmatpush1.msra.mxu0 %v2581
        %4513 = vmatprep.subr.mxu0 %v2572
        %4514 = vmatpush1.msra.mxu0 %v2571
        %4515 = vmatprep.subr.mxu0 %v2562
        %4516 = vmatpush1.msra.mxu0 %v2561
        %4517 = vmatprep.subr.mxu0 %v2552
        %4518 = vmatpush1.msra.mxu0 %v2551
        %4519 = vmatprep.subr.mxu0 %v2542
        %4520 = vmatpush1.msra.mxu0 %v2541
        %4521 = vmatprep.subr.mxu0 %v2532
        %4522 = vmatpush1.msra.mxu0 %v2531
        %4523 = vmatprep.subr.mxu0 %v2522
        %4524 = vmatpush1.msra.mxu0 %v2521
        %4525 = vmatprep.subr.mxu0 %v2512
        %4526 = vmatpush1.msra.mxu0 %v2511
        %4527 = vmatprep.subr.mxu0 %v2502
        %4528 = vmatpush1.msra.mxu0 %v2501
        %4529 = vmatprep.subr.mxu0 %v2492
        %4530 = vmatpush1.msra.mxu0 %v2491
        %4531 = vmatprep.subr.mxu0 %v2802
        %4532 = vmatpush2.msra.mxu0 %v2801
        %4533 = vmatprep.subr.mxu0 %v2792
        %4534 = vmatpush2.msra.mxu0 %v2791
        %4535 = vmatprep.subr.mxu0 %v2782
        %4536 = vmatpush2.msra.mxu0 %v2781
        %4537 = vmatprep.subr.mxu0 %v2772
        %4538 = vmatpush2.msra.mxu0 %v2771
        %4539 = vmatprep.subr.mxu0 %v2762
        %4540 = vmatpush2.msra.mxu0 %v2761
        %4541 = vmatprep.subr.mxu0 %v2752
        %4542 = vmatpush2.msra.mxu0 %v2751
        %4543 = vmatprep.subr.mxu0 %v2742
        %4544 = vmatpush2.msra.mxu0 %v2741
        %4545 = vmatprep.subr.mxu0 %v2732
        %4546 = vmatpush2.msra.mxu0 %v2731
        %4547 = vmatprep.subr.mxu0 %v2722
        %4548 = vmatpush2.msra.mxu0 %v2721
        %4549 = vmatprep.subr.mxu0 %v2712
        %4550 = vmatpush2.msra.mxu0 %v2711
        %4551 = vmatprep.subr.mxu0 %v2702
        %4552 = vmatpush2.msra.mxu0 %v2701
        %4553 = vmatprep.subr.mxu0 %v2692
        %4554 = vmatpush2.msra.mxu0 %v2691
        %4555 = vmatprep.subr.mxu0 %v2682
        %4556 = vmatpush2.msra.mxu0 %v2681
        %4557 = vmatprep.subr.mxu0 %v2672
        %4558 = vmatpush2.msra.mxu0 %v2671
        %4559 = vmatprep.subr.mxu0 %v2662
        %4560 = vmatpush2.msra.mxu0 %v2661
        %4561 = vmatprep.subr.mxu0 %v2652
        %4562 = vmatpush2.msra.mxu0 %v2651
        %4563 = vmatprep.mubr.f32.mxu0 %v4107
        %4564 = vmatmul.mubr.f32.gmra.mxu0 %v4099
        %v4565 = vpop.f32.mrf.mxu0
        %v4566 = vadd.f32 0.0, %v4565
        %v4567 = vpop.f32.mrf.mxu0
        %v4568 = vadd.f32 0.0, %v4567
        %4569 = vdwg.mxu0
        %4570 = vmatprep.subr.mxu0 %v2962
        %4571 = vmatpush1.msra.mxu0 %v2961
        %4572 = vmatprep.subr.mxu0 %v2952
        %4573 = vmatpush1.msra.mxu0 %v2951
        %4574 = vmatprep.subr.mxu0 %v2942
        %4575 = vmatpush1.msra.mxu0 %v2941
        %4576 = vmatprep.subr.mxu0 %v2932
        %4577 = vmatpush1.msra.mxu0 %v2931
        %4578 = vmatprep.subr.mxu0 %v2922
        %4579 = vmatpush1.msra.mxu0 %v2921
        %4580 = vmatprep.subr.mxu0 %v2912
        %4581 = vmatpush1.msra.mxu0 %v2911
        %4582 = vmatprep.subr.mxu0 %v2902
        %4583 = vmatpush1.msra.mxu0 %v2901
        %4584 = vmatprep.subr.mxu0 %v2892
        %4585 = vmatpush1.msra.mxu0 %v2891
        %4586 = vmatprep.subr.mxu0 %v2882
        %4587 = vmatpush1.msra.mxu0 %v2881
        %4588 = vmatprep.subr.mxu0 %v2872
        %4589 = vmatpush1.msra.mxu0 %v2871
        %4590 = vmatprep.subr.mxu0 %v2862
        %4591 = vmatpush1.msra.mxu0 %v2861
        %4592 = vmatprep.subr.mxu0 %v2852
        %4593 = vmatpush1.msra.mxu0 %v2851
        %4594 = vmatprep.subr.mxu0 %v2842
        %4595 = vmatpush1.msra.mxu0 %v2841
        %4596 = vmatprep.subr.mxu0 %v2832
        %4597 = vmatpush1.msra.mxu0 %v2831
        %4598 = vmatprep.subr.mxu0 %v2822
        %4599 = vmatpush1.msra.mxu0 %v2821
        %4600 = vmatprep.subr.mxu0 %v2812
        %4601 = vmatpush1.msra.mxu0 %v2811
        %4602 = vmatprep.subr.mxu0 %v3122
        %4603 = vmatpush2.msra.mxu0 %v3121
        %4604 = vmatprep.subr.mxu0 %v3112
        %4605 = vmatpush2.msra.mxu0 %v3111
        %4606 = vmatprep.subr.mxu0 %v3102
        %4607 = vmatpush2.msra.mxu0 %v3101
        %4608 = vmatprep.subr.mxu0 %v3092
        %4609 = vmatpush2.msra.mxu0 %v3091
        %4610 = vmatprep.subr.mxu0 %v3082
        %4611 = vmatpush2.msra.mxu0 %v3081
        %4612 = vmatprep.subr.mxu0 %v3072
        %4613 = vmatpush2.msra.mxu0 %v3071
        %4614 = vmatprep.subr.mxu0 %v3062
        %4615 = vmatpush2.msra.mxu0 %v3061
        %4616 = vmatprep.subr.mxu0 %v3052
        %4617 = vmatpush2.msra.mxu0 %v3051
        %4618 = vmatprep.subr.mxu0 %v3042
        %4619 = vmatpush2.msra.mxu0 %v3041
        %4620 = vmatprep.subr.mxu0 %v3032
        %4621 = vmatpush2.msra.mxu0 %v3031
        %4622 = vmatprep.subr.mxu0 %v3022
        %4623 = vmatpush2.msra.mxu0 %v3021
        %4624 = vmatprep.subr.mxu0 %v3012
        %4625 = vmatpush2.msra.mxu0 %v3011
        %4626 = vmatprep.subr.mxu0 %v3002
        %4627 = vmatpush2.msra.mxu0 %v3001
        %4628 = vmatprep.subr.mxu0 %v2992
        %4629 = vmatpush2.msra.mxu0 %v2991
        %4630 = vmatprep.subr.mxu0 %v2982
        %4631 = vmatpush2.msra.mxu0 %v2981
        %4632 = vmatprep.subr.mxu0 %v2972
        %4633 = vmatpush2.msra.mxu0 %v2971
        %4634 = vmatprep.mubr.f32.mxu0 %v4108
        %4635 = vmatmul.mubr.f32.gmra.mxu0 %v4106
        %v4636 = vpop.f32.mrf.mxu0
        %v4637 = vadd.f32 %v4566, %v4636
        %v4638 = vpop.f32.mrf.mxu0
        %v4639 = vadd.f32 %v4568, %v4638
        %4640 = vdwg.mxu0
        %4641 = vmatprep.subr.mxu0 %v3282
        %4642 = vmatpush1.msra.mxu0 %v3281
        %4643 = vmatprep.subr.mxu0 %v3272
        %4644 = vmatpush1.msra.mxu0 %v3271
        %4645 = vmatprep.subr.mxu0 %v3262
        %4646 = vmatpush1.msra.mxu0 %v3261
        %4647 = vmatprep.subr.mxu0 %v3252
        %4648 = vmatpush1.msra.mxu0 %v3251
        %4649 = vmatprep.subr.mxu0 %v3242
        %4650 = vmatpush1.msra.mxu0 %v3241
        %4651 = vmatprep.subr.mxu0 %v3232
        %4652 = vmatpush1.msra.mxu0 %v3231
        %4653 = vmatprep.subr.mxu0 %v3222
        %4654 = vmatpush1.msra.mxu0 %v3221
        %4655 = vmatprep.subr.mxu0 %v3212
        %4656 = vmatpush1.msra.mxu0 %v3211
        %4657 = vmatprep.subr.mxu0 %v3202
        %4658 = vmatpush1.msra.mxu0 %v3201
        %4659 = vmatprep.subr.mxu0 %v3192
        %4660 = vmatpush1.msra.mxu0 %v3191
        %4661 = vmatprep.subr.mxu0 %v3182
        %4662 = vmatpush1.msra.mxu0 %v3181
        %4663 = vmatprep.subr.mxu0 %v3172
        %4664 = vmatpush1.msra.mxu0 %v3171
        %4665 = vmatprep.subr.mxu0 %v3162
        %4666 = vmatpush1.msra.mxu0 %v3161
        %4667 = vmatprep.subr.mxu0 %v3152
        %4668 = vmatpush1.msra.mxu0 %v3151
        %4669 = vmatprep.subr.mxu0 %v3142
        %4670 = vmatpush1.msra.mxu0 %v3141
        %4671 = vmatprep.subr.mxu0 %v3132
        %4672 = vmatpush1.msra.mxu0 %v3131
        %4673 = vmatprep.subr.mxu0 %v3442
        %4674 = vmatpush2.msra.mxu0 %v3441
        %4675 = vmatprep.subr.mxu0 %v3432
        %4676 = vmatpush2.msra.mxu0 %v3431
        %4677 = vmatprep.subr.mxu0 %v3422
        %4678 = vmatpush2.msra.mxu0 %v3421
        %4679 = vmatprep.subr.mxu0 %v3412
        %4680 = vmatpush2.msra.mxu0 %v3411
        %4681 = vmatprep.subr.mxu0 %v3402
        %4682 = vmatpush2.msra.mxu0 %v3401
        %4683 = vmatprep.subr.mxu0 %v3392
        %4684 = vmatpush2.msra.mxu0 %v3391
        %4685 = vmatprep.subr.mxu0 %v3382
        %4686 = vmatpush2.msra.mxu0 %v3381
        %4687 = vmatprep.subr.mxu0 %v3372
        %4688 = vmatpush2.msra.mxu0 %v3371
        %4689 = vmatprep.subr.mxu0 %v3362
        %4690 = vmatpush2.msra.mxu0 %v3361
        %4691 = vmatprep.subr.mxu0 %v3352
        %4692 = vmatpush2.msra.mxu0 %v3351
        %4693 = vmatprep.subr.mxu0 %v3342
        %4694 = vmatpush2.msra.mxu0 %v3341
        %4695 = vmatprep.subr.mxu0 %v3332
        %4696 = vmatpush2.msra.mxu0 %v3331
        %4697 = vmatprep.subr.mxu0 %v3322
        %4698 = vmatpush2.msra.mxu0 %v3321
        %4699 = vmatprep.subr.mxu0 %v3312
        %4700 = vmatpush2.msra.mxu0 %v3311
        %4701 = vmatprep.subr.mxu0 %v3302
        %4702 = vmatpush2.msra.mxu0 %v3301
        %4703 = vmatprep.subr.mxu0 %v3292
        %4704 = vmatpush2.msra.mxu0 %v3291
        %4705 = vmatprep.mubr.f32.mxu0 %v4124
        %4706 = vmatmul.mubr.f32.gmra.mxu0 %v4116
        %v4707 = vpop.f32.mrf.mxu0
        %v4708 = vadd.f32 %v4637, %v4707
        %v4709 = vpop.f32.mrf.mxu0
        %v4710 = vadd.f32 %v4639, %v4709
        %4711 = vdwg.mxu0
        %4712 = vmatprep.subr.mxu0 %v3602
        %4713 = vmatpush1.msra.mxu0 %v3601
        %4714 = vmatprep.subr.mxu0 %v3592
        %4715 = vmatpush1.msra.mxu0 %v3591
        %4716 = vmatprep.subr.mxu0 %v3582
        %4717 = vmatpush1.msra.mxu0 %v3581
        %4718 = vmatprep.subr.mxu0 %v3572
        %4719 = vmatpush1.msra.mxu0 %v3571
        %4720 = vmatprep.subr.mxu0 %v3562
        %4721 = vmatpush1.msra.mxu0 %v3561
        %4722 = vmatprep.subr.mxu0 %v3552
        %4723 = vmatpush1.msra.mxu0 %v3551
        %4724 = vmatprep.subr.mxu0 %v3542
        %4725 = vmatpush1.msra.mxu0 %v3541
        %4726 = vmatprep.subr.mxu0 %v3532
        %4727 = vmatpush1.msra.mxu0 %v3531
        %4728 = vmatprep.subr.mxu0 %v3522
        %4729 = vmatpush1.msra.mxu0 %v3521
        %4730 = vmatprep.subr.mxu0 %v3512
        %4731 = vmatpush1.msra.mxu0 %v3511
        %4732 = vmatprep.subr.mxu0 %v3502
        %4733 = vmatpush1.msra.mxu0 %v3501
        %4734 = vmatprep.subr.mxu0 %v3492
        %4735 = vmatpush1.msra.mxu0 %v3491
        %4736 = vmatprep.subr.mxu0 %v3482
        %4737 = vmatpush1.msra.mxu0 %v3481
        %4738 = vmatprep.subr.mxu0 %v3472
        %4739 = vmatpush1.msra.mxu0 %v3471
        %4740 = vmatprep.subr.mxu0 %v3462
        %4741 = vmatpush1.msra.mxu0 %v3461
        %4742 = vmatprep.subr.mxu0 %v3452
        %4743 = vmatpush1.msra.mxu0 %v3451
        %4744 = vmatprep.subr.mxu0 %v3762
        %4745 = vmatpush2.msra.mxu0 %v3761
        %4746 = vmatprep.subr.mxu0 %v3752
        %4747 = vmatpush2.msra.mxu0 %v3751
        %4748 = vmatprep.subr.mxu0 %v3742
        %4749 = vmatpush2.msra.mxu0 %v3741
        %4750 = vmatprep.subr.mxu0 %v3732
        %4751 = vmatpush2.msra.mxu0 %v3731
        %4752 = vmatprep.subr.mxu0 %v3722
        %4753 = vmatpush2.msra.mxu0 %v3721
        %4754 = vmatprep.subr.mxu0 %v3712
        %4755 = vmatpush2.msra.mxu0 %v3711
        %4756 = vmatprep.subr.mxu0 %v3702
        %4757 = vmatpush2.msra.mxu0 %v3701
        %4758 = vmatprep.subr.mxu0 %v3692
        %4759 = vmatpush2.msra.mxu0 %v3691
        %4760 = vmatprep.subr.mxu0 %v3682
        %4761 = vmatpush2.msra.mxu0 %v3681
        %4762 = vmatprep.subr.mxu0 %v3672
        %4763 = vmatpush2.msra.mxu0 %v3671
        %4764 = vmatprep.subr.mxu0 %v3662
        %4765 = vmatpush2.msra.mxu0 %v3661
        %4766 = vmatprep.subr.mxu0 %v3652
        %4767 = vmatpush2.msra.mxu0 %v3651
        %4768 = vmatprep.subr.mxu0 %v3642
        %4769 = vmatpush2.msra.mxu0 %v3641
        %4770 = vmatprep.subr.mxu0 %v3632
        %4771 = vmatpush2.msra.mxu0 %v3631
        %4772 = vmatprep.subr.mxu0 %v3622
        %4773 = vmatpush2.msra.mxu0 %v3621
        %4774 = vmatprep.subr.mxu0 %v3612
        %4775 = vmatpush2.msra.mxu0 %v3611
        %4776 = vmatprep.mubr.f32.mxu0 %v4125
        %4777 = vmatmul.mubr.f32.gmra.mxu0 %v4123
        %v4778 = vpop.f32.mrf.mxu0
        %v4779 = vadd.f32 %v4708, %v4778
        %v4780 = vpop.f32.mrf.mxu0
        %v4781 = vadd.f32 %v4710, %v4780
        %4782 = vdwg.mxu0
        %4783 = vmatprep.subr.mxu0 %v3922
        %4784 = vmatpush1.msra.mxu0 %v3921
        %4785 = vmatprep.subr.mxu0 %v3912
        %4786 = vmatpush1.msra.mxu0 %v3911
        %4787 = vmatprep.subr.mxu0 %v3902
        %4788 = vmatpush1.msra.mxu0 %v3901
        %4789 = vmatprep.subr.mxu0 %v3892
        %4790 = vmatpush1.msra.mxu0 %v3891
        %4791 = vmatprep.subr.mxu0 %v3882
        %4792 = vmatpush1.msra.mxu0 %v3881
        %4793 = vmatprep.subr.mxu0 %v3872
        %4794 = vmatpush1.msra.mxu0 %v3871
        %4795 = vmatprep.subr.mxu0 %v3862
        %4796 = vmatpush1.msra.mxu0 %v3861
        %4797 = vmatprep.subr.mxu0 %v3852
        %4798 = vmatpush1.msra.mxu0 %v3851
        %4799 = vmatprep.subr.mxu0 %v3842
        %4800 = vmatpush1.msra.mxu0 %v3841
        %4801 = vmatprep.subr.mxu0 %v3832
        %4802 = vmatpush1.msra.mxu0 %v3831
        %4803 = vmatprep.subr.mxu0 %v3822
        %4804 = vmatpush1.msra.mxu0 %v3821
        %4805 = vmatprep.subr.mxu0 %v3812
        %4806 = vmatpush1.msra.mxu0 %v3811
        %4807 = vmatprep.subr.mxu0 %v3802
        %4808 = vmatpush1.msra.mxu0 %v3801
        %4809 = vmatprep.subr.mxu0 %v3792
        %4810 = vmatpush1.msra.mxu0 %v3791
        %4811 = vmatprep.subr.mxu0 %v3782
        %4812 = vmatpush1.msra.mxu0 %v3781
        %4813 = vmatprep.subr.mxu0 %v3772
        %4814 = vmatpush1.msra.mxu0 %v3771
        %4815 = vmatprep.subr.mxu0 %v4082
        %4816 = vmatpush2.msra.mxu0 %v4081
        %4817 = vmatprep.subr.mxu0 %v4072
        %4818 = vmatpush2.msra.mxu0 %v4071
        %4819 = vmatprep.subr.mxu0 %v4062
        %4820 = vmatpush2.msra.mxu0 %v4061
        %4821 = vmatprep.subr.mxu0 %v4052
        %4822 = vmatpush2.msra.mxu0 %v4051
        %4823 = vmatprep.subr.mxu0 %v4042
        %4824 = vmatpush2.msra.mxu0 %v4041
        %4825 = vmatprep.subr.mxu0 %v4032
        %4826 = vmatpush2.msra.mxu0 %v4031
        %4827 = vmatprep.subr.mxu0 %v4022
        %4828 = vmatpush2.msra.mxu0 %v4021
        %4829 = vmatprep.subr.mxu0 %v4012
        %4830 = vmatpush2.msra.mxu0 %v4011
        %4831 = vmatprep.subr.mxu0 %v4002
        %4832 = vmatpush2.msra.mxu0 %v4001
        %4833 = vmatprep.subr.mxu0 %v3992
        %4834 = vmatpush2.msra.mxu0 %v3991
        %4835 = vmatprep.subr.mxu0 %v3982
        %4836 = vmatpush2.msra.mxu0 %v3981
        %4837 = vmatprep.subr.mxu0 %v3972
        %4838 = vmatpush2.msra.mxu0 %v3971
        %4839 = vmatprep.subr.mxu0 %v3962
        %4840 = vmatpush2.msra.mxu0 %v3961
        %4841 = vmatprep.subr.mxu0 %v3952
        %4842 = vmatpush2.msra.mxu0 %v3951
        %4843 = vmatprep.subr.mxu0 %v3942
        %4844 = vmatpush2.msra.mxu0 %v3941
        %4845 = vmatprep.subr.mxu0 %v3932
        %4846 = vmatpush2.msra.mxu0 %v3931
        %4847 = vmatprep.mubr.f32.mxu0 %v4133
        %4848 = vmatmul.mubr.f32.gmra.mxu0 %v4132
        %v4849 = vpop.f32.mrf.mxu0
        %v4850 = vadd.f32 %v4779, %v4849
        %v4851 = vpop.f32.mrf.mxu0
        %v4852 = vadd.f32 %v4781, %v4851
        %4853 = vdwg.mxu0
        %4854 = vmatprep.subr.mxu0 %v2644
        %4855 = vmatpush1.msra.mxu0 %v2643
        %4856 = vmatprep.subr.mxu0 %v2634
        %4857 = vmatpush1.msra.mxu0 %v2633
        %4858 = vmatprep.subr.mxu0 %v2624
        %4859 = vmatpush1.msra.mxu0 %v2623
        %4860 = vmatprep.subr.mxu0 %v2614
        %4861 = vmatpush1.msra.mxu0 %v2613
        %4862 = vmatprep.subr.mxu0 %v2604
        %4863 = vmatpush1.msra.mxu0 %v2603
        %4864 = vmatprep.subr.mxu0 %v2594
        %4865 = vmatpush1.msra.mxu0 %v2593
        %4866 = vmatprep.subr.mxu0 %v2584
        %4867 = vmatpush1.msra.mxu0 %v2583
        %4868 = vmatprep.subr.mxu0 %v2574
        %4869 = vmatpush1.msra.mxu0 %v2573
        %4870 = vmatprep.subr.mxu0 %v2564
        %4871 = vmatpush1.msra.mxu0 %v2563
        %4872 = vmatprep.subr.mxu0 %v2554
        %4873 = vmatpush1.msra.mxu0 %v2553
        %4874 = vmatprep.subr.mxu0 %v2544
        %4875 = vmatpush1.msra.mxu0 %v2543
        %4876 = vmatprep.subr.mxu0 %v2534
        %4877 = vmatpush1.msra.mxu0 %v2533
        %4878 = vmatprep.subr.mxu0 %v2524
        %4879 = vmatpush1.msra.mxu0 %v2523
        %4880 = vmatprep.subr.mxu0 %v2514
        %4881 = vmatpush1.msra.mxu0 %v2513
        %4882 = vmatprep.subr.mxu0 %v2504
        %4883 = vmatpush1.msra.mxu0 %v2503
        %4884 = vmatprep.subr.mxu0 %v2494
        %4885 = vmatpush1.msra.mxu0 %v2493
        %4886 = vmatprep.subr.mxu0 %v2804
        %4887 = vmatpush2.msra.mxu0 %v2803
        %4888 = vmatprep.subr.mxu0 %v2794
        %4889 = vmatpush2.msra.mxu0 %v2793
        %4890 = vmatprep.subr.mxu0 %v2784
        %4891 = vmatpush2.msra.mxu0 %v2783
        %4892 = vmatprep.subr.mxu0 %v2774
        %4893 = vmatpush2.msra.mxu0 %v2773
        %4894 = vmatprep.subr.mxu0 %v2764
        %4895 = vmatpush2.msra.mxu0 %v2763
        %4896 = vmatprep.subr.mxu0 %v2754
        %4897 = vmatpush2.msra.mxu0 %v2753
        %4898 = vmatprep.subr.mxu0 %v2744
        %4899 = vmatpush2.msra.mxu0 %v2743
        %4900 = vmatprep.subr.mxu0 %v2734
        %4901 = vmatpush2.msra.mxu0 %v2733
        %4902 = vmatprep.subr.mxu0 %v2724
        %4903 = vmatpush2.msra.mxu0 %v2723
        %4904 = vmatprep.subr.mxu0 %v2714
        %4905 = vmatpush2.msra.mxu0 %v2713
        %4906 = vmatprep.subr.mxu0 %v2704
        %4907 = vmatpush2.msra.mxu0 %v2703
        %4908 = vmatprep.subr.mxu0 %v2694
        %4909 = vmatpush2.msra.mxu0 %v2693
        %4910 = vmatprep.subr.mxu0 %v2684
        %4911 = vmatpush2.msra.mxu0 %v2683
        %4912 = vmatprep.subr.mxu0 %v2674
        %4913 = vmatpush2.msra.mxu0 %v2673
        %4914 = vmatprep.subr.mxu0 %v2664
        %4915 = vmatpush2.msra.mxu0 %v2663
        %4916 = vmatprep.subr.mxu0 %v2654
        %4917 = vmatpush2.msra.mxu0 %v2653
        %4918 = vmatprep.mubr.f32.mxu0 %v4107
        %4919 = vmatmul.mubr.f32.gmra.mxu0 %v4099
        %v4920 = vpop.f32.mrf.mxu0
        %v4921 = vadd.f32 0.0, %v4920
        %v4922 = vpop.f32.mrf.mxu0
        %v4923 = vadd.f32 0.0, %v4922
        %4924 = vdwg.mxu0
        %4925 = vmatprep.subr.mxu0 %v2964
        %4926 = vmatpush1.msra.mxu0 %v2963
        %4927 = vmatprep.subr.mxu0 %v2954
        %4928 = vmatpush1.msra.mxu0 %v2953
        %4929 = vmatprep.subr.mxu0 %v2944
        %4930 = vmatpush1.msra.mxu0 %v2943
        %4931 = vmatprep.subr.mxu0 %v2934
        %4932 = vmatpush1.msra.mxu0 %v2933
        %4933 = vmatprep.subr.mxu0 %v2924
        %4934 = vmatpush1.msra.mxu0 %v2923
        %4935 = vmatprep.subr.mxu0 %v2914
        %4936 = vmatpush1.msra.mxu0 %v2913
        %4937 = vmatprep.subr.mxu0 %v2904
        %4938 = vmatpush1.msra.mxu0 %v2903
        %4939 = vmatprep.subr.mxu0 %v2894
        %4940 = vmatpush1.msra.mxu0 %v2893
        %4941 = vmatprep.subr.mxu0 %v2884
        %4942 = vmatpush1.msra.mxu0 %v2883
        %4943 = vmatprep.subr.mxu0 %v2874
        %4944 = vmatpush1.msra.mxu0 %v2873
        %4945 = vmatprep.subr.mxu0 %v2864
        %4946 = vmatpush1.msra.mxu0 %v2863
        %4947 = vmatprep.subr.mxu0 %v2854
        %4948 = vmatpush1.msra.mxu0 %v2853
        %4949 = vmatprep.subr.mxu0 %v2844
        %4950 = vmatpush1.msra.mxu0 %v2843
        %4951 = vmatprep.subr.mxu0 %v2834
        %4952 = vmatpush1.msra.mxu0 %v2833
        %4953 = vmatprep.subr.mxu0 %v2824
        %4954 = vmatpush1.msra.mxu0 %v2823
        %4955 = vmatprep.subr.mxu0 %v2814
        %4956 = vmatpush1.msra.mxu0 %v2813
        %4957 = vmatprep.subr.mxu0 %v3124
        %4958 = vmatpush2.msra.mxu0 %v3123
        %4959 = vmatprep.subr.mxu0 %v3114
        %4960 = vmatpush2.msra.mxu0 %v3113
        %4961 = vmatprep.subr.mxu0 %v3104
        %4962 = vmatpush2.msra.mxu0 %v3103
        %4963 = vmatprep.subr.mxu0 %v3094
        %4964 = vmatpush2.msra.mxu0 %v3093
        %4965 = vmatprep.subr.mxu0 %v3084
        %4966 = vmatpush2.msra.mxu0 %v3083
        %4967 = vmatprep.subr.mxu0 %v3074
        %4968 = vmatpush2.msra.mxu0 %v3073
        %4969 = vmatprep.subr.mxu0 %v3064
        %4970 = vmatpush2.msra.mxu0 %v3063
        %4971 = vmatprep.subr.mxu0 %v3054
        %4972 = vmatpush2.msra.mxu0 %v3053
        %4973 = vmatprep.subr.mxu0 %v3044
        %4974 = vmatpush2.msra.mxu0 %v3043
        %4975 = vmatprep.subr.mxu0 %v3034
        %4976 = vmatpush2.msra.mxu0 %v3033
        %4977 = vmatprep.subr.mxu0 %v3024
        %4978 = vmatpush2.msra.mxu0 %v3023
        %4979 = vmatprep.subr.mxu0 %v3014
        %4980 = vmatpush2.msra.mxu0 %v3013
        %4981 = vmatprep.subr.mxu0 %v3004
        %4982 = vmatpush2.msra.mxu0 %v3003
        %4983 = vmatprep.subr.mxu0 %v2994
        %4984 = vmatpush2.msra.mxu0 %v2993
        %4985 = vmatprep.subr.mxu0 %v2984
        %4986 = vmatpush2.msra.mxu0 %v2983
        %4987 = vmatprep.subr.mxu0 %v2974
        %4988 = vmatpush2.msra.mxu0 %v2973
        %4989 = vmatprep.mubr.f32.mxu0 %v4108
        %4990 = vmatmul.mubr.f32.gmra.mxu0 %v4106
        %v4991 = vpop.f32.mrf.mxu0
        %v4992 = vadd.f32 %v4921, %v4991
        %v4993 = vpop.f32.mrf.mxu0
        %v4994 = vadd.f32 %v4923, %v4993
        %4995 = vdwg.mxu0
        %4996 = vmatprep.subr.mxu0 %v3284
        %4997 = vmatpush1.msra.mxu0 %v3283
        %4998 = vmatprep.subr.mxu0 %v3274
        %4999 = vmatpush1.msra.mxu0 %v3273
        %5000 = vmatprep.subr.mxu0 %v3264
        %5001 = vmatpush1.msra.mxu0 %v3263
        %5002 = vmatprep.subr.mxu0 %v3254
        %5003 = vmatpush1.msra.mxu0 %v3253
        %5004 = vmatprep.subr.mxu0 %v3244
        %5005 = vmatpush1.msra.mxu0 %v3243
        %5006 = vmatprep.subr.mxu0 %v3234
        %5007 = vmatpush1.msra.mxu0 %v3233
        %5008 = vmatprep.subr.mxu0 %v3224
        %5009 = vmatpush1.msra.mxu0 %v3223
        %5010 = vmatprep.subr.mxu0 %v3214
        %5011 = vmatpush1.msra.mxu0 %v3213
        %5012 = vmatprep.subr.mxu0 %v3204
        %5013 = vmatpush1.msra.mxu0 %v3203
        %5014 = vmatprep.subr.mxu0 %v3194
        %5015 = vmatpush1.msra.mxu0 %v3193
        %5016 = vmatprep.subr.mxu0 %v3184
        %5017 = vmatpush1.msra.mxu0 %v3183
        %5018 = vmatprep.subr.mxu0 %v3174
        %5019 = vmatpush1.msra.mxu0 %v3173
        %5020 = vmatprep.subr.mxu0 %v3164
        %5021 = vmatpush1.msra.mxu0 %v3163
        %5022 = vmatprep.subr.mxu0 %v3154
        %5023 = vmatpush1.msra.mxu0 %v3153
        %5024 = vmatprep.subr.mxu0 %v3144
        %5025 = vmatpush1.msra.mxu0 %v3143
        %5026 = vmatprep.subr.mxu0 %v3134
        %5027 = vmatpush1.msra.mxu0 %v3133
        %5028 = vmatprep.subr.mxu0 %v3444
        %5029 = vmatpush2.msra.mxu0 %v3443
        %5030 = vmatprep.subr.mxu0 %v3434
        %5031 = vmatpush2.msra.mxu0 %v3433
        %5032 = vmatprep.subr.mxu0 %v3424
        %5033 = vmatpush2.msra.mxu0 %v3423
        %5034 = vmatprep.subr.mxu0 %v3414
        %5035 = vmatpush2.msra.mxu0 %v3413
        %5036 = vmatprep.subr.mxu0 %v3404
        %5037 = vmatpush2.msra.mxu0 %v3403
        %5038 = vmatprep.subr.mxu0 %v3394
        %5039 = vmatpush2.msra.mxu0 %v3393
        %5040 = vmatprep.subr.mxu0 %v3384
        %5041 = vmatpush2.msra.mxu0 %v3383
        %5042 = vmatprep.subr.mxu0 %v3374
        %5043 = vmatpush2.msra.mxu0 %v3373
        %5044 = vmatprep.subr.mxu0 %v3364
        %5045 = vmatpush2.msra.mxu0 %v3363
        %5046 = vmatprep.subr.mxu0 %v3354
        %5047 = vmatpush2.msra.mxu0 %v3353
        %5048 = vmatprep.subr.mxu0 %v3344
        %5049 = vmatpush2.msra.mxu0 %v3343
        %5050 = vmatprep.subr.mxu0 %v3334
        %5051 = vmatpush2.msra.mxu0 %v3333
        %5052 = vmatprep.subr.mxu0 %v3324
        %5053 = vmatpush2.msra.mxu0 %v3323
        %5054 = vmatprep.subr.mxu0 %v3314
        %5055 = vmatpush2.msra.mxu0 %v3313
        %5056 = vmatprep.subr.mxu0 %v3304
        %5057 = vmatpush2.msra.mxu0 %v3303
        %5058 = vmatprep.subr.mxu0 %v3294
        %5059 = vmatpush2.msra.mxu0 %v3293
        %5060 = vmatprep.mubr.f32.mxu0 %v4124
        %5061 = vmatmul.mubr.f32.gmra.mxu0 %v4116
        %v5062 = vpop.f32.mrf.mxu0
        %v5063 = vadd.f32 %v4992, %v5062
        %v5064 = vpop.f32.mrf.mxu0
        %v5065 = vadd.f32 %v4994, %v5064
        %5066 = vdwg.mxu0
        %5067 = vmatprep.subr.mxu0 %v3604
        %5068 = vmatpush1.msra.mxu0 %v3603
        %5069 = vmatprep.subr.mxu0 %v3594
        %5070 = vmatpush1.msra.mxu0 %v3593
        %5071 = vmatprep.subr.mxu0 %v3584
        %5072 = vmatpush1.msra.mxu0 %v3583
        %5073 = vmatprep.subr.mxu0 %v3574
        %5074 = vmatpush1.msra.mxu0 %v3573
        %5075 = vmatprep.subr.mxu0 %v3564
        %5076 = vmatpush1.msra.mxu0 %v3563
        %5077 = vmatprep.subr.mxu0 %v3554
        %5078 = vmatpush1.msra.mxu0 %v3553
        %5079 = vmatprep.subr.mxu0 %v3544
        %5080 = vmatpush1.msra.mxu0 %v3543
        %5081 = vmatprep.subr.mxu0 %v3534
        %5082 = vmatpush1.msra.mxu0 %v3533
        %5083 = vmatprep.subr.mxu0 %v3524
        %5084 = vmatpush1.msra.mxu0 %v3523
        %5085 = vmatprep.subr.mxu0 %v3514
        %5086 = vmatpush1.msra.mxu0 %v3513
        %5087 = vmatprep.subr.mxu0 %v3504
        %5088 = vmatpush1.msra.mxu0 %v3503
        %5089 = vmatprep.subr.mxu0 %v3494
        %5090 = vmatpush1.msra.mxu0 %v3493
        %5091 = vmatprep.subr.mxu0 %v3484
        %5092 = vmatpush1.msra.mxu0 %v3483
        %5093 = vmatprep.subr.mxu0 %v3474
        %5094 = vmatpush1.msra.mxu0 %v3473
        %5095 = vmatprep.subr.mxu0 %v3464
        %5096 = vmatpush1.msra.mxu0 %v3463
        %5097 = vmatprep.subr.mxu0 %v3454
        %5098 = vmatpush1.msra.mxu0 %v3453
        %5099 = vmatprep.subr.mxu0 %v3764
        %5100 = vmatpush2.msra.mxu0 %v3763
        %5101 = vmatprep.subr.mxu0 %v3754
        %5102 = vmatpush2.msra.mxu0 %v3753
        %5103 = vmatprep.subr.mxu0 %v3744
        %5104 = vmatpush2.msra.mxu0 %v3743
        %5105 = vmatprep.subr.mxu0 %v3734
        %5106 = vmatpush2.msra.mxu0 %v3733
        %5107 = vmatprep.subr.mxu0 %v3724
        %5108 = vmatpush2.msra.mxu0 %v3723
        %5109 = vmatprep.subr.mxu0 %v3714
        %5110 = vmatpush2.msra.mxu0 %v3713
        %5111 = vmatprep.subr.mxu0 %v3704
        %5112 = vmatpush2.msra.mxu0 %v3703
        %5113 = vmatprep.subr.mxu0 %v3694
        %5114 = vmatpush2.msra.mxu0 %v3693
        %5115 = vmatprep.subr.mxu0 %v3684
        %5116 = vmatpush2.msra.mxu0 %v3683
        %5117 = vmatprep.subr.mxu0 %v3674
        %5118 = vmatpush2.msra.mxu0 %v3673
        %5119 = vmatprep.subr.mxu0 %v3664
        %5120 = vmatpush2.msra.mxu0 %v3663
        %5121 = vmatprep.subr.mxu0 %v3654
        %5122 = vmatpush2.msra.mxu0 %v3653
        %5123 = vmatprep.subr.mxu0 %v3644
        %5124 = vmatpush2.msra.mxu0 %v3643
        %5125 = vmatprep.subr.mxu0 %v3634
        %5126 = vmatpush2.msra.mxu0 %v3633
        %5127 = vmatprep.subr.mxu0 %v3624
        %5128 = vmatpush2.msra.mxu0 %v3623
        %5129 = vmatprep.subr.mxu0 %v3614
        %5130 = vmatpush2.msra.mxu0 %v3613
        %5131 = vmatprep.mubr.f32.mxu0 %v4125
        %5132 = vmatmul.mubr.f32.gmra.mxu0 %v4123
        %v5133 = vpop.f32.mrf.mxu0
        %v5134 = vadd.f32 %v5063, %v5133
        %v5135 = vpop.f32.mrf.mxu0
        %v5136 = vadd.f32 %v5065, %v5135
        %5137 = vdwg.mxu0
        %5138 = vmatprep.subr.mxu0 %v3924
        %5139 = vmatpush1.msra.mxu0 %v3923
        %5140 = vmatprep.subr.mxu0 %v3914
        %5141 = vmatpush1.msra.mxu0 %v3913
        %5142 = vmatprep.subr.mxu0 %v3904
        %5143 = vmatpush1.msra.mxu0 %v3903
        %5144 = vmatprep.subr.mxu0 %v3894
        %5145 = vmatpush1.msra.mxu0 %v3893
        %5146 = vmatprep.subr.mxu0 %v3884
        %5147 = vmatpush1.msra.mxu0 %v3883
        %5148 = vmatprep.subr.mxu0 %v3874
        %5149 = vmatpush1.msra.mxu0 %v3873
        %5150 = vmatprep.subr.mxu0 %v3864
        %5151 = vmatpush1.msra.mxu0 %v3863
        %5152 = vmatprep.subr.mxu0 %v3854
        %5153 = vmatpush1.msra.mxu0 %v3853
        %5154 = vmatprep.subr.mxu0 %v3844
        %5155 = vmatpush1.msra.mxu0 %v3843
        %5156 = vmatprep.subr.mxu0 %v3834
        %5157 = vmatpush1.msra.mxu0 %v3833
        %5158 = vmatprep.subr.mxu0 %v3824
        %5159 = vmatpush1.msra.mxu0 %v3823
        %5160 = vmatprep.subr.mxu0 %v3814
        %5161 = vmatpush1.msra.mxu0 %v3813
        %5162 = vmatprep.subr.mxu0 %v3804
        %5163 = vmatpush1.msra.mxu0 %v3803
        %5164 = vmatprep.subr.mxu0 %v3794
        %5165 = vmatpush1.msra.mxu0 %v3793
        %5166 = vmatprep.subr.mxu0 %v3784
        %5167 = vmatpush1.msra.mxu0 %v3783
        %5168 = vmatprep.subr.mxu0 %v3774
        %5169 = vmatpush1.msra.mxu0 %v3773
        %5170 = vmatprep.subr.mxu0 %v4084
        %5171 = vmatpush2.msra.mxu0 %v4083
        %5172 = vmatprep.subr.mxu0 %v4074
        %5173 = vmatpush2.msra.mxu0 %v4073
        %5174 = vmatprep.subr.mxu0 %v4064
        %5175 = vmatpush2.msra.mxu0 %v4063
        %5176 = vmatprep.subr.mxu0 %v4054
        %5177 = vmatpush2.msra.mxu0 %v4053
        %5178 = vmatprep.subr.mxu0 %v4044
        %5179 = vmatpush2.msra.mxu0 %v4043
        %5180 = vmatprep.subr.mxu0 %v4034
        %5181 = vmatpush2.msra.mxu0 %v4033
        %5182 = vmatprep.subr.mxu0 %v4024
        %5183 = vmatpush2.msra.mxu0 %v4023
        %5184 = vmatprep.subr.mxu0 %v4014
        %5185 = vmatpush2.msra.mxu0 %v4013
        %5186 = vmatprep.subr.mxu0 %v4004
        %5187 = vmatpush2.msra.mxu0 %v4003
        %5188 = vmatprep.subr.mxu0 %v3994
        %5189 = vmatpush2.msra.mxu0 %v3993
        %5190 = vmatprep.subr.mxu0 %v3984
        %5191 = vmatpush2.msra.mxu0 %v3983
        %5192 = vmatprep.subr.mxu0 %v3974
        %5193 = vmatpush2.msra.mxu0 %v3973
        %5194 = vmatprep.subr.mxu0 %v3964
        %5195 = vmatpush2.msra.mxu0 %v3963
        %5196 = vmatprep.subr.mxu0 %v3954
        %5197 = vmatpush2.msra.mxu0 %v3953
        %5198 = vmatprep.subr.mxu0 %v3944
        %5199 = vmatpush2.msra.mxu0 %v3943
        %5200 = vmatprep.subr.mxu0 %v3934
        %5201 = vmatpush2.msra.mxu0 %v3933
        %5202 = vmatprep.mubr.f32.mxu0 %v4133
        %5203 = vmatmul.mubr.f32.gmra.mxu0 %v4132
        %v5204 = vpop.f32.mrf.mxu0
        %v5205 = vadd.f32 %v5134, %v5204
        %v5206 = vpop.f32.mrf.mxu0
        %v5207 = vadd.f32 %v5136, %v5206
        %5208 = vdwg.mxu0
        %5209 = vmatprep.subr.mxu0 %v2646
        %5210 = vmatpush1.msra.mxu0 %v2645
        %5211 = vmatprep.subr.mxu0 %v2636
        %5212 = vmatpush1.msra.mxu0 %v2635
        %5213 = vmatprep.subr.mxu0 %v2626
        %5214 = vmatpush1.msra.mxu0 %v2625
        %5215 = vmatprep.subr.mxu0 %v2616
        %5216 = vmatpush1.msra.mxu0 %v2615
        %5217 = vmatprep.subr.mxu0 %v2606
        %5218 = vmatpush1.msra.mxu0 %v2605
        %5219 = vmatprep.subr.mxu0 %v2596
        %5220 = vmatpush1.msra.mxu0 %v2595
        %5221 = vmatprep.subr.mxu0 %v2586
        %5222 = vmatpush1.msra.mxu0 %v2585
        %5223 = vmatprep.subr.mxu0 %v2576
        %5224 = vmatpush1.msra.mxu0 %v2575
        %5225 = vmatprep.subr.mxu0 %v2566
        %5226 = vmatpush1.msra.mxu0 %v2565
        %5227 = vmatprep.subr.mxu0 %v2556
        %5228 = vmatpush1.msra.mxu0 %v2555
        %5229 = vmatprep.subr.mxu0 %v2546
        %5230 = vmatpush1.msra.mxu0 %v2545
        %5231 = vmatprep.subr.mxu0 %v2536
        %5232 = vmatpush1.msra.mxu0 %v2535
        %5233 = vmatprep.subr.mxu0 %v2526
        %5234 = vmatpush1.msra.mxu0 %v2525
        %5235 = vmatprep.subr.mxu0 %v2516
        %5236 = vmatpush1.msra.mxu0 %v2515
        %5237 = vmatprep.subr.mxu0 %v2506
        %5238 = vmatpush1.msra.mxu0 %v2505
        %5239 = vmatprep.subr.mxu0 %v2496
        %5240 = vmatpush1.msra.mxu0 %v2495
        %5241 = vmatprep.subr.mxu0 %v2806
        %5242 = vmatpush2.msra.mxu0 %v2805
        %5243 = vmatprep.subr.mxu0 %v2796
        %5244 = vmatpush2.msra.mxu0 %v2795
        %5245 = vmatprep.subr.mxu0 %v2786
        %5246 = vmatpush2.msra.mxu0 %v2785
        %5247 = vmatprep.subr.mxu0 %v2776
        %5248 = vmatpush2.msra.mxu0 %v2775
        %5249 = vmatprep.subr.mxu0 %v2766
        %5250 = vmatpush2.msra.mxu0 %v2765
        %5251 = vmatprep.subr.mxu0 %v2756
        %5252 = vmatpush2.msra.mxu0 %v2755
        %5253 = vmatprep.subr.mxu0 %v2746
        %5254 = vmatpush2.msra.mxu0 %v2745
        %5255 = vmatprep.subr.mxu0 %v2736
        %5256 = vmatpush2.msra.mxu0 %v2735
        %5257 = vmatprep.subr.mxu0 %v2726
        %5258 = vmatpush2.msra.mxu0 %v2725
        %5259 = vmatprep.subr.mxu0 %v2716
        %5260 = vmatpush2.msra.mxu0 %v2715
        %5261 = vmatprep.subr.mxu0 %v2706
        %5262 = vmatpush2.msra.mxu0 %v2705
        %5263 = vmatprep.subr.mxu0 %v2696
        %5264 = vmatpush2.msra.mxu0 %v2695
        %5265 = vmatprep.subr.mxu0 %v2686
        %5266 = vmatpush2.msra.mxu0 %v2685
        %5267 = vmatprep.subr.mxu0 %v2676
        %5268 = vmatpush2.msra.mxu0 %v2675
        %5269 = vmatprep.subr.mxu0 %v2666
        %5270 = vmatpush2.msra.mxu0 %v2665
        %5271 = vmatprep.subr.mxu0 %v2656
        %5272 = vmatpush2.msra.mxu0 %v2655
        %5273 = vmatprep.mubr.f32.mxu0 %v4107
        %5274 = vmatmul.mubr.f32.gmra.mxu0 %v4099
        %v5275 = vpop.f32.mrf.mxu0
        %v5276 = vadd.f32 0.0, %v5275
        %v5277 = vpop.f32.mrf.mxu0
        %v5278 = vadd.f32 0.0, %v5277
        %5279 = vdwg.mxu0
        %5280 = vmatprep.subr.mxu0 %v2966
        %5281 = vmatpush1.msra.mxu0 %v2965
        %5282 = vmatprep.subr.mxu0 %v2956
        %5283 = vmatpush1.msra.mxu0 %v2955
        %5284 = vmatprep.subr.mxu0 %v2946
        %5285 = vmatpush1.msra.mxu0 %v2945
        %5286 = vmatprep.subr.mxu0 %v2936
        %5287 = vmatpush1.msra.mxu0 %v2935
        %5288 = vmatprep.subr.mxu0 %v2926
        %5289 = vmatpush1.msra.mxu0 %v2925
        %5290 = vmatprep.subr.mxu0 %v2916
        %5291 = vmatpush1.msra.mxu0 %v2915
        %5292 = vmatprep.subr.mxu0 %v2906
        %5293 = vmatpush1.msra.mxu0 %v2905
        %5294 = vmatprep.subr.mxu0 %v2896
        %5295 = vmatpush1.msra.mxu0 %v2895
        %5296 = vmatprep.subr.mxu0 %v2886
        %5297 = vmatpush1.msra.mxu0 %v2885
        %5298 = vmatprep.subr.mxu0 %v2876
        %5299 = vmatpush1.msra.mxu0 %v2875
        %5300 = vmatprep.subr.mxu0 %v2866
        %5301 = vmatpush1.msra.mxu0 %v2865
        %5302 = vmatprep.subr.mxu0 %v2856
        %5303 = vmatpush1.msra.mxu0 %v2855
        %5304 = vmatprep.subr.mxu0 %v2846
        %5305 = vmatpush1.msra.mxu0 %v2845
        %5306 = vmatprep.subr.mxu0 %v2836
        %5307 = vmatpush1.msra.mxu0 %v2835
        %5308 = vmatprep.subr.mxu0 %v2826
        %5309 = vmatpush1.msra.mxu0 %v2825
        %5310 = vmatprep.subr.mxu0 %v2816
        %5311 = vmatpush1.msra.mxu0 %v2815
        %5312 = vmatprep.subr.mxu0 %v3126
        %5313 = vmatpush2.msra.mxu0 %v3125
        %5314 = vmatprep.subr.mxu0 %v3116
        %5315 = vmatpush2.msra.mxu0 %v3115
        %5316 = vmatprep.subr.mxu0 %v3106
        %5317 = vmatpush2.msra.mxu0 %v3105
        %5318 = vmatprep.subr.mxu0 %v3096
        %5319 = vmatpush2.msra.mxu0 %v3095
        %5320 = vmatprep.subr.mxu0 %v3086
        %5321 = vmatpush2.msra.mxu0 %v3085
        %5322 = vmatprep.subr.mxu0 %v3076
        %5323 = vmatpush2.msra.mxu0 %v3075
        %5324 = vmatprep.subr.mxu0 %v3066
        %5325 = vmatpush2.msra.mxu0 %v3065
        %5326 = vmatprep.subr.mxu0 %v3056
        %5327 = vmatpush2.msra.mxu0 %v3055
        %5328 = vmatprep.subr.mxu0 %v3046
        %5329 = vmatpush2.msra.mxu0 %v3045
        %5330 = vmatprep.subr.mxu0 %v3036
        %5331 = vmatpush2.msra.mxu0 %v3035
        %5332 = vmatprep.subr.mxu0 %v3026
        %5333 = vmatpush2.msra.mxu0 %v3025
        %5334 = vmatprep.subr.mxu0 %v3016
        %5335 = vmatpush2.msra.mxu0 %v3015
        %5336 = vmatprep.subr.mxu0 %v3006
        %5337 = vmatpush2.msra.mxu0 %v3005
        %5338 = vmatprep.subr.mxu0 %v2996
        %5339 = vmatpush2.msra.mxu0 %v2995
        %5340 = vmatprep.subr.mxu0 %v2986
        %5341 = vmatpush2.msra.mxu0 %v2985
        %5342 = vmatprep.subr.mxu0 %v2976
        %5343 = vmatpush2.msra.mxu0 %v2975
        %5344 = vmatprep.mubr.f32.mxu0 %v4108
        %5345 = vmatmul.mubr.f32.gmra.mxu0 %v4106
        %v5346 = vpop.f32.mrf.mxu0
        %v5347 = vadd.f32 %v5276, %v5346
        %v5348 = vpop.f32.mrf.mxu0
        %v5349 = vadd.f32 %v5278, %v5348
        %5350 = vdwg.mxu0
        %5351 = vmatprep.subr.mxu0 %v3286
        %5352 = vmatpush1.msra.mxu0 %v3285
        %5353 = vmatprep.subr.mxu0 %v3276
        %5354 = vmatpush1.msra.mxu0 %v3275
        %5355 = vmatprep.subr.mxu0 %v3266
        %5356 = vmatpush1.msra.mxu0 %v3265
        %5357 = vmatprep.subr.mxu0 %v3256
        %5358 = vmatpush1.msra.mxu0 %v3255
        %5359 = vmatprep.subr.mxu0 %v3246
        %5360 = vmatpush1.msra.mxu0 %v3245
        %5361 = vmatprep.subr.mxu0 %v3236
        %5362 = vmatpush1.msra.mxu0 %v3235
        %5363 = vmatprep.subr.mxu0 %v3226
        %5364 = vmatpush1.msra.mxu0 %v3225
        %5365 = vmatprep.subr.mxu0 %v3216
        %5366 = vmatpush1.msra.mxu0 %v3215
        %5367 = vmatprep.subr.mxu0 %v3206
        %5368 = vmatpush1.msra.mxu0 %v3205
        %5369 = vmatprep.subr.mxu0 %v3196
        %5370 = vmatpush1.msra.mxu0 %v3195
        %5371 = vmatprep.subr.mxu0 %v3186
        %5372 = vmatpush1.msra.mxu0 %v3185
        %5373 = vmatprep.subr.mxu0 %v3176
        %5374 = vmatpush1.msra.mxu0 %v3175
        %5375 = vmatprep.subr.mxu0 %v3166
        %5376 = vmatpush1.msra.mxu0 %v3165
        %5377 = vmatprep.subr.mxu0 %v3156
        %5378 = vmatpush1.msra.mxu0 %v3155
        %5379 = vmatprep.subr.mxu0 %v3146
        %5380 = vmatpush1.msra.mxu0 %v3145
        %5381 = vmatprep.subr.mxu0 %v3136
        %5382 = vmatpush1.msra.mxu0 %v3135
        %5383 = vmatprep.subr.mxu0 %v3446
        %5384 = vmatpush2.msra.mxu0 %v3445
        %5385 = vmatprep.subr.mxu0 %v3436
        %5386 = vmatpush2.msra.mxu0 %v3435
        %5387 = vmatprep.subr.mxu0 %v3426
        %5388 = vmatpush2.msra.mxu0 %v3425
        %5389 = vmatprep.subr.mxu0 %v3416
        %5390 = vmatpush2.msra.mxu0 %v3415
        %5391 = vmatprep.subr.mxu0 %v3406
        %5392 = vmatpush2.msra.mxu0 %v3405
        %5393 = vmatprep.subr.mxu0 %v3396
        %5394 = vmatpush2.msra.mxu0 %v3395
        %5395 = vmatprep.subr.mxu0 %v3386
        %5396 = vmatpush2.msra.mxu0 %v3385
        %5397 = vmatprep.subr.mxu0 %v3376
        %5398 = vmatpush2.msra.mxu0 %v3375
        %5399 = vmatprep.subr.mxu0 %v3366
        %5400 = vmatpush2.msra.mxu0 %v3365
        %5401 = vmatprep.subr.mxu0 %v3356
        %5402 = vmatpush2.msra.mxu0 %v3355
        %5403 = vmatprep.subr.mxu0 %v3346
        %5404 = vmatpush2.msra.mxu0 %v3345
        %5405 = vmatprep.subr.mxu0 %v3336
        %5406 = vmatpush2.msra.mxu0 %v3335
        %5407 = vmatprep.subr.mxu0 %v3326
        %5408 = vmatpush2.msra.mxu0 %v3325
        %5409 = vmatprep.subr.mxu0 %v3316
        %5410 = vmatpush2.msra.mxu0 %v3315
        %5411 = vmatprep.subr.mxu0 %v3306
        %5412 = vmatpush2.msra.mxu0 %v3305
        %5413 = vmatprep.subr.mxu0 %v3296
        %5414 = vmatpush2.msra.mxu0 %v3295
        %5415 = vmatprep.mubr.f32.mxu0 %v4124
        %5416 = vmatmul.mubr.f32.gmra.mxu0 %v4116
        %v5417 = vpop.f32.mrf.mxu0
        %v5418 = vadd.f32 %v5347, %v5417
        %v5419 = vpop.f32.mrf.mxu0
        %v5420 = vadd.f32 %v5349, %v5419
        %5421 = vdwg.mxu0
        %5422 = vmatprep.subr.mxu0 %v3606
        %5423 = vmatpush1.msra.mxu0 %v3605
        %5424 = vmatprep.subr.mxu0 %v3596
        %5425 = vmatpush1.msra.mxu0 %v3595
        %5426 = vmatprep.subr.mxu0 %v3586
        %5427 = vmatpush1.msra.mxu0 %v3585
        %5428 = vmatprep.subr.mxu0 %v3576
        %5429 = vmatpush1.msra.mxu0 %v3575
        %5430 = vmatprep.subr.mxu0 %v3566
        %5431 = vmatpush1.msra.mxu0 %v3565
        %5432 = vmatprep.subr.mxu0 %v3556
        %5433 = vmatpush1.msra.mxu0 %v3555
        %5434 = vmatprep.subr.mxu0 %v3546
        %5435 = vmatpush1.msra.mxu0 %v3545
        %5436 = vmatprep.subr.mxu0 %v3536
        %5437 = vmatpush1.msra.mxu0 %v3535
        %5438 = vmatprep.subr.mxu0 %v3526
        %5439 = vmatpush1.msra.mxu0 %v3525
        %5440 = vmatprep.subr.mxu0 %v3516
        %5441 = vmatpush1.msra.mxu0 %v3515
        %5442 = vmatprep.subr.mxu0 %v3506
        %5443 = vmatpush1.msra.mxu0 %v3505
        %5444 = vmatprep.subr.mxu0 %v3496
        %5445 = vmatpush1.msra.mxu0 %v3495
        %5446 = vmatprep.subr.mxu0 %v3486
        %5447 = vmatpush1.msra.mxu0 %v3485
        %5448 = vmatprep.subr.mxu0 %v3476
        %5449 = vmatpush1.msra.mxu0 %v3475
        %5450 = vmatprep.subr.mxu0 %v3466
        %5451 = vmatpush1.msra.mxu0 %v3465
        %5452 = vmatprep.subr.mxu0 %v3456
        %5453 = vmatpush1.msra.mxu0 %v3455
        %5454 = vmatprep.subr.mxu0 %v3766
        %5455 = vmatpush2.msra.mxu0 %v3765
        %5456 = vmatprep.subr.mxu0 %v3756
        %5457 = vmatpush2.msra.mxu0 %v3755
        %5458 = vmatprep.subr.mxu0 %v3746
        %5459 = vmatpush2.msra.mxu0 %v3745
        %5460 = vmatprep.subr.mxu0 %v3736
        %5461 = vmatpush2.msra.mxu0 %v3735
        %5462 = vmatprep.subr.mxu0 %v3726
        %5463 = vmatpush2.msra.mxu0 %v3725
        %5464 = vmatprep.subr.mxu0 %v3716
        %5465 = vmatpush2.msra.mxu0 %v3715
        %5466 = vmatprep.subr.mxu0 %v3706
        %5467 = vmatpush2.msra.mxu0 %v3705
        %5468 = vmatprep.subr.mxu0 %v3696
        %5469 = vmatpush2.msra.mxu0 %v3695
        %5470 = vmatprep.subr.mxu0 %v3686
        %5471 = vmatpush2.msra.mxu0 %v3685
        %5472 = vmatprep.subr.mxu0 %v3676
        %5473 = vmatpush2.msra.mxu0 %v3675
        %5474 = vmatprep.subr.mxu0 %v3666
        %5475 = vmatpush2.msra.mxu0 %v3665
        %5476 = vmatprep.subr.mxu0 %v3656
        %5477 = vmatpush2.msra.mxu0 %v3655
        %5478 = vmatprep.subr.mxu0 %v3646
        %5479 = vmatpush2.msra.mxu0 %v3645
        %5480 = vmatprep.subr.mxu0 %v3636
        %5481 = vmatpush2.msra.mxu0 %v3635
        %5482 = vmatprep.subr.mxu0 %v3626
        %5483 = vmatpush2.msra.mxu0 %v3625
        %5484 = vmatprep.subr.mxu0 %v3616
        %5485 = vmatpush2.msra.mxu0 %v3615
        %5486 = vmatprep.mubr.f32.mxu0 %v4125
        %5487 = vmatmul.mubr.f32.gmra.mxu0 %v4123
        %v5488 = vpop.f32.mrf.mxu0
        %v5489 = vadd.f32 %v5418, %v5488
        %v5490 = vpop.f32.mrf.mxu0
        %v5491 = vadd.f32 %v5420, %v5490
        %5492 = vdwg.mxu0
        %5493 = vmatprep.subr.mxu0 %v3926
        %5494 = vmatpush1.msra.mxu0 %v3925
        %5495 = vmatprep.subr.mxu0 %v3916
        %5496 = vmatpush1.msra.mxu0 %v3915
        %5497 = vmatprep.subr.mxu0 %v3906
        %5498 = vmatpush1.msra.mxu0 %v3905
        %5499 = vmatprep.subr.mxu0 %v3896
        %5500 = vmatpush1.msra.mxu0 %v3895
        %5501 = vmatprep.subr.mxu0 %v3886
        %5502 = vmatpush1.msra.mxu0 %v3885
        %5503 = vmatprep.subr.mxu0 %v3876
        %5504 = vmatpush1.msra.mxu0 %v3875
        %5505 = vmatprep.subr.mxu0 %v3866
        %5506 = vmatpush1.msra.mxu0 %v3865
        %5507 = vmatprep.subr.mxu0 %v3856
        %5508 = vmatpush1.msra.mxu0 %v3855
        %5509 = vmatprep.subr.mxu0 %v3846
        %5510 = vmatpush1.msra.mxu0 %v3845
        %5511 = vmatprep.subr.mxu0 %v3836
        %5512 = vmatpush1.msra.mxu0 %v3835
        %5513 = vmatprep.subr.mxu0 %v3826
        %5514 = vmatpush1.msra.mxu0 %v3825
        %5515 = vmatprep.subr.mxu0 %v3816
        %5516 = vmatpush1.msra.mxu0 %v3815
        %5517 = vmatprep.subr.mxu0 %v3806
        %5518 = vmatpush1.msra.mxu0 %v3805
        %5519 = vmatprep.subr.mxu0 %v3796
        %5520 = vmatpush1.msra.mxu0 %v3795
        %5521 = vmatprep.subr.mxu0 %v3786
        %5522 = vmatpush1.msra.mxu0 %v3785
        %5523 = vmatprep.subr.mxu0 %v3776
        %5524 = vmatpush1.msra.mxu0 %v3775
        %5525 = vmatprep.subr.mxu0 %v4086
        %5526 = vmatpush2.msra.mxu0 %v4085
        %5527 = vmatprep.subr.mxu0 %v4076
        %5528 = vmatpush2.msra.mxu0 %v4075
        %5529 = vmatprep.subr.mxu0 %v4066
        %5530 = vmatpush2.msra.mxu0 %v4065
        %5531 = vmatprep.subr.mxu0 %v4056
        %5532 = vmatpush2.msra.mxu0 %v4055
        %5533 = vmatprep.subr.mxu0 %v4046
        %5534 = vmatpush2.msra.mxu0 %v4045
        %5535 = vmatprep.subr.mxu0 %v4036
        %5536 = vmatpush2.msra.mxu0 %v4035
        %5537 = vmatprep.subr.mxu0 %v4026
        %5538 = vmatpush2.msra.mxu0 %v4025
        %5539 = vmatprep.subr.mxu0 %v4016
        %5540 = vmatpush2.msra.mxu0 %v4015
        %5541 = vmatprep.subr.mxu0 %v4006
        %5542 = vmatpush2.msra.mxu0 %v4005
        %5543 = vmatprep.subr.mxu0 %v3996
        %5544 = vmatpush2.msra.mxu0 %v3995
        %5545 = vmatprep.subr.mxu0 %v3986
        %5546 = vmatpush2.msra.mxu0 %v3985
        %5547 = vmatprep.subr.mxu0 %v3976
        %5548 = vmatpush2.msra.mxu0 %v3975
        %5549 = vmatprep.subr.mxu0 %v3966
        %5550 = vmatpush2.msra.mxu0 %v3965
        %5551 = vmatprep.subr.mxu0 %v3956
        %5552 = vmatpush2.msra.mxu0 %v3955
        %5553 = vmatprep.subr.mxu0 %v3946
        %5554 = vmatpush2.msra.mxu0 %v3945
        %5555 = vmatprep.subr.mxu0 %v3936
        %5556 = vmatpush2.msra.mxu0 %v3935
        %5557 = vmatprep.mubr.f32.mxu0 %v4133
        %5558 = vmatmul.mubr.f32.gmra.mxu0 %v4132
        %v5559 = vpop.f32.mrf.mxu0
        %v5560 = vadd.f32 %v5489, %v5559
        %v5561 = vpop.f32.mrf.mxu0
        %v5562 = vadd.f32 %v5491, %v5561
        %5563 = vdwg.mxu0
        %5564 = vmatprep.subr.mxu0 %v2648
        %5565 = vmatpush1.msra.mxu0 %v2647
        %5566 = vmatprep.subr.mxu0 %v2638
        %5567 = vmatpush1.msra.mxu0 %v2637
        %5568 = vmatprep.subr.mxu0 %v2628
        %5569 = vmatpush1.msra.mxu0 %v2627
        %5570 = vmatprep.subr.mxu0 %v2618
        %5571 = vmatpush1.msra.mxu0 %v2617
        %5572 = vmatprep.subr.mxu0 %v2608
        %5573 = vmatpush1.msra.mxu0 %v2607
        %5574 = vmatprep.subr.mxu0 %v2598
        %5575 = vmatpush1.msra.mxu0 %v2597
        %5576 = vmatprep.subr.mxu0 %v2588
        %5577 = vmatpush1.msra.mxu0 %v2587
        %5578 = vmatprep.subr.mxu0 %v2578
        %5579 = vmatpush1.msra.mxu0 %v2577
        %5580 = vmatprep.subr.mxu0 %v2568
        %5581 = vmatpush1.msra.mxu0 %v2567
        %5582 = vmatprep.subr.mxu0 %v2558
        %5583 = vmatpush1.msra.mxu0 %v2557
        %5584 = vmatprep.subr.mxu0 %v2548
        %5585 = vmatpush1.msra.mxu0 %v2547
        %5586 = vmatprep.subr.mxu0 %v2538
        %5587 = vmatpush1.msra.mxu0 %v2537
        %5588 = vmatprep.subr.mxu0 %v2528
        %5589 = vmatpush1.msra.mxu0 %v2527
        %5590 = vmatprep.subr.mxu0 %v2518
        %5591 = vmatpush1.msra.mxu0 %v2517
        %5592 = vmatprep.subr.mxu0 %v2508
        %5593 = vmatpush1.msra.mxu0 %v2507
        %5594 = vmatprep.subr.mxu0 %v2498
        %5595 = vmatpush1.msra.mxu0 %v2497
        %5596 = vmatprep.subr.mxu0 %v2808
        %5597 = vmatpush2.msra.mxu0 %v2807
        %5598 = vmatprep.subr.mxu0 %v2798
        %5599 = vmatpush2.msra.mxu0 %v2797
        %5600 = vmatprep.subr.mxu0 %v2788
        %5601 = vmatpush2.msra.mxu0 %v2787
        %5602 = vmatprep.subr.mxu0 %v2778
        %5603 = vmatpush2.msra.mxu0 %v2777
        %5604 = vmatprep.subr.mxu0 %v2768
        %5605 = vmatpush2.msra.mxu0 %v2767
        %5606 = vmatprep.subr.mxu0 %v2758
        %5607 = vmatpush2.msra.mxu0 %v2757
        %5608 = vmatprep.subr.mxu0 %v2748
        %5609 = vmatpush2.msra.mxu0 %v2747
        %5610 = vmatprep.subr.mxu0 %v2738
        %5611 = vmatpush2.msra.mxu0 %v2737
        %5612 = vmatprep.subr.mxu0 %v2728
        %5613 = vmatpush2.msra.mxu0 %v2727
        %5614 = vmatprep.subr.mxu0 %v2718
        %5615 = vmatpush2.msra.mxu0 %v2717
        %5616 = vmatprep.subr.mxu0 %v2708
        %5617 = vmatpush2.msra.mxu0 %v2707
        %5618 = vmatprep.subr.mxu0 %v2698
        %5619 = vmatpush2.msra.mxu0 %v2697
        %5620 = vmatprep.subr.mxu0 %v2688
        %5621 = vmatpush2.msra.mxu0 %v2687
        %5622 = vmatprep.subr.mxu0 %v2678
        %5623 = vmatpush2.msra.mxu0 %v2677
        %5624 = vmatprep.subr.mxu0 %v2668
        %5625 = vmatpush2.msra.mxu0 %v2667
        %5626 = vmatprep.subr.mxu0 %v2658
        %5627 = vmatpush2.msra.mxu0 %v2657
        %5628 = vmatprep.mubr.f32.mxu0 %v4107
        %5629 = vmatmul.mubr.f32.gmra.mxu0 %v4099
        %v5630 = vpop.f32.mrf.mxu0
        %v5631 = vadd.f32 0.0, %v5630
        %v5632 = vpop.f32.mrf.mxu0
        %v5633 = vadd.f32 0.0, %v5632
        %5634 = vdwg.mxu0
        %5635 = vmatprep.subr.mxu0 %v2968
        %5636 = vmatpush1.msra.mxu0 %v2967
        %5637 = vmatprep.subr.mxu0 %v2958
        %5638 = vmatpush1.msra.mxu0 %v2957
        %5639 = vmatprep.subr.mxu0 %v2948
        %5640 = vmatpush1.msra.mxu0 %v2947
        %5641 = vmatprep.subr.mxu0 %v2938
        %5642 = vmatpush1.msra.mxu0 %v2937
        %5643 = vmatprep.subr.mxu0 %v2928
        %5644 = vmatpush1.msra.mxu0 %v2927
        %5645 = vmatprep.subr.mxu0 %v2918
        %5646 = vmatpush1.msra.mxu0 %v2917
        %5647 = vmatprep.subr.mxu0 %v2908
        %5648 = vmatpush1.msra.mxu0 %v2907
        %5649 = vmatprep.subr.mxu0 %v2898
        %5650 = vmatpush1.msra.mxu0 %v2897
        %5651 = vmatprep.subr.mxu0 %v2888
        %5652 = vmatpush1.msra.mxu0 %v2887
        %5653 = vmatprep.subr.mxu0 %v2878
        %5654 = vmatpush1.msra.mxu0 %v2877
        %5655 = vmatprep.subr.mxu0 %v2868
        %5656 = vmatpush1.msra.mxu0 %v2867
        %5657 = vmatprep.subr.mxu0 %v2858
        %5658 = vmatpush1.msra.mxu0 %v2857
        %5659 = vmatprep.subr.mxu0 %v2848
        %5660 = vmatpush1.msra.mxu0 %v2847
        %5661 = vmatprep.subr.mxu0 %v2838
        %5662 = vmatpush1.msra.mxu0 %v2837
        %5663 = vmatprep.subr.mxu0 %v2828
        %5664 = vmatpush1.msra.mxu0 %v2827
        %5665 = vmatprep.subr.mxu0 %v2818
        %5666 = vmatpush1.msra.mxu0 %v2817
        %5667 = vmatprep.subr.mxu0 %v3128
        %5668 = vmatpush2.msra.mxu0 %v3127
        %5669 = vmatprep.subr.mxu0 %v3118
        %5670 = vmatpush2.msra.mxu0 %v3117
        %5671 = vmatprep.subr.mxu0 %v3108
        %5672 = vmatpush2.msra.mxu0 %v3107
        %5673 = vmatprep.subr.mxu0 %v3098
        %5674 = vmatpush2.msra.mxu0 %v3097
        %5675 = vmatprep.subr.mxu0 %v3088
        %5676 = vmatpush2.msra.mxu0 %v3087
        %5677 = vmatprep.subr.mxu0 %v3078
        %5678 = vmatpush2.msra.mxu0 %v3077
        %5679 = vmatprep.subr.mxu0 %v3068
        %5680 = vmatpush2.msra.mxu0 %v3067
        %5681 = vmatprep.subr.mxu0 %v3058
        %5682 = vmatpush2.msra.mxu0 %v3057
        %5683 = vmatprep.subr.mxu0 %v3048
        %5684 = vmatpush2.msra.mxu0 %v3047
        %5685 = vmatprep.subr.mxu0 %v3038
        %5686 = vmatpush2.msra.mxu0 %v3037
        %5687 = vmatprep.subr.mxu0 %v3028
        %5688 = vmatpush2.msra.mxu0 %v3027
        %5689 = vmatprep.subr.mxu0 %v3018
        %5690 = vmatpush2.msra.mxu0 %v3017
        %5691 = vmatprep.subr.mxu0 %v3008
        %5692 = vmatpush2.msra.mxu0 %v3007
        %5693 = vmatprep.subr.mxu0 %v2998
        %5694 = vmatpush2.msra.mxu0 %v2997
        %5695 = vmatprep.subr.mxu0 %v2988
        %5696 = vmatpush2.msra.mxu0 %v2987
        %5697 = vmatprep.subr.mxu0 %v2978
        %5698 = vmatpush2.msra.mxu0 %v2977
        %5699 = vmatprep.mubr.f32.mxu0 %v4108
        %5700 = vmatmul.mubr.f32.gmra.mxu0 %v4106
        %v5701 = vpop.f32.mrf.mxu0
        %v5702 = vadd.f32 %v5631, %v5701
        %v5703 = vpop.f32.mrf.mxu0
        %v5704 = vadd.f32 %v5633, %v5703
        %5705 = vdwg.mxu0
        %5706 = vmatprep.subr.mxu0 %v3288
        %5707 = vmatpush1.msra.mxu0 %v3287
        %5708 = vmatprep.subr.mxu0 %v3278
        %5709 = vmatpush1.msra.mxu0 %v3277
        %5710 = vmatprep.subr.mxu0 %v3268
        %5711 = vmatpush1.msra.mxu0 %v3267
        %5712 = vmatprep.subr.mxu0 %v3258
        %5713 = vmatpush1.msra.mxu0 %v3257
        %5714 = vmatprep.subr.mxu0 %v3248
        %5715 = vmatpush1.msra.mxu0 %v3247
        %5716 = vmatprep.subr.mxu0 %v3238
        %5717 = vmatpush1.msra.mxu0 %v3237
        %5718 = vmatprep.subr.mxu0 %v3228
        %5719 = vmatpush1.msra.mxu0 %v3227
        %5720 = vmatprep.subr.mxu0 %v3218
        %5721 = vmatpush1.msra.mxu0 %v3217
        %5722 = vmatprep.subr.mxu0 %v3208
        %5723 = vmatpush1.msra.mxu0 %v3207
        %5724 = vmatprep.subr.mxu0 %v3198
        %5725 = vmatpush1.msra.mxu0 %v3197
        %5726 = vmatprep.subr.mxu0 %v3188
        %5727 = vmatpush1.msra.mxu0 %v3187
        %5728 = vmatprep.subr.mxu0 %v3178
        %5729 = vmatpush1.msra.mxu0 %v3177
        %5730 = vmatprep.subr.mxu0 %v3168
        %5731 = vmatpush1.msra.mxu0 %v3167
        %5732 = vmatprep.subr.mxu0 %v3158
        %5733 = vmatpush1.msra.mxu0 %v3157
        %5734 = vmatprep.subr.mxu0 %v3148
        %5735 = vmatpush1.msra.mxu0 %v3147
        %5736 = vmatprep.subr.mxu0 %v3138
        %5737 = vmatpush1.msra.mxu0 %v3137
        %5738 = vmatprep.subr.mxu0 %v3448
        %5739 = vmatpush2.msra.mxu0 %v3447
        %5740 = vmatprep.subr.mxu0 %v3438
        %5741 = vmatpush2.msra.mxu0 %v3437
        %5742 = vmatprep.subr.mxu0 %v3428
        %5743 = vmatpush2.msra.mxu0 %v3427
        %5744 = vmatprep.subr.mxu0 %v3418
        %5745 = vmatpush2.msra.mxu0 %v3417
        %5746 = vmatprep.subr.mxu0 %v3408
        %5747 = vmatpush2.msra.mxu0 %v3407
        %5748 = vmatprep.subr.mxu0 %v3398
        %5749 = vmatpush2.msra.mxu0 %v3397
        %5750 = vmatprep.subr.mxu0 %v3388
        %5751 = vmatpush2.msra.mxu0 %v3387
        %5752 = vmatprep.subr.mxu0 %v3378
        %5753 = vmatpush2.msra.mxu0 %v3377
        %5754 = vmatprep.subr.mxu0 %v3368
        %5755 = vmatpush2.msra.mxu0 %v3367
        %5756 = vmatprep.subr.mxu0 %v3358
        %5757 = vmatpush2.msra.mxu0 %v3357
        %5758 = vmatprep.subr.mxu0 %v3348
        %5759 = vmatpush2.msra.mxu0 %v3347
        %5760 = vmatprep.subr.mxu0 %v3338
        %5761 = vmatpush2.msra.mxu0 %v3337
        %5762 = vmatprep.subr.mxu0 %v3328
        %5763 = vmatpush2.msra.mxu0 %v3327
        %5764 = vmatprep.subr.mxu0 %v3318
        %5765 = vmatpush2.msra.mxu0 %v3317
        %5766 = vmatprep.subr.mxu0 %v3308
        %5767 = vmatpush2.msra.mxu0 %v3307
        %5768 = vmatprep.subr.mxu0 %v3298
        %5769 = vmatpush2.msra.mxu0 %v3297
        %5770 = vmatprep.mubr.f32.mxu0 %v4124
        %5771 = vmatmul.mubr.f32.gmra.mxu0 %v4116
        %v5772 = vpop.f32.mrf.mxu0
        %v5773 = vadd.f32 %v5702, %v5772
        %v5774 = vpop.f32.mrf.mxu0
        %v5775 = vadd.f32 %v5704, %v5774
        %5776 = vdwg.mxu0
        %5777 = vmatprep.subr.mxu0 %v3608
        %5778 = vmatpush1.msra.mxu0 %v3607
        %5779 = vmatprep.subr.mxu0 %v3598
        %5780 = vmatpush1.msra.mxu0 %v3597
        %5781 = vmatprep.subr.mxu0 %v3588
        %5782 = vmatpush1.msra.mxu0 %v3587
        %5783 = vmatprep.subr.mxu0 %v3578
        %5784 = vmatpush1.msra.mxu0 %v3577
        %5785 = vmatprep.subr.mxu0 %v3568
        %5786 = vmatpush1.msra.mxu0 %v3567
        %5787 = vmatprep.subr.mxu0 %v3558
        %5788 = vmatpush1.msra.mxu0 %v3557
        %5789 = vmatprep.subr.mxu0 %v3548
        %5790 = vmatpush1.msra.mxu0 %v3547
        %5791 = vmatprep.subr.mxu0 %v3538
        %5792 = vmatpush1.msra.mxu0 %v3537
        %5793 = vmatprep.subr.mxu0 %v3528
        %5794 = vmatpush1.msra.mxu0 %v3527
        %5795 = vmatprep.subr.mxu0 %v3518
        %5796 = vmatpush1.msra.mxu0 %v3517
        %5797 = vmatprep.subr.mxu0 %v3508
        %5798 = vmatpush1.msra.mxu0 %v3507
        %5799 = vmatprep.subr.mxu0 %v3498
        %5800 = vmatpush1.msra.mxu0 %v3497
        %5801 = vmatprep.subr.mxu0 %v3488
        %5802 = vmatpush1.msra.mxu0 %v3487
        %5803 = vmatprep.subr.mxu0 %v3478
        %5804 = vmatpush1.msra.mxu0 %v3477
        %5805 = vmatprep.subr.mxu0 %v3468
        %5806 = vmatpush1.msra.mxu0 %v3467
        %5807 = vmatprep.subr.mxu0 %v3458
        %5808 = vmatpush1.msra.mxu0 %v3457
        %5809 = vmatprep.subr.mxu0 %v3768
        %5810 = vmatpush2.msra.mxu0 %v3767
        %5811 = vmatprep.subr.mxu0 %v3758
        %5812 = vmatpush2.msra.mxu0 %v3757
        %5813 = vmatprep.subr.mxu0 %v3748
        %5814 = vmatpush2.msra.mxu0 %v3747
        %5815 = vmatprep.subr.mxu0 %v3738
        %5816 = vmatpush2.msra.mxu0 %v3737
        %5817 = vmatprep.subr.mxu0 %v3728
        %5818 = vmatpush2.msra.mxu0 %v3727
        %5819 = vmatprep.subr.mxu0 %v3718
        %5820 = vmatpush2.msra.mxu0 %v3717
        %5821 = vmatprep.subr.mxu0 %v3708
        %5822 = vmatpush2.msra.mxu0 %v3707
        %5823 = vmatprep.subr.mxu0 %v3698
        %5824 = vmatpush2.msra.mxu0 %v3697
        %5825 = vmatprep.subr.mxu0 %v3688
        %5826 = vmatpush2.msra.mxu0 %v3687
        %5827 = vmatprep.subr.mxu0 %v3678
        %5828 = vmatpush2.msra.mxu0 %v3677
        %5829 = vmatprep.subr.mxu0 %v3668
        %5830 = vmatpush2.msra.mxu0 %v3667
        %5831 = vmatprep.subr.mxu0 %v3658
        %5832 = vmatpush2.msra.mxu0 %v3657
        %5833 = vmatprep.subr.mxu0 %v3648
        %5834 = vmatpush2.msra.mxu0 %v3647
        %5835 = vmatprep.subr.mxu0 %v3638
        %5836 = vmatpush2.msra.mxu0 %v3637
        %5837 = vmatprep.subr.mxu0 %v3628
        %5838 = vmatpush2.msra.mxu0 %v3627
        %5839 = vmatprep.subr.mxu0 %v3618
        %5840 = vmatpush2.msra.mxu0 %v3617
        %5841 = vmatprep.mubr.f32.mxu0 %v4125
        %5842 = vmatmul.mubr.f32.gmra.mxu0 %v4123
        %v5843 = vpop.f32.mrf.mxu0
        %v5844 = vadd.f32 %v5773, %v5843
        %v5845 = vpop.f32.mrf.mxu0
        %v5846 = vadd.f32 %v5775, %v5845
        %5847 = vdwg.mxu0
        %5848 = vmatprep.subr.mxu0 %v3928
        %5849 = vmatpush1.msra.mxu0 %v3927
        %5850 = vmatprep.subr.mxu0 %v3918
        %5851 = vmatpush1.msra.mxu0 %v3917
        %5852 = vmatprep.subr.mxu0 %v3908
        %5853 = vmatpush1.msra.mxu0 %v3907
        %5854 = vmatprep.subr.mxu0 %v3898
        %5855 = vmatpush1.msra.mxu0 %v3897
        %5856 = vmatprep.subr.mxu0 %v3888
        %5857 = vmatpush1.msra.mxu0 %v3887
        %5858 = vmatprep.subr.mxu0 %v3878
        %5859 = vmatpush1.msra.mxu0 %v3877
        %5860 = vmatprep.subr.mxu0 %v3868
        %5861 = vmatpush1.msra.mxu0 %v3867
        %5862 = vmatprep.subr.mxu0 %v3858
        %5863 = vmatpush1.msra.mxu0 %v3857
        %5864 = vmatprep.subr.mxu0 %v3848
        %5865 = vmatpush1.msra.mxu0 %v3847
        %5866 = vmatprep.subr.mxu0 %v3838
        %5867 = vmatpush1.msra.mxu0 %v3837
        %5868 = vmatprep.subr.mxu0 %v3828
        %5869 = vmatpush1.msra.mxu0 %v3827
        %5870 = vmatprep.subr.mxu0 %v3818
        %5871 = vmatpush1.msra.mxu0 %v3817
        %5872 = vmatprep.subr.mxu0 %v3808
        %5873 = vmatpush1.msra.mxu0 %v3807
        %5874 = vmatprep.subr.mxu0 %v3798
        %5875 = vmatpush1.msra.mxu0 %v3797
        %5876 = vmatprep.subr.mxu0 %v3788
        %5877 = vmatpush1.msra.mxu0 %v3787
        %5878 = vmatprep.subr.mxu0 %v3778
        %5879 = vmatpush1.msra.mxu0 %v3777
        %5880 = vmatprep.subr.mxu0 %v4088
        %5881 = vmatpush2.msra.mxu0 %v4087
        %5882 = vmatprep.subr.mxu0 %v4078
        %5883 = vmatpush2.msra.mxu0 %v4077
        %5884 = vmatprep.subr.mxu0 %v4068
        %5885 = vmatpush2.msra.mxu0 %v4067
        %5886 = vmatprep.subr.mxu0 %v4058
        %5887 = vmatpush2.msra.mxu0 %v4057
        %5888 = vmatprep.subr.mxu0 %v4048
        %5889 = vmatpush2.msra.mxu0 %v4047
        %5890 = vmatprep.subr.mxu0 %v4038
        %5891 = vmatpush2.msra.mxu0 %v4037
        %5892 = vmatprep.subr.mxu0 %v4028
        %5893 = vmatpush2.msra.mxu0 %v4027
        %5894 = vmatprep.subr.mxu0 %v4018
        %5895 = vmatpush2.msra.mxu0 %v4017
        %5896 = vmatprep.subr.mxu0 %v4008
        %5897 = vmatpush2.msra.mxu0 %v4007
        %5898 = vmatprep.subr.mxu0 %v3998
        %5899 = vmatpush2.msra.mxu0 %v3997
        %5900 = vmatprep.subr.mxu0 %v3988
        %5901 = vmatpush2.msra.mxu0 %v3987
        %5902 = vmatprep.subr.mxu0 %v3978
        %5903 = vmatpush2.msra.mxu0 %v3977
        %5904 = vmatprep.subr.mxu0 %v3968
        %5905 = vmatpush2.msra.mxu0 %v3967
        %5906 = vmatprep.subr.mxu0 %v3958
        %5907 = vmatpush2.msra.mxu0 %v3957
        %5908 = vmatprep.subr.mxu0 %v3948
        %5909 = vmatpush2.msra.mxu0 %v3947
        %5910 = vmatprep.subr.mxu0 %v3938
        %5911 = vmatpush2.msra.mxu0 %v3937
        %5912 = vmatprep.mubr.f32.mxu0 %v4133
        %5913 = vmatmul.mubr.f32.gmra.mxu0 %v4132
        %v5914 = vpop.f32.mrf.mxu0
        %v5915 = vadd.f32 %v5844, %v5914
        %v5916 = vpop.f32.mrf.mxu0
        %v5917 = vadd.f32 %v5846, %v5916
        %5918 = vdwg.mxu0
        %v5929 = vcombine.low %v4495, %v4497
        %v5930 = vcombine.low %v4850, %v4852
        %v5932 = vunpack.c.l.s4 1983009808
        %v5933 = vunpack.c.0.s8 %v5932
        %v5934 = vlaneseq
        %v5935 = vshrl.u32 %v5934, 7
        %v5936 = vsub.s32 %v5933, %v5935
        %v5937 = vrot.slane %v5929, %v5936
        %v5939 = vunpack.c.l.s4 1983009808
        %v5940 = vunpack.c.0.s8 %v5939
        %v5941 = vlaneseq
        %v5942 = vshrl.u32 %v5941, 7
        %v5943 = vsub.s32 %v5940, %v5942
        %v5944 = vrot.slane %v5930, %v5943
        %v5945 = vcombine.low %v5937, %v5944
        %v5946 = vcombine.low %v5205, %v5207
        %v5947 = vcombine.low %v5560, %v5562
        %v5949 = vunpack.c.l.s4 1983009808
        %v5950 = vunpack.c.0.s8 %v5949
        %v5951 = vlaneseq
        %v5952 = vshrl.u32 %v5951, 7
        %v5953 = vsub.s32 %v5950, %v5952
        %v5954 = vrot.slane %v5946, %v5953
        %v5956 = vunpack.c.l.s4 1983009808
        %v5957 = vunpack.c.0.s8 %v5956
        %v5958 = vlaneseq
        %v5959 = vshrl.u32 %v5958, 7
        %v5960 = vsub.s32 %v5957, %v5959
        %v5961 = vrot.slane %v5947, %v5960
        %v5962 = vcombine.low %v5954, %v5961
        %v5963 = vcombine.low %v5915, %v5917
        %v5965 = vunpack.c.l.s4 1983009808
        %v5966 = vunpack.c.0.s8 %v5965
        %v5967 = vlaneseq
        %v5968 = vshrl.u32 %v5967, 7
        %v5969 = vsub.s32 %v5966, %v5968
        %v5970 = vrot.slane %v5963, %v5969
        %v5974 = vadd.f32 %v483, %v5945
        %v5975 = vadd.f32 %v484, %v5962
        %v5976 = vadd.f32 %v485, %v5970
        %5977 = vst [vmem:[#allocation2] sm:$0xff] %v5974
        %5978 = vst [vmem:[#allocation2 + $0x8] sm:$0xff] %v5975
        %5979 = vst [vmem:[#allocation2 + $0x10] sm:$0xf] %v5976
        %p5980 = scmp.eq.s32.totalorder %s31, 1
        // Predicated region
        $region73: #{featnet_forward.1} parent=51 // pred_check
          %p5981 = pneg %p5980
        $region74: #{featnet_forward.1} parent=51 // pred_check_branch
          %5983 = sbr.rel (%p5981) target = $region76
        $region75: #{featnet_forward.1} parent=51 // pred_region
          %v5984 = vld [vmem:[#allocation2] sm:$0xff]
          %v5985 = vld [vmem:[#allocation2 + $0x8] sm:$0xff]
          %v5986 = vld [vmem:[#allocation2 + $0x10] sm:$0xf]
          %v5987 = vld [vmem:[%s390] sm:$0xff]
          %v5988 = vld [vmem:[%s390 + $0x8] sm:$0x3]
          %v5991 = vlaneseq
          %v5992 = vshrl.u32 %v5991, 7
          %v5993 = vsub.s32 0, %v5992
          %v5994 = vrot.slane %v5987, %v5993
          %v5995 = vlaneseq
          %v5996 = vshrl.u32 %v5995, 7
          %v5997 = vsub.s32 1, %v5996
          %v5998 = vrot.slane %v5987, %v5997
          %v5999 = vlaneseq
          %v6000 = vshrl.u32 %v5999, 7
          %v6001 = vsub.s32 2, %v6000
          %v6002 = vrot.slane %v5987, %v6001
          %v6003 = vlaneseq
          %v6004 = vshrl.u32 %v6003, 7
          %v6005 = vsub.s32 3, %v6004
          %v6006 = vrot.slane %v5987, %v6005
          %v6007 = vlaneseq
          %v6008 = vshrl.u32 %v6007, 7
          %v6009 = vsub.s32 4, %v6008
          %v6010 = vrot.slane %v5987, %v6009
          %v6011 = vlaneseq
          %v6012 = vshrl.u32 %v6011, 7
          %v6013 = vsub.s32 5, %v6012
          %v6014 = vrot.slane %v5987, %v6013
          %v6015 = vlaneseq
          %v6016 = vshrl.u32 %v6015, 7
          %v6017 = vsub.s32 6, %v6016
          %v6018 = vrot.slane %v5987, %v6017
          %v6019 = vlaneseq
          %v6020 = vshrl.u32 %v6019, 7
          %v6021 = vsub.s32 7, %v6020
          %v6022 = vrot.slane %v5987, %v6021
          %v6023 = vlaneseq
          %v6024 = vshrl.u32 %v6023, 7
          %v6025 = vsub.s32 0, %v6024
          %v6026 = vrot.slane %v5988, %v6025
          %v6027 = vlaneseq
          %v6028 = vshrl.u32 %v6027, 7
          %v6029 = vsub.s32 1, %v6028
          %v6030 = vrot.slane %v5988, %v6029
          %v6031 = vcombine.low %v5994, %v5998
          %v6032 = vcombine.low %v6002, %v6006
          %v6034 = vunpack.c.l.s4 1983009808
          %v6035 = vunpack.c.0.s8 %v6034
          %v6036 = vlaneseq
          %v6037 = vshrl.u32 %v6036, 7
          %v6038 = vsub.s32 %v6035, %v6037
          %v6039 = vrot.slane %v6031, %v6038
          %v6041 = vunpack.c.l.s4 1983009808
          %v6042 = vunpack.c.0.s8 %v6041
          %v6043 = vlaneseq
          %v6044 = vshrl.u32 %v6043, 7
          %v6045 = vsub.s32 %v6042, %v6044
          %v6046 = vrot.slane %v6032, %v6045
          %v6047 = vcombine.low %v6039, %v6046
          %v6048 = vcombine.low %v6010, %v6014
          %v6049 = vcombine.low %v6018, %v6022
          %v6051 = vunpack.c.l.s4 1983009808
          %v6052 = vunpack.c.0.s8 %v6051
          %v6053 = vlaneseq
          %v6054 = vshrl.u32 %v6053, 7
          %v6055 = vsub.s32 %v6052, %v6054
          %v6056 = vrot.slane %v6048, %v6055
          %v6058 = vunpack.c.l.s4 1983009808
          %v6059 = vunpack.c.0.s8 %v6058
          %v6060 = vlaneseq
          %v6061 = vshrl.u32 %v6060, 7
          %v6062 = vsub.s32 %v6059, %v6061
          %v6063 = vrot.slane %v6049, %v6062
          %v6064 = vcombine.low %v6056, %v6063
          %v6065 = vcombine.low %v6026, %v6030
          %v6067 = vunpack.c.l.s4 1983009808
          %v6068 = vunpack.c.0.s8 %v6067
          %v6069 = vlaneseq
          %v6070 = vshrl.u32 %v6069, 7
          %v6071 = vsub.s32 %v6068, %v6070
          %v6072 = vrot.slane %v6065, %v6071
          %v6076 = vmul.f32 %v5984, %v6047
          %v6077 = vmul.f32 %v5985, %v6064
          %v6078 = vmul.f32 %v5986, %v6072
          %v6079 = vld [vmem:[%s399] sm:$0xff]
          %v6080 = vld [vmem:[%s399 + $0x8] sm:$0x3]
          %v6083 = vlaneseq
          %v6084 = vshrl.u32 %v6083, 7
          %v6085 = vsub.s32 0, %v6084
          %v6086 = vrot.slane %v6079, %v6085
          %v6087 = vlaneseq
          %v6088 = vshrl.u32 %v6087, 7
          %v6089 = vsub.s32 1, %v6088
          %v6090 = vrot.slane %v6079, %v6089
          %v6091 = vlaneseq
          %v6092 = vshrl.u32 %v6091, 7
          %v6093 = vsub.s32 2, %v6092
          %v6094 = vrot.slane %v6079, %v6093
          %v6095 = vlaneseq
          %v6096 = vshrl.u32 %v6095, 7
          %v6097 = vsub.s32 3, %v6096
          %v6098 = vrot.slane %v6079, %v6097
          %v6099 = vlaneseq
          %v6100 = vshrl.u32 %v6099, 7
          %v6101 = vsub.s32 4, %v6100
          %v6102 = vrot.slane %v6079, %v6101
          %v6103 = vlaneseq
          %v6104 = vshrl.u32 %v6103, 7
          %v6105 = vsub.s32 5, %v6104
          %v6106 = vrot.slane %v6079, %v6105
          %v6107 = vlaneseq
          %v6108 = vshrl.u32 %v6107, 7
          %v6109 = vsub.s32 6, %v6108
          %v6110 = vrot.slane %v6079, %v6109
          %v6111 = vlaneseq
          %v6112 = vshrl.u32 %v6111, 7
          %v6113 = vsub.s32 7, %v6112
          %v6114 = vrot.slane %v6079, %v6113
          %v6115 = vlaneseq
          %v6116 = vshrl.u32 %v6115, 7
          %v6117 = vsub.s32 0, %v6116
          %v6118 = vrot.slane %v6080, %v6117
          %v6119 = vlaneseq
          %v6120 = vshrl.u32 %v6119, 7
          %v6121 = vsub.s32 1, %v6120
          %v6122 = vrot.slane %v6080, %v6121
          %v6123 = vcombine.low %v6086, %v6090
          %v6124 = vcombine.low %v6094, %v6098
          %v6126 = vunpack.c.l.s4 1983009808
          %v6127 = vunpack.c.0.s8 %v6126
          %v6128 = vlaneseq
          %v6129 = vshrl.u32 %v6128, 7
          %v6130 = vsub.s32 %v6127, %v6129
          %v6131 = vrot.slane %v6123, %v6130
          %v6133 = vunpack.c.l.s4 1983009808
          %v6134 = vunpack.c.0.s8 %v6133
          %v6135 = vlaneseq
          %v6136 = vshrl.u32 %v6135, 7
          %v6137 = vsub.s32 %v6134, %v6136
          %v6138 = vrot.slane %v6124, %v6137
          %v6139 = vcombine.low %v6131, %v6138
          %v6140 = vcombine.low %v6102, %v6106
          %v6141 = vcombine.low %v6110, %v6114
          %v6143 = vunpack.c.l.s4 1983009808
          %v6144 = vunpack.c.0.s8 %v6143
          %v6145 = vlaneseq
          %v6146 = vshrl.u32 %v6145, 7
          %v6147 = vsub.s32 %v6144, %v6146
          %v6148 = vrot.slane %v6140, %v6147
          %v6150 = vunpack.c.l.s4 1983009808
          %v6151 = vunpack.c.0.s8 %v6150
          %v6152 = vlaneseq
          %v6153 = vshrl.u32 %v6152, 7
          %v6154 = vsub.s32 %v6151, %v6153
          %v6155 = vrot.slane %v6141, %v6154
          %v6156 = vcombine.low %v6148, %v6155
          %v6157 = vcombine.low %v6118, %v6122
          %v6159 = vunpack.c.l.s4 1983009808
          %v6160 = vunpack.c.0.s8 %v6159
          %v6161 = vlaneseq
          %v6162 = vshrl.u32 %v6161, 7
          %v6163 = vsub.s32 %v6160, %v6162
          %v6164 = vrot.slane %v6157, %v6163
          %v6168 = vadd.f32 %v6076, %v6139
          %v6169 = vadd.f32 %v6077, %v6156
          %v6170 = vadd.f32 %v6078, %v6164
          %v6171 = vmax.f32 %v6168, 0.0
          %v6172 = vmax.f32 %v6169, 0.0
          %v6173 = vmax.f32 %v6170, 0.0
          %vm6174 = vcmp.ne.f32.partialorder %v6168, %v6168
          %vm6175 = vcmp.ne.f32.partialorder %v6169, %v6169
          %vm6176 = vcmp.ne.f32.partialorder %v6170, %v6170
          %v6177 = vadd.f32 %v6168, 0.0
          %v6178 = vadd.f32 %v6169, 0.0
          %v6179 = vadd.f32 %v6170, 0.0
          %v6180 = vand.u32 2147483647, %v6168
          %v6181 = vand.u32 2147483647, %v6169
          %v6182 = vand.u32 2147483647, %v6170
          %v6183 = vsub.f32 0.0, %v6180
          %v6184 = vsub.f32 0.0, %v6181
          %v6185 = vsub.f32 0.0, %v6182
          %v6186 = vmul.f32 %v6183, 1.442695
          %v6187 = vpow.pop %v6186
          %v6188 = vmul.f32 %v6184, 1.442695
          %v6189 = vpow.pop %v6188
          %v6190 = vmul.f32 %v6185, 1.442695
          %v6191 = vpow.pop %v6190
          %v6192 = vadd.f32 %v6187, 1.0
          %v6193 = vlog2.pop %v6192
          %v6194 = vmul.f32 %v6193, 0.6931472
          %v6195 = vmul.f32 -0.5, %v6187
          %v6196 = vadd.f32 %v6195, 1.0
          %v6197 = vmul.f32 %v6196, %v6187
          %v6198 = vand.u32 2147483647, %v6187
          %vm6199 = vcmp.lt.f32.partialorder %v6198, 0.0004427343
          %v6200 = vsel %vm6199, %v6197, %v6194
          %v6201 = vadd.f32 %v6189, 1.0
          %v6202 = vlog2.pop %v6201
          %v6203 = vmul.f32 %v6202, 0.6931472
          %v6204 = vmul.f32 -0.5, %v6189
          %v6205 = vadd.f32 %v6204, 1.0
          %v6206 = vmul.f32 %v6205, %v6189
          %v6207 = vand.u32 2147483647, %v6189
          %vm6208 = vcmp.lt.f32.partialorder %v6207, 0.0004427343
          %v6209 = vsel %vm6208, %v6206, %v6203
          %v6210 = vadd.f32 %v6191, 1.0
          %v6211 = vlog2.pop %v6210
          %v6212 = vmul.f32 %v6211, 0.6931472
          %v6213 = vmul.f32 -0.5, %v6191
          %v6214 = vadd.f32 %v6213, 1.0
          %v6215 = vmul.f32 %v6214, %v6191
          %v6216 = vand.u32 2147483647, %v6191
          %vm6217 = vcmp.lt.f32.partialorder %v6216, 0.0004427343
          %v6218 = vsel %vm6217, %v6215, %v6212
          %v6219 = vadd.f32 %v6171, %v6200
          %v6220 = vadd.f32 %v6172, %v6209
          %v6221 = vadd.f32 %v6173, %v6218
          %v6222 = vsel %vm6174, %v6177, %v6219
          %v6223 = vsel %vm6175, %v6178, %v6220
          %v6224 = vsel %vm6176, %v6179, %v6221
          %v6225 = vtanh.pop %v6222
          %v6226 = vtanh.pop %v6223
          %v6227 = vtanh.pop %v6224
          %v6228 = vmul.f32 %v6168, %v6225
          %v6229 = vmul.f32 %v6169, %v6226
          %v6230 = vmul.f32 %v6170, %v6227
          %v6234 = vcombine.high %v6228, %v6228
          %v6236 = vunpack.c.l.s4 1983009808
          %v6237 = vunpack.c.0.s8 %v6236
          %v6238 = vlaneseq
          %v6239 = vshrl.u32 %v6238, 7
          %v6240 = vsub.s32 %v6237, %v6239
          %v6241 = vrot.slane %v6228, %v6240
          %v6243 = vunpack.c.l.s4 1983009808
          %v6244 = vunpack.c.0.s8 %v6243
          %v6245 = vlaneseq
          %v6246 = vshrl.u32 %v6245, 7
          %v6247 = vsub.s32 %v6244, %v6246
          %v6248 = vrot.slane %v6234, %v6247
          %v6249 = vcombine.high %v6241, %v6241
          %v6250 = vcombine.high %v6248, %v6248
          %v6251 = vcombine.high %v6229, %v6229
          %v6253 = vunpack.c.l.s4 1983009808
          %v6254 = vunpack.c.0.s8 %v6253
          %v6255 = vlaneseq
          %v6256 = vshrl.u32 %v6255, 7
          %v6257 = vsub.s32 %v6254, %v6256
          %v6258 = vrot.slane %v6229, %v6257
          %v6260 = vunpack.c.l.s4 1983009808
          %v6261 = vunpack.c.0.s8 %v6260
          %v6262 = vlaneseq
          %v6263 = vshrl.u32 %v6262, 7
          %v6264 = vsub.s32 %v6261, %v6263
          %v6265 = vrot.slane %v6251, %v6264
          %v6266 = vcombine.high %v6258, %v6258
          %v6267 = vcombine.high %v6265, %v6265
          %v6269 = vunpack.c.l.s4 1983009808
          %v6270 = vunpack.c.0.s8 %v6269
          %v6271 = vlaneseq
          %v6272 = vshrl.u32 %v6271, 7
          %v6273 = vsub.s32 %v6270, %v6272
          %v6274 = vrot.slane %v6230, %v6273
          %v6275 = vcombine.high %v6274, %v6274
          %v6286 = vpack.c.bf16 %v6241, %v6241
          %v6287 = vpack.c.bf16 %v6249, %v6249
          %v6288 = vpack.c.bf16 %v6248, %v6248
          %v6289 = vpack.c.bf16 %v6250, %v6250
          %v6290 = vpack.c.bf16 %v6258, %v6258
          %v6291 = vpack.c.bf16 %v6266, %v6266
          %v6292 = vpack.c.bf16 %v6265, %v6265
          %v6293 = vpack.c.bf16 %v6267, %v6267
          %v6294 = vpack.c.bf16 %v6274, %v6274
          %v6295 = vpack.c.bf16 %v6275, %v6275
          %v6296 = vld [vmem:[%s469] sm:$0xf]
          %v6297 = vld [vmem:[%s469 + $0x4] sm:$0xf]
          %v6298 = vld [vmem:[%s469 + $0x8] sm:$0xf]
          %v6299 = vld [vmem:[%s469 + $0xc] sm:$0xf]
          %v6300 = vld [vmem:[%s469 + $0x10] sm:$0xf]
          %v6301 = vld [vmem:[%s469 + $0x14] sm:$0xf]
          %v6302 = vld [vmem:[%s469 + $0x18] sm:$0xf]
          %v6303 = vld [vmem:[%s469 + $0x1c] sm:$0xf]
          %v6304 = vld [vmem:[%s469 + $0x20] sm:$0xf]
          %v6305 = vld [vmem:[%s469 + $0x24] sm:$0xf]
          %v6306 = vld [vmem:[%s469 + $0x28] sm:$0xf]
          %v6307 = vld [vmem:[%s469 + $0x2c] sm:$0xf]
          %v6308 = vld [vmem:[%s469 + $0x30] sm:$0xf]
          %v6309 = vld [vmem:[%s469 + $0x34] sm:$0xf]
          %v6310 = vld [vmem:[%s469 + $0x38] sm:$0xf]
          %v6311 = vld [vmem:[%s469 + $0x3c] sm:$0xf]
          %v6312 = vld [vmem:[%s469 + $0x40] sm:$0xf]
          %v6313 = vld [vmem:[%s469 + $0x44] sm:$0xf]
          %v6314 = vld [vmem:[%s469 + $0x48] sm:$0xf]
          %v6315 = vld [vmem:[%s469 + $0x4c] sm:$0xf]
          %v6316 = vld [vmem:[%s469 + $0x50] sm:$0xf]
          %v6317 = vld [vmem:[%s469 + $0x54] sm:$0xf]
          %v6318 = vld [vmem:[%s469 + $0x58] sm:$0xf]
          %v6319 = vld [vmem:[%s469 + $0x5c] sm:$0xf]
          %v6320 = vld [vmem:[%s469 + $0x60] sm:$0xf]
          %v6321 = vld [vmem:[%s469 + $0x64] sm:$0xf]
          %v6322 = vld [vmem:[%s469 + $0x68] sm:$0xf]
          %v6323 = vld [vmem:[%s469 + $0x6c] sm:$0xf]
          %v6324 = vld [vmem:[%s469 + $0x70] sm:$0xf]
          %v6325 = vld [vmem:[%s469 + $0x74] sm:$0xf]
          %v6326 = vld [vmem:[%s469 + $0x78] sm:$0xf]
          %v6327 = vld [vmem:[%s469 + $0x7c] sm:$0xf]
          %v6328 = vld [vmem:[%s469 + $0x80] sm:$0xf]
          %v6329 = vld [vmem:[%s469 + $0x84] sm:$0xf]
          %v6330 = vld [vmem:[%s469 + $0x88] sm:$0xf]
          %v6331 = vld [vmem:[%s469 + $0x8c] sm:$0xf]
          %v6332 = vld [vmem:[%s469 + $0x90] sm:$0xf]
          %v6333 = vld [vmem:[%s469 + $0x94] sm:$0xf]
          %v6334 = vld [vmem:[%s469 + $0x98] sm:$0xf]
          %v6335 = vld [vmem:[%s469 + $0x9c] sm:$0xf]
          %v6336 = vld [vmem:[%s469 + $0xa0] sm:$0xf]
          %v6337 = vld [vmem:[%s469 + $0xa4] sm:$0xf]
          %v6338 = vld [vmem:[%s469 + $0xa8] sm:$0xf]
          %v6339 = vld [vmem:[%s469 + $0xac] sm:$0xf]
          %v6340 = vld [vmem:[%s469 + $0xb0] sm:$0xf]
          %v6341 = vld [vmem:[%s469 + $0xb4] sm:$0xf]
          %v6342 = vld [vmem:[%s469 + $0xb8] sm:$0xf]
          %v6343 = vld [vmem:[%s469 + $0xbc] sm:$0xf]
          %v6344 = vld [vmem:[%s469 + $0xc0] sm:$0xf]
          %v6345 = vld [vmem:[%s469 + $0xc4] sm:$0xf]
          %v6346 = vld [vmem:[%s469 + $0xc8] sm:$0xf]
          %v6347 = vld [vmem:[%s469 + $0xcc] sm:$0xf]
          %v6348 = vld [vmem:[%s469 + $0xd0] sm:$0xf]
          %v6349 = vld [vmem:[%s469 + $0xd4] sm:$0xf]
          %v6350 = vld [vmem:[%s469 + $0xd8] sm:$0xf]
          %v6351 = vld [vmem:[%s469 + $0xdc] sm:$0xf]
          %v6352 = vld [vmem:[%s469 + $0xe0] sm:$0xf]
          %v6353 = vld [vmem:[%s469 + $0xe4] sm:$0xf]
          %v6354 = vld [vmem:[%s469 + $0xe8] sm:$0xf]
          %v6355 = vld [vmem:[%s469 + $0xec] sm:$0xf]
          %v6356 = vld [vmem:[%s469 + $0xf0] sm:$0xf]
          %v6357 = vld [vmem:[%s469 + $0xf4] sm:$0xf]
          %v6358 = vld [vmem:[%s469 + $0xf8] sm:$0xf]
          %v6359 = vld [vmem:[%s469 + $0xfc] sm:$0xf]
          %v6360 = vld [vmem:[%s469 + $0x100] sm:$0xf]
          %v6361 = vld [vmem:[%s469 + $0x104] sm:$0xf]
          %v6362 = vld [vmem:[%s469 + $0x108] sm:$0xf]
          %v6363 = vld [vmem:[%s469 + $0x10c] sm:$0xf]
          %v6364 = vld [vmem:[%s469 + $0x110] sm:$0xf]
          %v6365 = vld [vmem:[%s469 + $0x114] sm:$0xf]
          %v6366 = vld [vmem:[%s469 + $0x118] sm:$0xf]
          %v6367 = vld [vmem:[%s469 + $0x11c] sm:$0xf]
          %v6368 = vld [vmem:[%s469 + $0x120] sm:$0xf]
          %v6369 = vld [vmem:[%s469 + $0x124] sm:$0xf]
          %v6370 = vld [vmem:[%s469 + $0x128] sm:$0xf]
          %v6371 = vld [vmem:[%s469 + $0x12c] sm:$0xf]
          %v6372 = vld [vmem:[%s469 + $0x130] sm:$0xf]
          %v6373 = vld [vmem:[%s469 + $0x134] sm:$0xf]
          %v6374 = vld [vmem:[%s469 + $0x138] sm:$0xf]
          %v6375 = vld [vmem:[%s469 + $0x13c] sm:$0xf]
          %v6376 = vld [vmem:[%s469 + $0x140] sm:$0xf]
          %v6377 = vld [vmem:[%s469 + $0x144] sm:$0xf]
          %v6378 = vld [vmem:[%s469 + $0x148] sm:$0xf]
          %v6379 = vld [vmem:[%s469 + $0x14c] sm:$0xf]
          %v6380 = vld [vmem:[%s469 + $0x150] sm:$0xf]
          %v6381 = vld [vmem:[%s469 + $0x154] sm:$0xf]
          %v6382 = vld [vmem:[%s469 + $0x158] sm:$0xf]
          %v6383 = vld [vmem:[%s469 + $0x15c] sm:$0xf]
          %v6384 = vld [vmem:[%s469 + $0x160] sm:$0xf]
          %v6385 = vld [vmem:[%s469 + $0x164] sm:$0xf]
          %v6386 = vld [vmem:[%s469 + $0x168] sm:$0xf]
          %v6387 = vld [vmem:[%s469 + $0x16c] sm:$0xf]
          %v6388 = vld [vmem:[%s469 + $0x170] sm:$0xf]
          %v6389 = vld [vmem:[%s469 + $0x174] sm:$0xf]
          %v6390 = vld [vmem:[%s469 + $0x178] sm:$0xf]
          %v6391 = vld [vmem:[%s469 + $0x17c] sm:$0xf]
          %v6392 = vld [vmem:[%s469 + $0x180] sm:$0xf]
          %v6393 = vld [vmem:[%s469 + $0x184] sm:$0xf]
          %v6394 = vld [vmem:[%s469 + $0x188] sm:$0xf]
          %v6395 = vld [vmem:[%s469 + $0x18c] sm:$0xf]
          %v6396 = vld [vmem:[%s469 + $0x190] sm:$0xf]
          %v6397 = vld [vmem:[%s469 + $0x194] sm:$0xf]
          %v6398 = vld [vmem:[%s469 + $0x198] sm:$0xf]
          %v6399 = vld [vmem:[%s469 + $0x19c] sm:$0xf]
          %v6400 = vld [vmem:[%s469 + $0x1a0] sm:$0xf]
          %v6401 = vld [vmem:[%s469 + $0x1a4] sm:$0xf]
          %v6402 = vld [vmem:[%s469 + $0x1a8] sm:$0xf]
          %v6403 = vld [vmem:[%s469 + $0x1ac] sm:$0xf]
          %v6404 = vld [vmem:[%s469 + $0x1b0] sm:$0xf]
          %v6405 = vld [vmem:[%s469 + $0x1b4] sm:$0xf]
          %v6406 = vld [vmem:[%s469 + $0x1b8] sm:$0xf]
          %v6407 = vld [vmem:[%s469 + $0x1bc] sm:$0xf]
          %v6408 = vld [vmem:[%s469 + $0x1c0] sm:$0xf]
          %v6409 = vld [vmem:[%s469 + $0x1c4] sm:$0xf]
          %v6410 = vld [vmem:[%s469 + $0x1c8] sm:$0xf]
          %v6411 = vld [vmem:[%s469 + $0x1cc] sm:$0xf]
          %v6412 = vld [vmem:[%s469 + $0x1d0] sm:$0xf]
          %v6413 = vld [vmem:[%s469 + $0x1d4] sm:$0xf]
          %v6414 = vld [vmem:[%s469 + $0x1d8] sm:$0xf]
          %v6415 = vld [vmem:[%s469 + $0x1dc] sm:$0xf]
          %v6416 = vld [vmem:[%s469 + $0x1e0] sm:$0xf]
          %v6417 = vld [vmem:[%s469 + $0x1e4] sm:$0xf]
          %v6418 = vld [vmem:[%s469 + $0x1e8] sm:$0xf]
          %v6419 = vld [vmem:[%s469 + $0x1ec] sm:$0xf]
          %v6420 = vld [vmem:[%s469 + $0x1f0] sm:$0xf]
          %v6421 = vld [vmem:[%s469 + $0x1f4] sm:$0xf]
          %v6422 = vld [vmem:[%s469 + $0x1f8] sm:$0xf]
          %v6423 = vld [vmem:[%s469 + $0x1fc] sm:$0xf]
          %v6424 = vld [vmem:[%s469 + $0x200] sm:$0xf]
          %v6425 = vld [vmem:[%s469 + $0x204] sm:$0xf]
          %v6426 = vld [vmem:[%s469 + $0x208] sm:$0xf]
          %v6427 = vld [vmem:[%s469 + $0x20c] sm:$0xf]
          %v6428 = vld [vmem:[%s469 + $0x210] sm:$0xf]
          %v6429 = vld [vmem:[%s469 + $0x214] sm:$0xf]
          %v6430 = vld [vmem:[%s469 + $0x218] sm:$0xf]
          %v6431 = vld [vmem:[%s469 + $0x21c] sm:$0xf]
          %v6432 = vld [vmem:[%s469 + $0x220] sm:$0xf]
          %v6433 = vld [vmem:[%s469 + $0x224] sm:$0xf]
          %v6434 = vld [vmem:[%s469 + $0x228] sm:$0xf]
          %v6435 = vld [vmem:[%s469 + $0x22c] sm:$0xf]
          %v6436 = vld [vmem:[%s469 + $0x230] sm:$0xf]
          %v6437 = vld [vmem:[%s469 + $0x234] sm:$0xf]
          %v6438 = vld [vmem:[%s469 + $0x238] sm:$0xf]
          %v6439 = vld [vmem:[%s469 + $0x23c] sm:$0xf]
          %v6440 = vld [vmem:[%s469 + $0x240] sm:$0xf]
          %v6441 = vld [vmem:[%s469 + $0x244] sm:$0xf]
          %v6442 = vld [vmem:[%s469 + $0x248] sm:$0xf]
          %v6443 = vld [vmem:[%s469 + $0x24c] sm:$0xf]
          %v6444 = vld [vmem:[%s469 + $0x250] sm:$0xf]
          %v6445 = vld [vmem:[%s469 + $0x254] sm:$0xf]
          %v6446 = vld [vmem:[%s469 + $0x258] sm:$0xf]
          %v6447 = vld [vmem:[%s469 + $0x25c] sm:$0xf]
          %v6448 = vld [vmem:[%s469 + $0x260] sm:$0xf]
          %v6449 = vld [vmem:[%s469 + $0x264] sm:$0xf]
          %v6450 = vld [vmem:[%s469 + $0x268] sm:$0xf]
          %v6451 = vld [vmem:[%s469 + $0x26c] sm:$0xf]
          %v6452 = vld [vmem:[%s469 + $0x270] sm:$0xf]
          %v6453 = vld [vmem:[%s469 + $0x274] sm:$0xf]
          %v6454 = vld [vmem:[%s469 + $0x278] sm:$0xf]
          %v6455 = vld [vmem:[%s469 + $0x27c] sm:$0xf]
          %v6616 = vunpack.c.l.b16 %v6296
          %v6617 = vunpack.c.l.b16 %v6297
          %v6618 = vunpack.c.l.b16 %v6298
          %v6619 = vunpack.c.l.b16 %v6299
          %v6620 = vunpack.c.l.b16 %v6300
          %v6621 = vunpack.c.l.b16 %v6301
          %v6622 = vunpack.c.l.b16 %v6302
          %v6623 = vunpack.c.l.b16 %v6303
          %v6624 = vunpack.c.l.b16 %v6304
          %v6625 = vunpack.c.l.b16 %v6305
          %v6626 = vunpack.c.l.b16 %v6306
          %v6627 = vunpack.c.l.b16 %v6307
          %v6628 = vunpack.c.l.b16 %v6308
          %v6629 = vunpack.c.l.b16 %v6309
          %v6630 = vunpack.c.l.b16 %v6310
          %v6631 = vunpack.c.l.b16 %v6311
          %v6632 = vunpack.c.l.b16 %v6312
          %v6633 = vunpack.c.l.b16 %v6313
          %v6634 = vunpack.c.l.b16 %v6314
          %v6635 = vunpack.c.l.b16 %v6315
          %v6636 = vunpack.c.l.b16 %v6316
          %v6637 = vunpack.c.l.b16 %v6317
          %v6638 = vunpack.c.l.b16 %v6318
          %v6639 = vunpack.c.l.b16 %v6319
          %v6640 = vunpack.c.l.b16 %v6320
          %v6641 = vunpack.c.l.b16 %v6321
          %v6642 = vunpack.c.l.b16 %v6322
          %v6643 = vunpack.c.l.b16 %v6323
          %v6644 = vunpack.c.l.b16 %v6324
          %v6645 = vunpack.c.l.b16 %v6325
          %v6646 = vunpack.c.l.b16 %v6326
          %v6647 = vunpack.c.l.b16 %v6327
          %v6648 = vunpack.c.l.b16 %v6328
          %v6649 = vunpack.c.l.b16 %v6329
          %v6650 = vunpack.c.l.b16 %v6330
          %v6651 = vunpack.c.l.b16 %v6331
          %v6652 = vunpack.c.l.b16 %v6332
          %v6653 = vunpack.c.l.b16 %v6333
          %v6654 = vunpack.c.l.b16 %v6334
          %v6655 = vunpack.c.l.b16 %v6335
          %v6656 = vunpack.c.l.b16 %v6336
          %v6657 = vunpack.c.l.b16 %v6337
          %v6658 = vunpack.c.l.b16 %v6338
          %v6659 = vunpack.c.l.b16 %v6339
          %v6660 = vunpack.c.l.b16 %v6340
          %v6661 = vunpack.c.l.b16 %v6341
          %v6662 = vunpack.c.l.b16 %v6342
          %v6663 = vunpack.c.l.b16 %v6343
          %v6664 = vunpack.c.l.b16 %v6344
          %v6665 = vunpack.c.l.b16 %v6345
          %v6666 = vunpack.c.l.b16 %v6346
          %v6667 = vunpack.c.l.b16 %v6347
          %v6668 = vunpack.c.l.b16 %v6348
          %v6669 = vunpack.c.l.b16 %v6349
          %v6670 = vunpack.c.l.b16 %v6350
          %v6671 = vunpack.c.l.b16 %v6351
          %v6672 = vunpack.c.l.b16 %v6352
          %v6673 = vunpack.c.l.b16 %v6353
          %v6674 = vunpack.c.l.b16 %v6354
          %v6675 = vunpack.c.l.b16 %v6355
          %v6676 = vunpack.c.l.b16 %v6356
          %v6677 = vunpack.c.l.b16 %v6357
          %v6678 = vunpack.c.l.b16 %v6358
          %v6679 = vunpack.c.l.b16 %v6359
          %v6680 = vunpack.c.l.b16 %v6360
          %v6681 = vunpack.c.l.b16 %v6361
          %v6682 = vunpack.c.l.b16 %v6362
          %v6683 = vunpack.c.l.b16 %v6363
          %v6684 = vunpack.c.l.b16 %v6364
          %v6685 = vunpack.c.l.b16 %v6365
          %v6686 = vunpack.c.l.b16 %v6366
          %v6687 = vunpack.c.l.b16 %v6367
          %v6688 = vunpack.c.l.b16 %v6368
          %v6689 = vunpack.c.l.b16 %v6369
          %v6690 = vunpack.c.l.b16 %v6370
          %v6691 = vunpack.c.l.b16 %v6371
          %v6692 = vunpack.c.l.b16 %v6372
          %v6693 = vunpack.c.l.b16 %v6373
          %v6694 = vunpack.c.l.b16 %v6374
          %v6695 = vunpack.c.l.b16 %v6375
          %v6696 = vunpack.c.l.b16 %v6376
          %v6697 = vunpack.c.l.b16 %v6377
          %v6698 = vunpack.c.l.b16 %v6378
          %v6699 = vunpack.c.l.b16 %v6379
          %v6700 = vunpack.c.l.b16 %v6380
          %v6701 = vunpack.c.l.b16 %v6381
          %v6702 = vunpack.c.l.b16 %v6382
          %v6703 = vunpack.c.l.b16 %v6383
          %v6704 = vunpack.c.l.b16 %v6384
          %v6705 = vunpack.c.l.b16 %v6385
          %v6706 = vunpack.c.l.b16 %v6386
          %v6707 = vunpack.c.l.b16 %v6387
          %v6708 = vunpack.c.l.b16 %v6388
          %v6709 = vunpack.c.l.b16 %v6389
          %v6710 = vunpack.c.l.b16 %v6390
          %v6711 = vunpack.c.l.b16 %v6391
          %v6712 = vunpack.c.l.b16 %v6392
          %v6713 = vunpack.c.l.b16 %v6393
          %v6714 = vunpack.c.l.b16 %v6394
          %v6715 = vunpack.c.l.b16 %v6395
          %v6716 = vunpack.c.l.b16 %v6396
          %v6717 = vunpack.c.l.b16 %v6397
          %v6718 = vunpack.c.l.b16 %v6398
          %v6719 = vunpack.c.l.b16 %v6399
          %v6720 = vunpack.c.l.b16 %v6400
          %v6721 = vunpack.c.l.b16 %v6401
          %v6722 = vunpack.c.l.b16 %v6402
          %v6723 = vunpack.c.l.b16 %v6403
          %v6724 = vunpack.c.l.b16 %v6404
          %v6725 = vunpack.c.l.b16 %v6405
          %v6726 = vunpack.c.l.b16 %v6406
          %v6727 = vunpack.c.l.b16 %v6407
          %v6728 = vunpack.c.l.b16 %v6408
          %v6729 = vunpack.c.l.b16 %v6409
          %v6730 = vunpack.c.l.b16 %v6410
          %v6731 = vunpack.c.l.b16 %v6411
          %v6732 = vunpack.c.l.b16 %v6412
          %v6733 = vunpack.c.l.b16 %v6413
          %v6734 = vunpack.c.l.b16 %v6414
          %v6735 = vunpack.c.l.b16 %v6415
          %v6736 = vunpack.c.l.b16 %v6416
          %v6737 = vunpack.c.l.b16 %v6417
          %v6738 = vunpack.c.l.b16 %v6418
          %v6739 = vunpack.c.l.b16 %v6419
          %v6740 = vunpack.c.l.b16 %v6420
          %v6741 = vunpack.c.l.b16 %v6421
          %v6742 = vunpack.c.l.b16 %v6422
          %v6743 = vunpack.c.l.b16 %v6423
          %v6744 = vunpack.c.l.b16 %v6424
          %v6745 = vunpack.c.l.b16 %v6425
          %v6746 = vunpack.c.l.b16 %v6426
          %v6747 = vunpack.c.l.b16 %v6427
          %v6748 = vunpack.c.l.b16 %v6428
          %v6749 = vunpack.c.l.b16 %v6429
          %v6750 = vunpack.c.l.b16 %v6430
          %v6751 = vunpack.c.l.b16 %v6431
          %v6752 = vunpack.c.l.b16 %v6432
          %v6753 = vunpack.c.l.b16 %v6433
          %v6754 = vunpack.c.l.b16 %v6434
          %v6755 = vunpack.c.l.b16 %v6435
          %v6756 = vunpack.c.l.b16 %v6436
          %v6757 = vunpack.c.l.b16 %v6437
          %v6758 = vunpack.c.l.b16 %v6438
          %v6759 = vunpack.c.l.b16 %v6439
          %v6760 = vunpack.c.l.b16 %v6440
          %v6761 = vunpack.c.l.b16 %v6441
          %v6762 = vunpack.c.l.b16 %v6442
          %v6763 = vunpack.c.l.b16 %v6443
          %v6764 = vunpack.c.l.b16 %v6444
          %v6765 = vunpack.c.l.b16 %v6445
          %v6766 = vunpack.c.l.b16 %v6446
          %v6767 = vunpack.c.l.b16 %v6447
          %v6768 = vunpack.c.l.b16 %v6448
          %v6769 = vunpack.c.l.b16 %v6449
          %v6770 = vunpack.c.l.b16 %v6450
          %v6771 = vunpack.c.l.b16 %v6451
          %v6772 = vunpack.c.l.b16 %v6452
          %v6773 = vunpack.c.l.b16 %v6453
          %v6774 = vunpack.c.l.b16 %v6454
          %v6775 = vunpack.c.l.b16 %v6455
          %v6776 = vpack.c.b16 %v6617, %v6616
          %v6777 = vpack.c.b16 %v6619, %v6618
          %v6778 = vpack.c.b16 %v6621, %v6620
          %v6779 = vpack.c.b16 %v6623, %v6622
          %v6780 = vpack.c.b16 %v6625, %v6624
          %v6781 = vpack.c.b16 %v6627, %v6626
          %v6782 = vpack.c.b16 %v6629, %v6628
          %v6783 = vpack.c.b16 %v6631, %v6630
          %v6784 = vpack.c.b16 %v6633, %v6632
          %v6785 = vpack.c.b16 %v6635, %v6634
          %v6786 = vpack.c.b16 %v6637, %v6636
          %v6787 = vpack.c.b16 %v6639, %v6638
          %v6788 = vpack.c.b16 %v6641, %v6640
          %v6789 = vpack.c.b16 %v6643, %v6642
          %v6790 = vpack.c.b16 %v6645, %v6644
          %v6791 = vpack.c.b16 %v6647, %v6646
          %v6792 = vpack.c.b16 %v6649, %v6648
          %v6793 = vpack.c.b16 %v6651, %v6650
          %v6794 = vpack.c.b16 %v6653, %v6652
          %v6795 = vpack.c.b16 %v6655, %v6654
          %v6796 = vpack.c.b16 %v6657, %v6656
          %v6797 = vpack.c.b16 %v6659, %v6658
          %v6798 = vpack.c.b16 %v6661, %v6660
          %v6799 = vpack.c.b16 %v6663, %v6662
          %v6800 = vpack.c.b16 %v6665, %v6664
          %v6801 = vpack.c.b16 %v6667, %v6666
          %v6802 = vpack.c.b16 %v6669, %v6668
          %v6803 = vpack.c.b16 %v6671, %v6670
          %v6804 = vpack.c.b16 %v6673, %v6672
          %v6805 = vpack.c.b16 %v6675, %v6674
          %v6806 = vpack.c.b16 %v6677, %v6676
          %v6807 = vpack.c.b16 %v6679, %v6678
          %v6808 = vpack.c.b16 %v6681, %v6680
          %v6809 = vpack.c.b16 %v6683, %v6682
          %v6810 = vpack.c.b16 %v6685, %v6684
          %v6811 = vpack.c.b16 %v6687, %v6686
          %v6812 = vpack.c.b16 %v6689, %v6688
          %v6813 = vpack.c.b16 %v6691, %v6690
          %v6814 = vpack.c.b16 %v6693, %v6692
          %v6815 = vpack.c.b16 %v6695, %v6694
          %v6816 = vpack.c.b16 %v6697, %v6696
          %v6817 = vpack.c.b16 %v6699, %v6698
          %v6818 = vpack.c.b16 %v6701, %v6700
          %v6819 = vpack.c.b16 %v6703, %v6702
          %v6820 = vpack.c.b16 %v6705, %v6704
          %v6821 = vpack.c.b16 %v6707, %v6706
          %v6822 = vpack.c.b16 %v6709, %v6708
          %v6823 = vpack.c.b16 %v6711, %v6710
          %v6824 = vpack.c.b16 %v6713, %v6712
          %v6825 = vpack.c.b16 %v6715, %v6714
          %v6826 = vpack.c.b16 %v6717, %v6716
          %v6827 = vpack.c.b16 %v6719, %v6718
          %v6828 = vpack.c.b16 %v6721, %v6720
          %v6829 = vpack.c.b16 %v6723, %v6722
          %v6830 = vpack.c.b16 %v6725, %v6724
          %v6831 = vpack.c.b16 %v6727, %v6726
          %v6832 = vpack.c.b16 %v6729, %v6728
          %v6833 = vpack.c.b16 %v6731, %v6730
          %v6834 = vpack.c.b16 %v6733, %v6732
          %v6835 = vpack.c.b16 %v6735, %v6734
          %v6836 = vpack.c.b16 %v6737, %v6736
          %v6837 = vpack.c.b16 %v6739, %v6738
          %v6838 = vpack.c.b16 %v6741, %v6740
          %v6839 = vpack.c.b16 %v6743, %v6742
          %v6840 = vpack.c.b16 %v6745, %v6744
          %v6841 = vpack.c.b16 %v6747, %v6746
          %v6842 = vpack.c.b16 %v6749, %v6748
          %v6843 = vpack.c.b16 %v6751, %v6750
          %v6844 = vpack.c.b16 %v6753, %v6752
          %v6845 = vpack.c.b16 %v6755, %v6754
          %v6846 = vpack.c.b16 %v6757, %v6756
          %v6847 = vpack.c.b16 %v6759, %v6758
          %v6848 = vpack.c.b16 %v6761, %v6760
          %v6849 = vpack.c.b16 %v6763, %v6762
          %v6850 = vpack.c.b16 %v6765, %v6764
          %v6851 = vpack.c.b16 %v6767, %v6766
          %v6852 = vpack.c.b16 %v6769, %v6768
          %v6853 = vpack.c.b16 %v6771, %v6770
          %v6854 = vpack.c.b16 %v6773, %v6772
          %v6855 = vpack.c.b16 %v6775, %v6774
          %6936 = vmatprep.subr.bf16.mxu0 0
          %6937 = vmatpush1.bf16.msra.mxu0 %v6783
          %6938 = vmatprep.subr.bf16.mxu0 0
          %6939 = vmatpush1.bf16.msra.mxu0 %v6782
          %6940 = vmatprep.subr.bf16.mxu0 0
          %6941 = vmatpush1.bf16.msra.mxu0 %v6781
          %6942 = vmatprep.subr.bf16.mxu0 0
          %6943 = vmatpush1.bf16.msra.mxu0 %v6780
          %6944 = vmatprep.subr.bf16.mxu0 0
          %6945 = vmatpush1.bf16.msra.mxu0 %v6779
          %6946 = vmatprep.subr.bf16.mxu0 0
          %6947 = vmatpush1.bf16.msra.mxu0 %v6778
          %6948 = vmatprep.subr.bf16.mxu0 0
          %6949 = vmatpush1.bf16.msra.mxu0 %v6777
          %6950 = vmatprep.subr.bf16.mxu0 0
          %6951 = vmatpush1.bf16.msra.mxu0 %v6776
          %6952 = vmatprep.subr.bf16.mxu0 0
          %6953 = vmatpush2.bf16.msra.mxu0 %v6791
          %6954 = vmatprep.subr.bf16.mxu0 0
          %6955 = vmatpush2.bf16.msra.mxu0 %v6790
          %6956 = vmatprep.subr.bf16.mxu0 0
          %6957 = vmatpush2.bf16.msra.mxu0 %v6789
          %6958 = vmatprep.subr.bf16.mxu0 0
          %6959 = vmatpush2.bf16.msra.mxu0 %v6788
          %6960 = vmatprep.subr.bf16.mxu0 0
          %6961 = vmatpush2.bf16.msra.mxu0 %v6787
          %6962 = vmatprep.subr.bf16.mxu0 0
          %6963 = vmatpush2.bf16.msra.mxu0 %v6786
          %6964 = vmatprep.subr.bf16.mxu0 0
          %6965 = vmatpush2.bf16.msra.mxu0 %v6785
          %6966 = vmatprep.subr.bf16.mxu0 0
          %6967 = vmatpush2.bf16.msra.mxu0 %v6784
          %6968 = vmatprep.mubr.bf16.mxu0 %v6287
          %6969 = vmatmul.mubr.bf16.gmra.mxu0 %v6286
          %v6970 = vpop.f32.mrf.mxu0
          %v6971 = vadd.f32 0.0, %v6970
          %v6972 = vpop.f32.mrf.mxu0
          %v6973 = vpop.f32.mrf.mxu0
          %v6974 = vpop.f32.mrf.mxu0
          %6975 = vdwg.mxu0
          %6976 = vmatprep.subr.bf16.mxu0 0
          %6977 = vmatpush1.bf16.msra.mxu0 %v6799
          %6978 = vmatprep.subr.bf16.mxu0 0
          %6979 = vmatpush1.bf16.msra.mxu0 %v6798
          %6980 = vmatprep.subr.bf16.mxu0 0
          %6981 = vmatpush1.bf16.msra.mxu0 %v6797
          %6982 = vmatprep.subr.bf16.mxu0 0
          %6983 = vmatpush1.bf16.msra.mxu0 %v6796
          %6984 = vmatprep.subr.bf16.mxu0 0
          %6985 = vmatpush1.bf16.msra.mxu0 %v6795
          %6986 = vmatprep.subr.bf16.mxu0 0
          %6987 = vmatpush1.bf16.msra.mxu0 %v6794
          %6988 = vmatprep.subr.bf16.mxu0 0
          %6989 = vmatpush1.bf16.msra.mxu0 %v6793
          %6990 = vmatprep.subr.bf16.mxu0 0
          %6991 = vmatpush1.bf16.msra.mxu0 %v6792
          %6992 = vmatprep.subr.bf16.mxu0 0
          %6993 = vmatpush2.bf16.msra.mxu0 %v6807
          %6994 = vmatprep.subr.bf16.mxu0 0
          %6995 = vmatpush2.bf16.msra.mxu0 %v6806
          %6996 = vmatprep.subr.bf16.mxu0 0
          %6997 = vmatpush2.bf16.msra.mxu0 %v6805
          %6998 = vmatprep.subr.bf16.mxu0 0
          %6999 = vmatpush2.bf16.msra.mxu0 %v6804
          %7000 = vmatprep.subr.bf16.mxu0 0
          %7001 = vmatpush2.bf16.msra.mxu0 %v6803
          %7002 = vmatprep.subr.bf16.mxu0 0
          %7003 = vmatpush2.bf16.msra.mxu0 %v6802
          %7004 = vmatprep.subr.bf16.mxu0 0
          %7005 = vmatpush2.bf16.msra.mxu0 %v6801
          %7006 = vmatprep.subr.bf16.mxu0 0
          %7007 = vmatpush2.bf16.msra.mxu0 %v6800
          %7008 = vmatprep.mubr.bf16.mxu0 %v6289
          %7009 = vmatmul.mubr.bf16.gmra.mxu0 %v6288
          %v7010 = vpop.f32.mrf.mxu0
          %v7011 = vadd.f32 %v6971, %v7010
          %v7012 = vpop.f32.mrf.mxu0
          %v7013 = vpop.f32.mrf.mxu0
          %v7014 = vpop.f32.mrf.mxu0
          %7015 = vdwg.mxu0
          %7016 = vmatprep.subr.bf16.mxu0 0
          %7017 = vmatpush1.bf16.msra.mxu0 %v6815
          %7018 = vmatprep.subr.bf16.mxu0 0
          %7019 = vmatpush1.bf16.msra.mxu0 %v6814
          %7020 = vmatprep.subr.bf16.mxu0 0
          %7021 = vmatpush1.bf16.msra.mxu0 %v6813
          %7022 = vmatprep.subr.bf16.mxu0 0
          %7023 = vmatpush1.bf16.msra.mxu0 %v6812
          %7024 = vmatprep.subr.bf16.mxu0 0
          %7025 = vmatpush1.bf16.msra.mxu0 %v6811
          %7026 = vmatprep.subr.bf16.mxu0 0
          %7027 = vmatpush1.bf16.msra.mxu0 %v6810
          %7028 = vmatprep.subr.bf16.mxu0 0
          %7029 = vmatpush1.bf16.msra.mxu0 %v6809
          %7030 = vmatprep.subr.bf16.mxu0 0
          %7031 = vmatpush1.bf16.msra.mxu0 %v6808
          %7032 = vmatprep.subr.bf16.mxu0 0
          %7033 = vmatpush2.bf16.msra.mxu0 %v6823
          %7034 = vmatprep.subr.bf16.mxu0 0
          %7035 = vmatpush2.bf16.msra.mxu0 %v6822
          %7036 = vmatprep.subr.bf16.mxu0 0
          %7037 = vmatpush2.bf16.msra.mxu0 %v6821
          %7038 = vmatprep.subr.bf16.mxu0 0
          %7039 = vmatpush2.bf16.msra.mxu0 %v6820
          %7040 = vmatprep.subr.bf16.mxu0 0
          %7041 = vmatpush2.bf16.msra.mxu0 %v6819
          %7042 = vmatprep.subr.bf16.mxu0 0
          %7043 = vmatpush2.bf16.msra.mxu0 %v6818
          %7044 = vmatprep.subr.bf16.mxu0 0
          %7045 = vmatpush2.bf16.msra.mxu0 %v6817
          %7046 = vmatprep.subr.bf16.mxu0 0
          %7047 = vmatpush2.bf16.msra.mxu0 %v6816
          %7048 = vmatprep.mubr.bf16.mxu0 %v6291
          %7049 = vmatmul.mubr.bf16.gmra.mxu0 %v6290
          %v7050 = vpop.f32.mrf.mxu0
          %v7051 = vadd.f32 %v7011, %v7050
          %v7052 = vpop.f32.mrf.mxu0
          %v7053 = vpop.f32.mrf.mxu0
          %v7054 = vpop.f32.mrf.mxu0
          %7055 = vdwg.mxu0
          %7056 = vmatprep.subr.bf16.mxu0 0
          %7057 = vmatpush1.bf16.msra.mxu0 %v6831
          %7058 = vmatprep.subr.bf16.mxu0 0
          %7059 = vmatpush1.bf16.msra.mxu0 %v6830
          %7060 = vmatprep.subr.bf16.mxu0 0
          %7061 = vmatpush1.bf16.msra.mxu0 %v6829
          %7062 = vmatprep.subr.bf16.mxu0 0
          %7063 = vmatpush1.bf16.msra.mxu0 %v6828
          %7064 = vmatprep.subr.bf16.mxu0 0
          %7065 = vmatpush1.bf16.msra.mxu0 %v6827
          %7066 = vmatprep.subr.bf16.mxu0 0
          %7067 = vmatpush1.bf16.msra.mxu0 %v6826
          %7068 = vmatprep.subr.bf16.mxu0 0
          %7069 = vmatpush1.bf16.msra.mxu0 %v6825
          %7070 = vmatprep.subr.bf16.mxu0 0
          %7071 = vmatpush1.bf16.msra.mxu0 %v6824
          %7072 = vmatprep.subr.bf16.mxu0 0
          %7073 = vmatpush2.bf16.msra.mxu0 %v6839
          %7074 = vmatprep.subr.bf16.mxu0 0
          %7075 = vmatpush2.bf16.msra.mxu0 %v6838
          %7076 = vmatprep.subr.bf16.mxu0 0
          %7077 = vmatpush2.bf16.msra.mxu0 %v6837
          %7078 = vmatprep.subr.bf16.mxu0 0
          %7079 = vmatpush2.bf16.msra.mxu0 %v6836
          %7080 = vmatprep.subr.bf16.mxu0 0
          %7081 = vmatpush2.bf16.msra.mxu0 %v6835
          %7082 = vmatprep.subr.bf16.mxu0 0
          %7083 = vmatpush2.bf16.msra.mxu0 %v6834
          %7084 = vmatprep.subr.bf16.mxu0 0
          %7085 = vmatpush2.bf16.msra.mxu0 %v6833
          %7086 = vmatprep.subr.bf16.mxu0 0
          %7087 = vmatpush2.bf16.msra.mxu0 %v6832
          %7088 = vmatprep.mubr.bf16.mxu0 %v6293
          %7089 = vmatmul.mubr.bf16.gmra.mxu0 %v6292
          %v7090 = vpop.f32.mrf.mxu0
          %v7091 = vadd.f32 %v7051, %v7090
          %v7092 = vpop.f32.mrf.mxu0
          %v7093 = vpop.f32.mrf.mxu0
          %v7094 = vpop.f32.mrf.mxu0
          %7095 = vdwg.mxu0
          %7096 = vmatprep.subr.bf16.mxu0 0
          %7097 = vmatpush1.bf16.msra.mxu0 %v6847
          %7098 = vmatprep.subr.bf16.mxu0 0
          %7099 = vmatpush1.bf16.msra.mxu0 %v6846
          %7100 = vmatprep.subr.bf16.mxu0 0
          %7101 = vmatpush1.bf16.msra.mxu0 %v6845
          %7102 = vmatprep.subr.bf16.mxu0 0
          %7103 = vmatpush1.bf16.msra.mxu0 %v6844
          %7104 = vmatprep.subr.bf16.mxu0 0
          %7105 = vmatpush1.bf16.msra.mxu0 %v6843
          %7106 = vmatprep.subr.bf16.mxu0 0
          %7107 = vmatpush1.bf16.msra.mxu0 %v6842
          %7108 = vmatprep.subr.bf16.mxu0 0
          %7109 = vmatpush1.bf16.msra.mxu0 %v6841
          %7110 = vmatprep.subr.bf16.mxu0 0
          %7111 = vmatpush1.bf16.msra.mxu0 %v6840
          %7112 = vmatprep.subr.bf16.mxu0 0
          %7113 = vmatpush2.bf16.msra.mxu0 %v6855
          %7114 = vmatprep.subr.bf16.mxu0 0
          %7115 = vmatpush2.bf16.msra.mxu0 %v6854
          %7116 = vmatprep.subr.bf16.mxu0 0
          %7117 = vmatpush2.bf16.msra.mxu0 %v6853
          %7118 = vmatprep.subr.bf16.mxu0 0
          %7119 = vmatpush2.bf16.msra.mxu0 %v6852
          %7120 = vmatprep.subr.bf16.mxu0 0
          %7121 = vmatpush2.bf16.msra.mxu0 %v6851
          %7122 = vmatprep.subr.bf16.mxu0 0
          %7123 = vmatpush2.bf16.msra.mxu0 %v6850
          %7124 = vmatprep.subr.bf16.mxu0 0
          %7125 = vmatpush2.bf16.msra.mxu0 %v6849
          %7126 = vmatprep.subr.bf16.mxu0 0
          %7127 = vmatpush2.bf16.msra.mxu0 %v6848
          %7128 = vmatprep.mubr.bf16.mxu0 %v6295
          %7129 = vmatmul.mubr.bf16.gmra.mxu0 %v6294
          %v7130 = vpop.f32.mrf.mxu0
          %v7131 = vadd.f32 %v7091, %v7130
          %v7132 = vpop.f32.mrf.mxu0
          %v7133 = vpop.f32.mrf.mxu0
          %v7134 = vpop.f32.mrf.mxu0
          %7135 = vdwg.mxu0
          %v7136 = vld [vmem:[%s0] sm:$0xff]
          %v7137 = vld [vmem:[%s0 + $0x8] sm:$0xf]
          %v7140 = vcombine.high %v7136, %v7136
          %v7142 = vunpack.c.l.s4 1983009808
          %v7143 = vunpack.c.0.s8 %v7142
          %v7144 = vlaneseq
          %v7145 = vshrl.u32 %v7144, 7
          %v7146 = vsub.s32 %v7143, %v7145
          %v7147 = vrot.slane %v7136, %v7146
          %v7149 = vunpack.c.l.s4 1983009808
          %v7150 = vunpack.c.0.s8 %v7149
          %v7151 = vlaneseq
          %v7152 = vshrl.u32 %v7151, 7
          %v7153 = vsub.s32 %v7150, %v7152
          %v7154 = vrot.slane %v7140, %v7153
          %v7155 = vcombine.high %v7147, %v7147
          %v7156 = vcombine.high %v7154, %v7154
          %v7158 = vunpack.c.l.s4 1983009808
          %v7159 = vunpack.c.0.s8 %v7158
          %v7160 = vlaneseq
          %v7161 = vshrl.u32 %v7160, 7
          %v7162 = vsub.s32 %v7159, %v7161
          %v7163 = vrot.slane %v7137, %v7162
          %v7164 = vcombine.high %v7163, %v7163
          %v7171 = vpack.c.bf16 %v7147, %v7147
          %v7172 = vpack.c.bf16 %v7155, %v7155
          %v7173 = vpack.c.bf16 %v7154, %v7154
          %v7174 = vpack.c.bf16 %v7156, %v7156
          %v7175 = vpack.c.bf16 %v7163, %v7163
          %v7176 = vpack.c.bf16 %v7164, %v7164
          %v7177 = vld [vmem:[%s2] sm:$0xf]
          %v7178 = vld [vmem:[%s2 + $0x4] sm:$0xf]
          %v7179 = vld [vmem:[%s2 + $0x8] sm:$0xf]
          %v7180 = vld [vmem:[%s2 + $0xc] sm:$0xf]
          %v7181 = vld [vmem:[%s2 + $0x10] sm:$0xf]
          %v7182 = vld [vmem:[%s2 + $0x14] sm:$0xf]
          %v7183 = vld [vmem:[%s2 + $0x18] sm:$0xf]
          %v7184 = vld [vmem:[%s2 + $0x1c] sm:$0xf]
          %v7185 = vld [vmem:[%s2 + $0x20] sm:$0xf]
          %v7186 = vld [vmem:[%s2 + $0x24] sm:$0xf]
          %v7187 = vld [vmem:[%s2 + $0x28] sm:$0xf]
          %v7188 = vld [vmem:[%s2 + $0x2c] sm:$0xf]
          %v7189 = vld [vmem:[%s2 + $0x30] sm:$0xf]
          %v7190 = vld [vmem:[%s2 + $0x34] sm:$0xf]
          %v7191 = vld [vmem:[%s2 + $0x38] sm:$0xf]
          %v7192 = vld [vmem:[%s2 + $0x3c] sm:$0xf]
          %v7193 = vld [vmem:[%s2 + $0x40] sm:$0xf]
          %v7194 = vld [vmem:[%s2 + $0x44] sm:$0xf]
          %v7195 = vld [vmem:[%s2 + $0x48] sm:$0xf]
          %v7196 = vld [vmem:[%s2 + $0x4c] sm:$0xf]
          %v7197 = vld [vmem:[%s2 + $0x50] sm:$0xf]
          %v7198 = vld [vmem:[%s2 + $0x54] sm:$0xf]
          %v7199 = vld [vmem:[%s2 + $0x58] sm:$0xf]
          %v7200 = vld [vmem:[%s2 + $0x5c] sm:$0xf]
          %v7201 = vld [vmem:[%s2 + $0x60] sm:$0xf]
          %v7202 = vld [vmem:[%s2 + $0x64] sm:$0xf]
          %v7203 = vld [vmem:[%s2 + $0x68] sm:$0xf]
          %v7204 = vld [vmem:[%s2 + $0x6c] sm:$0xf]
          %v7205 = vld [vmem:[%s2 + $0x70] sm:$0xf]
          %v7206 = vld [vmem:[%s2 + $0x74] sm:$0xf]
          %v7207 = vld [vmem:[%s2 + $0x78] sm:$0xf]
          %v7208 = vld [vmem:[%s2 + $0x7c] sm:$0xf]
          %v7209 = vld [vmem:[%s2 + $0x80] sm:$0xf]
          %v7210 = vld [vmem:[%s2 + $0x84] sm:$0xf]
          %v7211 = vld [vmem:[%s2 + $0x88] sm:$0xf]
          %v7212 = vld [vmem:[%s2 + $0x8c] sm:$0xf]
          %v7213 = vld [vmem:[%s2 + $0x90] sm:$0xf]
          %v7214 = vld [vmem:[%s2 + $0x94] sm:$0xf]
          %v7215 = vld [vmem:[%s2 + $0x98] sm:$0xf]
          %v7216 = vld [vmem:[%s2 + $0x9c] sm:$0xf]
          %v7217 = vld [vmem:[%s2 + $0xa0] sm:$0xf]
          %v7218 = vld [vmem:[%s2 + $0xa4] sm:$0xf]
          %v7219 = vld [vmem:[%s2 + $0xa8] sm:$0xf]
          %v7220 = vld [vmem:[%s2 + $0xac] sm:$0xf]
          %v7221 = vld [vmem:[%s2 + $0xb0] sm:$0xf]
          %v7222 = vld [vmem:[%s2 + $0xb4] sm:$0xf]
          %v7223 = vld [vmem:[%s2 + $0xb8] sm:$0xf]
          %v7224 = vld [vmem:[%s2 + $0xbc] sm:$0xf]
          %v7225 = vld [vmem:[%s2 + $0xc0] sm:$0xf]
          %v7226 = vld [vmem:[%s2 + $0xc4] sm:$0xf]
          %v7227 = vld [vmem:[%s2 + $0xc8] sm:$0xf]
          %v7228 = vld [vmem:[%s2 + $0xcc] sm:$0xf]
          %v7229 = vld [vmem:[%s2 + $0xd0] sm:$0xf]
          %v7230 = vld [vmem:[%s2 + $0xd4] sm:$0xf]
          %v7231 = vld [vmem:[%s2 + $0xd8] sm:$0xf]
          %v7232 = vld [vmem:[%s2 + $0xdc] sm:$0xf]
          %v7233 = vld [vmem:[%s2 + $0xe0] sm:$0xf]
          %v7234 = vld [vmem:[%s2 + $0xe4] sm:$0xf]
          %v7235 = vld [vmem:[%s2 + $0xe8] sm:$0xf]
          %v7236 = vld [vmem:[%s2 + $0xec] sm:$0xf]
          %v7237 = vld [vmem:[%s2 + $0xf0] sm:$0xf]
          %v7238 = vld [vmem:[%s2 + $0xf4] sm:$0xf]
          %v7239 = vld [vmem:[%s2 + $0xf8] sm:$0xf]
          %v7240 = vld [vmem:[%s2 + $0xfc] sm:$0xf]
          %v7241 = vld [vmem:[%s2 + $0x100] sm:$0xf]
          %v7242 = vld [vmem:[%s2 + $0x104] sm:$0xf]
          %v7243 = vld [vmem:[%s2 + $0x108] sm:$0xf]
          %v7244 = vld [vmem:[%s2 + $0x10c] sm:$0xf]
          %v7245 = vld [vmem:[%s2 + $0x110] sm:$0xf]
          %v7246 = vld [vmem:[%s2 + $0x114] sm:$0xf]
          %v7247 = vld [vmem:[%s2 + $0x118] sm:$0xf]
          %v7248 = vld [vmem:[%s2 + $0x11c] sm:$0xf]
          %v7249 = vld [vmem:[%s2 + $0x120] sm:$0xf]
          %v7250 = vld [vmem:[%s2 + $0x124] sm:$0xf]
          %v7251 = vld [vmem:[%s2 + $0x128] sm:$0xf]
          %v7252 = vld [vmem:[%s2 + $0x12c] sm:$0xf]
          %v7253 = vld [vmem:[%s2 + $0x130] sm:$0xf]
          %v7254 = vld [vmem:[%s2 + $0x134] sm:$0xf]
          %v7255 = vld [vmem:[%s2 + $0x138] sm:$0xf]
          %v7256 = vld [vmem:[%s2 + $0x13c] sm:$0xf]
          %v7257 = vld [vmem:[%s2 + $0x140] sm:$0xf]
          %v7258 = vld [vmem:[%s2 + $0x144] sm:$0xf]
          %v7259 = vld [vmem:[%s2 + $0x148] sm:$0xf]
          %v7260 = vld [vmem:[%s2 + $0x14c] sm:$0xf]
          %v7261 = vld [vmem:[%s2 + $0x150] sm:$0xf]
          %v7262 = vld [vmem:[%s2 + $0x154] sm:$0xf]
          %v7263 = vld [vmem:[%s2 + $0x158] sm:$0xf]
          %v7264 = vld [vmem:[%s2 + $0x15c] sm:$0xf]
          %v7265 = vld [vmem:[%s2 + $0x160] sm:$0xf]
          %v7266 = vld [vmem:[%s2 + $0x164] sm:$0xf]
          %v7267 = vld [vmem:[%s2 + $0x168] sm:$0xf]
          %v7268 = vld [vmem:[%s2 + $0x16c] sm:$0xf]
          %v7269 = vld [vmem:[%s2 + $0x170] sm:$0xf]
          %v7270 = vld [vmem:[%s2 + $0x174] sm:$0xf]
          %v7271 = vld [vmem:[%s2 + $0x178] sm:$0xf]
          %v7272 = vld [vmem:[%s2 + $0x17c] sm:$0xf]
          %v7273 = vld [vmem:[#allocation8] sm:$0x1]
          %v7275 = vlaneseq
          %v7276 = vshrl.u32 %v7275, 7
          %v7277 = vsub.s32 0, %v7276
          %v7278 = vrot.slane %v7273, %v7277
          %v7376 = vunpack.c.l.b16 %v7177
          %v7377 = vunpack.c.l.b16 %v7178
          %v7378 = vunpack.c.l.b16 %v7179
          %v7379 = vunpack.c.l.b16 %v7180
          %v7380 = vunpack.c.l.b16 %v7181
          %v7381 = vunpack.c.l.b16 %v7182
          %v7382 = vunpack.c.l.b16 %v7183
          %v7383 = vunpack.c.l.b16 %v7184
          %v7384 = vunpack.c.l.b16 %v7185
          %v7385 = vunpack.c.l.b16 %v7186
          %v7386 = vunpack.c.l.b16 %v7187
          %v7387 = vunpack.c.l.b16 %v7188
          %v7388 = vunpack.c.l.b16 %v7189
          %v7389 = vunpack.c.l.b16 %v7190
          %v7390 = vunpack.c.l.b16 %v7191
          %v7391 = vunpack.c.l.b16 %v7192
          %v7392 = vunpack.c.l.b16 %v7193
          %v7393 = vunpack.c.l.b16 %v7194
          %v7394 = vunpack.c.l.b16 %v7195
          %v7395 = vunpack.c.l.b16 %v7196
          %v7396 = vunpack.c.l.b16 %v7197
          %v7397 = vunpack.c.l.b16 %v7198
          %v7398 = vunpack.c.l.b16 %v7199
          %v7399 = vunpack.c.l.b16 %v7200
          %v7400 = vunpack.c.l.b16 %v7201
          %v7401 = vunpack.c.l.b16 %v7202
          %v7402 = vunpack.c.l.b16 %v7203
          %v7403 = vunpack.c.l.b16 %v7204
          %v7404 = vunpack.c.l.b16 %v7205
          %v7405 = vunpack.c.l.b16 %v7206
          %v7406 = vunpack.c.l.b16 %v7207
          %v7407 = vunpack.c.l.b16 %v7208
          %v7408 = vunpack.c.l.b16 %v7209
          %v7409 = vunpack.c.l.b16 %v7210
          %v7410 = vunpack.c.l.b16 %v7211
          %v7411 = vunpack.c.l.b16 %v7212
          %v7412 = vunpack.c.l.b16 %v7213
          %v7413 = vunpack.c.l.b16 %v7214
          %v7414 = vunpack.c.l.b16 %v7215
          %v7415 = vunpack.c.l.b16 %v7216
          %v7416 = vunpack.c.l.b16 %v7217
          %v7417 = vunpack.c.l.b16 %v7218
          %v7418 = vunpack.c.l.b16 %v7219
          %v7419 = vunpack.c.l.b16 %v7220
          %v7420 = vunpack.c.l.b16 %v7221
          %v7421 = vunpack.c.l.b16 %v7222
          %v7422 = vunpack.c.l.b16 %v7223
          %v7423 = vunpack.c.l.b16 %v7224
          %v7424 = vunpack.c.l.b16 %v7225
          %v7425 = vunpack.c.l.b16 %v7226
          %v7426 = vunpack.c.l.b16 %v7227
          %v7427 = vunpack.c.l.b16 %v7228
          %v7428 = vunpack.c.l.b16 %v7229
          %v7429 = vunpack.c.l.b16 %v7230
          %v7430 = vunpack.c.l.b16 %v7231
          %v7431 = vunpack.c.l.b16 %v7232
          %v7432 = vunpack.c.l.b16 %v7233
          %v7433 = vunpack.c.l.b16 %v7234
          %v7434 = vunpack.c.l.b16 %v7235
          %v7435 = vunpack.c.l.b16 %v7236
          %v7436 = vunpack.c.l.b16 %v7237
          %v7437 = vunpack.c.l.b16 %v7238
          %v7438 = vunpack.c.l.b16 %v7239
          %v7439 = vunpack.c.l.b16 %v7240
          %v7440 = vunpack.c.l.b16 %v7241
          %v7441 = vunpack.c.l.b16 %v7242
          %v7442 = vunpack.c.l.b16 %v7243
          %v7443 = vunpack.c.l.b16 %v7244
          %v7444 = vunpack.c.l.b16 %v7245
          %v7445 = vunpack.c.l.b16 %v7246
          %v7446 = vunpack.c.l.b16 %v7247
          %v7447 = vunpack.c.l.b16 %v7248
          %v7448 = vunpack.c.l.b16 %v7249
          %v7449 = vunpack.c.l.b16 %v7250
          %v7450 = vunpack.c.l.b16 %v7251
          %v7451 = vunpack.c.l.b16 %v7252
          %v7452 = vunpack.c.l.b16 %v7253
          %v7453 = vunpack.c.l.b16 %v7254
          %v7454 = vunpack.c.l.b16 %v7255
          %v7455 = vunpack.c.l.b16 %v7256
          %v7456 = vunpack.c.l.b16 %v7257
          %v7457 = vunpack.c.l.b16 %v7258
          %v7458 = vunpack.c.l.b16 %v7259
          %v7459 = vunpack.c.l.b16 %v7260
          %v7460 = vunpack.c.l.b16 %v7261
          %v7461 = vunpack.c.l.b16 %v7262
          %v7462 = vunpack.c.l.b16 %v7263
          %v7463 = vunpack.c.l.b16 %v7264
          %v7464 = vunpack.c.l.b16 %v7265
          %v7465 = vunpack.c.l.b16 %v7266
          %v7466 = vunpack.c.l.b16 %v7267
          %v7467 = vunpack.c.l.b16 %v7268
          %v7468 = vunpack.c.l.b16 %v7269
          %v7469 = vunpack.c.l.b16 %v7270
          %v7470 = vunpack.c.l.b16 %v7271
          %v7471 = vunpack.c.l.b16 %v7272
          %v7472 = vpack.c.b16 %v7377, %v7376
          %v7473 = vpack.c.b16 %v7379, %v7378
          %v7474 = vpack.c.b16 %v7381, %v7380
          %v7475 = vpack.c.b16 %v7383, %v7382
          %v7476 = vpack.c.b16 %v7385, %v7384
          %v7477 = vpack.c.b16 %v7387, %v7386
          %v7478 = vpack.c.b16 %v7389, %v7388
          %v7479 = vpack.c.b16 %v7391, %v7390
          %v7480 = vpack.c.b16 %v7393, %v7392
          %v7481 = vpack.c.b16 %v7395, %v7394
          %v7482 = vpack.c.b16 %v7397, %v7396
          %v7483 = vpack.c.b16 %v7399, %v7398
          %v7484 = vpack.c.b16 %v7401, %v7400
          %v7485 = vpack.c.b16 %v7403, %v7402
          %v7486 = vpack.c.b16 %v7405, %v7404
          %v7487 = vpack.c.b16 %v7407, %v7406
          %v7488 = vpack.c.b16 %v7409, %v7408
          %v7489 = vpack.c.b16 %v7411, %v7410
          %v7490 = vpack.c.b16 %v7413, %v7412
          %v7491 = vpack.c.b16 %v7415, %v7414
          %v7492 = vpack.c.b16 %v7417, %v7416
          %v7493 = vpack.c.b16 %v7419, %v7418
          %v7494 = vpack.c.b16 %v7421, %v7420
          %v7495 = vpack.c.b16 %v7423, %v7422
          %v7496 = vpack.c.b16 %v7425, %v7424
          %v7497 = vpack.c.b16 %v7427, %v7426
          %v7498 = vpack.c.b16 %v7429, %v7428
          %v7499 = vpack.c.b16 %v7431, %v7430
          %v7500 = vpack.c.b16 %v7433, %v7432
          %v7501 = vpack.c.b16 %v7435, %v7434
          %v7502 = vpack.c.b16 %v7437, %v7436
          %v7503 = vpack.c.b16 %v7439, %v7438
          %v7504 = vpack.c.b16 %v7441, %v7440
          %v7505 = vpack.c.b16 %v7443, %v7442
          %v7506 = vpack.c.b16 %v7445, %v7444
          %v7507 = vpack.c.b16 %v7447, %v7446
          %v7508 = vpack.c.b16 %v7449, %v7448
          %v7509 = vpack.c.b16 %v7451, %v7450
          %v7510 = vpack.c.b16 %v7453, %v7452
          %v7511 = vpack.c.b16 %v7455, %v7454
          %v7512 = vpack.c.b16 %v7457, %v7456
          %v7513 = vpack.c.b16 %v7459, %v7458
          %v7514 = vpack.c.b16 %v7461, %v7460
          %v7515 = vpack.c.b16 %v7463, %v7462
          %v7516 = vpack.c.b16 %v7465, %v7464
          %v7517 = vpack.c.b16 %v7467, %v7466
          %v7518 = vpack.c.b16 %v7469, %v7468
          %v7519 = vpack.c.b16 %v7471, %v7470
          %7568 = vmatprep.subr.bf16.mxu0 0
          %7569 = vmatpush1.bf16.msra.mxu0 %v7479
          %7570 = vmatprep.subr.bf16.mxu0 0
          %7571 = vmatpush1.bf16.msra.mxu0 %v7478
          %7572 = vmatprep.subr.bf16.mxu0 0
          %7573 = vmatpush1.bf16.msra.mxu0 %v7477
          %7574 = vmatprep.subr.bf16.mxu0 0
          %7575 = vmatpush1.bf16.msra.mxu0 %v7476
          %7576 = vmatprep.subr.bf16.mxu0 0
          %7577 = vmatpush1.bf16.msra.mxu0 %v7475
          %7578 = vmatprep.subr.bf16.mxu0 0
          %7579 = vmatpush1.bf16.msra.mxu0 %v7474
          %7580 = vmatprep.subr.bf16.mxu0 0
          %7581 = vmatpush1.bf16.msra.mxu0 %v7473
          %7582 = vmatprep.subr.bf16.mxu0 0
          %7583 = vmatpush1.bf16.msra.mxu0 %v7472
          %7584 = vmatprep.subr.bf16.mxu0 0
          %7585 = vmatpush2.bf16.msra.mxu0 %v7487
          %7586 = vmatprep.subr.bf16.mxu0 0
          %7587 = vmatpush2.bf16.msra.mxu0 %v7486
          %7588 = vmatprep.subr.bf16.mxu0 0
          %7589 = vmatpush2.bf16.msra.mxu0 %v7485
          %7590 = vmatprep.subr.bf16.mxu0 0
          %7591 = vmatpush2.bf16.msra.mxu0 %v7484
          %7592 = vmatprep.subr.bf16.mxu0 0
          %7593 = vmatpush2.bf16.msra.mxu0 %v7483
          %7594 = vmatprep.subr.bf16.mxu0 0
          %7595 = vmatpush2.bf16.msra.mxu0 %v7482
          %7596 = vmatprep.subr.bf16.mxu0 0
          %7597 = vmatpush2.bf16.msra.mxu0 %v7481
          %7598 = vmatprep.subr.bf16.mxu0 0
          %7599 = vmatpush2.bf16.msra.mxu0 %v7480
          %7600 = vmatprep.mubr.bf16.mxu0 %v7172
          %7601 = vmatmul.mubr.bf16.gmra.mxu0 %v7171
          %v7602 = vpop.f32.mrf.mxu0
          %v7603 = vadd.f32 %v7278, %v7602
          %v7604 = vpop.f32.mrf.mxu0
          %v7605 = vpop.f32.mrf.mxu0
          %v7606 = vpop.f32.mrf.mxu0
          %7607 = vdwg.mxu0
          %7608 = vmatprep.subr.bf16.mxu0 0
          %7609 = vmatpush1.bf16.msra.mxu0 %v7495
          %7610 = vmatprep.subr.bf16.mxu0 0
          %7611 = vmatpush1.bf16.msra.mxu0 %v7494
          %7612 = vmatprep.subr.bf16.mxu0 0
          %7613 = vmatpush1.bf16.msra.mxu0 %v7493
          %7614 = vmatprep.subr.bf16.mxu0 0
          %7615 = vmatpush1.bf16.msra.mxu0 %v7492
          %7616 = vmatprep.subr.bf16.mxu0 0
          %7617 = vmatpush1.bf16.msra.mxu0 %v7491
          %7618 = vmatprep.subr.bf16.mxu0 0
          %7619 = vmatpush1.bf16.msra.mxu0 %v7490
          %7620 = vmatprep.subr.bf16.mxu0 0
          %7621 = vmatpush1.bf16.msra.mxu0 %v7489
          %7622 = vmatprep.subr.bf16.mxu0 0
          %7623 = vmatpush1.bf16.msra.mxu0 %v7488
          %7624 = vmatprep.subr.bf16.mxu0 0
          %7625 = vmatpush2.bf16.msra.mxu0 %v7503
          %7626 = vmatprep.subr.bf16.mxu0 0
          %7627 = vmatpush2.bf16.msra.mxu0 %v7502
          %7628 = vmatprep.subr.bf16.mxu0 0
          %7629 = vmatpush2.bf16.msra.mxu0 %v7501
          %7630 = vmatprep.subr.bf16.mxu0 0
          %7631 = vmatpush2.bf16.msra.mxu0 %v7500
          %7632 = vmatprep.subr.bf16.mxu0 0
          %7633 = vmatpush2.bf16.msra.mxu0 %v7499
          %7634 = vmatprep.subr.bf16.mxu0 0
          %7635 = vmatpush2.bf16.msra.mxu0 %v7498
          %7636 = vmatprep.subr.bf16.mxu0 0
          %7637 = vmatpush2.bf16.msra.mxu0 %v7497
          %7638 = vmatprep.subr.bf16.mxu0 0
          %7639 = vmatpush2.bf16.msra.mxu0 %v7496
          %7640 = vmatprep.mubr.bf16.mxu0 %v7174
          %7641 = vmatmul.mubr.bf16.gmra.mxu0 %v7173
          %v7642 = vpop.f32.mrf.mxu0
          %v7643 = vadd.f32 %v7603, %v7642
          %v7644 = vpop.f32.mrf.mxu0
          %v7645 = vpop.f32.mrf.mxu0
          %v7646 = vpop.f32.mrf.mxu0
          %7647 = vdwg.mxu0
          %7648 = vmatprep.subr.bf16.mxu0 0
          %7649 = vmatpush1.bf16.msra.mxu0 %v7511
          %7650 = vmatprep.subr.bf16.mxu0 0
          %7651 = vmatpush1.bf16.msra.mxu0 %v7510
          %7652 = vmatprep.subr.bf16.mxu0 0
          %7653 = vmatpush1.bf16.msra.mxu0 %v7509
          %7654 = vmatprep.subr.bf16.mxu0 0
          %7655 = vmatpush1.bf16.msra.mxu0 %v7508
          %7656 = vmatprep.subr.bf16.mxu0 0
          %7657 = vmatpush1.bf16.msra.mxu0 %v7507
          %7658 = vmatprep.subr.bf16.mxu0 0
          %7659 = vmatpush1.bf16.msra.mxu0 %v7506
          %7660 = vmatprep.subr.bf16.mxu0 0
          %7661 = vmatpush1.bf16.msra.mxu0 %v7505
          %7662 = vmatprep.subr.bf16.mxu0 0
          %7663 = vmatpush1.bf16.msra.mxu0 %v7504
          %7664 = vmatprep.subr.bf16.mxu0 0
          %7665 = vmatpush2.bf16.msra.mxu0 %v7519
          %7666 = vmatprep.subr.bf16.mxu0 0
          %7667 = vmatpush2.bf16.msra.mxu0 %v7518
          %7668 = vmatprep.subr.bf16.mxu0 0
          %7669 = vmatpush2.bf16.msra.mxu0 %v7517
          %7670 = vmatprep.subr.bf16.mxu0 0
          %7671 = vmatpush2.bf16.msra.mxu0 %v7516
          %7672 = vmatprep.subr.bf16.mxu0 0
          %7673 = vmatpush2.bf16.msra.mxu0 %v7515
          %7674 = vmatprep.subr.bf16.mxu0 0
          %7675 = vmatpush2.bf16.msra.mxu0 %v7514
          %7676 = vmatprep.subr.bf16.mxu0 0
          %7677 = vmatpush2.bf16.msra.mxu0 %v7513
          %7678 = vmatprep.subr.bf16.mxu0 0
          %7679 = vmatpush2.bf16.msra.mxu0 %v7512
          %7680 = vmatprep.mubr.bf16.mxu0 %v7176
          %7681 = vmatmul.mubr.bf16.gmra.mxu0 %v7175
          %v7682 = vpop.f32.mrf.mxu0
          %v7683 = vadd.f32 %v7643, %v7682
          %v7684 = vpop.f32.mrf.mxu0
          %v7685 = vpop.f32.mrf.mxu0
          %v7686 = vpop.f32.mrf.mxu0
          %7687 = vdwg.mxu0
          %p7688 = scmp.eq.s32.totalorder %s30, 0
          %v7689 = vadd.f32 %v7131, %v7683
          %s7690 = scalar_select %p7688, 1, 0
          %v7691 = vstv %s7690
          %vm7692 = vcmp.eq.s32.totalorder %v7691, 1
          %v7693 = vsel %vm7692, %v7689, %v7131
          %vm7694 = vcmask 123904
          %7695 = vst.msk [vmem:[%s474] sm:$0x3] %vm7694, %v7693
        $region76: #{featnet_forward.1} parent=51 // pred_fallthru
          _
        %p7696 = scmp.lt.s32.totalorder %s30, 1
        %s7697 = scalar_select %p7696, %s30, 1
        %s7698 = smul.addr %s7697, 2
        %s7699 = scalar_lea.vmem %s8, %s7698
        // Predicated region
        $region77: #{featnet_forward.1} parent=51 // pred_check
          %p7700 = pneg %p251
        $region78: #{featnet_forward.1} parent=51 // pred_check_branch
          %7702 = sbr.rel (%p7700) target = $region80
        $region79: #{featnet_forward.1} parent=51 // pred_region
          _
        $region80: #{featnet_forward.1} parent=51 // pred_fallthru
          _
      $region52: #{featnet_forward.1} parent=5 // pred_fallthru
        _
      %p7703 = scmp.le.s32.totalorder 2, %s21
      // Predicated region
      $region81: #{featnet_forward.1} parent=5 // pred_check
        %p7704 = pneg %p7703
      $region82: #{featnet_forward.1} parent=5 // pred_check_branch
        %7706 = sbr.rel (%p7704) target = $region84
      $region83: #{featnet_forward.1} parent=5 // pred_region
        %s7707 = ssub.s32 %s21, 2
        // Predicated region
        $region85: #{featnet_forward.1} parent=83 // pred_check
          %p7708 = pneg %p257
        $region86: #{featnet_forward.1} parent=83 // pred_check_branch
          %7710 = sbr.rel (%p7708) target = $region88
        $region87: #{featnet_forward.1} parent=83 // pred_region
          %p7711 = scmp.lt.s32.totalorder %s32, 1
          %s7712 = scalar_select %p7711, %s32, 1
          %s7713 = smul.addr %s7712, 2
          %s7714 = scalar_lea.vmem %s8, %s7713
        $region88: #{featnet_forward.1} parent=83 // pred_fallthru
          _
      $region84: #{featnet_forward.1} parent=5 // pred_fallthru
        _
    $region6: #{featnet_forward.1} parent=1 // loop_footer
      %s25 = sadd.s32 1, %s21
    $region7: #{featnet_forward.1} parent=1 // loop_footer_branch
      %20 = sbr.rel target = $region3
    $region8: #{featnet_forward.1} parent=1 // loop_exit
      _
    %7715 = vsyncpa [#allocation4], 1
    %s7716 = scalar_lea.sflag [#allocation4], 1
    %7717 = vsyncpa %s7716, 1
    %7718 = vsyncpa [#allocation6], 1
    %s7719 = scalar_lea.sflag [#allocation6], 1
    %7720 = vsyncpa %s7719, 1
    %7721 = vsyncpa [#allocation9], 1

</llo_original>
